<compile_context>
chip_gen: v6e
topology: v6e:2x2x1
jax: 0.10.0
libtpu: 0.0.40
codegen_flags: <defaults>
</compile_context>

<pallas_src>
import jax
import jax.numpy as jnp
from jax import lax
from jax.experimental import pallas as pl
from jax.experimental.pallas import tpu as pltpu

BN_EPS = 1e-5
LRELU_SLOPE = 0.2


# ------------------------------ host-side helpers ------------------------------

def _bilinear_matrix(n_out, n_in):
    """1-D bilinear interpolation operator, align_corners=True (n_out x n_in)."""
    src = jnp.arange(n_out, dtype=jnp.float32) * (n_in - 1) / (n_out - 1)
    i0 = jnp.clip(jnp.floor(src).astype(jnp.int32), 0, n_in - 1)
    i1 = jnp.clip(i0 + 1, 0, n_in - 1)
    frac = src - i0.astype(jnp.float32)
    rows = jnp.arange(n_out)
    m = jnp.zeros((n_out, n_in), jnp.float32)
    m = m.at[rows, i0].add(1.0 - frac)
    m = m.at[rows, i1].add(frac)
    return m


def _fold_conv_weight(w, n):
    """(3,3,ci,co) HWIO -> (9*ci*n, co*n) bf16 im2col weight, block-diagonal over
    the batch index (channel-major, batch-minor lane folding)."""
    kh, kw, ci, co = w.shape
    eye = jnp.eye(n, dtype=w.dtype)
    wf = (w.reshape(kh * kw, ci, co)[:, :, None, :, None]
          * eye[None, None, :, None, :])                     # (9, ci, n, co, n)
    return wf.reshape(kh * kw * ci * n, co * n).astype(jnp.bfloat16)


# --------------------------------- forward pass --------------------------------

def up_forward(x1_nhwc, x2_nhwc, params):
    n, h1, w1, c_in = x1_nhwc.shape
    n2, h2, w2, c_half = x2_nhwc.shape
    assert n2 == n and h2 == 2 * h1 and w2 == 2 * w1 and c_half == c_in // 2
    c_out = params["w2"].shape[-1]
    f_in, f_half, f_out = c_in * n, c_half * n, c_out * n
    count = float(n * h2 * w2)          # elements per channel for batch-stat BN

    # ---- host-side layout prep (cheap XLA reshapes/transposes) ----
    # activations: (H, W, C*N) with channel-major / batch-minor lane folding.
    x1f = x1_nhwc.transpose(1, 2, 3, 0).reshape(h1 * w1, f_in).astype(jnp.bfloat16)
    x2f = x2_nhwc.transpose(1, 2, 3, 0).reshape(h2, w2, f_half).astype(jnp.float32)

    # bilinear upsample operator (align_corners=True), applied as ONE matmul for
    # the whole batch.  Dense kron is fine at this spatial size; for large H/W
    # apply mh and mw as two separable matmuls instead.
    mh = _bilinear_matrix(h2, h1)
    mw = _bilinear_matrix(w2, w1)
    u = jnp.kron(mh, mw).astype(jnp.bfloat16)                 # (H2*W2, H1*W1)

    rep = lambda v: jnp.repeat(v.astype(jnp.float32), n).reshape(1, -1)
    wu_f = _fold_conv_weight(params["wu"], n)                 # (144, C_half*N)
    w1_f = _fold_conv_weight(params["w1"], n)                 # (144, C_out*N)
    w2_f = _fold_conv_weight(params["w2"], n)                 # (144, C_out*N)
    bu_f = rep(params["bu"])
    g1_f, bb1_f = rep(params["g1"]), rep(params["beta1"])
    g2_f, bb2_f = rep(params["g2"]), rep(params["beta2"])
    # NB: double_conv biases b1/b2 cancel exactly under batch-statistics BN and
    #     are therefore not passed to the kernel at all.

    # group-sum matrix: lanes i, j belong to the same real channel iff i//n==j//n
    lane = jnp.arange(f_out)
    gsum = (lane[:, None] // n == lane[None, :] // n).astype(jnp.float32)

    def kernel(x1_ref, u_ref, x2_ref, wu_ref, bu_ref,
               w1_ref, g1_ref, bb1_ref, w2_ref, g2_ref, bb2_ref,
               gs_ref, o_ref):
        gs = gs_ref[...]

        def conv3x3(x_hwf, w_mat):
            """3x3 'same' conv as a single im2col matmul.
            x:(H,W,F) f32, w:(9F,Fo) bf16 (block-diag over batch)."""
            hh, ww, ff = x_hwf.shape
            zr = jnp.zeros((1, ww, ff), x_hwf.dtype)
            xp = jnp.concatenate([zr, x_hwf, zr], axis=0)
            zc = jnp.zeros((hh + 2, 1, ff), x_hwf.dtype)
            xp = jnp.concatenate([zc, xp, zc], axis=1)        # (H+2, W+2, F)
            cols = [xp[ky:ky + hh, kx:kx + ww, :]
                    for ky in range(3) for kx in range(3)]
            patches = jnp.concatenate(cols, axis=-1).reshape(hh * ww, 9 * ff)
            return jnp.dot(patches.astype(jnp.bfloat16), w_mat,
                           preferred_element_type=jnp.float32)

        def bn_lrelu(y, gamma, beta):
            """BatchNorm2d (batch stats, biased var) + LeakyReLU(0.2).
            Single pass: sum & sum-of-squares, folded scale/shift."""
            s = jnp.dot(jnp.sum(y, axis=0, keepdims=True), gs,
                        precision=lax.Precision.HIGHEST,
                        preferred_element_type=jnp.float32)
            ss = jnp.dot(jnp.sum(y * y, axis=0, keepdims=True), gs,
                         precision=lax.Precision.HIGHEST,
                         preferred_element_type=jnp.float32)
            mu = s * (1.0 / count)
            var = ss * (1.0 / count) - mu * mu
            scale = gamma * lax.rsqrt(var + BN_EPS)
            shift = beta - mu * scale
            yn = y * scale + shift
            return jnp.where(yn > 0, yn, LRELU_SLOPE * yn)

        # (1) bilinear upsample: one MXU matmul for the whole batch.
        xu = jnp.dot(u_ref[...], x1_ref[...],
                     preferred_element_type=jnp.float32)      # (H2*W2, C_in*N)
        xu = xu.reshape(h2, w2, f_in)

        # (2) Conv2d(C_in -> C_in//2) of self.up (bias kept; no BN follows it).
        xc = conv3x3(xu, wu_ref[...]) + bu_ref[...]           # (H2*W2, C_half*N)
        xc = xc.reshape(h2, w2, f_half)

        # (3) channel concat + first conv of double_conv + BN + LeakyReLU.
        xcat = jnp.concatenate([xc, x2_ref[...]], axis=-1)    # (H2, W2, C_in*N)
        y = bn_lrelu(conv3x3(xcat, w1_ref[...]), g1_ref[...], bb1_ref[...])

        # (4) second conv + BN + LeakyReLU.
        y = bn_lrelu(conv3x3(y.reshape(h2, w2, f_out), w2_ref[...]),
                     g2_ref[...], bb2_ref[...])               # (H2*W2, C_out*N)

        # (5) lane-dense store: assemble a (H2, W2*C_out*N) = (16, 256) slab so
        #     the HBM writeback uses unmasked full-width vector stores.
        y3 = y.reshape(h2, w2, f_out)
        o_ref[...] = jnp.concatenate([y3[:, i, :] for i in range(w2)], axis=-1)

    # TODO(synk): at real UNet sizes, tile spatially over a grid (two-pass BN for
    # the batch statistics) and shard the grid across TensorCores on v7x; the toy
    # shapes here fit comfortably in a single VMEM-resident invocation.
    out2d = pl.pallas_call(
        kernel,
        out_shape=jax.ShapeDtypeStruct((h2, w2 * f_out), jnp.float32),
        in_specs=[pl.BlockSpec(memory_space=pltpu.MemorySpace.VMEM)] * 12,
        out_specs=pl.BlockSpec(memory_space=pltpu.MemorySpace.VMEM),
    )(x1f, u, x2f, wu_f, bu_f, w1_f, g1_f, bb1_f, w2_f, g2_f, bb2_f, gsum)

    # unfold (H2, W2*C_out*N) -> NHWC
    return out2d.reshape(h2, w2, c_out, n).transpose(3, 0, 1, 2)


# ------------------------------ pure-JAX reference ------------------------------

def up_forward_ref(x1, x2, params):
    """Pure-JAX f32 reference (same math as the PyTorch module, NHWC)."""
    n, h1, w1, c_in = x1.shape
    h2, w2 = 2 * h1, 2 * w1
    mh = _bilinear_matrix(h2, h1)
    mw = _bilinear_matrix(w2, w1)
    x1u = jnp.einsum("Hh,nhwc->nHwc", mh, x1, precision=lax.Precision.HIGHEST)
    x1u = jnp.einsum("Ww,nhwc->nhWc", mw, x1u, precision=lax.Precision.HIGHEST)

    def conv(x, w, b):
        y = lax.conv_general_dilated(x, w, (1, 1), "SAME",
                                     dimension_numbers=("NHWC", "HWIO", "NHWC"),
                                     precision=lax.Precision.HIGHEST)
        return y + b.reshape(1, 1, 1, -1)

    def bn_lrelu(y, g, b):
        mu = jnp.mean(y, axis=(0, 1, 2), keepdims=True)
        var = jnp.mean((y - mu) ** 2, axis=(0, 1, 2), keepdims=True)
        yn = (g.reshape(1, 1, 1, -1) * (y - mu) / jnp.sqrt(var + BN_EPS)
              + b.reshape(1, 1, 1, -1))
        return jnp.where(yn > 0, yn, LRELU_SLOPE * yn)

    xc = conv(x1u, params["wu"], params["bu"])
    x = jnp.concatenate([xc, x2], axis=-1)
    y = bn_lrelu(conv(x, params["w1"], params["b1"]), params["g1"], params["beta1"])
    y = bn_lrelu(conv(y, params["w2"], params["b2"]), params["g2"], params["beta2"])
    return y


if __name__ == "__main__":
    key = jax.random.PRNGKey(0)
    N, C_IN, C_OUT = 2, 8, 8          # Up(in_channels=8, out_channels=8)
    H1 = W1 = 8
    H2, W2 = 2 * H1, 2 * W1
    C_HALF = C_IN // 2

    ks = jax.random.split(key, 12)
    x1 = jax.random.normal(ks[0], (N, H1, W1, C_IN), jnp.float32)       # NHWC
    x2 = jax.random.normal(ks[1], (N, H2, W2, C_HALF), jnp.float32)     # NHWC

    def winit(k, shape, fan_in):
        return jax.random.normal(k, shape, jnp.float32) / jnp.sqrt(float(fan_in))

    params = {
        "wu":    winit(ks[2], (3, 3, C_IN, C_HALF), 9 * C_IN),
        "bu":    0.1 * jax.random.normal(ks[3], (C_HALF,), jnp.float32),
        "w1":    winit(ks[4], (3, 3, C_IN, C_OUT), 9 * C_IN),
        "b1":    0.1 * jax.random.normal(ks[5], (C_OUT,), jnp.float32),
        "g1":    1.0 + 0.1 * jax.random.normal(ks[6], (C_OUT,), jnp.float32),
        "beta1": 0.1 * jax.random.normal(ks[7], (C_OUT,), jnp.float32),
        "w2":    winit(ks[8], (3, 3, C_OUT, C_OUT), 9 * C_OUT),
        "b2":    0.1 * jax.random.normal(ks[9], (C_OUT,), jnp.float32),
        "g2":    1.0 + 0.1 * jax.random.normal(ks[10], (C_OUT,), jnp.float32),
        "beta2": 0.1 * jax.random.normal(ks[11], (C_OUT,), jnp.float32),
    }

    out = jax.block_until_ready(up_forward(x1, x2, params))
    ref = jax.block_until_ready(up_forward_ref(x1, x2, params))

    assert out.shape == (N, H2, W2, C_OUT), out.shape
    # bf16 MXU inputs (f32 accumulate) vs an all-f32 HIGHEST reference.
    max_err = float(jnp.max(jnp.abs(out - ref)))
    if not max_err < 7.5e-2:
        raise AssertionError(f"kernel/reference mismatch: max_err={max_err}")
    print("KERNEL_OK")
</pallas_src>

<mosaic_0001>
module attributes {stable_mosaic.version = 11 : i64} {
  func.func @kernel(%arg0: memref<64x16xbf16, #tpu.memory_space<vmem>>, %arg1: memref<256x64xbf16, #tpu.memory_space<vmem>>, %arg2: memref<16x16x8xf32, #tpu.memory_space<vmem>>, %arg3: memref<144x8xbf16, #tpu.memory_space<vmem>>, %arg4: memref<1x8xf32, #tpu.memory_space<vmem>>, %arg5: memref<144x16xbf16, #tpu.memory_space<vmem>>, %arg6: memref<1x16xf32, #tpu.memory_space<vmem>>, %arg7: memref<1x16xf32, #tpu.memory_space<vmem>>, %arg8: memref<144x16xbf16, #tpu.memory_space<vmem>>, %arg9: memref<1x16xf32, #tpu.memory_space<vmem>>, %arg10: memref<1x16xf32, #tpu.memory_space<vmem>>, %arg11: memref<16x16xf32, #tpu.memory_space<vmem>>, %arg12: memref<16x256xf32, #tpu.memory_space<vmem>>) attributes {dimension_semantics = [], scalar_prefetch = 0 : i64, scratch_operands = 0 : i64, tpu.core_type = #tpu.core_type<tc>} {
    %c0 = arith.constant 0 : index
    %c0_0 = arith.constant 0 : index
    %0 = vector.load %arg11[%c0, %c0_0] : memref<16x16xf32, #tpu.memory_space<vmem>>, vector<16x16xf32>
    %c0_1 = arith.constant 0 : index
    %c0_2 = arith.constant 0 : index
    %1 = vector.load %arg1[%c0_1, %c0_2] : memref<256x64xbf16, #tpu.memory_space<vmem>>, vector<256x64xbf16>
    %c0_3 = arith.constant 0 : index
    %c0_4 = arith.constant 0 : index
    %2 = vector.load %arg0[%c0_3, %c0_4] : memref<64x16xbf16, #tpu.memory_space<vmem>>, vector<64x16xbf16>
    %cst = arith.constant dense<0.000000e+00> : vector<256x16xf32>
    %3 = tpu.matmul %1, %2, %cst {dimension_numbers = #tpu.dot_dimension_numbers<[1], [0], [0], [1], [0, 0, 1, 1], [], []>} : vector<256x64xbf16>, vector<64x16xbf16>, vector<256x16xf32> -> vector<256x16xf32>
    %4 = vector.shape_cast %3 : vector<256x16xf32> to vector<16x16x16xf32>
    %c0_5 = arith.constant 0 : index
    %c0_6 = arith.constant 0 : index
    %5 = vector.load %arg3[%c0_5, %c0_6] : memref<144x8xbf16, #tpu.memory_space<vmem>>, vector<144x8xbf16>
    %cst_7 = arith.constant 0.000000e+00 : f32
    %6 = vector.broadcast %cst_7 : f32 to vector<1x16x16xf32>
    %7 = tpu.concatenate %6, %4, %6 in 0 : vector<1x16x16xf32>, vector<16x16x16xf32>, vector<1x16x16xf32> -> vector<18x16x16xf32>
    %cst_8 = arith.constant 0.000000e+00 : f32
    %8 = vector.broadcast %cst_8 : f32 to vector<18x1x16xf32>
    %9 = tpu.concatenate %8, %7, %8 in 1 : vector<18x1x16xf32>, vector<18x16x16xf32>, vector<18x1x16xf32> -> vector<18x18x16xf32>
    %10 = vector.extract_strided_slice %9 {offsets = [0, 0, 0], sizes = [16, 16, 16], strides = [1, 1, 1]} : vector<18x18x16xf32> to vector<16x16x16xf32>
    %11 = vector.extract_strided_slice %9 {offsets = [0, 1, 0], sizes = [16, 16, 16], strides = [1, 1, 1]} : vector<18x18x16xf32> to vector<16x16x16xf32>
    %12 = vector.extract_strided_slice %9 {offsets = [0, 2, 0], sizes = [16, 16, 16], strides = [1, 1, 1]} : vector<18x18x16xf32> to vector<16x16x16xf32>
    %13 = vector.extract_strided_slice %9 {offsets = [1, 0, 0], sizes = [16, 16, 16], strides = [1, 1, 1]} : vector<18x18x16xf32> to vector<16x16x16xf32>
    %14 = vector.extract_strided_slice %9 {offsets = [1, 1, 0], sizes = [16, 16, 16], strides = [1, 1, 1]} : vector<18x18x16xf32> to vector<16x16x16xf32>
    %15 = vector.extract_strided_slice %9 {offsets = [1, 2, 0], sizes = [16, 16, 16], strides = [1, 1, 1]} : vector<18x18x16xf32> to vector<16x16x16xf32>
    %16 = vector.extract_strided_slice %9 {offsets = [2, 0, 0], sizes = [16, 16, 16], strides = [1, 1, 1]} : vector<18x18x16xf32> to vector<16x16x16xf32>
    %17 = vector.extract_strided_slice %9 {offsets = [2, 1, 0], sizes = [16, 16, 16], strides = [1, 1, 1]} : vector<18x18x16xf32> to vector<16x16x16xf32>
    %18 = vector.extract_strided_slice %9 {offsets = [2, 2, 0], sizes = [16, 16, 16], strides = [1, 1, 1]} : vector<18x18x16xf32> to vector<16x16x16xf32>
    %19 = tpu.concatenate %10, %11, %12, %13, %14, %15, %16, %17, %18 in 2 : vector<16x16x16xf32>, vector<16x16x16xf32>, vector<16x16x16xf32>, vector<16x16x16xf32>, vector<16x16x16xf32>, vector<16x16x16xf32>, vector<16x16x16xf32>, vector<16x16x16xf32>, vector<16x16x16xf32> -> vector<16x16x144xf32>
    %20 = vector.shape_cast %19 : vector<16x16x144xf32> to vector<256x144xf32>
    %21 = arith.truncf %20 : vector<256x144xf32> to vector<256x144xbf16>
    %cst_9 = arith.constant dense<0.000000e+00> : vector<256x8xf32>
    %22 = tpu.matmul %21, %5, %cst_9 {dimension_numbers = #tpu.dot_dimension_numbers<[1], [0], [0], [1], [0, 0, 1, 1], [], []>} : vector<256x144xbf16>, vector<144x8xbf16>, vector<256x8xf32> -> vector<256x8xf32>
    %c0_10 = arith.constant 0 : index
    %c0_11 = arith.constant 0 : index
    %23 = vector.load %arg4[%c0_10, %c0_11] : memref<1x8xf32, #tpu.memory_space<vmem>>, vector<1x8xf32>
    %24 = vector.broadcast %23 : vector<1x8xf32> to vector<256x8xf32>
    %25 = arith.addf %22, %24 : vector<256x8xf32>
    %26 = vector.shape_cast %25 : vector<256x8xf32> to vector<16x16x8xf32>
    %c0_12 = arith.constant 0 : index
    %c0_13 = arith.constant 0 : index
    %c0_14 = arith.constant 0 : index
    %27 = vector.load %arg2[%c0_12, %c0_13, %c0_14] : memref<16x16x8xf32, #tpu.memory_space<vmem>>, vector<16x16x8xf32>
    %28 = tpu.concatenate %26, %27 in 2 : vector<16x16x8xf32>, vector<16x16x8xf32> -> vector<16x16x16xf32>
    %c0_15 = arith.constant 0 : index
    %c0_16 = arith.constant 0 : index
    %29 = vector.load %arg5[%c0_15, %c0_16] : memref<144x16xbf16, #tpu.memory_space<vmem>>, vector<144x16xbf16>
    %cst_17 = arith.constant 0.000000e+00 : f32
    %30 = vector.broadcast %cst_17 : f32 to vector<1x16x16xf32>
    %31 = tpu.concatenate %30, %28, %30 in 0 : vector<1x16x16xf32>, vector<16x16x16xf32>, vector<1x16x16xf32> -> vector<18x16x16xf32>
    %cst_18 = arith.constant 0.000000e+00 : f32
    %32 = vector.broadcast %cst_18 : f32 to vector<18x1x16xf32>
    %33 = tpu.concatenate %32, %31, %32 in 1 : vector<18x1x16xf32>, vector<18x16x16xf32>, vector<18x1x16xf32> -> vector<18x18x16xf32>
    %34 = vector.extract_strided_slice %33 {offsets = [0, 0, 0], sizes = [16, 16, 16], strides = [1, 1, 1]} : vector<18x18x16xf32> to vector<16x16x16xf32>
    %35 = vector.extract_strided_slice %33 {offsets = [0, 1, 0], sizes = [16, 16, 16], strides = [1, 1, 1]} : vector<18x18x16xf32> to vector<16x16x16xf32>
    %36 = vector.extract_strided_slice %33 {offsets = [0, 2, 0], sizes = [16, 16, 16], strides = [1, 1, 1]} : vector<18x18x16xf32> to vector<16x16x16xf32>
    %37 = vector.extract_strided_slice %33 {offsets = [1, 0, 0], sizes = [16, 16, 16], strides = [1, 1, 1]} : vector<18x18x16xf32> to vector<16x16x16xf32>
    %38 = vector.extract_strided_slice %33 {offsets = [1, 1, 0], sizes = [16, 16, 16], strides = [1, 1, 1]} : vector<18x18x16xf32> to vector<16x16x16xf32>
    %39 = vector.extract_strided_slice %33 {offsets = [1, 2, 0], sizes = [16, 16, 16], strides = [1, 1, 1]} : vector<18x18x16xf32> to vector<16x16x16xf32>
    %40 = vector.extract_strided_slice %33 {offsets = [2, 0, 0], sizes = [16, 16, 16], strides = [1, 1, 1]} : vector<18x18x16xf32> to vector<16x16x16xf32>
    %41 = vector.extract_strided_slice %33 {offsets = [2, 1, 0], sizes = [16, 16, 16], strides = [1, 1, 1]} : vector<18x18x16xf32> to vector<16x16x16xf32>
    %42 = vector.extract_strided_slice %33 {offsets = [2, 2, 0], sizes = [16, 16, 16], strides = [1, 1, 1]} : vector<18x18x16xf32> to vector<16x16x16xf32>
    %43 = tpu.concatenate %34, %35, %36, %37, %38, %39, %40, %41, %42 in 2 : vector<16x16x16xf32>, vector<16x16x16xf32>, vector<16x16x16xf32>, vector<16x16x16xf32>, vector<16x16x16xf32>, vector<16x16x16xf32>, vector<16x16x16xf32>, vector<16x16x16xf32>, vector<16x16x16xf32> -> vector<16x16x144xf32>
    %44 = vector.shape_cast %43 : vector<16x16x144xf32> to vector<256x144xf32>
    %45 = arith.truncf %44 : vector<256x144xf32> to vector<256x144xbf16>
    %cst_19 = arith.constant dense<0.000000e+00> : vector<256x16xf32>
    %46 = tpu.matmul %45, %29, %cst_19 {dimension_numbers = #tpu.dot_dimension_numbers<[1], [0], [0], [1], [0, 0, 1, 1], [], []>} : vector<256x144xbf16>, vector<144x16xbf16>, vector<256x16xf32> -> vector<256x16xf32>
    %c0_20 = arith.constant 0 : index
    %c0_21 = arith.constant 0 : index
    %47 = vector.load %arg6[%c0_20, %c0_21] : memref<1x16xf32, #tpu.memory_space<vmem>>, vector<1x16xf32>
    %c0_22 = arith.constant 0 : index
    %c0_23 = arith.constant 0 : index
    %48 = vector.load %arg7[%c0_22, %c0_23] : memref<1x16xf32, #tpu.memory_space<vmem>>, vector<1x16xf32>
    %cst_24 = arith.constant dense<0.000000e+00> : vector<16xf32>
    %49 = vector.multi_reduction <add>, %46, %cst_24 [0] : vector<256x16xf32> to vector<16xf32>
    %50 = vector.shape_cast %49 : vector<16xf32> to vector<1x16xf32>
    %cst_25 = arith.constant dense<0.000000e+00> : vector<1x16xf32>
    %51 = tpu.matmul %50, %0, %cst_25 {dimension_numbers = #tpu.dot_dimension_numbers<[1], [0], [0], [1], [0, 0, 1, 1], [], []>, precision = #tpu.contract_precision<fp32>} : vector<1x16xf32>, vector<16x16xf32>, vector<1x16xf32> -> vector<1x16xf32>
    %52 = arith.mulf %46, %46 : vector<256x16xf32>
    %cst_26 = arith.constant dense<0.000000e+00> : vector<16xf32>
    %53 = vector.multi_reduction <add>, %52, %cst_26 [0] : vector<256x16xf32> to vector<16xf32>
    %54 = vector.shape_cast %53 : vector<16xf32> to vector<1x16xf32>
    %cst_27 = arith.constant dense<0.000000e+00> : vector<1x16xf32>
    %55 = tpu.matmul %54, %0, %cst_27 {dimension_numbers = #tpu.dot_dimension_numbers<[1], [0], [0], [1], [0, 0, 1, 1], [], []>, precision = #tpu.contract_precision<fp32>} : vector<1x16xf32>, vector<16x16xf32>, vector<1x16xf32> -> vector<1x16xf32>
    %cst_28 = arith.constant 0.001953125 : f32
    %56 = vector.broadcast %cst_28 : f32 to vector<1x16xf32>
    %57 = arith.mulf %51, %56 : vector<1x16xf32>
    %cst_29 = arith.constant 0.001953125 : f32
    %58 = vector.broadcast %cst_29 : f32 to vector<1x16xf32>
    %59 = arith.mulf %55, %58 : vector<1x16xf32>
    %60 = arith.mulf %57, %57 : vector<1x16xf32>
    %61 = arith.subf %59, %60 : vector<1x16xf32>
    %cst_30 = arith.constant 9.99999974E-6 : f32
    %62 = vector.broadcast %cst_30 : f32 to vector<1x16xf32>
    %63 = arith.addf %61, %62 : vector<1x16xf32>
    %64 = math.rsqrt %63 : vector<1x16xf32>
    %65 = arith.mulf %47, %64 : vector<1x16xf32>
    %66 = arith.mulf %57, %65 : vector<1x16xf32>
    %67 = arith.subf %48, %66 : vector<1x16xf32>
    %68 = vector.broadcast %65 : vector<1x16xf32> to vector<256x16xf32>
    %69 = arith.mulf %46, %68 : vector<256x16xf32>
    %70 = vector.broadcast %67 : vector<1x16xf32> to vector<256x16xf32>
    %71 = arith.addf %69, %70 : vector<256x16xf32>
    %cst_31 = arith.constant 0.000000e+00 : f32
    %72 = vector.broadcast %cst_31 : f32 to vector<256x16xf32>
    %73 = arith.cmpf ogt, %71, %72 : vector<256x16xf32>
    %cst_32 = arith.constant 2.000000e-01 : f32
    %74 = vector.broadcast %cst_32 : f32 to vector<256x16xf32>
    %75 = arith.mulf %74, %71 : vector<256x16xf32>
    %76 = arith.select %73, %71, %75 : vector<256x16xi1>, vector<256x16xf32>
    %77 = vector.shape_cast %76 : vector<256x16xf32> to vector<16x16x16xf32>
    %c0_33 = arith.constant 0 : index
    %c0_34 = arith.constant 0 : index
    %78 = vector.load %arg8[%c0_33, %c0_34] : memref<144x16xbf16, #tpu.memory_space<vmem>>, vector<144x16xbf16>
    %cst_35 = arith.constant 0.000000e+00 : f32
    %79 = vector.broadcast %cst_35 : f32 to vector<1x16x16xf32>
    %80 = tpu.concatenate %79, %77, %79 in 0 : vector<1x16x16xf32>, vector<16x16x16xf32>, vector<1x16x16xf32> -> vector<18x16x16xf32>
    %cst_36 = arith.constant 0.000000e+00 : f32
    %81 = vector.broadcast %cst_36 : f32 to vector<18x1x16xf32>
    %82 = tpu.concatenate %81, %80, %81 in 1 : vector<18x1x16xf32>, vector<18x16x16xf32>, vector<18x1x16xf32> -> vector<18x18x16xf32>
    %83 = vector.extract_strided_slice %82 {offsets = [0, 0, 0], sizes = [16, 16, 16], strides = [1, 1, 1]} : vector<18x18x16xf32> to vector<16x16x16xf32>
    %84 = vector.extract_strided_slice %82 {offsets = [0, 1, 0], sizes = [16, 16, 16], strides = [1, 1, 1]} : vector<18x18x16xf32> to vector<16x16x16xf32>
    %85 = vector.extract_strided_slice %82 {offsets = [0, 2, 0], sizes = [16, 16, 16], strides = [1, 1, 1]} : vector<18x18x16xf32> to vector<16x16x16xf32>
    %86 = vector.extract_strided_slice %82 {offsets = [1, 0, 0], sizes = [16, 16, 16], strides = [1, 1, 1]} : vector<18x18x16xf32> to vector<16x16x16xf32>
    %87 = vector.extract_strided_slice %82 {offsets = [1, 1, 0], sizes = [16, 16, 16], strides = [1, 1, 1]} : vector<18x18x16xf32> to vector<16x16x16xf32>
    %88 = vector.extract_strided_slice %82 {offsets = [1, 2, 0], sizes = [16, 16, 16], strides = [1, 1, 1]} : vector<18x18x16xf32> to vector<16x16x16xf32>
    %89 = vector.extract_strided_slice %82 {offsets = [2, 0, 0], sizes = [16, 16, 16], strides = [1, 1, 1]} : vector<18x18x16xf32> to vector<16x16x16xf32>
    %90 = vector.extract_strided_slice %82 {offsets = [2, 1, 0], sizes = [16, 16, 16], strides = [1, 1, 1]} : vector<18x18x16xf32> to vector<16x16x16xf32>
    %91 = vector.extract_strided_slice %82 {offsets = [2, 2, 0], sizes = [16, 16, 16], strides = [1, 1, 1]} : vector<18x18x16xf32> to vector<16x16x16xf32>
    %92 = tpu.concatenate %83, %84, %85, %86, %87, %88, %89, %90, %91 in 2 : vector<16x16x16xf32>, vector<16x16x16xf32>, vector<16x16x16xf32>, vector<16x16x16xf32>, vector<16x16x16xf32>, vector<16x16x16xf32>, vector<16x16x16xf32>, vector<16x16x16xf32>, vector<16x16x16xf32> -> vector<16x16x144xf32>
    %93 = vector.shape_cast %92 : vector<16x16x144xf32> to vector<256x144xf32>
    %94 = arith.truncf %93 : vector<256x144xf32> to vector<256x144xbf16>
    %cst_37 = arith.constant dense<0.000000e+00> : vector<256x16xf32>
    %95 = tpu.matmul %94, %78, %cst_37 {dimension_numbers = #tpu.dot_dimension_numbers<[1], [0], [0], [1], [0, 0, 1, 1], [], []>} : vector<256x144xbf16>, vector<144x16xbf16>, vector<256x16xf32> -> vector<256x16xf32>
    %c0_38 = arith.constant 0 : index
    %c0_39 = arith.constant 0 : index
    %96 = vector.load %arg9[%c0_38, %c0_39] : memref<1x16xf32, #tpu.memory_space<vmem>>, vector<1x16xf32>
    %c0_40 = arith.constant 0 : index
    %c0_41 = arith.constant 0 : index
    %97 = vector.load %arg10[%c0_40, %c0_41] : memref<1x16xf32, #tpu.memory_space<vmem>>, vector<1x16xf32>
    %cst_42 = arith.constant dense<0.000000e+00> : vector<16xf32>
    %98 = vector.multi_reduction <add>, %95, %cst_42 [0] : vector<256x16xf32> to vector<16xf32>
    %99 = vector.shape_cast %98 : vector<16xf32> to vector<1x16xf32>
    %cst_43 = arith.constant dense<0.000000e+00> : vector<1x16xf32>
    %100 = tpu.matmul %99, %0, %cst_43 {dimension_numbers = #tpu.dot_dimension_numbers<[1], [0], [0], [1], [0, 0, 1, 1], [], []>, precision = #tpu.contract_precision<fp32>} : vector<1x16xf32>, vector<16x16xf32>, vector<1x16xf32> -> vector<1x16xf32>
    %101 = arith.mulf %95, %95 : vector<256x16xf32>
    %cst_44 = arith.constant dense<0.000000e+00> : vector<16xf32>
    %102 = vector.multi_reduction <add>, %101, %cst_44 [0] : vector<256x16xf32> to vector<16xf32>
    %103 = vector.shape_cast %102 : vector<16xf32> to vector<1x16xf32>
    %cst_45 = arith.constant dense<0.000000e+00> : vector<1x16xf32>
    %104 = tpu.matmul %103, %0, %cst_45 {dimension_numbers = #tpu.dot_dimension_numbers<[1], [0], [0], [1], [0, 0, 1, 1], [], []>, precision = #tpu.contract_precision<fp32>} : vector<1x16xf32>, vector<16x16xf32>, vector<1x16xf32> -> vector<1x16xf32>
    %cst_46 = arith.constant 0.001953125 : f32
    %105 = vector.broadcast %cst_46 : f32 to vector<1x16xf32>
    %106 = arith.mulf %100, %105 : vector<1x16xf32>
    %cst_47 = arith.constant 0.001953125 : f32
    %107 = vector.broadcast %cst_47 : f32 to vector<1x16xf32>
    %108 = arith.mulf %104, %107 : vector<1x16xf32>
    %109 = arith.mulf %106, %106 : vector<1x16xf32>
    %110 = arith.subf %108, %109 : vector<1x16xf32>
    %cst_48 = arith.constant 9.99999974E-6 : f32
    %111 = vector.broadcast %cst_48 : f32 to vector<1x16xf32>
    %112 = arith.addf %110, %111 : vector<1x16xf32>
    %113 = math.rsqrt %112 : vector<1x16xf32>
    %114 = arith.mulf %96, %113 : vector<1x16xf32>
    %115 = arith.mulf %106, %114 : vector<1x16xf32>
    %116 = arith.subf %97, %115 : vector<1x16xf32>
    %117 = vector.broadcast %114 : vector<1x16xf32> to vector<256x16xf32>
    %118 = arith.mulf %95, %117 : vector<256x16xf32>
    %119 = vector.broadcast %116 : vector<1x16xf32> to vector<256x16xf32>
    %120 = arith.addf %118, %119 : vector<256x16xf32>
    %cst_49 = arith.constant 0.000000e+00 : f32
    %121 = vector.broadcast %cst_49 : f32 to vector<256x16xf32>
    %122 = arith.cmpf ogt, %120, %121 : vector<256x16xf32>
    %cst_50 = arith.constant 2.000000e-01 : f32
    %123 = vector.broadcast %cst_50 : f32 to vector<256x16xf32>
    %124 = arith.mulf %123, %120 : vector<256x16xf32>
    %125 = arith.select %122, %120, %124 : vector<256x16xi1>, vector<256x16xf32>
    %126 = vector.shape_cast %125 : vector<256x16xf32> to vector<16x16x16xf32>
    %127 = vector.extract_strided_slice %126 {offsets = [0, 0, 0], sizes = [16, 1, 16], strides = [1, 1, 1]} : vector<16x16x16xf32> to vector<16x1x16xf32>
    %128 = vector.shape_cast %127 : vector<16x1x16xf32> to vector<16x16xf32>
    %129 = vector.extract_strided_slice %126 {offsets = [0, 1, 0], sizes = [16, 1, 16], strides = [1, 1, 1]} : vector<16x16x16xf32> to vector<16x1x16xf32>
    %130 = vector.shape_cast %129 : vector<16x1x16xf32> to vector<16x16xf32>
    %131 = vector.extract_strided_slice %126 {offsets = [0, 2, 0], sizes = [16, 1, 16], strides = [1, 1, 1]} : vector<16x16x16xf32> to vector<16x1x16xf32>
    %132 = vector.shape_cast %131 : vector<16x1x16xf32> to vector<16x16xf32>
    %133 = vector.extract_strided_slice %126 {offsets = [0, 3, 0], sizes = [16, 1, 16], strides = [1, 1, 1]} : vector<16x16x16xf32> to vector<16x1x16xf32>
    %134 = vector.shape_cast %133 : vector<16x1x16xf32> to vector<16x16xf32>
    %135 = vector.extract_strided_slice %126 {offsets = [0, 4, 0], sizes = [16, 1, 16], strides = [1, 1, 1]} : vector<16x16x16xf32> to vector<16x1x16xf32>
    %136 = vector.shape_cast %135 : vector<16x1x16xf32> to vector<16x16xf32>
    %137 = vector.extract_strided_slice %126 {offsets = [0, 5, 0], sizes = [16, 1, 16], strides = [1, 1, 1]} : vector<16x16x16xf32> to vector<16x1x16xf32>
    %138 = vector.shape_cast %137 : vector<16x1x16xf32> to vector<16x16xf32>
    %139 = vector.extract_strided_slice %126 {offsets = [0, 6, 0], sizes = [16, 1, 16], strides = [1, 1, 1]} : vector<16x16x16xf32> to vector<16x1x16xf32>
    %140 = vector.shape_cast %139 : vector<16x1x16xf32> to vector<16x16xf32>
    %141 = vector.extract_strided_slice %126 {offsets = [0, 7, 0], sizes = [16, 1, 16], strides = [1, 1, 1]} : vector<16x16x16xf32> to vector<16x1x16xf32>
    %142 = vector.shape_cast %141 : vector<16x1x16xf32> to vector<16x16xf32>
    %143 = vector.extract_strided_slice %126 {offsets = [0, 8, 0], sizes = [16, 1, 16], strides = [1, 1, 1]} : vector<16x16x16xf32> to vector<16x1x16xf32>
    %144 = vector.shape_cast %143 : vector<16x1x16xf32> to vector<16x16xf32>
    %145 = vector.extract_strided_slice %126 {offsets = [0, 9, 0], sizes = [16, 1, 16], strides = [1, 1, 1]} : vector<16x16x16xf32> to vector<16x1x16xf32>
    %146 = vector.shape_cast %145 : vector<16x1x16xf32> to vector<16x16xf32>
    %147 = vector.extract_strided_slice %126 {offsets = [0, 10, 0], sizes = [16, 1, 16], strides = [1, 1, 1]} : vector<16x16x16xf32> to vector<16x1x16xf32>
    %148 = vector.shape_cast %147 : vector<16x1x16xf32> to vector<16x16xf32>
    %149 = vector.extract_strided_slice %126 {offsets = [0, 11, 0], sizes = [16, 1, 16], strides = [1, 1, 1]} : vector<16x16x16xf32> to vector<16x1x16xf32>
    %150 = vector.shape_cast %149 : vector<16x1x16xf32> to vector<16x16xf32>
    %151 = vector.extract_strided_slice %126 {offsets = [0, 12, 0], sizes = [16, 1, 16], strides = [1, 1, 1]} : vector<16x16x16xf32> to vector<16x1x16xf32>
    %152 = vector.shape_cast %151 : vector<16x1x16xf32> to vector<16x16xf32>
    %153 = vector.extract_strided_slice %126 {offsets = [0, 13, 0], sizes = [16, 1, 16], strides = [1, 1, 1]} : vector<16x16x16xf32> to vector<16x1x16xf32>
    %154 = vector.shape_cast %153 : vector<16x1x16xf32> to vector<16x16xf32>
    %155 = vector.extract_strided_slice %126 {offsets = [0, 14, 0], sizes = [16, 1, 16], strides = [1, 1, 1]} : vector<16x16x16xf32> to vector<16x1x16xf32>
    %156 = vector.shape_cast %155 : vector<16x1x16xf32> to vector<16x16xf32>
    %157 = vector.extract_strided_slice %126 {offsets = [0, 15, 0], sizes = [16, 1, 16], strides = [1, 1, 1]} : vector<16x16x16xf32> to vector<16x1x16xf32>
    %158 = vector.shape_cast %157 : vector<16x1x16xf32> to vector<16x16xf32>
    %159 = tpu.concatenate %128, %130, %132, %134, %136, %138, %140, %142, %144, %146, %148, %150, %152, %154, %156, %158 in 1 : vector<16x16xf32>, vector<16x16xf32>, vector<16x16xf32>, vector<16x16xf32>, vector<16x16xf32>, vector<16x16xf32>, vector<16x16xf32>, vector<16x16xf32>, vector<16x16xf32>, vector<16x16xf32>, vector<16x16xf32>, vector<16x16xf32>, vector<16x16xf32>, vector<16x16xf32>, vector<16x16xf32>, vector<16x16xf32> -> vector<16x256xf32>
    %c0_51 = arith.constant 0 : index
    %c0_52 = arith.constant 0 : index
    %160 = vector.load %arg12[%c0_51, %c0_52] : memref<16x256xf32, #tpu.memory_space<vmem>>, vector<16x256xf32>
    tpu.vector_store %arg12[%c0_51, %c0_52], %159 {strides = array<i32>} : memref<16x256xf32, #tpu.memory_space<vmem>>, vector<16x256xf32>,
    return
  }
}

</mosaic_0001>

<llo_original>
// kernel: tpu_custom_call.1
$region0: #{tpu_custom_call.1}
  #allocation0 [shape = 'u32[]', space=smem, size = 0x4, offset = 0x4, fixed_abs, tag = 'smem constant byte address 0x4 - core index']
  #allocation1 [shape = 'u32[144,128]{1,0:T(1,128)}', space=vmem, size = 0x12000, scoped, tag = 'internal scratch']
  %s0 = inlined_call_operand.vmem [shape: bf16[64,16], index: 0, kind: input, shape index: {}]
  %s1 = inlined_call_operand.vmem [shape: bf16[256,64], index: 1, kind: input, shape index: {}]
  %s2 = inlined_call_operand.vmem [shape: f32[16,16,8], index: 2, kind: input, shape index: {}]
  %s3 = inlined_call_operand.vmem [shape: bf16[144,8], index: 3, kind: input, shape index: {}]
  %s4 = inlined_call_operand.vmem [shape: f32[1,8], index: 4, kind: input, shape index: {}]
  %s5 = inlined_call_operand.vmem [shape: bf16[144,16], index: 5, kind: input, shape index: {}]
  %s6 = inlined_call_operand.vmem [shape: f32[1,16], index: 6, kind: input, shape index: {}]
  %s7 = inlined_call_operand.vmem [shape: f32[1,16], index: 7, kind: input, shape index: {}]
  %s8 = inlined_call_operand.vmem [shape: bf16[144,16], index: 8, kind: input, shape index: {}]
  %s9 = inlined_call_operand.vmem [shape: f32[1,16], index: 9, kind: input, shape index: {}]
  %s10 = inlined_call_operand.vmem [shape: f32[1,16], index: 10, kind: input, shape index: {}]
  %s11 = inlined_call_operand.vmem [shape: f32[16,16], index: 11, kind: input, shape index: {}]
  %s12 = inlined_call_operand.hbm [shape: f32[16,256], index: 12, kind: output, shape index: {}]
  %s13 = sld [smem:[#allocation0]]
  $region58: #{tpu_custom_call.1} parent=0
    _
  %s15 = ssub.s32 1, %s13
  %s16 = scalar_select 0, %s15, %s13
  $region1: #{tpu_custom_call.1} parent=0
    #allocation2 [shape = 'u8[16384]{0}', space=vmem, size = 0x4000, scoped, tag = 'output window, operand 0, single buffered']
    #allocation3 [shape = 's32[1]{0}', space=sflag, size = 0x4, scoped, tag = 'scoped memory for tpu_custom_call.1']
    %17 = vsyncpa [#allocation3], 0
    // Predicated region
    $region2: #{tpu_custom_call.1} parent=1 // pred_check
      _
    $region3: #{tpu_custom_call.1} parent=1 // pred_check_branch
      %19 = sbr.rel (0) target = $region5
    $region4: #{tpu_custom_call.1} parent=1 // pred_region
      _
    $region5: #{tpu_custom_call.1} parent=1 // pred_fallthru
      _
    // Predicated region
    $region6: #{tpu_custom_call.1} parent=1 // pred_check
      _
    $region7: #{tpu_custom_call.1} parent=1 // pred_check_branch
      %21 = sbr.rel (0) target = $region9
    $region8: #{tpu_custom_call.1} parent=1 // pred_region
      _
    $region9: #{tpu_custom_call.1} parent=1 // pred_fallthru
      _
    // Predicated region
    $region10: #{tpu_custom_call.1} parent=1 // pred_check
      _
    $region11: #{tpu_custom_call.1} parent=1 // pred_check_branch
      %23 = sbr.rel (0) target = $region13
    $region12: #{tpu_custom_call.1} parent=1 // pred_region
      _
    $region13: #{tpu_custom_call.1} parent=1 // pred_fallthru
      _
    // Predicated region
    $region14: #{tpu_custom_call.1} parent=1 // pred_check
      _
    $region15: #{tpu_custom_call.1} parent=1 // pred_check_branch
      %25 = sbr.rel (0) target = $region17
    $region16: #{tpu_custom_call.1} parent=1 // pred_region
      _
    $region17: #{tpu_custom_call.1} parent=1 // pred_fallthru
      _
    // Predicated region
    $region18: #{tpu_custom_call.1} parent=1 // pred_check
      _
    $region19: #{tpu_custom_call.1} parent=1 // pred_check_branch
      %27 = sbr.rel (0) target = $region21
    $region20: #{tpu_custom_call.1} parent=1 // pred_region
      _
    $region21: #{tpu_custom_call.1} parent=1 // pred_fallthru
      _
    // Predicated region
    $region22: #{tpu_custom_call.1} parent=1 // pred_check
      _
    $region23: #{tpu_custom_call.1} parent=1 // pred_check_branch
      %29 = sbr.rel (0) target = $region25
    $region24: #{tpu_custom_call.1} parent=1 // pred_region
      _
    $region25: #{tpu_custom_call.1} parent=1 // pred_fallthru
      _
    // Predicated region
    $region26: #{tpu_custom_call.1} parent=1 // pred_check
      _
    $region27: #{tpu_custom_call.1} parent=1 // pred_check_branch
      %31 = sbr.rel (0) target = $region29
    $region28: #{tpu_custom_call.1} parent=1 // pred_region
      _
    $region29: #{tpu_custom_call.1} parent=1 // pred_fallthru
      _
    // Predicated region
    $region30: #{tpu_custom_call.1} parent=1 // pred_check
      _
    $region31: #{tpu_custom_call.1} parent=1 // pred_check_branch
      %33 = sbr.rel (0) target = $region33
    $region32: #{tpu_custom_call.1} parent=1 // pred_region
      _
    $region33: #{tpu_custom_call.1} parent=1 // pred_fallthru
      _
    // Predicated region
    $region34: #{tpu_custom_call.1} parent=1 // pred_check
      _
    $region35: #{tpu_custom_call.1} parent=1 // pred_check_branch
      %35 = sbr.rel (0) target = $region37
    $region36: #{tpu_custom_call.1} parent=1 // pred_region
      _
    $region37: #{tpu_custom_call.1} parent=1 // pred_fallthru
      _
    // Predicated region
    $region38: #{tpu_custom_call.1} parent=1 // pred_check
      _
    $region39: #{tpu_custom_call.1} parent=1 // pred_check_branch
      %37 = sbr.rel (0) target = $region41
    $region40: #{tpu_custom_call.1} parent=1 // pred_region
      _
    $region41: #{tpu_custom_call.1} parent=1 // pred_fallthru
      _
    // Predicated region
    $region42: #{tpu_custom_call.1} parent=1 // pred_check
      _
    $region43: #{tpu_custom_call.1} parent=1 // pred_check_branch
      %39 = sbr.rel (0) target = $region45
    $region44: #{tpu_custom_call.1} parent=1 // pred_region
      _
    $region45: #{tpu_custom_call.1} parent=1 // pred_fallthru
      _
    // Predicated region
    $region46: #{tpu_custom_call.1} parent=1 // pred_check
      _
    $region47: #{tpu_custom_call.1} parent=1 // pred_check_branch
      %41 = sbr.rel (0) target = $region49
    $region48: #{tpu_custom_call.1} parent=1 // pred_region
      _
    $region49: #{tpu_custom_call.1} parent=1 // pred_fallthru
      _
    %v43 = vld [vmem:[%s11] sm:$0xff]
    %v44 = vld [vmem:[%s11 + $0x8] sm:$0xff]
    %v45 = vld [vmem:[%s1] sm:$0xf]
    %v46 = vld [vmem:[%s1 + $0x4] sm:$0xf]
    %v47 = vld [vmem:[%s1 + $0x8] sm:$0xf]
    %v48 = vld [vmem:[%s1 + $0xc] sm:$0xf]
    %v49 = vld [vmem:[%s1 + $0x10] sm:$0xf]
    %v50 = vld [vmem:[%s1 + $0x14] sm:$0xf]
    %v51 = vld [vmem:[%s1 + $0x18] sm:$0xf]
    %v52 = vld [vmem:[%s1 + $0x1c] sm:$0xf]
    %v53 = vld [vmem:[%s1 + $0x20] sm:$0xf]
    %v54 = vld [vmem:[%s1 + $0x24] sm:$0xf]
    %v55 = vld [vmem:[%s1 + $0x28] sm:$0xf]
    %v56 = vld [vmem:[%s1 + $0x2c] sm:$0xf]
    %v57 = vld [vmem:[%s1 + $0x30] sm:$0xf]
    %v58 = vld [vmem:[%s1 + $0x34] sm:$0xf]
    %v59 = vld [vmem:[%s1 + $0x38] sm:$0xf]
    %v60 = vld [vmem:[%s1 + $0x3c] sm:$0xf]
    %v61 = vld [vmem:[%s1 + $0x40] sm:$0xf]
    %v62 = vld [vmem:[%s1 + $0x44] sm:$0xf]
    %v63 = vld [vmem:[%s1 + $0x48] sm:$0xf]
    %v64 = vld [vmem:[%s1 + $0x4c] sm:$0xf]
    %v65 = vld [vmem:[%s1 + $0x50] sm:$0xf]
    %v66 = vld [vmem:[%s1 + $0x54] sm:$0xf]
    %v67 = vld [vmem:[%s1 + $0x58] sm:$0xf]
    %v68 = vld [vmem:[%s1 + $0x5c] sm:$0xf]
    %v69 = vld [vmem:[%s1 + $0x60] sm:$0xf]
    %v70 = vld [vmem:[%s1 + $0x64] sm:$0xf]
    %v71 = vld [vmem:[%s1 + $0x68] sm:$0xf]
    %v72 = vld [vmem:[%s1 + $0x6c] sm:$0xf]
    %v73 = vld [vmem:[%s1 + $0x70] sm:$0xf]
    %v74 = vld [vmem:[%s1 + $0x74] sm:$0xf]
    %v75 = vld [vmem:[%s1 + $0x78] sm:$0xf]
    %v76 = vld [vmem:[%s1 + $0x7c] sm:$0xf]
    %v77 = vld [vmem:[%s0] sm:$0xf]
    %v78 = vld [vmem:[%s0 + $0x4] sm:$0xf]
    %v79 = vld [vmem:[%s0 + $0x8] sm:$0xf]
    %v80 = vld [vmem:[%s0 + $0xc] sm:$0xf]
    %v81 = vld [vmem:[%s0 + $0x10] sm:$0xf]
    %v82 = vld [vmem:[%s0 + $0x14] sm:$0xf]
    %v83 = vld [vmem:[%s0 + $0x18] sm:$0xf]
    %v84 = vld [vmem:[%s0 + $0x1c] sm:$0xf]
    %v117 = vunpack.c.l.b16 %v45
    %v118 = vunpack.c.l.b16 %v46
    %v119 = vunpack.c.l.b16 %v47
    %v120 = vunpack.c.l.b16 %v48
    %v121 = vunpack.c.l.b16 %v49
    %v122 = vunpack.c.l.b16 %v50
    %v123 = vunpack.c.l.b16 %v51
    %v124 = vunpack.c.l.b16 %v52
    %v125 = vunpack.c.l.b16 %v53
    %v126 = vunpack.c.l.b16 %v54
    %v127 = vunpack.c.l.b16 %v55
    %v128 = vunpack.c.l.b16 %v56
    %v129 = vunpack.c.l.b16 %v57
    %v130 = vunpack.c.l.b16 %v58
    %v131 = vunpack.c.l.b16 %v59
    %v132 = vunpack.c.l.b16 %v60
    %v133 = vunpack.c.l.b16 %v61
    %v134 = vunpack.c.l.b16 %v62
    %v135 = vunpack.c.l.b16 %v63
    %v136 = vunpack.c.l.b16 %v64
    %v137 = vunpack.c.l.b16 %v65
    %v138 = vunpack.c.l.b16 %v66
    %v139 = vunpack.c.l.b16 %v67
    %v140 = vunpack.c.l.b16 %v68
    %v141 = vunpack.c.l.b16 %v69
    %v142 = vunpack.c.l.b16 %v70
    %v143 = vunpack.c.l.b16 %v71
    %v144 = vunpack.c.l.b16 %v72
    %v145 = vunpack.c.l.b16 %v73
    %v146 = vunpack.c.l.b16 %v74
    %v147 = vunpack.c.l.b16 %v75
    %v148 = vunpack.c.l.b16 %v76
    %v149 = vpack.c.b16 %v118, %v117
    %v150 = vpack.c.b16 %v120, %v119
    %v151 = vpack.c.b16 %v122, %v121
    %v152 = vpack.c.b16 %v124, %v123
    %v153 = vpack.c.b16 %v126, %v125
    %v154 = vpack.c.b16 %v128, %v127
    %v155 = vpack.c.b16 %v130, %v129
    %v156 = vpack.c.b16 %v132, %v131
    %v157 = vpack.c.b16 %v134, %v133
    %v158 = vpack.c.b16 %v136, %v135
    %v159 = vpack.c.b16 %v138, %v137
    %v160 = vpack.c.b16 %v140, %v139
    %v161 = vpack.c.b16 %v142, %v141
    %v162 = vpack.c.b16 %v144, %v143
    %v163 = vpack.c.b16 %v146, %v145
    %v164 = vpack.c.b16 %v148, %v147
    %v173 = vunpack.c.l.b16 %v77
    %v174 = vunpack.c.l.b16 %v78
    %v175 = vunpack.c.l.b16 %v79
    %v176 = vunpack.c.l.b16 %v80
    %v177 = vunpack.c.l.b16 %v81
    %v178 = vunpack.c.l.b16 %v82
    %v179 = vunpack.c.l.b16 %v83
    %v180 = vunpack.c.l.b16 %v84
    %v181 = vpack.c.b16 %v174, %v173
    %v182 = vpack.c.b16 %v176, %v175
    %v183 = vpack.c.b16 %v178, %v177
    %v184 = vpack.c.b16 %v180, %v179
    %vm189 = vcmask 523264
    %v191 = vsel %vm189, %v149, 0
    %v194 = vsel %vm189, %v150, 0
    %v197 = vsel %vm189, %v151, 0
    %v200 = vsel %vm189, %v152, 0
    %v203 = vsel %vm189, %v153, 0
    %v206 = vsel %vm189, %v154, 0
    %v209 = vsel %vm189, %v155, 0
    %v212 = vsel %vm189, %v156, 0
    %v215 = vsel %vm189, %v157, 0
    %v218 = vsel %vm189, %v158, 0
    %v221 = vsel %vm189, %v159, 0
    %v224 = vsel %vm189, %v160, 0
    %v227 = vsel %vm189, %v161, 0
    %v230 = vsel %vm189, %v162, 0
    %v233 = vsel %vm189, %v163, 0
    %v236 = vsel %vm189, %v164, 0
    %238 = vmatprep.subr.bf16.mxu0 0
    %239 = vmatpush1.bf16.msra.mxu0 0
    %240 = vmatprep.subr.bf16.mxu0 0
    %241 = vmatpush1.bf16.msra.mxu0 0
    %242 = vmatprep.subr.bf16.mxu0 0
    %243 = vmatpush1.bf16.msra.mxu0 0
    %244 = vmatprep.subr.bf16.mxu0 0
    %245 = vmatpush1.bf16.msra.mxu0 0
    %246 = vmatprep.subr.bf16.mxu0 0
    %247 = vmatpush1.bf16.msra.mxu0 %v184
    %248 = vmatprep.subr.bf16.mxu0 0
    %249 = vmatpush1.bf16.msra.mxu0 %v183
    %250 = vmatprep.subr.bf16.mxu0 0
    %251 = vmatpush1.bf16.msra.mxu0 %v182
    %252 = vmatprep.subr.bf16.mxu0 0
    %253 = vmatpush1.bf16.msra.mxu0 %v181
    %254 = vmatprep.subr.bf16.mxu0 0
    %255 = vmatpush2.bf16.msra.mxu0 0
    %256 = vmatprep.subr.bf16.mxu0 0
    %257 = vmatpush2.bf16.msra.mxu0 0
    %258 = vmatprep.subr.bf16.mxu0 0
    %259 = vmatpush2.bf16.msra.mxu0 0
    %260 = vmatprep.subr.bf16.mxu0 0
    %261 = vmatpush2.bf16.msra.mxu0 0
    %262 = vmatprep.subr.bf16.mxu0 0
    %263 = vmatpush2.bf16.msra.mxu0 0
    %264 = vmatprep.subr.bf16.mxu0 0
    %265 = vmatpush2.bf16.msra.mxu0 0
    %266 = vmatprep.subr.bf16.mxu0 0
    %267 = vmatpush2.bf16.msra.mxu0 0
    %268 = vmatprep.subr.bf16.mxu0 0
    %269 = vmatpush2.bf16.msra.mxu0 0
    %270 = vmatprep.mubr.bf16.mxu0 0
    %271 = vmatmul.mubr.bf16.gmra.mxu0 %v191
    %v272 = vpop.f32.mrf.mxu0
    %v273 = vadd.f32 0.0, %v272
    %v274 = vpop.f32.mrf.mxu0
    %v275 = vpop.f32.mrf.mxu0
    %v276 = vadd.f32 0.0, %v275
    %v277 = vpop.f32.mrf.mxu0
    %278 = vmatprep.mubr.bf16.mxu0 0
    %279 = vmatmul.mubr.bf16.gmra.mxu0 %v194
    %v280 = vpop.f32.mrf.mxu0
    %v281 = vadd.f32 0.0, %v280
    %v282 = vpop.f32.mrf.mxu0
    %v283 = vpop.f32.mrf.mxu0
    %v284 = vadd.f32 0.0, %v283
    %v285 = vpop.f32.mrf.mxu0
    %286 = vmatprep.mubr.bf16.mxu0 0
    %287 = vmatmul.mubr.bf16.gmra.mxu0 %v197
    %v288 = vpop.f32.mrf.mxu0
    %v289 = vadd.f32 0.0, %v288
    %v290 = vpop.f32.mrf.mxu0
    %v291 = vpop.f32.mrf.mxu0
    %v292 = vadd.f32 0.0, %v291
    %v293 = vpop.f32.mrf.mxu0
    %294 = vmatprep.mubr.bf16.mxu0 0
    %295 = vmatmul.mubr.bf16.gmra.mxu0 %v200
    %v296 = vpop.f32.mrf.mxu0
    %v297 = vadd.f32 0.0, %v296
    %v298 = vpop.f32.mrf.mxu0
    %v299 = vpop.f32.mrf.mxu0
    %v300 = vadd.f32 0.0, %v299
    %v301 = vpop.f32.mrf.mxu0
    %302 = vmatprep.mubr.bf16.mxu0 0
    %303 = vmatmul.mubr.bf16.gmra.mxu0 %v203
    %v304 = vpop.f32.mrf.mxu0
    %v305 = vadd.f32 0.0, %v304
    %v306 = vpop.f32.mrf.mxu0
    %v307 = vpop.f32.mrf.mxu0
    %v308 = vadd.f32 0.0, %v307
    %v309 = vpop.f32.mrf.mxu0
    %310 = vmatprep.mubr.bf16.mxu0 0
    %311 = vmatmul.mubr.bf16.gmra.mxu0 %v206
    %v312 = vpop.f32.mrf.mxu0
    %v313 = vadd.f32 0.0, %v312
    %v314 = vpop.f32.mrf.mxu0
    %v315 = vpop.f32.mrf.mxu0
    %v316 = vadd.f32 0.0, %v315
    %v317 = vpop.f32.mrf.mxu0
    %318 = vmatprep.mubr.bf16.mxu0 0
    %319 = vmatmul.mubr.bf16.gmra.mxu0 %v209
    %v320 = vpop.f32.mrf.mxu0
    %v321 = vadd.f32 0.0, %v320
    %v322 = vpop.f32.mrf.mxu0
    %v323 = vpop.f32.mrf.mxu0
    %v324 = vadd.f32 0.0, %v323
    %v325 = vpop.f32.mrf.mxu0
    %326 = vmatprep.mubr.bf16.mxu0 0
    %327 = vmatmul.mubr.bf16.gmra.mxu0 %v212
    %v328 = vpop.f32.mrf.mxu0
    %v329 = vadd.f32 0.0, %v328
    %v330 = vpop.f32.mrf.mxu0
    %v331 = vpop.f32.mrf.mxu0
    %v332 = vadd.f32 0.0, %v331
    %v333 = vpop.f32.mrf.mxu0
    %334 = vmatprep.mubr.bf16.mxu0 0
    %335 = vmatmul.mubr.bf16.gmra.mxu0 %v215
    %v336 = vpop.f32.mrf.mxu0
    %v337 = vadd.f32 0.0, %v336
    %v338 = vpop.f32.mrf.mxu0
    %v339 = vpop.f32.mrf.mxu0
    %v340 = vadd.f32 0.0, %v339
    %v341 = vpop.f32.mrf.mxu0
    %342 = vmatprep.mubr.bf16.mxu0 0
    %343 = vmatmul.mubr.bf16.gmra.mxu0 %v218
    %v344 = vpop.f32.mrf.mxu0
    %v345 = vadd.f32 0.0, %v344
    %v346 = vpop.f32.mrf.mxu0
    %v347 = vpop.f32.mrf.mxu0
    %v348 = vadd.f32 0.0, %v347
    %v349 = vpop.f32.mrf.mxu0
    %350 = vmatprep.mubr.bf16.mxu0 0
    %351 = vmatmul.mubr.bf16.gmra.mxu0 %v221
    %v352 = vpop.f32.mrf.mxu0
    %v353 = vadd.f32 0.0, %v352
    %v354 = vpop.f32.mrf.mxu0
    %v355 = vpop.f32.mrf.mxu0
    %v356 = vadd.f32 0.0, %v355
    %v357 = vpop.f32.mrf.mxu0
    %358 = vmatprep.mubr.bf16.mxu0 0
    %359 = vmatmul.mubr.bf16.gmra.mxu0 %v224
    %v360 = vpop.f32.mrf.mxu0
    %v361 = vadd.f32 0.0, %v360
    %v362 = vpop.f32.mrf.mxu0
    %v363 = vpop.f32.mrf.mxu0
    %v364 = vadd.f32 0.0, %v363
    %v365 = vpop.f32.mrf.mxu0
    %366 = vmatprep.mubr.bf16.mxu0 0
    %367 = vmatmul.mubr.bf16.gmra.mxu0 %v227
    %v368 = vpop.f32.mrf.mxu0
    %v369 = vadd.f32 0.0, %v368
    %v370 = vpop.f32.mrf.mxu0
    %v371 = vpop.f32.mrf.mxu0
    %v372 = vadd.f32 0.0, %v371
    %v373 = vpop.f32.mrf.mxu0
    %374 = vmatprep.mubr.bf16.mxu0 0
    %375 = vmatmul.mubr.bf16.gmra.mxu0 %v230
    %v376 = vpop.f32.mrf.mxu0
    %v377 = vadd.f32 0.0, %v376
    %v378 = vpop.f32.mrf.mxu0
    %v379 = vpop.f32.mrf.mxu0
    %v380 = vadd.f32 0.0, %v379
    %v381 = vpop.f32.mrf.mxu0
    %382 = vmatprep.mubr.bf16.mxu0 0
    %383 = vmatmul.mubr.bf16.gmra.mxu0 %v233
    %v384 = vpop.f32.mrf.mxu0
    %v385 = vadd.f32 0.0, %v384
    %v386 = vpop.f32.mrf.mxu0
    %v387 = vpop.f32.mrf.mxu0
    %v388 = vadd.f32 0.0, %v387
    %v389 = vpop.f32.mrf.mxu0
    %390 = vmatprep.mubr.bf16.mxu0 0
    %391 = vmatmul.mubr.bf16.gmra.mxu0 %v236
    %v392 = vpop.f32.mrf.mxu0
    %v393 = vadd.f32 0.0, %v392
    %v394 = vpop.f32.mrf.mxu0
    %v395 = vpop.f32.mrf.mxu0
    %v396 = vadd.f32 0.0, %v395
    %v397 = vpop.f32.mrf.mxu0
    %398 = vdwg.mxu0
    %v399 = vld [vmem:[%s3] sm:$0xf]
    %v400 = vld [vmem:[%s3 + $0x4] sm:$0xf]
    %v401 = vld [vmem:[%s3 + $0x8] sm:$0xf]
    %v402 = vld [vmem:[%s3 + $0xc] sm:$0xf]
    %v403 = vld [vmem:[%s3 + $0x10] sm:$0xf]
    %v404 = vld [vmem:[%s3 + $0x14] sm:$0xf]
    %v405 = vld [vmem:[%s3 + $0x18] sm:$0xf]
    %v406 = vld [vmem:[%s3 + $0x1c] sm:$0xf]
    %v407 = vld [vmem:[%s3 + $0x20] sm:$0xf]
    %v408 = vld [vmem:[%s3 + $0x24] sm:$0xf]
    %v409 = vld [vmem:[%s3 + $0x28] sm:$0xf]
    %v410 = vld [vmem:[%s3 + $0x2c] sm:$0xf]
    %v411 = vld [vmem:[%s3 + $0x30] sm:$0xf]
    %v412 = vld [vmem:[%s3 + $0x34] sm:$0xf]
    %v413 = vld [vmem:[%s3 + $0x38] sm:$0xf]
    %v414 = vld [vmem:[%s3 + $0x3c] sm:$0xf]
    %v415 = vld [vmem:[%s3 + $0x40] sm:$0xf]
    %v416 = vld [vmem:[%s3 + $0x44] sm:$0xf]
    %vm450 = vcmask 1040384
    %v451 = vrot.slane 0.0, 7
    %v452 = vsel %vm450, %v451, %v451
    %v453 = vrot.slane %v273, 7
    %v454 = vrot.slane %v276, 7
    %v455 = vsel %vm450, %v453, %v454
    %v456 = vrot.slane %v281, 7
    %v457 = vrot.slane %v284, 7
    %v458 = vsel %vm450, %v456, %v457
    %v459 = vrot.slane %v289, 7
    %v460 = vrot.slane %v292, 7
    %v461 = vsel %vm450, %v459, %v460
    %v462 = vrot.slane %v297, 7
    %v463 = vrot.slane %v300, 7
    %v464 = vsel %vm450, %v462, %v463
    %v465 = vrot.slane %v305, 7
    %v466 = vrot.slane %v308, 7
    %v467 = vsel %vm450, %v465, %v466
    %v468 = vrot.slane %v313, 7
    %v469 = vrot.slane %v316, 7
    %v470 = vsel %vm450, %v468, %v469
    %v471 = vrot.slane %v321, 7
    %v472 = vrot.slane %v324, 7
    %v473 = vsel %vm450, %v471, %v472
    %v474 = vrot.slane %v329, 7
    %v475 = vrot.slane %v332, 7
    %v476 = vsel %vm450, %v474, %v475
    %v477 = vrot.slane %v337, 7
    %v478 = vrot.slane %v340, 7
    %v479 = vsel %vm450, %v477, %v478
    %v480 = vrot.slane %v345, 7
    %v481 = vrot.slane %v348, 7
    %v482 = vsel %vm450, %v480, %v481
    %v483 = vrot.slane %v353, 7
    %v484 = vrot.slane %v356, 7
    %v485 = vsel %vm450, %v483, %v484
    %v486 = vrot.slane %v361, 7
    %v487 = vrot.slane %v364, 7
    %v488 = vsel %vm450, %v486, %v487
    %v489 = vrot.slane %v369, 7
    %v490 = vrot.slane %v372, 7
    %v491 = vsel %vm450, %v489, %v490
    %v492 = vrot.slane %v377, 7
    %v493 = vrot.slane %v380, 7
    %v494 = vsel %vm450, %v492, %v493
    %v495 = vrot.slane %v385, 7
    %v496 = vrot.slane %v388, 7
    %v497 = vsel %vm450, %v495, %v496
    %v498 = vrot.slane %v393, 7
    %v499 = vrot.slane %v396, 7
    %v500 = vsel %vm450, %v498, %v499
    %v550 = vsel %vm450, 0.0, %v451
    %v551 = vsel %vm450, 0.0, %v453
    %v552 = vsel %vm450, 0.0, %v456
    %v553 = vsel %vm450, 0.0, %v459
    %v554 = vsel %vm450, 0.0, %v462
    %v555 = vsel %vm450, 0.0, %v465
    %v556 = vsel %vm450, 0.0, %v468
    %v557 = vsel %vm450, 0.0, %v471
    %v558 = vsel %vm450, 0.0, %v474
    %v559 = vsel %vm450, 0.0, %v477
    %v560 = vsel %vm450, 0.0, %v480
    %v561 = vsel %vm450, 0.0, %v483
    %v562 = vsel %vm450, 0.0, %v486
    %v563 = vsel %vm450, 0.0, %v489
    %v564 = vsel %vm450, 0.0, %v492
    %v565 = vsel %vm450, 0.0, %v495
    %v566 = vsel %vm450, 0.0, %v498
    %v567 = vsel %vm450, %v451, 0.0
    %v568 = vsel %vm450, %v454, 0.0
    %v569 = vsel %vm450, %v457, 0.0
    %v570 = vsel %vm450, %v460, 0.0
    %v571 = vsel %vm450, %v463, 0.0
    %v572 = vsel %vm450, %v466, 0.0
    %v573 = vsel %vm450, %v469, 0.0
    %v574 = vsel %vm450, %v472, 0.0
    %v575 = vsel %vm450, %v475, 0.0
    %v576 = vsel %vm450, %v478, 0.0
    %v577 = vsel %vm450, %v481, 0.0
    %v578 = vsel %vm450, %v484, 0.0
    %v579 = vsel %vm450, %v487, 0.0
    %v580 = vsel %vm450, %v490, 0.0
    %v581 = vsel %vm450, %v493, 0.0
    %v582 = vsel %vm450, %v496, 0.0
    %v583 = vsel %vm450, %v499, 0.0
    %vm616 = vcmask 1046528
    %v617 = vrot.slane %v550, 1
    %v618 = vrot.slane %v452, 1
    %v619 = vsel %vm616, %v617, %v618
    %v620 = vrot.slane %v567, 1
    %v621 = vsel %vm616, %v618, %v620
    %v622 = vrot.slane %v551, 1
    %v623 = vrot.slane %v455, 1
    %v624 = vsel %vm616, %v622, %v623
    %v625 = vrot.slane %v568, 1
    %v626 = vsel %vm616, %v623, %v625
    %v627 = vrot.slane %v552, 1
    %v628 = vrot.slane %v458, 1
    %v629 = vsel %vm616, %v627, %v628
    %v630 = vrot.slane %v569, 1
    %v631 = vsel %vm616, %v628, %v630
    %v632 = vrot.slane %v553, 1
    %v633 = vrot.slane %v461, 1
    %v634 = vsel %vm616, %v632, %v633
    %v635 = vrot.slane %v570, 1
    %v636 = vsel %vm616, %v633, %v635
    %v637 = vrot.slane %v554, 1
    %v638 = vrot.slane %v464, 1
    %v639 = vsel %vm616, %v637, %v638
    %v640 = vrot.slane %v571, 1
    %v641 = vsel %vm616, %v638, %v640
    %v642 = vrot.slane %v555, 1
    %v643 = vrot.slane %v467, 1
    %v644 = vsel %vm616, %v642, %v643
    %v645 = vrot.slane %v572, 1
    %v646 = vsel %vm616, %v643, %v645
    %v647 = vrot.slane %v556, 1
    %v648 = vrot.slane %v470, 1
    %v649 = vsel %vm616, %v647, %v648
    %v650 = vrot.slane %v573, 1
    %v651 = vsel %vm616, %v648, %v650
    %v652 = vrot.slane %v557, 1
    %v653 = vrot.slane %v473, 1
    %v654 = vsel %vm616, %v652, %v653
    %v655 = vrot.slane %v574, 1
    %v656 = vsel %vm616, %v653, %v655
    %v657 = vrot.slane %v558, 1
    %v658 = vrot.slane %v476, 1
    %v659 = vsel %vm616, %v657, %v658
    %v660 = vrot.slane %v575, 1
    %v661 = vsel %vm616, %v658, %v660
    %v662 = vrot.slane %v559, 1
    %v663 = vrot.slane %v479, 1
    %v664 = vsel %vm616, %v662, %v663
    %v665 = vrot.slane %v576, 1
    %v666 = vsel %vm616, %v663, %v665
    %v667 = vrot.slane %v560, 1
    %v668 = vrot.slane %v482, 1
    %v669 = vsel %vm616, %v667, %v668
    %v670 = vrot.slane %v577, 1
    %v671 = vsel %vm616, %v668, %v670
    %v672 = vrot.slane %v561, 1
    %v673 = vrot.slane %v485, 1
    %v674 = vsel %vm616, %v672, %v673
    %v675 = vrot.slane %v578, 1
    %v676 = vsel %vm616, %v673, %v675
    %v677 = vrot.slane %v562, 1
    %v678 = vrot.slane %v488, 1
    %v679 = vsel %vm616, %v677, %v678
    %v680 = vrot.slane %v579, 1
    %v681 = vsel %vm616, %v678, %v680
    %v682 = vrot.slane %v563, 1
    %v683 = vrot.slane %v491, 1
    %v684 = vsel %vm616, %v682, %v683
    %v685 = vrot.slane %v580, 1
    %v686 = vsel %vm616, %v683, %v685
    %v687 = vrot.slane %v564, 1
    %v688 = vrot.slane %v494, 1
    %v689 = vsel %vm616, %v687, %v688
    %v690 = vrot.slane %v581, 1
    %v691 = vsel %vm616, %v688, %v690
    %v692 = vrot.slane %v565, 1
    %v693 = vrot.slane %v497, 1
    %v694 = vsel %vm616, %v692, %v693
    %v695 = vrot.slane %v582, 1
    %v696 = vsel %vm616, %v693, %v695
    %697 = vrot.lane.b32.xlu0 %v619, 16
    %v698 = vpop.permute.xlu0 %697
    %699 = vrot.lane.b32.xlu0 %v621, 16
    %v700 = vpop.permute.xlu0 %699
    %701 = vrot.lane.b32.xlu0 %v624, 16
    %v702 = vpop.permute.xlu0 %701
    %703 = vrot.lane.b32.xlu0 %v626, 16
    %v704 = vpop.permute.xlu0 %703
    %705 = vrot.lane.b32.xlu0 %v629, 16
    %v706 = vpop.permute.xlu0 %705
    %707 = vrot.lane.b32.xlu0 %v631, 16
    %v708 = vpop.permute.xlu0 %707
    %709 = vrot.lane.b32.xlu0 %v634, 16
    %v710 = vpop.permute.xlu0 %709
    %711 = vrot.lane.b32.xlu0 %v636, 16
    %v712 = vpop.permute.xlu0 %711
    %713 = vrot.lane.b32.xlu0 %v639, 16
    %v714 = vpop.permute.xlu0 %713
    %715 = vrot.lane.b32.xlu0 %v641, 16
    %v716 = vpop.permute.xlu0 %715
    %717 = vrot.lane.b32.xlu0 %v644, 16
    %v718 = vpop.permute.xlu0 %717
    %719 = vrot.lane.b32.xlu0 %v646, 16
    %v720 = vpop.permute.xlu0 %719
    %721 = vrot.lane.b32.xlu0 %v649, 16
    %v722 = vpop.permute.xlu0 %721
    %723 = vrot.lane.b32.xlu0 %v651, 16
    %v724 = vpop.permute.xlu0 %723
    %725 = vrot.lane.b32.xlu0 %v654, 16
    %v726 = vpop.permute.xlu0 %725
    %727 = vrot.lane.b32.xlu0 %v656, 16
    %v728 = vpop.permute.xlu0 %727
    %729 = vrot.lane.b32.xlu0 %v659, 16
    %v730 = vpop.permute.xlu0 %729
    %731 = vrot.lane.b32.xlu0 %v661, 16
    %v732 = vpop.permute.xlu0 %731
    %733 = vrot.lane.b32.xlu0 %v664, 16
    %v734 = vpop.permute.xlu0 %733
    %735 = vrot.lane.b32.xlu0 %v666, 16
    %v736 = vpop.permute.xlu0 %735
    %737 = vrot.lane.b32.xlu0 %v669, 16
    %v738 = vpop.permute.xlu0 %737
    %739 = vrot.lane.b32.xlu0 %v671, 16
    %v740 = vpop.permute.xlu0 %739
    %741 = vrot.lane.b32.xlu0 %v674, 16
    %v742 = vpop.permute.xlu0 %741
    %743 = vrot.lane.b32.xlu0 %v676, 16
    %v744 = vpop.permute.xlu0 %743
    %745 = vrot.lane.b32.xlu0 %v679, 16
    %v746 = vpop.permute.xlu0 %745
    %747 = vrot.lane.b32.xlu0 %v681, 16
    %v748 = vpop.permute.xlu0 %747
    %749 = vrot.lane.b32.xlu0 %v684, 16
    %v750 = vpop.permute.xlu0 %749
    %751 = vrot.lane.b32.xlu0 %v686, 16
    %v752 = vpop.permute.xlu0 %751
    %753 = vrot.lane.b32.xlu0 %v689, 16
    %v754 = vpop.permute.xlu0 %753
    %755 = vrot.lane.b32.xlu0 %v691, 16
    %v756 = vpop.permute.xlu0 %755
    %757 = vrot.lane.b32.xlu0 %v694, 16
    %v758 = vpop.permute.xlu0 %757
    %759 = vrot.lane.b32.xlu0 %v696, 16
    %v760 = vpop.permute.xlu0 %759
    %vm793 = vcmask 1045504
    %v794 = vrot.slane %v550, 2
    %v795 = vrot.slane %v452, 2
    %v796 = vsel %vm793, %v794, %v795
    %v797 = vrot.slane %v567, 2
    %v798 = vsel %vm793, %v795, %v797
    %v799 = vrot.slane %v551, 2
    %v800 = vrot.slane %v455, 2
    %v801 = vsel %vm793, %v799, %v800
    %v802 = vrot.slane %v568, 2
    %v803 = vsel %vm793, %v800, %v802
    %v804 = vrot.slane %v552, 2
    %v805 = vrot.slane %v458, 2
    %v806 = vsel %vm793, %v804, %v805
    %v807 = vrot.slane %v569, 2
    %v808 = vsel %vm793, %v805, %v807
    %v809 = vrot.slane %v553, 2
    %v810 = vrot.slane %v461, 2
    %v811 = vsel %vm793, %v809, %v810
    %v812 = vrot.slane %v570, 2
    %v813 = vsel %vm793, %v810, %v812
    %v814 = vrot.slane %v554, 2
    %v815 = vrot.slane %v464, 2
    %v816 = vsel %vm793, %v814, %v815
    %v817 = vrot.slane %v571, 2
    %v818 = vsel %vm793, %v815, %v817
    %v819 = vrot.slane %v555, 2
    %v820 = vrot.slane %v467, 2
    %v821 = vsel %vm793, %v819, %v820
    %v822 = vrot.slane %v572, 2
    %v823 = vsel %vm793, %v820, %v822
    %v824 = vrot.slane %v556, 2
    %v825 = vrot.slane %v470, 2
    %v826 = vsel %vm793, %v824, %v825
    %v827 = vrot.slane %v573, 2
    %v828 = vsel %vm793, %v825, %v827
    %v829 = vrot.slane %v557, 2
    %v830 = vrot.slane %v473, 2
    %v831 = vsel %vm793, %v829, %v830
    %v832 = vrot.slane %v574, 2
    %v833 = vsel %vm793, %v830, %v832
    %v834 = vrot.slane %v558, 2
    %v835 = vrot.slane %v476, 2
    %v836 = vsel %vm793, %v834, %v835
    %v837 = vrot.slane %v575, 2
    %v838 = vsel %vm793, %v835, %v837
    %v839 = vrot.slane %v559, 2
    %v840 = vrot.slane %v479, 2
    %v841 = vsel %vm793, %v839, %v840
    %v842 = vrot.slane %v576, 2
    %v843 = vsel %vm793, %v840, %v842
    %v844 = vrot.slane %v560, 2
    %v845 = vrot.slane %v482, 2
    %v846 = vsel %vm793, %v844, %v845
    %v847 = vrot.slane %v577, 2
    %v848 = vsel %vm793, %v845, %v847
    %v849 = vrot.slane %v561, 2
    %v850 = vrot.slane %v485, 2
    %v851 = vsel %vm793, %v849, %v850
    %v852 = vrot.slane %v578, 2
    %v853 = vsel %vm793, %v850, %v852
    %v854 = vrot.slane %v562, 2
    %v855 = vrot.slane %v488, 2
    %v856 = vsel %vm793, %v854, %v855
    %v857 = vrot.slane %v579, 2
    %v858 = vsel %vm793, %v855, %v857
    %v859 = vrot.slane %v563, 2
    %v860 = vrot.slane %v491, 2
    %v861 = vsel %vm793, %v859, %v860
    %v862 = vrot.slane %v580, 2
    %v863 = vsel %vm793, %v860, %v862
    %v864 = vrot.slane %v564, 2
    %v865 = vrot.slane %v494, 2
    %v866 = vsel %vm793, %v864, %v865
    %v867 = vrot.slane %v581, 2
    %v868 = vsel %vm793, %v865, %v867
    %v869 = vrot.slane %v565, 2
    %v870 = vrot.slane %v497, 2
    %v871 = vsel %vm793, %v869, %v870
    %v872 = vrot.slane %v582, 2
    %v873 = vsel %vm793, %v870, %v872
    %874 = vrot.lane.b32.xlu0 %v796, 32
    %v875 = vpop.permute.xlu0 %874
    %876 = vrot.lane.b32.xlu0 %v798, 32
    %v877 = vpop.permute.xlu0 %876
    %878 = vrot.lane.b32.xlu0 %v801, 32
    %v879 = vpop.permute.xlu0 %878
    %880 = vrot.lane.b32.xlu0 %v803, 32
    %v881 = vpop.permute.xlu0 %880
    %882 = vrot.lane.b32.xlu0 %v806, 32
    %v883 = vpop.permute.xlu0 %882
    %884 = vrot.lane.b32.xlu0 %v808, 32
    %v885 = vpop.permute.xlu0 %884
    %886 = vrot.lane.b32.xlu0 %v811, 32
    %v887 = vpop.permute.xlu0 %886
    %888 = vrot.lane.b32.xlu0 %v813, 32
    %v889 = vpop.permute.xlu0 %888
    %890 = vrot.lane.b32.xlu0 %v816, 32
    %v891 = vpop.permute.xlu0 %890
    %892 = vrot.lane.b32.xlu0 %v818, 32
    %v893 = vpop.permute.xlu0 %892
    %894 = vrot.lane.b32.xlu0 %v821, 32
    %v895 = vpop.permute.xlu0 %894
    %896 = vrot.lane.b32.xlu0 %v823, 32
    %v897 = vpop.permute.xlu0 %896
    %898 = vrot.lane.b32.xlu0 %v826, 32
    %v899 = vpop.permute.xlu0 %898
    %900 = vrot.lane.b32.xlu0 %v828, 32
    %v901 = vpop.permute.xlu0 %900
    %902 = vrot.lane.b32.xlu0 %v831, 32
    %v903 = vpop.permute.xlu0 %902
    %904 = vrot.lane.b32.xlu0 %v833, 32
    %v905 = vpop.permute.xlu0 %904
    %906 = vrot.lane.b32.xlu0 %v836, 32
    %v907 = vpop.permute.xlu0 %906
    %908 = vrot.lane.b32.xlu0 %v838, 32
    %v909 = vpop.permute.xlu0 %908
    %910 = vrot.lane.b32.xlu0 %v841, 32
    %v911 = vpop.permute.xlu0 %910
    %912 = vrot.lane.b32.xlu0 %v843, 32
    %v913 = vpop.permute.xlu0 %912
    %914 = vrot.lane.b32.xlu0 %v846, 32
    %v915 = vpop.permute.xlu0 %914
    %916 = vrot.lane.b32.xlu0 %v848, 32
    %v917 = vpop.permute.xlu0 %916
    %918 = vrot.lane.b32.xlu0 %v851, 32
    %v919 = vpop.permute.xlu0 %918
    %920 = vrot.lane.b32.xlu0 %v853, 32
    %v921 = vpop.permute.xlu0 %920
    %922 = vrot.lane.b32.xlu0 %v856, 32
    %v923 = vpop.permute.xlu0 %922
    %924 = vrot.lane.b32.xlu0 %v858, 32
    %v925 = vpop.permute.xlu0 %924
    %926 = vrot.lane.b32.xlu0 %v861, 32
    %v927 = vpop.permute.xlu0 %926
    %928 = vrot.lane.b32.xlu0 %v863, 32
    %v929 = vpop.permute.xlu0 %928
    %930 = vrot.lane.b32.xlu0 %v866, 32
    %v931 = vpop.permute.xlu0 %930
    %932 = vrot.lane.b32.xlu0 %v868, 32
    %v933 = vpop.permute.xlu0 %932
    %934 = vrot.lane.b32.xlu0 %v871, 32
    %v935 = vpop.permute.xlu0 %934
    %936 = vrot.lane.b32.xlu0 %v873, 32
    %v937 = vpop.permute.xlu0 %936
    %971 = vrot.lane.b32.xlu0 %v551, 48
    %v972 = vpop.permute.xlu0 %971
    %973 = vrot.lane.b32.xlu0 %v455, 48
    %v974 = vpop.permute.xlu0 %973
    %975 = vrot.lane.b32.xlu0 %v552, 48
    %v976 = vpop.permute.xlu0 %975
    %977 = vrot.lane.b32.xlu0 %v458, 48
    %v978 = vpop.permute.xlu0 %977
    %979 = vrot.lane.b32.xlu0 %v553, 48
    %v980 = vpop.permute.xlu0 %979
    %981 = vrot.lane.b32.xlu0 %v461, 48
    %v982 = vpop.permute.xlu0 %981
    %983 = vrot.lane.b32.xlu0 %v554, 48
    %v984 = vpop.permute.xlu0 %983
    %985 = vrot.lane.b32.xlu0 %v464, 48
    %v986 = vpop.permute.xlu0 %985
    %987 = vrot.lane.b32.xlu0 %v555, 48
    %v988 = vpop.permute.xlu0 %987
    %989 = vrot.lane.b32.xlu0 %v467, 48
    %v990 = vpop.permute.xlu0 %989
    %991 = vrot.lane.b32.xlu0 %v556, 48
    %v992 = vpop.permute.xlu0 %991
    %993 = vrot.lane.b32.xlu0 %v470, 48
    %v994 = vpop.permute.xlu0 %993
    %995 = vrot.lane.b32.xlu0 %v557, 48
    %v996 = vpop.permute.xlu0 %995
    %997 = vrot.lane.b32.xlu0 %v473, 48
    %v998 = vpop.permute.xlu0 %997
    %999 = vrot.lane.b32.xlu0 %v558, 48
    %v1000 = vpop.permute.xlu0 %999
    %1001 = vrot.lane.b32.xlu0 %v476, 48
    %v1002 = vpop.permute.xlu0 %1001
    %1003 = vrot.lane.b32.xlu0 %v559, 48
    %v1004 = vpop.permute.xlu0 %1003
    %1005 = vrot.lane.b32.xlu0 %v479, 48
    %v1006 = vpop.permute.xlu0 %1005
    %1007 = vrot.lane.b32.xlu0 %v560, 48
    %v1008 = vpop.permute.xlu0 %1007
    %1009 = vrot.lane.b32.xlu0 %v482, 48
    %v1010 = vpop.permute.xlu0 %1009
    %1011 = vrot.lane.b32.xlu0 %v561, 48
    %v1012 = vpop.permute.xlu0 %1011
    %1013 = vrot.lane.b32.xlu0 %v485, 48
    %v1014 = vpop.permute.xlu0 %1013
    %1015 = vrot.lane.b32.xlu0 %v562, 48
    %v1016 = vpop.permute.xlu0 %1015
    %1017 = vrot.lane.b32.xlu0 %v488, 48
    %v1018 = vpop.permute.xlu0 %1017
    %1019 = vrot.lane.b32.xlu0 %v563, 48
    %v1020 = vpop.permute.xlu0 %1019
    %1021 = vrot.lane.b32.xlu0 %v491, 48
    %v1022 = vpop.permute.xlu0 %1021
    %1023 = vrot.lane.b32.xlu0 %v564, 48
    %v1024 = vpop.permute.xlu0 %1023
    %1025 = vrot.lane.b32.xlu0 %v494, 48
    %v1026 = vpop.permute.xlu0 %1025
    %1027 = vrot.lane.b32.xlu0 %v565, 48
    %v1028 = vpop.permute.xlu0 %1027
    %1029 = vrot.lane.b32.xlu0 %v497, 48
    %v1030 = vpop.permute.xlu0 %1029
    %1031 = vrot.lane.b32.xlu0 %v566, 48
    %v1032 = vpop.permute.xlu0 %1031
    %1033 = vrot.lane.b32.xlu0 %v500, 48
    %v1034 = vpop.permute.xlu0 %1033
    %v1068 = vrot.slane %v566, 1
    %v1069 = vrot.slane %v500, 1
    %v1070 = vsel %vm616, %v1068, %v1069
    %v1071 = vrot.slane %v583, 1
    %v1072 = vsel %vm616, %v1069, %v1071
    %1073 = vrot.lane.b32.xlu0 %v624, 64
    %v1074 = vpop.permute.xlu0 %1073
    %1075 = vrot.lane.b32.xlu0 %v626, 64
    %v1076 = vpop.permute.xlu0 %1075
    %1077 = vrot.lane.b32.xlu0 %v629, 64
    %v1078 = vpop.permute.xlu0 %1077
    %1079 = vrot.lane.b32.xlu0 %v631, 64
    %v1080 = vpop.permute.xlu0 %1079
    %1081 = vrot.lane.b32.xlu0 %v634, 64
    %v1082 = vpop.permute.xlu0 %1081
    %1083 = vrot.lane.b32.xlu0 %v636, 64
    %v1084 = vpop.permute.xlu0 %1083
    %1085 = vrot.lane.b32.xlu0 %v639, 64
    %v1086 = vpop.permute.xlu0 %1085
    %1087 = vrot.lane.b32.xlu0 %v641, 64
    %v1088 = vpop.permute.xlu0 %1087
    %1089 = vrot.lane.b32.xlu0 %v644, 64
    %v1090 = vpop.permute.xlu0 %1089
    %1091 = vrot.lane.b32.xlu0 %v646, 64
    %v1092 = vpop.permute.xlu0 %1091
    %1093 = vrot.lane.b32.xlu0 %v649, 64
    %v1094 = vpop.permute.xlu0 %1093
    %1095 = vrot.lane.b32.xlu0 %v651, 64
    %v1096 = vpop.permute.xlu0 %1095
    %1097 = vrot.lane.b32.xlu0 %v654, 64
    %v1098 = vpop.permute.xlu0 %1097
    %1099 = vrot.lane.b32.xlu0 %v656, 64
    %v1100 = vpop.permute.xlu0 %1099
    %1101 = vrot.lane.b32.xlu0 %v659, 64
    %v1102 = vpop.permute.xlu0 %1101
    %1103 = vrot.lane.b32.xlu0 %v661, 64
    %v1104 = vpop.permute.xlu0 %1103
    %1105 = vrot.lane.b32.xlu0 %v664, 64
    %v1106 = vpop.permute.xlu0 %1105
    %1107 = vrot.lane.b32.xlu0 %v666, 64
    %v1108 = vpop.permute.xlu0 %1107
    %1109 = vrot.lane.b32.xlu0 %v669, 64
    %v1110 = vpop.permute.xlu0 %1109
    %1111 = vrot.lane.b32.xlu0 %v671, 64
    %v1112 = vpop.permute.xlu0 %1111
    %1113 = vrot.lane.b32.xlu0 %v674, 64
    %v1114 = vpop.permute.xlu0 %1113
    %1115 = vrot.lane.b32.xlu0 %v676, 64
    %v1116 = vpop.permute.xlu0 %1115
    %1117 = vrot.lane.b32.xlu0 %v679, 64
    %v1118 = vpop.permute.xlu0 %1117
    %1119 = vrot.lane.b32.xlu0 %v681, 64
    %v1120 = vpop.permute.xlu0 %1119
    %1121 = vrot.lane.b32.xlu0 %v684, 64
    %v1122 = vpop.permute.xlu0 %1121
    %1123 = vrot.lane.b32.xlu0 %v686, 64
    %v1124 = vpop.permute.xlu0 %1123
    %1125 = vrot.lane.b32.xlu0 %v689, 64
    %v1126 = vpop.permute.xlu0 %1125
    %1127 = vrot.lane.b32.xlu0 %v691, 64
    %v1128 = vpop.permute.xlu0 %1127
    %1129 = vrot.lane.b32.xlu0 %v694, 64
    %v1130 = vpop.permute.xlu0 %1129
    %1131 = vrot.lane.b32.xlu0 %v696, 64
    %v1132 = vpop.permute.xlu0 %1131
    %1133 = vrot.lane.b32.xlu0 %v1070, 64
    %v1134 = vpop.permute.xlu0 %1133
    %1135 = vrot.lane.b32.xlu0 %v1072, 64
    %v1136 = vpop.permute.xlu0 %1135
    %v1169 = vrot.slane %v566, 2
    %v1170 = vrot.slane %v500, 2
    %v1171 = vsel %vm793, %v1169, %v1170
    %v1172 = vrot.slane %v583, 2
    %v1173 = vsel %vm793, %v1170, %v1172
    %1174 = vrot.lane.b32.xlu0 %v801, 80
    %v1175 = vpop.permute.xlu0 %1174
    %1176 = vrot.lane.b32.xlu0 %v803, 80
    %v1177 = vpop.permute.xlu0 %1176
    %1178 = vrot.lane.b32.xlu0 %v806, 80
    %v1179 = vpop.permute.xlu0 %1178
    %1180 = vrot.lane.b32.xlu0 %v808, 80
    %v1181 = vpop.permute.xlu0 %1180
    %1182 = vrot.lane.b32.xlu0 %v811, 80
    %v1183 = vpop.permute.xlu0 %1182
    %1184 = vrot.lane.b32.xlu0 %v813, 80
    %v1185 = vpop.permute.xlu0 %1184
    %1186 = vrot.lane.b32.xlu0 %v816, 80
    %v1187 = vpop.permute.xlu0 %1186
    %1188 = vrot.lane.b32.xlu0 %v818, 80
    %v1189 = vpop.permute.xlu0 %1188
    %1190 = vrot.lane.b32.xlu0 %v821, 80
    %v1191 = vpop.permute.xlu0 %1190
    %1192 = vrot.lane.b32.xlu0 %v823, 80
    %v1193 = vpop.permute.xlu0 %1192
    %1194 = vrot.lane.b32.xlu0 %v826, 80
    %v1195 = vpop.permute.xlu0 %1194
    %1196 = vrot.lane.b32.xlu0 %v828, 80
    %v1197 = vpop.permute.xlu0 %1196
    %1198 = vrot.lane.b32.xlu0 %v831, 80
    %v1199 = vpop.permute.xlu0 %1198
    %1200 = vrot.lane.b32.xlu0 %v833, 80
    %v1201 = vpop.permute.xlu0 %1200
    %1202 = vrot.lane.b32.xlu0 %v836, 80
    %v1203 = vpop.permute.xlu0 %1202
    %1204 = vrot.lane.b32.xlu0 %v838, 80
    %v1205 = vpop.permute.xlu0 %1204
    %1206 = vrot.lane.b32.xlu0 %v841, 80
    %v1207 = vpop.permute.xlu0 %1206
    %1208 = vrot.lane.b32.xlu0 %v843, 80
    %v1209 = vpop.permute.xlu0 %1208
    %1210 = vrot.lane.b32.xlu0 %v846, 80
    %v1211 = vpop.permute.xlu0 %1210
    %1212 = vrot.lane.b32.xlu0 %v848, 80
    %v1213 = vpop.permute.xlu0 %1212
    %1214 = vrot.lane.b32.xlu0 %v851, 80
    %v1215 = vpop.permute.xlu0 %1214
    %1216 = vrot.lane.b32.xlu0 %v853, 80
    %v1217 = vpop.permute.xlu0 %1216
    %1218 = vrot.lane.b32.xlu0 %v856, 80
    %v1219 = vpop.permute.xlu0 %1218
    %1220 = vrot.lane.b32.xlu0 %v858, 80
    %v1221 = vpop.permute.xlu0 %1220
    %1222 = vrot.lane.b32.xlu0 %v861, 80
    %v1223 = vpop.permute.xlu0 %1222
    %1224 = vrot.lane.b32.xlu0 %v863, 80
    %v1225 = vpop.permute.xlu0 %1224
    %1226 = vrot.lane.b32.xlu0 %v866, 80
    %v1227 = vpop.permute.xlu0 %1226
    %1228 = vrot.lane.b32.xlu0 %v868, 80
    %v1229 = vpop.permute.xlu0 %1228
    %1230 = vrot.lane.b32.xlu0 %v871, 80
    %v1231 = vpop.permute.xlu0 %1230
    %1232 = vrot.lane.b32.xlu0 %v873, 80
    %v1233 = vpop.permute.xlu0 %1232
    %1234 = vrot.lane.b32.xlu0 %v1171, 80
    %v1235 = vpop.permute.xlu0 %1234
    %1236 = vrot.lane.b32.xlu0 %v1173, 80
    %v1237 = vpop.permute.xlu0 %1236
    %1270 = vrot.lane.b32.xlu0 %v552, 96
    %v1271 = vpop.permute.xlu0 %1270
    %1272 = vrot.lane.b32.xlu0 %v458, 96
    %v1273 = vpop.permute.xlu0 %1272
    %1274 = vrot.lane.b32.xlu0 %v553, 96
    %v1275 = vpop.permute.xlu0 %1274
    %1276 = vrot.lane.b32.xlu0 %v461, 96
    %v1277 = vpop.permute.xlu0 %1276
    %1278 = vrot.lane.b32.xlu0 %v554, 96
    %v1279 = vpop.permute.xlu0 %1278
    %1280 = vrot.lane.b32.xlu0 %v464, 96
    %v1281 = vpop.permute.xlu0 %1280
    %1282 = vrot.lane.b32.xlu0 %v555, 96
    %v1283 = vpop.permute.xlu0 %1282
    %1284 = vrot.lane.b32.xlu0 %v467, 96
    %v1285 = vpop.permute.xlu0 %1284
    %1286 = vrot.lane.b32.xlu0 %v556, 96
    %v1287 = vpop.permute.xlu0 %1286
    %1288 = vrot.lane.b32.xlu0 %v470, 96
    %v1289 = vpop.permute.xlu0 %1288
    %1290 = vrot.lane.b32.xlu0 %v557, 96
    %v1291 = vpop.permute.xlu0 %1290
    %1292 = vrot.lane.b32.xlu0 %v473, 96
    %v1293 = vpop.permute.xlu0 %1292
    %1294 = vrot.lane.b32.xlu0 %v558, 96
    %v1295 = vpop.permute.xlu0 %1294
    %1296 = vrot.lane.b32.xlu0 %v476, 96
    %v1297 = vpop.permute.xlu0 %1296
    %1298 = vrot.lane.b32.xlu0 %v559, 96
    %v1299 = vpop.permute.xlu0 %1298
    %1300 = vrot.lane.b32.xlu0 %v479, 96
    %v1301 = vpop.permute.xlu0 %1300
    %1302 = vrot.lane.b32.xlu0 %v560, 96
    %v1303 = vpop.permute.xlu0 %1302
    %1304 = vrot.lane.b32.xlu0 %v482, 96
    %v1305 = vpop.permute.xlu0 %1304
    %1306 = vrot.lane.b32.xlu0 %v561, 96
    %v1307 = vpop.permute.xlu0 %1306
    %1308 = vrot.lane.b32.xlu0 %v485, 96
    %v1309 = vpop.permute.xlu0 %1308
    %1310 = vrot.lane.b32.xlu0 %v562, 96
    %v1311 = vpop.permute.xlu0 %1310
    %1312 = vrot.lane.b32.xlu0 %v488, 96
    %v1313 = vpop.permute.xlu0 %1312
    %1314 = vrot.lane.b32.xlu0 %v563, 96
    %v1315 = vpop.permute.xlu0 %1314
    %1316 = vrot.lane.b32.xlu0 %v491, 96
    %v1317 = vpop.permute.xlu0 %1316
    %1318 = vrot.lane.b32.xlu0 %v564, 96
    %v1319 = vpop.permute.xlu0 %1318
    %1320 = vrot.lane.b32.xlu0 %v494, 96
    %v1321 = vpop.permute.xlu0 %1320
    %1322 = vrot.lane.b32.xlu0 %v565, 96
    %v1323 = vpop.permute.xlu0 %1322
    %1324 = vrot.lane.b32.xlu0 %v497, 96
    %v1325 = vpop.permute.xlu0 %1324
    %1326 = vrot.lane.b32.xlu0 %v566, 96
    %v1327 = vpop.permute.xlu0 %1326
    %1328 = vrot.lane.b32.xlu0 %v500, 96
    %v1329 = vpop.permute.xlu0 %1328
    %1330 = vrot.lane.b32.xlu0 %v550, 96
    %v1331 = vpop.permute.xlu0 %1330
    %1332 = vrot.lane.b32.xlu0 %v452, 96
    %v1333 = vpop.permute.xlu0 %1332
    %1366 = vrot.lane.b32.xlu0 %v629, 112
    %v1367 = vpop.permute.xlu0 %1366
    %1368 = vrot.lane.b32.xlu0 %v631, 112
    %v1369 = vpop.permute.xlu0 %1368
    %1370 = vrot.lane.b32.xlu0 %v634, 112
    %v1371 = vpop.permute.xlu0 %1370
    %1372 = vrot.lane.b32.xlu0 %v636, 112
    %v1373 = vpop.permute.xlu0 %1372
    %1374 = vrot.lane.b32.xlu0 %v639, 112
    %v1375 = vpop.permute.xlu0 %1374
    %1376 = vrot.lane.b32.xlu0 %v641, 112
    %v1377 = vpop.permute.xlu0 %1376
    %1378 = vrot.lane.b32.xlu0 %v644, 112
    %v1379 = vpop.permute.xlu0 %1378
    %1380 = vrot.lane.b32.xlu0 %v646, 112
    %v1381 = vpop.permute.xlu0 %1380
    %1382 = vrot.lane.b32.xlu0 %v649, 112
    %v1383 = vpop.permute.xlu0 %1382
    %1384 = vrot.lane.b32.xlu0 %v651, 112
    %v1385 = vpop.permute.xlu0 %1384
    %1386 = vrot.lane.b32.xlu0 %v654, 112
    %v1387 = vpop.permute.xlu0 %1386
    %1388 = vrot.lane.b32.xlu0 %v656, 112
    %v1389 = vpop.permute.xlu0 %1388
    %1390 = vrot.lane.b32.xlu0 %v659, 112
    %v1391 = vpop.permute.xlu0 %1390
    %1392 = vrot.lane.b32.xlu0 %v661, 112
    %v1393 = vpop.permute.xlu0 %1392
    %1394 = vrot.lane.b32.xlu0 %v664, 112
    %v1395 = vpop.permute.xlu0 %1394
    %1396 = vrot.lane.b32.xlu0 %v666, 112
    %v1397 = vpop.permute.xlu0 %1396
    %1398 = vrot.lane.b32.xlu0 %v669, 112
    %v1399 = vpop.permute.xlu0 %1398
    %1400 = vrot.lane.b32.xlu0 %v671, 112
    %v1401 = vpop.permute.xlu0 %1400
    %1402 = vrot.lane.b32.xlu0 %v674, 112
    %v1403 = vpop.permute.xlu0 %1402
    %1404 = vrot.lane.b32.xlu0 %v676, 112
    %v1405 = vpop.permute.xlu0 %1404
    %1406 = vrot.lane.b32.xlu0 %v679, 112
    %v1407 = vpop.permute.xlu0 %1406
    %1408 = vrot.lane.b32.xlu0 %v681, 112
    %v1409 = vpop.permute.xlu0 %1408
    %1410 = vrot.lane.b32.xlu0 %v684, 112
    %v1411 = vpop.permute.xlu0 %1410
    %1412 = vrot.lane.b32.xlu0 %v686, 112
    %v1413 = vpop.permute.xlu0 %1412
    %1414 = vrot.lane.b32.xlu0 %v689, 112
    %v1415 = vpop.permute.xlu0 %1414
    %1416 = vrot.lane.b32.xlu0 %v691, 112
    %v1417 = vpop.permute.xlu0 %1416
    %1418 = vrot.lane.b32.xlu0 %v694, 112
    %v1419 = vpop.permute.xlu0 %1418
    %1420 = vrot.lane.b32.xlu0 %v696, 112
    %v1421 = vpop.permute.xlu0 %1420
    %1422 = vrot.lane.b32.xlu0 %v1070, 112
    %v1423 = vpop.permute.xlu0 %1422
    %1424 = vrot.lane.b32.xlu0 %v1072, 112
    %v1425 = vpop.permute.xlu0 %1424
    %1426 = vrot.lane.b32.xlu0 %v619, 112
    %v1427 = vpop.permute.xlu0 %1426
    %1428 = vrot.lane.b32.xlu0 %v621, 112
    %v1429 = vpop.permute.xlu0 %1428
    %vm1494 = vcmask 130048
    %v1495 = vsel %vm1494, %v550, %v698
    %v1496 = vsel %vm1494, %v452, %v700
    %v1497 = vsel %vm1494, %v551, %v702
    %v1498 = vsel %vm1494, %v455, %v704
    %v1499 = vsel %vm1494, %v552, %v706
    %v1500 = vsel %vm1494, %v458, %v708
    %v1501 = vsel %vm1494, %v553, %v710
    %v1502 = vsel %vm1494, %v461, %v712
    %v1503 = vsel %vm1494, %v554, %v714
    %v1504 = vsel %vm1494, %v464, %v716
    %v1505 = vsel %vm1494, %v555, %v718
    %v1506 = vsel %vm1494, %v467, %v720
    %v1507 = vsel %vm1494, %v556, %v722
    %v1508 = vsel %vm1494, %v470, %v724
    %v1509 = vsel %vm1494, %v557, %v726
    %v1510 = vsel %vm1494, %v473, %v728
    %v1511 = vsel %vm1494, %v558, %v730
    %v1512 = vsel %vm1494, %v476, %v732
    %v1513 = vsel %vm1494, %v559, %v734
    %v1514 = vsel %vm1494, %v479, %v736
    %v1515 = vsel %vm1494, %v560, %v738
    %v1516 = vsel %vm1494, %v482, %v740
    %v1517 = vsel %vm1494, %v561, %v742
    %v1518 = vsel %vm1494, %v485, %v744
    %v1519 = vsel %vm1494, %v562, %v746
    %v1520 = vsel %vm1494, %v488, %v748
    %v1521 = vsel %vm1494, %v563, %v750
    %v1522 = vsel %vm1494, %v491, %v752
    %v1523 = vsel %vm1494, %v564, %v754
    %v1524 = vsel %vm1494, %v494, %v756
    %v1525 = vsel %vm1494, %v565, %v758
    %v1526 = vsel %vm1494, %v497, %v760
    %vm1527 = vcmask 261120
    %v1528 = vsel %vm1527, %v1495, %v875
    %v1529 = vsel %vm1527, %v1496, %v877
    %v1530 = vsel %vm1527, %v1497, %v879
    %v1531 = vsel %vm1527, %v1498, %v881
    %v1532 = vsel %vm1527, %v1499, %v883
    %v1533 = vsel %vm1527, %v1500, %v885
    %v1534 = vsel %vm1527, %v1501, %v887
    %v1535 = vsel %vm1527, %v1502, %v889
    %v1536 = vsel %vm1527, %v1503, %v891
    %v1537 = vsel %vm1527, %v1504, %v893
    %v1538 = vsel %vm1527, %v1505, %v895
    %v1539 = vsel %vm1527, %v1506, %v897
    %v1540 = vsel %vm1527, %v1507, %v899
    %v1541 = vsel %vm1527, %v1508, %v901
    %v1542 = vsel %vm1527, %v1509, %v903
    %v1543 = vsel %vm1527, %v1510, %v905
    %v1544 = vsel %vm1527, %v1511, %v907
    %v1545 = vsel %vm1527, %v1512, %v909
    %v1546 = vsel %vm1527, %v1513, %v911
    %v1547 = vsel %vm1527, %v1514, %v913
    %v1548 = vsel %vm1527, %v1515, %v915
    %v1549 = vsel %vm1527, %v1516, %v917
    %v1550 = vsel %vm1527, %v1517, %v919
    %v1551 = vsel %vm1527, %v1518, %v921
    %v1552 = vsel %vm1527, %v1519, %v923
    %v1553 = vsel %vm1527, %v1520, %v925
    %v1554 = vsel %vm1527, %v1521, %v927
    %v1555 = vsel %vm1527, %v1522, %v929
    %v1556 = vsel %vm1527, %v1523, %v931
    %v1557 = vsel %vm1527, %v1524, %v933
    %v1558 = vsel %vm1527, %v1525, %v935
    %v1559 = vsel %vm1527, %v1526, %v937
    %vm1560 = vcmask 392192
    %v1561 = vsel %vm1560, %v1528, %v972
    %v1562 = vsel %vm1560, %v1529, %v974
    %v1563 = vsel %vm1560, %v1530, %v976
    %v1564 = vsel %vm1560, %v1531, %v978
    %v1565 = vsel %vm1560, %v1532, %v980
    %v1566 = vsel %vm1560, %v1533, %v982
    %v1567 = vsel %vm1560, %v1534, %v984
    %v1568 = vsel %vm1560, %v1535, %v986
    %v1569 = vsel %vm1560, %v1536, %v988
    %v1570 = vsel %vm1560, %v1537, %v990
    %v1571 = vsel %vm1560, %v1538, %v992
    %v1572 = vsel %vm1560, %v1539, %v994
    %v1573 = vsel %vm1560, %v1540, %v996
    %v1574 = vsel %vm1560, %v1541, %v998
    %v1575 = vsel %vm1560, %v1542, %v1000
    %v1576 = vsel %vm1560, %v1543, %v1002
    %v1577 = vsel %vm1560, %v1544, %v1004
    %v1578 = vsel %vm1560, %v1545, %v1006
    %v1579 = vsel %vm1560, %v1546, %v1008
    %v1580 = vsel %vm1560, %v1547, %v1010
    %v1581 = vsel %vm1560, %v1548, %v1012
    %v1582 = vsel %vm1560, %v1549, %v1014
    %v1583 = vsel %vm1560, %v1550, %v1016
    %v1584 = vsel %vm1560, %v1551, %v1018
    %v1585 = vsel %vm1560, %v1552, %v1020
    %v1586 = vsel %vm1560, %v1553, %v1022
    %v1587 = vsel %vm1560, %v1554, %v1024
    %v1588 = vsel %vm1560, %v1555, %v1026
    %v1589 = vsel %vm1560, %v1556, %v1028
    %v1590 = vsel %vm1560, %v1557, %v1030
    %v1591 = vsel %vm1560, %v1558, %v1032
    %v1592 = vsel %vm1560, %v1559, %v1034
    %v1593 = vsel %vm189, %v1561, %v1074
    %v1594 = vsel %vm189, %v1562, %v1076
    %v1595 = vsel %vm189, %v1563, %v1078
    %v1596 = vsel %vm189, %v1564, %v1080
    %v1597 = vsel %vm189, %v1565, %v1082
    %v1598 = vsel %vm189, %v1566, %v1084
    %v1599 = vsel %vm189, %v1567, %v1086
    %v1600 = vsel %vm189, %v1568, %v1088
    %v1601 = vsel %vm189, %v1569, %v1090
    %v1602 = vsel %vm189, %v1570, %v1092
    %v1603 = vsel %vm189, %v1571, %v1094
    %v1604 = vsel %vm189, %v1572, %v1096
    %v1605 = vsel %vm189, %v1573, %v1098
    %v1606 = vsel %vm189, %v1574, %v1100
    %v1607 = vsel %vm189, %v1575, %v1102
    %v1608 = vsel %vm189, %v1576, %v1104
    %v1609 = vsel %vm189, %v1577, %v1106
    %v1610 = vsel %vm189, %v1578, %v1108
    %v1611 = vsel %vm189, %v1579, %v1110
    %v1612 = vsel %vm189, %v1580, %v1112
    %v1613 = vsel %vm189, %v1581, %v1114
    %v1614 = vsel %vm189, %v1582, %v1116
    %v1615 = vsel %vm189, %v1583, %v1118
    %v1616 = vsel %vm189, %v1584, %v1120
    %v1617 = vsel %vm189, %v1585, %v1122
    %v1618 = vsel %vm189, %v1586, %v1124
    %v1619 = vsel %vm189, %v1587, %v1126
    %v1620 = vsel %vm189, %v1588, %v1128
    %v1621 = vsel %vm189, %v1589, %v1130
    %v1622 = vsel %vm189, %v1590, %v1132
    %v1623 = vsel %vm189, %v1591, %v1134
    %v1624 = vsel %vm189, %v1592, %v1136
    %vm1625 = vcmask 654336
    %v1626 = vsel %vm1625, %v1593, %v1175
    %v1627 = vsel %vm1625, %v1594, %v1177
    %v1628 = vsel %vm1625, %v1595, %v1179
    %v1629 = vsel %vm1625, %v1596, %v1181
    %v1630 = vsel %vm1625, %v1597, %v1183
    %v1631 = vsel %vm1625, %v1598, %v1185
    %v1632 = vsel %vm1625, %v1599, %v1187
    %v1633 = vsel %vm1625, %v1600, %v1189
    %v1634 = vsel %vm1625, %v1601, %v1191
    %v1635 = vsel %vm1625, %v1602, %v1193
    %v1636 = vsel %vm1625, %v1603, %v1195
    %v1637 = vsel %vm1625, %v1604, %v1197
    %v1638 = vsel %vm1625, %v1605, %v1199
    %v1639 = vsel %vm1625, %v1606, %v1201
    %v1640 = vsel %vm1625, %v1607, %v1203
    %v1641 = vsel %vm1625, %v1608, %v1205
    %v1642 = vsel %vm1625, %v1609, %v1207
    %v1643 = vsel %vm1625, %v1610, %v1209
    %v1644 = vsel %vm1625, %v1611, %v1211
    %v1645 = vsel %vm1625, %v1612, %v1213
    %v1646 = vsel %vm1625, %v1613, %v1215
    %v1647 = vsel %vm1625, %v1614, %v1217
    %v1648 = vsel %vm1625, %v1615, %v1219
    %v1649 = vsel %vm1625, %v1616, %v1221
    %v1650 = vsel %vm1625, %v1617, %v1223
    %v1651 = vsel %vm1625, %v1618, %v1225
    %v1652 = vsel %vm1625, %v1619, %v1227
    %v1653 = vsel %vm1625, %v1620, %v1229
    %v1654 = vsel %vm1625, %v1621, %v1231
    %v1655 = vsel %vm1625, %v1622, %v1233
    %v1656 = vsel %vm1625, %v1623, %v1235
    %v1657 = vsel %vm1625, %v1624, %v1237
    %vm1658 = vcmask 785408
    %v1659 = vsel %vm1658, %v1626, %v1271
    %v1660 = vsel %vm1658, %v1627, %v1273
    %v1661 = vsel %vm1658, %v1628, %v1275
    %v1662 = vsel %vm1658, %v1629, %v1277
    %v1663 = vsel %vm1658, %v1630, %v1279
    %v1664 = vsel %vm1658, %v1631, %v1281
    %v1665 = vsel %vm1658, %v1632, %v1283
    %v1666 = vsel %vm1658, %v1633, %v1285
    %v1667 = vsel %vm1658, %v1634, %v1287
    %v1668 = vsel %vm1658, %v1635, %v1289
    %v1669 = vsel %vm1658, %v1636, %v1291
    %v1670 = vsel %vm1658, %v1637, %v1293
    %v1671 = vsel %vm1658, %v1638, %v1295
    %v1672 = vsel %vm1658, %v1639, %v1297
    %v1673 = vsel %vm1658, %v1640, %v1299
    %v1674 = vsel %vm1658, %v1641, %v1301
    %v1675 = vsel %vm1658, %v1642, %v1303
    %v1676 = vsel %vm1658, %v1643, %v1305
    %v1677 = vsel %vm1658, %v1644, %v1307
    %v1678 = vsel %vm1658, %v1645, %v1309
    %v1679 = vsel %vm1658, %v1646, %v1311
    %v1680 = vsel %vm1658, %v1647, %v1313
    %v1681 = vsel %vm1658, %v1648, %v1315
    %v1682 = vsel %vm1658, %v1649, %v1317
    %v1683 = vsel %vm1658, %v1650, %v1319
    %v1684 = vsel %vm1658, %v1651, %v1321
    %v1685 = vsel %vm1658, %v1652, %v1323
    %v1686 = vsel %vm1658, %v1653, %v1325
    %v1687 = vsel %vm1658, %v1654, %v1327
    %v1688 = vsel %vm1658, %v1655, %v1329
    %v1689 = vsel %vm1658, %v1656, %v1331
    %v1690 = vsel %vm1658, %v1657, %v1333
    %vm1691 = vcmask 916480
    %v1692 = vsel %vm1691, %v1659, %v1367
    %v1693 = vsel %vm1691, %v1660, %v1369
    %v1694 = vsel %vm1691, %v1661, %v1371
    %v1695 = vsel %vm1691, %v1662, %v1373
    %v1696 = vsel %vm1691, %v1663, %v1375
    %v1697 = vsel %vm1691, %v1664, %v1377
    %v1698 = vsel %vm1691, %v1665, %v1379
    %v1699 = vsel %vm1691, %v1666, %v1381
    %v1700 = vsel %vm1691, %v1667, %v1383
    %v1701 = vsel %vm1691, %v1668, %v1385
    %v1702 = vsel %vm1691, %v1669, %v1387
    %v1703 = vsel %vm1691, %v1670, %v1389
    %v1704 = vsel %vm1691, %v1671, %v1391
    %v1705 = vsel %vm1691, %v1672, %v1393
    %v1706 = vsel %vm1691, %v1673, %v1395
    %v1707 = vsel %vm1691, %v1674, %v1397
    %v1708 = vsel %vm1691, %v1675, %v1399
    %v1709 = vsel %vm1691, %v1676, %v1401
    %v1710 = vsel %vm1691, %v1677, %v1403
    %v1711 = vsel %vm1691, %v1678, %v1405
    %v1712 = vsel %vm1691, %v1679, %v1407
    %v1713 = vsel %vm1691, %v1680, %v1409
    %v1714 = vsel %vm1691, %v1681, %v1411
    %v1715 = vsel %vm1691, %v1682, %v1413
    %v1716 = vsel %vm1691, %v1683, %v1415
    %v1717 = vsel %vm1691, %v1684, %v1417
    %v1718 = vsel %vm1691, %v1685, %v1419
    %v1719 = vsel %vm1691, %v1686, %v1421
    %v1720 = vsel %vm1691, %v1687, %v1423
    %v1721 = vsel %vm1691, %v1688, %v1425
    %v1722 = vsel %vm1691, %v1689, %v1427
    %v1723 = vsel %vm1691, %v1690, %v1429
    %v1724 = vpack.c.bf16 %v1693, %v1692
    %v1725 = vpack.c.bf16 %v808, %v806
    %v1726 = vpack.c.bf16 %v1695, %v1694
    %v1727 = vpack.c.bf16 %v813, %v811
    %v1728 = vpack.c.bf16 %v1697, %v1696
    %v1729 = vpack.c.bf16 %v818, %v816
    %v1730 = vpack.c.bf16 %v1699, %v1698
    %v1731 = vpack.c.bf16 %v823, %v821
    %v1732 = vpack.c.bf16 %v1701, %v1700
    %v1733 = vpack.c.bf16 %v828, %v826
    %v1734 = vpack.c.bf16 %v1703, %v1702
    %v1735 = vpack.c.bf16 %v833, %v831
    %v1736 = vpack.c.bf16 %v1705, %v1704
    %v1737 = vpack.c.bf16 %v838, %v836
    %v1738 = vpack.c.bf16 %v1707, %v1706
    %v1739 = vpack.c.bf16 %v843, %v841
    %v1740 = vpack.c.bf16 %v1709, %v1708
    %v1741 = vpack.c.bf16 %v848, %v846
    %v1742 = vpack.c.bf16 %v1711, %v1710
    %v1743 = vpack.c.bf16 %v853, %v851
    %v1744 = vpack.c.bf16 %v1713, %v1712
    %v1745 = vpack.c.bf16 %v858, %v856
    %v1746 = vpack.c.bf16 %v1715, %v1714
    %v1747 = vpack.c.bf16 %v863, %v861
    %v1748 = vpack.c.bf16 %v1717, %v1716
    %v1749 = vpack.c.bf16 %v868, %v866
    %v1750 = vpack.c.bf16 %v1719, %v1718
    %v1751 = vpack.c.bf16 %v873, %v871
    %v1752 = vpack.c.bf16 %v1721, %v1720
    %v1753 = vpack.c.bf16 %v1173, %v1171
    %v1754 = vpack.c.bf16 %v1723, %v1722
    %v1755 = vpack.c.bf16 %v798, %v796
    %v1756 = vld [vmem:[%s4] sm:$0x1]
    %v1758 = vlaneseq
    %v1759 = vshrl.u32 %v1758, 7
    %v1760 = vsub.s32 0, %v1759
    %v1761 = vrot.slane %v1756, %v1760
    %v1781 = vunpack.c.l.b16 %v399
    %v1782 = vunpack.c.l.b16 %v400
    %v1783 = vunpack.c.l.b16 %v401
    %v1784 = vunpack.c.l.b16 %v402
    %v1785 = vunpack.c.l.b16 %v403
    %v1786 = vunpack.c.l.b16 %v404
    %v1787 = vunpack.c.l.b16 %v405
    %v1788 = vunpack.c.l.b16 %v406
    %v1789 = vunpack.c.l.b16 %v407
    %v1790 = vunpack.c.l.b16 %v408
    %v1791 = vunpack.c.l.b16 %v409
    %v1792 = vunpack.c.l.b16 %v410
    %v1793 = vunpack.c.l.b16 %v411
    %v1794 = vunpack.c.l.b16 %v412
    %v1795 = vunpack.c.l.b16 %v413
    %v1796 = vunpack.c.l.b16 %v414
    %v1797 = vunpack.c.l.b16 %v415
    %v1798 = vunpack.c.l.b16 %v416
    %v1799 = vpack.c.b16 %v1782, %v1781
    %v1800 = vpack.c.b16 %v1784, %v1783
    %v1801 = vpack.c.b16 %v1786, %v1785
    %v1802 = vpack.c.b16 %v1788, %v1787
    %v1803 = vpack.c.b16 %v1790, %v1789
    %v1804 = vpack.c.b16 %v1792, %v1791
    %v1805 = vpack.c.b16 %v1794, %v1793
    %v1806 = vpack.c.b16 %v1796, %v1795
    %v1807 = vpack.c.b16 %v1798, %v1797
    %v1818 = vsel %vm1494, %v1725, 0
    %v1821 = vsel %vm1494, %v1727, 0
    %v1824 = vsel %vm1494, %v1729, 0
    %v1827 = vsel %vm1494, %v1731, 0
    %v1830 = vsel %vm1494, %v1733, 0
    %v1833 = vsel %vm1494, %v1735, 0
    %v1836 = vsel %vm1494, %v1737, 0
    %v1839 = vsel %vm1494, %v1739, 0
    %v1842 = vsel %vm1494, %v1741, 0
    %v1845 = vsel %vm1494, %v1743, 0
    %v1848 = vsel %vm1494, %v1745, 0
    %v1851 = vsel %vm1494, %v1747, 0
    %v1854 = vsel %vm1494, %v1749, 0
    %v1857 = vsel %vm1494, %v1751, 0
    %v1860 = vsel %vm1494, %v1753, 0
    %v1863 = vsel %vm1494, %v1755, 0
    %1865 = vmatprep.subr.bf16.mxu0 0
    %1866 = vmatpush1.bf16.msra.mxu0 %v1806
    %1867 = vmatprep.subr.bf16.mxu0 0
    %1868 = vmatpush1.bf16.msra.mxu0 %v1805
    %1869 = vmatprep.subr.bf16.mxu0 0
    %1870 = vmatpush1.bf16.msra.mxu0 %v1804
    %1871 = vmatprep.subr.bf16.mxu0 0
    %1872 = vmatpush1.bf16.msra.mxu0 %v1803
    %1873 = vmatprep.subr.bf16.mxu0 0
    %1874 = vmatpush1.bf16.msra.mxu0 %v1802
    %1875 = vmatprep.subr.bf16.mxu0 0
    %1876 = vmatpush1.bf16.msra.mxu0 %v1801
    %1877 = vmatprep.subr.bf16.mxu0 0
    %1878 = vmatpush1.bf16.msra.mxu0 %v1800
    %1879 = vmatprep.subr.bf16.mxu0 0
    %1880 = vmatpush1.bf16.msra.mxu0 %v1799
    %1881 = vmatprep.subr.bf16.mxu0 0
    %1882 = vmatpush2.bf16.msra.mxu0 0
    %1883 = vmatprep.subr.bf16.mxu0 0
    %1884 = vmatpush2.bf16.msra.mxu0 0
    %1885 = vmatprep.subr.bf16.mxu0 0
    %1886 = vmatpush2.bf16.msra.mxu0 0
    %1887 = vmatprep.subr.bf16.mxu0 0
    %1888 = vmatpush2.bf16.msra.mxu0 0
    %1889 = vmatprep.subr.bf16.mxu0 0
    %1890 = vmatpush2.bf16.msra.mxu0 0
    %1891 = vmatprep.subr.bf16.mxu0 0
    %1892 = vmatpush2.bf16.msra.mxu0 0
    %1893 = vmatprep.subr.bf16.mxu0 0
    %1894 = vmatpush2.bf16.msra.mxu0 0
    %1895 = vmatprep.subr.bf16.mxu0 0
    %1896 = vmatpush2.bf16.msra.mxu0 %v1807
    %1897 = vmatprep.mubr.bf16.mxu0 %v1818
    %1898 = vmatmul.mubr.bf16.gmra.mxu0 %v1724
    %v1899 = vpop.f32.mrf.mxu0
    %v1900 = vadd.f32 %v1761, %v1899
    %v1901 = vpop.f32.mrf.mxu0
    %v1902 = vpop.f32.mrf.mxu0
    %v1903 = vadd.f32 %v1761, %v1902
    %v1904 = vpop.f32.mrf.mxu0
    %1905 = vmatprep.mubr.bf16.mxu0 %v1821
    %1906 = vmatmul.mubr.bf16.gmra.mxu0 %v1726
    %v1907 = vpop.f32.mrf.mxu0
    %v1908 = vadd.f32 %v1761, %v1907
    %v1909 = vpop.f32.mrf.mxu0
    %v1910 = vpop.f32.mrf.mxu0
    %v1911 = vadd.f32 %v1761, %v1910
    %v1912 = vpop.f32.mrf.mxu0
    %1913 = vmatprep.mubr.bf16.mxu0 %v1824
    %1914 = vmatmul.mubr.bf16.gmra.mxu0 %v1728
    %v1915 = vpop.f32.mrf.mxu0
    %v1916 = vadd.f32 %v1761, %v1915
    %v1917 = vpop.f32.mrf.mxu0
    %v1918 = vpop.f32.mrf.mxu0
    %v1919 = vadd.f32 %v1761, %v1918
    %v1920 = vpop.f32.mrf.mxu0
    %1921 = vmatprep.mubr.bf16.mxu0 %v1827
    %1922 = vmatmul.mubr.bf16.gmra.mxu0 %v1730
    %v1923 = vpop.f32.mrf.mxu0
    %v1924 = vadd.f32 %v1761, %v1923
    %v1925 = vpop.f32.mrf.mxu0
    %v1926 = vpop.f32.mrf.mxu0
    %v1927 = vadd.f32 %v1761, %v1926
    %v1928 = vpop.f32.mrf.mxu0
    %1929 = vmatprep.mubr.bf16.mxu0 %v1830
    %1930 = vmatmul.mubr.bf16.gmra.mxu0 %v1732
    %v1931 = vpop.f32.mrf.mxu0
    %v1932 = vadd.f32 %v1761, %v1931
    %v1933 = vpop.f32.mrf.mxu0
    %v1934 = vpop.f32.mrf.mxu0
    %v1935 = vadd.f32 %v1761, %v1934
    %v1936 = vpop.f32.mrf.mxu0
    %1937 = vmatprep.mubr.bf16.mxu0 %v1833
    %1938 = vmatmul.mubr.bf16.gmra.mxu0 %v1734
    %v1939 = vpop.f32.mrf.mxu0
    %v1940 = vadd.f32 %v1761, %v1939
    %v1941 = vpop.f32.mrf.mxu0
    %v1942 = vpop.f32.mrf.mxu0
    %v1943 = vadd.f32 %v1761, %v1942
    %v1944 = vpop.f32.mrf.mxu0
    %1945 = vmatprep.mubr.bf16.mxu0 %v1836
    %1946 = vmatmul.mubr.bf16.gmra.mxu0 %v1736
    %v1947 = vpop.f32.mrf.mxu0
    %v1948 = vadd.f32 %v1761, %v1947
    %v1949 = vpop.f32.mrf.mxu0
    %v1950 = vpop.f32.mrf.mxu0
    %v1951 = vadd.f32 %v1761, %v1950
    %v1952 = vpop.f32.mrf.mxu0
    %1953 = vmatprep.mubr.bf16.mxu0 %v1839
    %1954 = vmatmul.mubr.bf16.gmra.mxu0 %v1738
    %v1955 = vpop.f32.mrf.mxu0
    %v1956 = vadd.f32 %v1761, %v1955
    %v1957 = vpop.f32.mrf.mxu0
    %v1958 = vpop.f32.mrf.mxu0
    %v1959 = vadd.f32 %v1761, %v1958
    %v1960 = vpop.f32.mrf.mxu0
    %1961 = vmatprep.mubr.bf16.mxu0 %v1842
    %1962 = vmatmul.mubr.bf16.gmra.mxu0 %v1740
    %v1963 = vpop.f32.mrf.mxu0
    %v1964 = vadd.f32 %v1761, %v1963
    %v1965 = vpop.f32.mrf.mxu0
    %v1966 = vpop.f32.mrf.mxu0
    %v1967 = vadd.f32 %v1761, %v1966
    %v1968 = vpop.f32.mrf.mxu0
    %1969 = vmatprep.mubr.bf16.mxu0 %v1845
    %1970 = vmatmul.mubr.bf16.gmra.mxu0 %v1742
    %v1971 = vpop.f32.mrf.mxu0
    %v1972 = vadd.f32 %v1761, %v1971
    %v1973 = vpop.f32.mrf.mxu0
    %v1974 = vpop.f32.mrf.mxu0
    %v1975 = vadd.f32 %v1761, %v1974
    %v1976 = vpop.f32.mrf.mxu0
    %1977 = vmatprep.mubr.bf16.mxu0 %v1848
    %1978 = vmatmul.mubr.bf16.gmra.mxu0 %v1744
    %v1979 = vpop.f32.mrf.mxu0
    %v1980 = vadd.f32 %v1761, %v1979
    %v1981 = vpop.f32.mrf.mxu0
    %v1982 = vpop.f32.mrf.mxu0
    %v1983 = vadd.f32 %v1761, %v1982
    %v1984 = vpop.f32.mrf.mxu0
    %1985 = vmatprep.mubr.bf16.mxu0 %v1851
    %1986 = vmatmul.mubr.bf16.gmra.mxu0 %v1746
    %v1987 = vpop.f32.mrf.mxu0
    %v1988 = vadd.f32 %v1761, %v1987
    %v1989 = vpop.f32.mrf.mxu0
    %v1990 = vpop.f32.mrf.mxu0
    %v1991 = vadd.f32 %v1761, %v1990
    %v1992 = vpop.f32.mrf.mxu0
    %1993 = vmatprep.mubr.bf16.mxu0 %v1854
    %1994 = vmatmul.mubr.bf16.gmra.mxu0 %v1748
    %v1995 = vpop.f32.mrf.mxu0
    %v1996 = vadd.f32 %v1761, %v1995
    %v1997 = vpop.f32.mrf.mxu0
    %v1998 = vpop.f32.mrf.mxu0
    %v1999 = vadd.f32 %v1761, %v1998
    %v2000 = vpop.f32.mrf.mxu0
    %2001 = vmatprep.mubr.bf16.mxu0 %v1857
    %2002 = vmatmul.mubr.bf16.gmra.mxu0 %v1750
    %v2003 = vpop.f32.mrf.mxu0
    %v2004 = vadd.f32 %v1761, %v2003
    %v2005 = vpop.f32.mrf.mxu0
    %v2006 = vpop.f32.mrf.mxu0
    %v2007 = vadd.f32 %v1761, %v2006
    %v2008 = vpop.f32.mrf.mxu0
    %2009 = vmatprep.mubr.bf16.mxu0 %v1860
    %2010 = vmatmul.mubr.bf16.gmra.mxu0 %v1752
    %v2011 = vpop.f32.mrf.mxu0
    %v2012 = vadd.f32 %v1761, %v2011
    %v2013 = vpop.f32.mrf.mxu0
    %v2014 = vpop.f32.mrf.mxu0
    %v2015 = vadd.f32 %v1761, %v2014
    %v2016 = vpop.f32.mrf.mxu0
    %2017 = vmatprep.mubr.bf16.mxu0 %v1863
    %2018 = vmatmul.mubr.bf16.gmra.mxu0 %v1754
    %v2019 = vpop.f32.mrf.mxu0
    %v2020 = vadd.f32 %v1761, %v2019
    %v2021 = vpop.f32.mrf.mxu0
    %v2022 = vpop.f32.mrf.mxu0
    %v2023 = vadd.f32 %v1761, %v2022
    %v2024 = vpop.f32.mrf.mxu0
    %2025 = vdwg.mxu0
    %v2026 = vld [vmem:[%s2] sm:$0xff]
    %v2027 = vld [vmem:[%s2 + $0x8] sm:$0xff]
    %v2028 = vld [vmem:[%s2 + $0x10] sm:$0xff]
    %v2029 = vld [vmem:[%s2 + $0x18] sm:$0xff]
    %v2030 = vld [vmem:[%s2 + $0x20] sm:$0xff]
    %v2031 = vld [vmem:[%s2 + $0x28] sm:$0xff]
    %v2032 = vld [vmem:[%s2 + $0x30] sm:$0xff]
    %v2033 = vld [vmem:[%s2 + $0x38] sm:$0xff]
    %v2034 = vld [vmem:[%s2 + $0x40] sm:$0xff]
    %v2035 = vld [vmem:[%s2 + $0x48] sm:$0xff]
    %v2036 = vld [vmem:[%s2 + $0x50] sm:$0xff]
    %v2037 = vld [vmem:[%s2 + $0x58] sm:$0xff]
    %v2038 = vld [vmem:[%s2 + $0x60] sm:$0xff]
    %v2039 = vld [vmem:[%s2 + $0x68] sm:$0xff]
    %v2040 = vld [vmem:[%s2 + $0x70] sm:$0xff]
    %v2041 = vld [vmem:[%s2 + $0x78] sm:$0xff]
    %v2042 = vld [vmem:[%s2 + $0x80] sm:$0xff]
    %v2043 = vld [vmem:[%s2 + $0x88] sm:$0xff]
    %v2044 = vld [vmem:[%s2 + $0x90] sm:$0xff]
    %v2045 = vld [vmem:[%s2 + $0x98] sm:$0xff]
    %v2046 = vld [vmem:[%s2 + $0xa0] sm:$0xff]
    %v2047 = vld [vmem:[%s2 + $0xa8] sm:$0xff]
    %v2048 = vld [vmem:[%s2 + $0xb0] sm:$0xff]
    %v2049 = vld [vmem:[%s2 + $0xb8] sm:$0xff]
    %v2050 = vld [vmem:[%s2 + $0xc0] sm:$0xff]
    %v2051 = vld [vmem:[%s2 + $0xc8] sm:$0xff]
    %v2052 = vld [vmem:[%s2 + $0xd0] sm:$0xff]
    %v2053 = vld [vmem:[%s2 + $0xd8] sm:$0xff]
    %v2054 = vld [vmem:[%s2 + $0xe0] sm:$0xff]
    %v2055 = vld [vmem:[%s2 + $0xe8] sm:$0xff]
    %v2056 = vld [vmem:[%s2 + $0xf0] sm:$0xff]
    %v2057 = vld [vmem:[%s2 + $0xf8] sm:$0xff]
    %2090 = vrot.lane.b32.xlu0 %v2026, 8
    %v2091 = vpop.permute.xlu0 %2090
    %2092 = vrot.lane.b32.xlu0 %v2027, 8
    %v2093 = vpop.permute.xlu0 %2092
    %2094 = vrot.lane.b32.xlu0 %v2028, 8
    %v2095 = vpop.permute.xlu0 %2094
    %2096 = vrot.lane.b32.xlu0 %v2029, 8
    %v2097 = vpop.permute.xlu0 %2096
    %2098 = vrot.lane.b32.xlu0 %v2030, 8
    %v2099 = vpop.permute.xlu0 %2098
    %2100 = vrot.lane.b32.xlu0 %v2031, 8
    %v2101 = vpop.permute.xlu0 %2100
    %2102 = vrot.lane.b32.xlu0 %v2032, 8
    %v2103 = vpop.permute.xlu0 %2102
    %2104 = vrot.lane.b32.xlu0 %v2033, 8
    %v2105 = vpop.permute.xlu0 %2104
    %2106 = vrot.lane.b32.xlu0 %v2034, 8
    %v2107 = vpop.permute.xlu0 %2106
    %2108 = vrot.lane.b32.xlu0 %v2035, 8
    %v2109 = vpop.permute.xlu0 %2108
    %2110 = vrot.lane.b32.xlu0 %v2036, 8
    %v2111 = vpop.permute.xlu0 %2110
    %2112 = vrot.lane.b32.xlu0 %v2037, 8
    %v2113 = vpop.permute.xlu0 %2112
    %2114 = vrot.lane.b32.xlu0 %v2038, 8
    %v2115 = vpop.permute.xlu0 %2114
    %2116 = vrot.lane.b32.xlu0 %v2039, 8
    %v2117 = vpop.permute.xlu0 %2116
    %2118 = vrot.lane.b32.xlu0 %v2040, 8
    %v2119 = vpop.permute.xlu0 %2118
    %2120 = vrot.lane.b32.xlu0 %v2041, 8
    %v2121 = vpop.permute.xlu0 %2120
    %2122 = vrot.lane.b32.xlu0 %v2042, 8
    %v2123 = vpop.permute.xlu0 %2122
    %2124 = vrot.lane.b32.xlu0 %v2043, 8
    %v2125 = vpop.permute.xlu0 %2124
    %2126 = vrot.lane.b32.xlu0 %v2044, 8
    %v2127 = vpop.permute.xlu0 %2126
    %2128 = vrot.lane.b32.xlu0 %v2045, 8
    %v2129 = vpop.permute.xlu0 %2128
    %2130 = vrot.lane.b32.xlu0 %v2046, 8
    %v2131 = vpop.permute.xlu0 %2130
    %2132 = vrot.lane.b32.xlu0 %v2047, 8
    %v2133 = vpop.permute.xlu0 %2132
    %2134 = vrot.lane.b32.xlu0 %v2048, 8
    %v2135 = vpop.permute.xlu0 %2134
    %2136 = vrot.lane.b32.xlu0 %v2049, 8
    %v2137 = vpop.permute.xlu0 %2136
    %2138 = vrot.lane.b32.xlu0 %v2050, 8
    %v2139 = vpop.permute.xlu0 %2138
    %2140 = vrot.lane.b32.xlu0 %v2051, 8
    %v2141 = vpop.permute.xlu0 %2140
    %2142 = vrot.lane.b32.xlu0 %v2052, 8
    %v2143 = vpop.permute.xlu0 %2142
    %2144 = vrot.lane.b32.xlu0 %v2053, 8
    %v2145 = vpop.permute.xlu0 %2144
    %2146 = vrot.lane.b32.xlu0 %v2054, 8
    %v2147 = vpop.permute.xlu0 %2146
    %2148 = vrot.lane.b32.xlu0 %v2055, 8
    %v2149 = vpop.permute.xlu0 %2148
    %2150 = vrot.lane.b32.xlu0 %v2056, 8
    %v2151 = vpop.permute.xlu0 %2150
    %2152 = vrot.lane.b32.xlu0 %v2057, 8
    %v2153 = vpop.permute.xlu0 %2152
    %vm2186 = vcmask 64512
    %v2187 = vsel %vm2186, %v1900, %v2091
    %v2188 = vsel %vm2186, %v1903, %v2093
    %v2189 = vsel %vm2186, %v1908, %v2095
    %v2190 = vsel %vm2186, %v1911, %v2097
    %v2191 = vsel %vm2186, %v1916, %v2099
    %v2192 = vsel %vm2186, %v1919, %v2101
    %v2193 = vsel %vm2186, %v1924, %v2103
    %v2194 = vsel %vm2186, %v1927, %v2105
    %v2195 = vsel %vm2186, %v1932, %v2107
    %v2196 = vsel %vm2186, %v1935, %v2109
    %v2197 = vsel %vm2186, %v1940, %v2111
    %v2198 = vsel %vm2186, %v1943, %v2113
    %v2199 = vsel %vm2186, %v1948, %v2115
    %v2200 = vsel %vm2186, %v1951, %v2117
    %v2201 = vsel %vm2186, %v1956, %v2119
    %v2202 = vsel %vm2186, %v1959, %v2121
    %v2203 = vsel %vm2186, %v1964, %v2123
    %v2204 = vsel %vm2186, %v1967, %v2125
    %v2205 = vsel %vm2186, %v1972, %v2127
    %v2206 = vsel %vm2186, %v1975, %v2129
    %v2207 = vsel %vm2186, %v1980, %v2131
    %v2208 = vsel %vm2186, %v1983, %v2133
    %v2209 = vsel %vm2186, %v1988, %v2135
    %v2210 = vsel %vm2186, %v1991, %v2137
    %v2211 = vsel %vm2186, %v1996, %v2139
    %v2212 = vsel %vm2186, %v1999, %v2141
    %v2213 = vsel %vm2186, %v2004, %v2143
    %v2214 = vsel %vm2186, %v2007, %v2145
    %v2215 = vsel %vm2186, %v2012, %v2147
    %v2216 = vsel %vm2186, %v2015, %v2149
    %v2217 = vsel %vm2186, %v2020, %v2151
    %v2218 = vsel %vm2186, %v2023, %v2153
    %v2219 = vld [vmem:[%s5] sm:$0xf]
    %v2220 = vld [vmem:[%s5 + $0x4] sm:$0xf]
    %v2221 = vld [vmem:[%s5 + $0x8] sm:$0xf]
    %v2222 = vld [vmem:[%s5 + $0xc] sm:$0xf]
    %v2223 = vld [vmem:[%s5 + $0x10] sm:$0xf]
    %v2224 = vld [vmem:[%s5 + $0x14] sm:$0xf]
    %v2225 = vld [vmem:[%s5 + $0x18] sm:$0xf]
    %v2226 = vld [vmem:[%s5 + $0x1c] sm:$0xf]
    %v2227 = vld [vmem:[%s5 + $0x20] sm:$0xf]
    %v2228 = vld [vmem:[%s5 + $0x24] sm:$0xf]
    %v2229 = vld [vmem:[%s5 + $0x28] sm:$0xf]
    %v2230 = vld [vmem:[%s5 + $0x2c] sm:$0xf]
    %v2231 = vld [vmem:[%s5 + $0x30] sm:$0xf]
    %v2232 = vld [vmem:[%s5 + $0x34] sm:$0xf]
    %v2233 = vld [vmem:[%s5 + $0x38] sm:$0xf]
    %v2234 = vld [vmem:[%s5 + $0x3c] sm:$0xf]
    %v2235 = vld [vmem:[%s5 + $0x40] sm:$0xf]
    %v2236 = vld [vmem:[%s5 + $0x44] sm:$0xf]
    %v2269 = vrot.slane %v2187, 7
    %v2270 = vrot.slane %v2188, 7
    %v2271 = vsel %vm450, %v2269, %v2270
    %v2272 = vrot.slane %v2189, 7
    %v2273 = vrot.slane %v2190, 7
    %v2274 = vsel %vm450, %v2272, %v2273
    %v2275 = vrot.slane %v2191, 7
    %v2276 = vrot.slane %v2192, 7
    %v2277 = vsel %vm450, %v2275, %v2276
    %v2278 = vrot.slane %v2193, 7
    %v2279 = vrot.slane %v2194, 7
    %v2280 = vsel %vm450, %v2278, %v2279
    %v2281 = vrot.slane %v2195, 7
    %v2282 = vrot.slane %v2196, 7
    %v2283 = vsel %vm450, %v2281, %v2282
    %v2284 = vrot.slane %v2197, 7
    %v2285 = vrot.slane %v2198, 7
    %v2286 = vsel %vm450, %v2284, %v2285
    %v2287 = vrot.slane %v2199, 7
    %v2288 = vrot.slane %v2200, 7
    %v2289 = vsel %vm450, %v2287, %v2288
    %v2290 = vrot.slane %v2201, 7
    %v2291 = vrot.slane %v2202, 7
    %v2292 = vsel %vm450, %v2290, %v2291
    %v2293 = vrot.slane %v2203, 7
    %v2294 = vrot.slane %v2204, 7
    %v2295 = vsel %vm450, %v2293, %v2294
    %v2296 = vrot.slane %v2205, 7
    %v2297 = vrot.slane %v2206, 7
    %v2298 = vsel %vm450, %v2296, %v2297
    %v2299 = vrot.slane %v2207, 7
    %v2300 = vrot.slane %v2208, 7
    %v2301 = vsel %vm450, %v2299, %v2300
    %v2302 = vrot.slane %v2209, 7
    %v2303 = vrot.slane %v2210, 7
    %v2304 = vsel %vm450, %v2302, %v2303
    %v2305 = vrot.slane %v2211, 7
    %v2306 = vrot.slane %v2212, 7
    %v2307 = vsel %vm450, %v2305, %v2306
    %v2308 = vrot.slane %v2213, 7
    %v2309 = vrot.slane %v2214, 7
    %v2310 = vsel %vm450, %v2308, %v2309
    %v2311 = vrot.slane %v2215, 7
    %v2312 = vrot.slane %v2216, 7
    %v2313 = vsel %vm450, %v2311, %v2312
    %v2314 = vrot.slane %v2217, 7
    %v2315 = vrot.slane %v2218, 7
    %v2316 = vsel %vm450, %v2314, %v2315
    %v2364 = vsel %vm450, 0.0, %v2269
    %v2365 = vsel %vm450, 0.0, %v2272
    %v2366 = vsel %vm450, 0.0, %v2275
    %v2367 = vsel %vm450, 0.0, %v2278
    %v2368 = vsel %vm450, 0.0, %v2281
    %v2369 = vsel %vm450, 0.0, %v2284
    %v2370 = vsel %vm450, 0.0, %v2287
    %v2371 = vsel %vm450, 0.0, %v2290
    %v2372 = vsel %vm450, 0.0, %v2293
    %v2373 = vsel %vm450, 0.0, %v2296
    %v2374 = vsel %vm450, 0.0, %v2299
    %v2375 = vsel %vm450, 0.0, %v2302
    %v2376 = vsel %vm450, 0.0, %v2305
    %v2377 = vsel %vm450, 0.0, %v2308
    %v2378 = vsel %vm450, 0.0, %v2311
    %v2379 = vsel %vm450, 0.0, %v2314
    %v2380 = vsel %vm450, %v2270, 0.0
    %v2381 = vsel %vm450, %v2273, 0.0
    %v2382 = vsel %vm450, %v2276, 0.0
    %v2383 = vsel %vm450, %v2279, 0.0
    %v2384 = vsel %vm450, %v2282, 0.0
    %v2385 = vsel %vm450, %v2285, 0.0
    %v2386 = vsel %vm450, %v2288, 0.0
    %v2387 = vsel %vm450, %v2291, 0.0
    %v2388 = vsel %vm450, %v2294, 0.0
    %v2389 = vsel %vm450, %v2297, 0.0
    %v2390 = vsel %vm450, %v2300, 0.0
    %v2391 = vsel %vm450, %v2303, 0.0
    %v2392 = vsel %vm450, %v2306, 0.0
    %v2393 = vsel %vm450, %v2309, 0.0
    %v2394 = vsel %vm450, %v2312, 0.0
    %v2395 = vsel %vm450, %v2315, 0.0
    %v2426 = vrot.slane %v2364, 1
    %v2427 = vrot.slane %v2271, 1
    %v2428 = vsel %vm616, %v2426, %v2427
    %v2429 = vrot.slane %v2380, 1
    %v2430 = vsel %vm616, %v2427, %v2429
    %v2431 = vrot.slane %v2365, 1
    %v2432 = vrot.slane %v2274, 1
    %v2433 = vsel %vm616, %v2431, %v2432
    %v2434 = vrot.slane %v2381, 1
    %v2435 = vsel %vm616, %v2432, %v2434
    %v2436 = vrot.slane %v2366, 1
    %v2437 = vrot.slane %v2277, 1
    %v2438 = vsel %vm616, %v2436, %v2437
    %v2439 = vrot.slane %v2382, 1
    %v2440 = vsel %vm616, %v2437, %v2439
    %v2441 = vrot.slane %v2367, 1
    %v2442 = vrot.slane %v2280, 1
    %v2443 = vsel %vm616, %v2441, %v2442
    %v2444 = vrot.slane %v2383, 1
    %v2445 = vsel %vm616, %v2442, %v2444
    %v2446 = vrot.slane %v2368, 1
    %v2447 = vrot.slane %v2283, 1
    %v2448 = vsel %vm616, %v2446, %v2447
    %v2449 = vrot.slane %v2384, 1
    %v2450 = vsel %vm616, %v2447, %v2449
    %v2451 = vrot.slane %v2369, 1
    %v2452 = vrot.slane %v2286, 1
    %v2453 = vsel %vm616, %v2451, %v2452
    %v2454 = vrot.slane %v2385, 1
    %v2455 = vsel %vm616, %v2452, %v2454
    %v2456 = vrot.slane %v2370, 1
    %v2457 = vrot.slane %v2289, 1
    %v2458 = vsel %vm616, %v2456, %v2457
    %v2459 = vrot.slane %v2386, 1
    %v2460 = vsel %vm616, %v2457, %v2459
    %v2461 = vrot.slane %v2371, 1
    %v2462 = vrot.slane %v2292, 1
    %v2463 = vsel %vm616, %v2461, %v2462
    %v2464 = vrot.slane %v2387, 1
    %v2465 = vsel %vm616, %v2462, %v2464
    %v2466 = vrot.slane %v2372, 1
    %v2467 = vrot.slane %v2295, 1
    %v2468 = vsel %vm616, %v2466, %v2467
    %v2469 = vrot.slane %v2388, 1
    %v2470 = vsel %vm616, %v2467, %v2469
    %v2471 = vrot.slane %v2373, 1
    %v2472 = vrot.slane %v2298, 1
    %v2473 = vsel %vm616, %v2471, %v2472
    %v2474 = vrot.slane %v2389, 1
    %v2475 = vsel %vm616, %v2472, %v2474
    %v2476 = vrot.slane %v2374, 1
    %v2477 = vrot.slane %v2301, 1
    %v2478 = vsel %vm616, %v2476, %v2477
    %v2479 = vrot.slane %v2390, 1
    %v2480 = vsel %vm616, %v2477, %v2479
    %v2481 = vrot.slane %v2375, 1
    %v2482 = vrot.slane %v2304, 1
    %v2483 = vsel %vm616, %v2481, %v2482
    %v2484 = vrot.slane %v2391, 1
    %v2485 = vsel %vm616, %v2482, %v2484
    %v2486 = vrot.slane %v2376, 1
    %v2487 = vrot.slane %v2307, 1
    %v2488 = vsel %vm616, %v2486, %v2487
    %v2489 = vrot.slane %v2392, 1
    %v2490 = vsel %vm616, %v2487, %v2489
    %v2491 = vrot.slane %v2377, 1
    %v2492 = vrot.slane %v2310, 1
    %v2493 = vsel %vm616, %v2491, %v2492
    %v2494 = vrot.slane %v2393, 1
    %v2495 = vsel %vm616, %v2492, %v2494
    %v2496 = vrot.slane %v2378, 1
    %v2497 = vrot.slane %v2313, 1
    %v2498 = vsel %vm616, %v2496, %v2497
    %v2499 = vrot.slane %v2394, 1
    %v2500 = vsel %vm616, %v2497, %v2499
    %2501 = vrot.lane.b32.xlu0 %v2428, 16
    %v2502 = vpop.permute.xlu0 %2501
    %2503 = vrot.lane.b32.xlu0 %v2430, 16
    %v2504 = vpop.permute.xlu0 %2503
    %2505 = vrot.lane.b32.xlu0 %v2433, 16
    %v2506 = vpop.permute.xlu0 %2505
    %2507 = vrot.lane.b32.xlu0 %v2435, 16
    %v2508 = vpop.permute.xlu0 %2507
    %2509 = vrot.lane.b32.xlu0 %v2438, 16
    %v2510 = vpop.permute.xlu0 %2509
    %2511 = vrot.lane.b32.xlu0 %v2440, 16
    %v2512 = vpop.permute.xlu0 %2511
    %2513 = vrot.lane.b32.xlu0 %v2443, 16
    %v2514 = vpop.permute.xlu0 %2513
    %2515 = vrot.lane.b32.xlu0 %v2445, 16
    %v2516 = vpop.permute.xlu0 %2515
    %2517 = vrot.lane.b32.xlu0 %v2448, 16
    %v2518 = vpop.permute.xlu0 %2517
    %2519 = vrot.lane.b32.xlu0 %v2450, 16
    %v2520 = vpop.permute.xlu0 %2519
    %2521 = vrot.lane.b32.xlu0 %v2453, 16
    %v2522 = vpop.permute.xlu0 %2521
    %2523 = vrot.lane.b32.xlu0 %v2455, 16
    %v2524 = vpop.permute.xlu0 %2523
    %2525 = vrot.lane.b32.xlu0 %v2458, 16
    %v2526 = vpop.permute.xlu0 %2525
    %2527 = vrot.lane.b32.xlu0 %v2460, 16
    %v2528 = vpop.permute.xlu0 %2527
    %2529 = vrot.lane.b32.xlu0 %v2463, 16
    %v2530 = vpop.permute.xlu0 %2529
    %2531 = vrot.lane.b32.xlu0 %v2465, 16
    %v2532 = vpop.permute.xlu0 %2531
    %2533 = vrot.lane.b32.xlu0 %v2468, 16
    %v2534 = vpop.permute.xlu0 %2533
    %2535 = vrot.lane.b32.xlu0 %v2470, 16
    %v2536 = vpop.permute.xlu0 %2535
    %2537 = vrot.lane.b32.xlu0 %v2473, 16
    %v2538 = vpop.permute.xlu0 %2537
    %2539 = vrot.lane.b32.xlu0 %v2475, 16
    %v2540 = vpop.permute.xlu0 %2539
    %2541 = vrot.lane.b32.xlu0 %v2478, 16
    %v2542 = vpop.permute.xlu0 %2541
    %2543 = vrot.lane.b32.xlu0 %v2480, 16
    %v2544 = vpop.permute.xlu0 %2543
    %2545 = vrot.lane.b32.xlu0 %v2483, 16
    %v2546 = vpop.permute.xlu0 %2545
    %2547 = vrot.lane.b32.xlu0 %v2485, 16
    %v2548 = vpop.permute.xlu0 %2547
    %2549 = vrot.lane.b32.xlu0 %v2488, 16
    %v2550 = vpop.permute.xlu0 %2549
    %2551 = vrot.lane.b32.xlu0 %v2490, 16
    %v2552 = vpop.permute.xlu0 %2551
    %2553 = vrot.lane.b32.xlu0 %v2493, 16
    %v2554 = vpop.permute.xlu0 %2553
    %2555 = vrot.lane.b32.xlu0 %v2495, 16
    %v2556 = vpop.permute.xlu0 %2555
    %2557 = vrot.lane.b32.xlu0 %v2498, 16
    %v2558 = vpop.permute.xlu0 %2557
    %2559 = vrot.lane.b32.xlu0 %v2500, 16
    %v2560 = vpop.permute.xlu0 %2559
    %v2591 = vrot.slane %v2364, 2
    %v2592 = vrot.slane %v2271, 2
    %v2593 = vsel %vm793, %v2591, %v2592
    %v2594 = vrot.slane %v2380, 2
    %v2595 = vsel %vm793, %v2592, %v2594
    %v2596 = vrot.slane %v2365, 2
    %v2597 = vrot.slane %v2274, 2
    %v2598 = vsel %vm793, %v2596, %v2597
    %v2599 = vrot.slane %v2381, 2
    %v2600 = vsel %vm793, %v2597, %v2599
    %v2601 = vrot.slane %v2366, 2
    %v2602 = vrot.slane %v2277, 2
    %v2603 = vsel %vm793, %v2601, %v2602
    %v2604 = vrot.slane %v2382, 2
    %v2605 = vsel %vm793, %v2602, %v2604
    %v2606 = vrot.slane %v2367, 2
    %v2607 = vrot.slane %v2280, 2
    %v2608 = vsel %vm793, %v2606, %v2607
    %v2609 = vrot.slane %v2383, 2
    %v2610 = vsel %vm793, %v2607, %v2609
    %v2611 = vrot.slane %v2368, 2
    %v2612 = vrot.slane %v2283, 2
    %v2613 = vsel %vm793, %v2611, %v2612
    %v2614 = vrot.slane %v2384, 2
    %v2615 = vsel %vm793, %v2612, %v2614
    %v2616 = vrot.slane %v2369, 2
    %v2617 = vrot.slane %v2286, 2
    %v2618 = vsel %vm793, %v2616, %v2617
    %v2619 = vrot.slane %v2385, 2
    %v2620 = vsel %vm793, %v2617, %v2619
    %v2621 = vrot.slane %v2370, 2
    %v2622 = vrot.slane %v2289, 2
    %v2623 = vsel %vm793, %v2621, %v2622
    %v2624 = vrot.slane %v2386, 2
    %v2625 = vsel %vm793, %v2622, %v2624
    %v2626 = vrot.slane %v2371, 2
    %v2627 = vrot.slane %v2292, 2
    %v2628 = vsel %vm793, %v2626, %v2627
    %v2629 = vrot.slane %v2387, 2
    %v2630 = vsel %vm793, %v2627, %v2629
    %v2631 = vrot.slane %v2372, 2
    %v2632 = vrot.slane %v2295, 2
    %v2633 = vsel %vm793, %v2631, %v2632
    %v2634 = vrot.slane %v2388, 2
    %v2635 = vsel %vm793, %v2632, %v2634
    %v2636 = vrot.slane %v2373, 2
    %v2637 = vrot.slane %v2298, 2
    %v2638 = vsel %vm793, %v2636, %v2637
    %v2639 = vrot.slane %v2389, 2
    %v2640 = vsel %vm793, %v2637, %v2639
    %v2641 = vrot.slane %v2374, 2
    %v2642 = vrot.slane %v2301, 2
    %v2643 = vsel %vm793, %v2641, %v2642
    %v2644 = vrot.slane %v2390, 2
    %v2645 = vsel %vm793, %v2642, %v2644
    %v2646 = vrot.slane %v2375, 2
    %v2647 = vrot.slane %v2304, 2
    %v2648 = vsel %vm793, %v2646, %v2647
    %v2649 = vrot.slane %v2391, 2
    %v2650 = vsel %vm793, %v2647, %v2649
    %v2651 = vrot.slane %v2376, 2
    %v2652 = vrot.slane %v2307, 2
    %v2653 = vsel %vm793, %v2651, %v2652
    %v2654 = vrot.slane %v2392, 2
    %v2655 = vsel %vm793, %v2652, %v2654
    %v2656 = vrot.slane %v2377, 2
    %v2657 = vrot.slane %v2310, 2
    %v2658 = vsel %vm793, %v2656, %v2657
    %v2659 = vrot.slane %v2393, 2
    %v2660 = vsel %vm793, %v2657, %v2659
    %v2661 = vrot.slane %v2378, 2
    %v2662 = vrot.slane %v2313, 2
    %v2663 = vsel %vm793, %v2661, %v2662
    %v2664 = vrot.slane %v2394, 2
    %v2665 = vsel %vm793, %v2662, %v2664
    %2666 = vrot.lane.b32.xlu0 %v2593, 32
    %v2667 = vpop.permute.xlu0 %2666
    %2668 = vrot.lane.b32.xlu0 %v2595, 32
    %v2669 = vpop.permute.xlu0 %2668
    %2670 = vrot.lane.b32.xlu0 %v2598, 32
    %v2671 = vpop.permute.xlu0 %2670
    %2672 = vrot.lane.b32.xlu0 %v2600, 32
    %v2673 = vpop.permute.xlu0 %2672
    %2674 = vrot.lane.b32.xlu0 %v2603, 32
    %v2675 = vpop.permute.xlu0 %2674
    %2676 = vrot.lane.b32.xlu0 %v2605, 32
    %v2677 = vpop.permute.xlu0 %2676
    %2678 = vrot.lane.b32.xlu0 %v2608, 32
    %v2679 = vpop.permute.xlu0 %2678
    %2680 = vrot.lane.b32.xlu0 %v2610, 32
    %v2681 = vpop.permute.xlu0 %2680
    %2682 = vrot.lane.b32.xlu0 %v2613, 32
    %v2683 = vpop.permute.xlu0 %2682
    %2684 = vrot.lane.b32.xlu0 %v2615, 32
    %v2685 = vpop.permute.xlu0 %2684
    %2686 = vrot.lane.b32.xlu0 %v2618, 32
    %v2687 = vpop.permute.xlu0 %2686
    %2688 = vrot.lane.b32.xlu0 %v2620, 32
    %v2689 = vpop.permute.xlu0 %2688
    %2690 = vrot.lane.b32.xlu0 %v2623, 32
    %v2691 = vpop.permute.xlu0 %2690
    %2692 = vrot.lane.b32.xlu0 %v2625, 32
    %v2693 = vpop.permute.xlu0 %2692
    %2694 = vrot.lane.b32.xlu0 %v2628, 32
    %v2695 = vpop.permute.xlu0 %2694
    %2696 = vrot.lane.b32.xlu0 %v2630, 32
    %v2697 = vpop.permute.xlu0 %2696
    %2698 = vrot.lane.b32.xlu0 %v2633, 32
    %v2699 = vpop.permute.xlu0 %2698
    %2700 = vrot.lane.b32.xlu0 %v2635, 32
    %v2701 = vpop.permute.xlu0 %2700
    %2702 = vrot.lane.b32.xlu0 %v2638, 32
    %v2703 = vpop.permute.xlu0 %2702
    %2704 = vrot.lane.b32.xlu0 %v2640, 32
    %v2705 = vpop.permute.xlu0 %2704
    %2706 = vrot.lane.b32.xlu0 %v2643, 32
    %v2707 = vpop.permute.xlu0 %2706
    %2708 = vrot.lane.b32.xlu0 %v2645, 32
    %v2709 = vpop.permute.xlu0 %2708
    %2710 = vrot.lane.b32.xlu0 %v2648, 32
    %v2711 = vpop.permute.xlu0 %2710
    %2712 = vrot.lane.b32.xlu0 %v2650, 32
    %v2713 = vpop.permute.xlu0 %2712
    %2714 = vrot.lane.b32.xlu0 %v2653, 32
    %v2715 = vpop.permute.xlu0 %2714
    %2716 = vrot.lane.b32.xlu0 %v2655, 32
    %v2717 = vpop.permute.xlu0 %2716
    %2718 = vrot.lane.b32.xlu0 %v2658, 32
    %v2719 = vpop.permute.xlu0 %2718
    %2720 = vrot.lane.b32.xlu0 %v2660, 32
    %v2721 = vpop.permute.xlu0 %2720
    %2722 = vrot.lane.b32.xlu0 %v2663, 32
    %v2723 = vpop.permute.xlu0 %2722
    %2724 = vrot.lane.b32.xlu0 %v2665, 32
    %v2725 = vpop.permute.xlu0 %2724
    %2757 = vrot.lane.b32.xlu0 %v2364, 48
    %v2758 = vpop.permute.xlu0 %2757
    %2759 = vrot.lane.b32.xlu0 %v2271, 48
    %v2760 = vpop.permute.xlu0 %2759
    %2761 = vrot.lane.b32.xlu0 %v2365, 48
    %v2762 = vpop.permute.xlu0 %2761
    %2763 = vrot.lane.b32.xlu0 %v2274, 48
    %v2764 = vpop.permute.xlu0 %2763
    %2765 = vrot.lane.b32.xlu0 %v2366, 48
    %v2766 = vpop.permute.xlu0 %2765
    %2767 = vrot.lane.b32.xlu0 %v2277, 48
    %v2768 = vpop.permute.xlu0 %2767
    %2769 = vrot.lane.b32.xlu0 %v2367, 48
    %v2770 = vpop.permute.xlu0 %2769
    %2771 = vrot.lane.b32.xlu0 %v2280, 48
    %v2772 = vpop.permute.xlu0 %2771
    %2773 = vrot.lane.b32.xlu0 %v2368, 48
    %v2774 = vpop.permute.xlu0 %2773
    %2775 = vrot.lane.b32.xlu0 %v2283, 48
    %v2776 = vpop.permute.xlu0 %2775
    %2777 = vrot.lane.b32.xlu0 %v2369, 48
    %v2778 = vpop.permute.xlu0 %2777
    %2779 = vrot.lane.b32.xlu0 %v2286, 48
    %v2780 = vpop.permute.xlu0 %2779
    %2781 = vrot.lane.b32.xlu0 %v2370, 48
    %v2782 = vpop.permute.xlu0 %2781
    %2783 = vrot.lane.b32.xlu0 %v2289, 48
    %v2784 = vpop.permute.xlu0 %2783
    %2785 = vrot.lane.b32.xlu0 %v2371, 48
    %v2786 = vpop.permute.xlu0 %2785
    %2787 = vrot.lane.b32.xlu0 %v2292, 48
    %v2788 = vpop.permute.xlu0 %2787
    %2789 = vrot.lane.b32.xlu0 %v2372, 48
    %v2790 = vpop.permute.xlu0 %2789
    %2791 = vrot.lane.b32.xlu0 %v2295, 48
    %v2792 = vpop.permute.xlu0 %2791
    %2793 = vrot.lane.b32.xlu0 %v2373, 48
    %v2794 = vpop.permute.xlu0 %2793
    %2795 = vrot.lane.b32.xlu0 %v2298, 48
    %v2796 = vpop.permute.xlu0 %2795
    %2797 = vrot.lane.b32.xlu0 %v2374, 48
    %v2798 = vpop.permute.xlu0 %2797
    %2799 = vrot.lane.b32.xlu0 %v2301, 48
    %v2800 = vpop.permute.xlu0 %2799
    %2801 = vrot.lane.b32.xlu0 %v2375, 48
    %v2802 = vpop.permute.xlu0 %2801
    %2803 = vrot.lane.b32.xlu0 %v2304, 48
    %v2804 = vpop.permute.xlu0 %2803
    %2805 = vrot.lane.b32.xlu0 %v2376, 48
    %v2806 = vpop.permute.xlu0 %2805
    %2807 = vrot.lane.b32.xlu0 %v2307, 48
    %v2808 = vpop.permute.xlu0 %2807
    %2809 = vrot.lane.b32.xlu0 %v2377, 48
    %v2810 = vpop.permute.xlu0 %2809
    %2811 = vrot.lane.b32.xlu0 %v2310, 48
    %v2812 = vpop.permute.xlu0 %2811
    %2813 = vrot.lane.b32.xlu0 %v2378, 48
    %v2814 = vpop.permute.xlu0 %2813
    %2815 = vrot.lane.b32.xlu0 %v2313, 48
    %v2816 = vpop.permute.xlu0 %2815
    %2817 = vrot.lane.b32.xlu0 %v2379, 48
    %v2818 = vpop.permute.xlu0 %2817
    %2819 = vrot.lane.b32.xlu0 %v2316, 48
    %v2820 = vpop.permute.xlu0 %2819
    %v2854 = vrot.slane %v2379, 1
    %v2855 = vrot.slane %v2316, 1
    %v2856 = vsel %vm616, %v2854, %v2855
    %v2857 = vrot.slane %v2395, 1
    %v2858 = vsel %vm616, %v2855, %v2857
    %2859 = vrot.lane.b32.xlu0 %v2428, 64
    %v2860 = vpop.permute.xlu0 %2859
    %2861 = vrot.lane.b32.xlu0 %v2430, 64
    %v2862 = vpop.permute.xlu0 %2861
    %2863 = vrot.lane.b32.xlu0 %v2433, 64
    %v2864 = vpop.permute.xlu0 %2863
    %2865 = vrot.lane.b32.xlu0 %v2435, 64
    %v2866 = vpop.permute.xlu0 %2865
    %2867 = vrot.lane.b32.xlu0 %v2438, 64
    %v2868 = vpop.permute.xlu0 %2867
    %2869 = vrot.lane.b32.xlu0 %v2440, 64
    %v2870 = vpop.permute.xlu0 %2869
    %2871 = vrot.lane.b32.xlu0 %v2443, 64
    %v2872 = vpop.permute.xlu0 %2871
    %2873 = vrot.lane.b32.xlu0 %v2445, 64
    %v2874 = vpop.permute.xlu0 %2873
    %2875 = vrot.lane.b32.xlu0 %v2448, 64
    %v2876 = vpop.permute.xlu0 %2875
    %2877 = vrot.lane.b32.xlu0 %v2450, 64
    %v2878 = vpop.permute.xlu0 %2877
    %2879 = vrot.lane.b32.xlu0 %v2453, 64
    %v2880 = vpop.permute.xlu0 %2879
    %2881 = vrot.lane.b32.xlu0 %v2455, 64
    %v2882 = vpop.permute.xlu0 %2881
    %2883 = vrot.lane.b32.xlu0 %v2458, 64
    %v2884 = vpop.permute.xlu0 %2883
    %2885 = vrot.lane.b32.xlu0 %v2460, 64
    %v2886 = vpop.permute.xlu0 %2885
    %2887 = vrot.lane.b32.xlu0 %v2463, 64
    %v2888 = vpop.permute.xlu0 %2887
    %2889 = vrot.lane.b32.xlu0 %v2465, 64
    %v2890 = vpop.permute.xlu0 %2889
    %2891 = vrot.lane.b32.xlu0 %v2468, 64
    %v2892 = vpop.permute.xlu0 %2891
    %2893 = vrot.lane.b32.xlu0 %v2470, 64
    %v2894 = vpop.permute.xlu0 %2893
    %2895 = vrot.lane.b32.xlu0 %v2473, 64
    %v2896 = vpop.permute.xlu0 %2895
    %2897 = vrot.lane.b32.xlu0 %v2475, 64
    %v2898 = vpop.permute.xlu0 %2897
    %2899 = vrot.lane.b32.xlu0 %v2478, 64
    %v2900 = vpop.permute.xlu0 %2899
    %2901 = vrot.lane.b32.xlu0 %v2480, 64
    %v2902 = vpop.permute.xlu0 %2901
    %2903 = vrot.lane.b32.xlu0 %v2483, 64
    %v2904 = vpop.permute.xlu0 %2903
    %2905 = vrot.lane.b32.xlu0 %v2485, 64
    %v2906 = vpop.permute.xlu0 %2905
    %2907 = vrot.lane.b32.xlu0 %v2488, 64
    %v2908 = vpop.permute.xlu0 %2907
    %2909 = vrot.lane.b32.xlu0 %v2490, 64
    %v2910 = vpop.permute.xlu0 %2909
    %2911 = vrot.lane.b32.xlu0 %v2493, 64
    %v2912 = vpop.permute.xlu0 %2911
    %2913 = vrot.lane.b32.xlu0 %v2495, 64
    %v2914 = vpop.permute.xlu0 %2913
    %2915 = vrot.lane.b32.xlu0 %v2498, 64
    %v2916 = vpop.permute.xlu0 %2915
    %2917 = vrot.lane.b32.xlu0 %v2500, 64
    %v2918 = vpop.permute.xlu0 %2917
    %2919 = vrot.lane.b32.xlu0 %v2856, 64
    %v2920 = vpop.permute.xlu0 %2919
    %2921 = vrot.lane.b32.xlu0 %v2858, 64
    %v2922 = vpop.permute.xlu0 %2921
    %v2955 = vrot.slane %v2379, 2
    %v2956 = vrot.slane %v2316, 2
    %v2957 = vsel %vm793, %v2955, %v2956
    %v2958 = vrot.slane %v2395, 2
    %v2959 = vsel %vm793, %v2956, %v2958
    %2960 = vrot.lane.b32.xlu0 %v2593, 80
    %v2961 = vpop.permute.xlu0 %2960
    %2962 = vrot.lane.b32.xlu0 %v2595, 80
    %v2963 = vpop.permute.xlu0 %2962
    %2964 = vrot.lane.b32.xlu0 %v2598, 80
    %v2965 = vpop.permute.xlu0 %2964
    %2966 = vrot.lane.b32.xlu0 %v2600, 80
    %v2967 = vpop.permute.xlu0 %2966
    %2968 = vrot.lane.b32.xlu0 %v2603, 80
    %v2969 = vpop.permute.xlu0 %2968
    %2970 = vrot.lane.b32.xlu0 %v2605, 80
    %v2971 = vpop.permute.xlu0 %2970
    %2972 = vrot.lane.b32.xlu0 %v2608, 80
    %v2973 = vpop.permute.xlu0 %2972
    %2974 = vrot.lane.b32.xlu0 %v2610, 80
    %v2975 = vpop.permute.xlu0 %2974
    %2976 = vrot.lane.b32.xlu0 %v2613, 80
    %v2977 = vpop.permute.xlu0 %2976
    %2978 = vrot.lane.b32.xlu0 %v2615, 80
    %v2979 = vpop.permute.xlu0 %2978
    %2980 = vrot.lane.b32.xlu0 %v2618, 80
    %v2981 = vpop.permute.xlu0 %2980
    %2982 = vrot.lane.b32.xlu0 %v2620, 80
    %v2983 = vpop.permute.xlu0 %2982
    %2984 = vrot.lane.b32.xlu0 %v2623, 80
    %v2985 = vpop.permute.xlu0 %2984
    %2986 = vrot.lane.b32.xlu0 %v2625, 80
    %v2987 = vpop.permute.xlu0 %2986
    %2988 = vrot.lane.b32.xlu0 %v2628, 80
    %v2989 = vpop.permute.xlu0 %2988
    %2990 = vrot.lane.b32.xlu0 %v2630, 80
    %v2991 = vpop.permute.xlu0 %2990
    %2992 = vrot.lane.b32.xlu0 %v2633, 80
    %v2993 = vpop.permute.xlu0 %2992
    %2994 = vrot.lane.b32.xlu0 %v2635, 80
    %v2995 = vpop.permute.xlu0 %2994
    %2996 = vrot.lane.b32.xlu0 %v2638, 80
    %v2997 = vpop.permute.xlu0 %2996
    %2998 = vrot.lane.b32.xlu0 %v2640, 80
    %v2999 = vpop.permute.xlu0 %2998
    %3000 = vrot.lane.b32.xlu0 %v2643, 80
    %v3001 = vpop.permute.xlu0 %3000
    %3002 = vrot.lane.b32.xlu0 %v2645, 80
    %v3003 = vpop.permute.xlu0 %3002
    %3004 = vrot.lane.b32.xlu0 %v2648, 80
    %v3005 = vpop.permute.xlu0 %3004
    %3006 = vrot.lane.b32.xlu0 %v2650, 80
    %v3007 = vpop.permute.xlu0 %3006
    %3008 = vrot.lane.b32.xlu0 %v2653, 80
    %v3009 = vpop.permute.xlu0 %3008
    %3010 = vrot.lane.b32.xlu0 %v2655, 80
    %v3011 = vpop.permute.xlu0 %3010
    %3012 = vrot.lane.b32.xlu0 %v2658, 80
    %v3013 = vpop.permute.xlu0 %3012
    %3014 = vrot.lane.b32.xlu0 %v2660, 80
    %v3015 = vpop.permute.xlu0 %3014
    %3016 = vrot.lane.b32.xlu0 %v2663, 80
    %v3017 = vpop.permute.xlu0 %3016
    %3018 = vrot.lane.b32.xlu0 %v2665, 80
    %v3019 = vpop.permute.xlu0 %3018
    %3020 = vrot.lane.b32.xlu0 %v2957, 80
    %v3021 = vpop.permute.xlu0 %3020
    %3022 = vrot.lane.b32.xlu0 %v2959, 80
    %v3023 = vpop.permute.xlu0 %3022
    %3056 = vrot.lane.b32.xlu0 %v2365, 96
    %v3057 = vpop.permute.xlu0 %3056
    %3058 = vrot.lane.b32.xlu0 %v2274, 96
    %v3059 = vpop.permute.xlu0 %3058
    %3060 = vrot.lane.b32.xlu0 %v2366, 96
    %v3061 = vpop.permute.xlu0 %3060
    %3062 = vrot.lane.b32.xlu0 %v2277, 96
    %v3063 = vpop.permute.xlu0 %3062
    %3064 = vrot.lane.b32.xlu0 %v2367, 96
    %v3065 = vpop.permute.xlu0 %3064
    %3066 = vrot.lane.b32.xlu0 %v2280, 96
    %v3067 = vpop.permute.xlu0 %3066
    %3068 = vrot.lane.b32.xlu0 %v2368, 96
    %v3069 = vpop.permute.xlu0 %3068
    %3070 = vrot.lane.b32.xlu0 %v2283, 96
    %v3071 = vpop.permute.xlu0 %3070
    %3072 = vrot.lane.b32.xlu0 %v2369, 96
    %v3073 = vpop.permute.xlu0 %3072
    %3074 = vrot.lane.b32.xlu0 %v2286, 96
    %v3075 = vpop.permute.xlu0 %3074
    %3076 = vrot.lane.b32.xlu0 %v2370, 96
    %v3077 = vpop.permute.xlu0 %3076
    %3078 = vrot.lane.b32.xlu0 %v2289, 96
    %v3079 = vpop.permute.xlu0 %3078
    %3080 = vrot.lane.b32.xlu0 %v2371, 96
    %v3081 = vpop.permute.xlu0 %3080
    %3082 = vrot.lane.b32.xlu0 %v2292, 96
    %v3083 = vpop.permute.xlu0 %3082
    %3084 = vrot.lane.b32.xlu0 %v2372, 96
    %v3085 = vpop.permute.xlu0 %3084
    %3086 = vrot.lane.b32.xlu0 %v2295, 96
    %v3087 = vpop.permute.xlu0 %3086
    %3088 = vrot.lane.b32.xlu0 %v2373, 96
    %v3089 = vpop.permute.xlu0 %3088
    %3090 = vrot.lane.b32.xlu0 %v2298, 96
    %v3091 = vpop.permute.xlu0 %3090
    %3092 = vrot.lane.b32.xlu0 %v2374, 96
    %v3093 = vpop.permute.xlu0 %3092
    %3094 = vrot.lane.b32.xlu0 %v2301, 96
    %v3095 = vpop.permute.xlu0 %3094
    %3096 = vrot.lane.b32.xlu0 %v2375, 96
    %v3097 = vpop.permute.xlu0 %3096
    %3098 = vrot.lane.b32.xlu0 %v2304, 96
    %v3099 = vpop.permute.xlu0 %3098
    %3100 = vrot.lane.b32.xlu0 %v2376, 96
    %v3101 = vpop.permute.xlu0 %3100
    %3102 = vrot.lane.b32.xlu0 %v2307, 96
    %v3103 = vpop.permute.xlu0 %3102
    %3104 = vrot.lane.b32.xlu0 %v2377, 96
    %v3105 = vpop.permute.xlu0 %3104
    %3106 = vrot.lane.b32.xlu0 %v2310, 96
    %v3107 = vpop.permute.xlu0 %3106
    %3108 = vrot.lane.b32.xlu0 %v2378, 96
    %v3109 = vpop.permute.xlu0 %3108
    %3110 = vrot.lane.b32.xlu0 %v2313, 96
    %v3111 = vpop.permute.xlu0 %3110
    %3112 = vrot.lane.b32.xlu0 %v2379, 96
    %v3113 = vpop.permute.xlu0 %3112
    %3114 = vrot.lane.b32.xlu0 %v2316, 96
    %v3115 = vpop.permute.xlu0 %3114
    %3146 = vrot.lane.b32.xlu0 %v2433, 112
    %v3147 = vpop.permute.xlu0 %3146
    %3148 = vrot.lane.b32.xlu0 %v2435, 112
    %v3149 = vpop.permute.xlu0 %3148
    %3150 = vrot.lane.b32.xlu0 %v2438, 112
    %v3151 = vpop.permute.xlu0 %3150
    %3152 = vrot.lane.b32.xlu0 %v2440, 112
    %v3153 = vpop.permute.xlu0 %3152
    %3154 = vrot.lane.b32.xlu0 %v2443, 112
    %v3155 = vpop.permute.xlu0 %3154
    %3156 = vrot.lane.b32.xlu0 %v2445, 112
    %v3157 = vpop.permute.xlu0 %3156
    %3158 = vrot.lane.b32.xlu0 %v2448, 112
    %v3159 = vpop.permute.xlu0 %3158
    %3160 = vrot.lane.b32.xlu0 %v2450, 112
    %v3161 = vpop.permute.xlu0 %3160
    %3162 = vrot.lane.b32.xlu0 %v2453, 112
    %v3163 = vpop.permute.xlu0 %3162
    %3164 = vrot.lane.b32.xlu0 %v2455, 112
    %v3165 = vpop.permute.xlu0 %3164
    %3166 = vrot.lane.b32.xlu0 %v2458, 112
    %v3167 = vpop.permute.xlu0 %3166
    %3168 = vrot.lane.b32.xlu0 %v2460, 112
    %v3169 = vpop.permute.xlu0 %3168
    %3170 = vrot.lane.b32.xlu0 %v2463, 112
    %v3171 = vpop.permute.xlu0 %3170
    %3172 = vrot.lane.b32.xlu0 %v2465, 112
    %v3173 = vpop.permute.xlu0 %3172
    %3174 = vrot.lane.b32.xlu0 %v2468, 112
    %v3175 = vpop.permute.xlu0 %3174
    %3176 = vrot.lane.b32.xlu0 %v2470, 112
    %v3177 = vpop.permute.xlu0 %3176
    %3178 = vrot.lane.b32.xlu0 %v2473, 112
    %v3179 = vpop.permute.xlu0 %3178
    %3180 = vrot.lane.b32.xlu0 %v2475, 112
    %v3181 = vpop.permute.xlu0 %3180
    %3182 = vrot.lane.b32.xlu0 %v2478, 112
    %v3183 = vpop.permute.xlu0 %3182
    %3184 = vrot.lane.b32.xlu0 %v2480, 112
    %v3185 = vpop.permute.xlu0 %3184
    %3186 = vrot.lane.b32.xlu0 %v2483, 112
    %v3187 = vpop.permute.xlu0 %3186
    %3188 = vrot.lane.b32.xlu0 %v2485, 112
    %v3189 = vpop.permute.xlu0 %3188
    %3190 = vrot.lane.b32.xlu0 %v2488, 112
    %v3191 = vpop.permute.xlu0 %3190
    %3192 = vrot.lane.b32.xlu0 %v2490, 112
    %v3193 = vpop.permute.xlu0 %3192
    %3194 = vrot.lane.b32.xlu0 %v2493, 112
    %v3195 = vpop.permute.xlu0 %3194
    %3196 = vrot.lane.b32.xlu0 %v2495, 112
    %v3197 = vpop.permute.xlu0 %3196
    %3198 = vrot.lane.b32.xlu0 %v2498, 112
    %v3199 = vpop.permute.xlu0 %3198
    %3200 = vrot.lane.b32.xlu0 %v2500, 112
    %v3201 = vpop.permute.xlu0 %3200
    %3202 = vrot.lane.b32.xlu0 %v2856, 112
    %v3203 = vpop.permute.xlu0 %3202
    %3204 = vrot.lane.b32.xlu0 %v2858, 112
    %v3205 = vpop.permute.xlu0 %3204
    %v3266 = vsel %vm1494, %v2364, %v2502
    %v3267 = vsel %vm1494, %v2271, %v2504
    %v3268 = vsel %vm1494, %v2365, %v2506
    %v3269 = vsel %vm1494, %v2274, %v2508
    %v3270 = vsel %vm1494, %v2366, %v2510
    %v3271 = vsel %vm1494, %v2277, %v2512
    %v3272 = vsel %vm1494, %v2367, %v2514
    %v3273 = vsel %vm1494, %v2280, %v2516
    %v3274 = vsel %vm1494, %v2368, %v2518
    %v3275 = vsel %vm1494, %v2283, %v2520
    %v3276 = vsel %vm1494, %v2369, %v2522
    %v3277 = vsel %vm1494, %v2286, %v2524
    %v3278 = vsel %vm1494, %v2370, %v2526
    %v3279 = vsel %vm1494, %v2289, %v2528
    %v3280 = vsel %vm1494, %v2371, %v2530
    %v3281 = vsel %vm1494, %v2292, %v2532
    %v3282 = vsel %vm1494, %v2372, %v2534
    %v3283 = vsel %vm1494, %v2295, %v2536
    %v3284 = vsel %vm1494, %v2373, %v2538
    %v3285 = vsel %vm1494, %v2298, %v2540
    %v3286 = vsel %vm1494, %v2374, %v2542
    %v3287 = vsel %vm1494, %v2301, %v2544
    %v3288 = vsel %vm1494, %v2375, %v2546
    %v3289 = vsel %vm1494, %v2304, %v2548
    %v3290 = vsel %vm1494, %v2376, %v2550
    %v3291 = vsel %vm1494, %v2307, %v2552
    %v3292 = vsel %vm1494, %v2377, %v2554
    %v3293 = vsel %vm1494, %v2310, %v2556
    %v3294 = vsel %vm1494, %v2378, %v2558
    %v3295 = vsel %vm1494, %v2313, %v2560
    %v3296 = vsel %vm1527, %v3266, %v2667
    %v3297 = vsel %vm1527, %v3267, %v2669
    %v3298 = vsel %vm1527, %v3268, %v2671
    %v3299 = vsel %vm1527, %v3269, %v2673
    %v3300 = vsel %vm1527, %v3270, %v2675
    %v3301 = vsel %vm1527, %v3271, %v2677
    %v3302 = vsel %vm1527, %v3272, %v2679
    %v3303 = vsel %vm1527, %v3273, %v2681
    %v3304 = vsel %vm1527, %v3274, %v2683
    %v3305 = vsel %vm1527, %v3275, %v2685
    %v3306 = vsel %vm1527, %v3276, %v2687
    %v3307 = vsel %vm1527, %v3277, %v2689
    %v3308 = vsel %vm1527, %v3278, %v2691
    %v3309 = vsel %vm1527, %v3279, %v2693
    %v3310 = vsel %vm1527, %v3280, %v2695
    %v3311 = vsel %vm1527, %v3281, %v2697
    %v3312 = vsel %vm1527, %v3282, %v2699
    %v3313 = vsel %vm1527, %v3283, %v2701
    %v3314 = vsel %vm1527, %v3284, %v2703
    %v3315 = vsel %vm1527, %v3285, %v2705
    %v3316 = vsel %vm1527, %v3286, %v2707
    %v3317 = vsel %vm1527, %v3287, %v2709
    %v3318 = vsel %vm1527, %v3288, %v2711
    %v3319 = vsel %vm1527, %v3289, %v2713
    %v3320 = vsel %vm1527, %v3290, %v2715
    %v3321 = vsel %vm1527, %v3291, %v2717
    %v3322 = vsel %vm1527, %v3292, %v2719
    %v3323 = vsel %vm1527, %v3293, %v2721
    %v3324 = vsel %vm1527, %v3294, %v2723
    %v3325 = vsel %vm1527, %v3295, %v2725
    %v3326 = vsel %vm1560, %v1528, %v2758
    %v3327 = vsel %vm1560, %v1529, %v2760
    %v3328 = vsel %vm1560, %v3296, %v2762
    %v3329 = vsel %vm1560, %v3297, %v2764
    %v3330 = vsel %vm1560, %v3298, %v2766
    %v3331 = vsel %vm1560, %v3299, %v2768
    %v3332 = vsel %vm1560, %v3300, %v2770
    %v3333 = vsel %vm1560, %v3301, %v2772
    %v3334 = vsel %vm1560, %v3302, %v2774
    %v3335 = vsel %vm1560, %v3303, %v2776
    %v3336 = vsel %vm1560, %v3304, %v2778
    %v3337 = vsel %vm1560, %v3305, %v2780
    %v3338 = vsel %vm1560, %v3306, %v2782
    %v3339 = vsel %vm1560, %v3307, %v2784
    %v3340 = vsel %vm1560, %v3308, %v2786
    %v3341 = vsel %vm1560, %v3309, %v2788
    %v3342 = vsel %vm1560, %v3310, %v2790
    %v3343 = vsel %vm1560, %v3311, %v2792
    %v3344 = vsel %vm1560, %v3312, %v2794
    %v3345 = vsel %vm1560, %v3313, %v2796
    %v3346 = vsel %vm1560, %v3314, %v2798
    %v3347 = vsel %vm1560, %v3315, %v2800
    %v3348 = vsel %vm1560, %v3316, %v2802
    %v3349 = vsel %vm1560, %v3317, %v2804
    %v3350 = vsel %vm1560, %v3318, %v2806
    %v3351 = vsel %vm1560, %v3319, %v2808
    %v3352 = vsel %vm1560, %v3320, %v2810
    %v3353 = vsel %vm1560, %v3321, %v2812
    %v3354 = vsel %vm1560, %v3322, %v2814
    %v3355 = vsel %vm1560, %v3323, %v2816
    %v3356 = vsel %vm1560, %v3324, %v2818
    %v3357 = vsel %vm1560, %v3325, %v2820
    %v3358 = vsel %vm189, %v3326, %v2860
    %v3359 = vsel %vm189, %v3327, %v2862
    %v3360 = vsel %vm189, %v3328, %v2864
    %v3361 = vsel %vm189, %v3329, %v2866
    %v3362 = vsel %vm189, %v3330, %v2868
    %v3363 = vsel %vm189, %v3331, %v2870
    %v3364 = vsel %vm189, %v3332, %v2872
    %v3365 = vsel %vm189, %v3333, %v2874
    %v3366 = vsel %vm189, %v3334, %v2876
    %v3367 = vsel %vm189, %v3335, %v2878
    %v3368 = vsel %vm189, %v3336, %v2880
    %v3369 = vsel %vm189, %v3337, %v2882
    %v3370 = vsel %vm189, %v3338, %v2884
    %v3371 = vsel %vm189, %v3339, %v2886
    %v3372 = vsel %vm189, %v3340, %v2888
    %v3373 = vsel %vm189, %v3341, %v2890
    %v3374 = vsel %vm189, %v3342, %v2892
    %v3375 = vsel %vm189, %v3343, %v2894
    %v3376 = vsel %vm189, %v3344, %v2896
    %v3377 = vsel %vm189, %v3345, %v2898
    %v3378 = vsel %vm189, %v3346, %v2900
    %v3379 = vsel %vm189, %v3347, %v2902
    %v3380 = vsel %vm189, %v3348, %v2904
    %v3381 = vsel %vm189, %v3349, %v2906
    %v3382 = vsel %vm189, %v3350, %v2908
    %v3383 = vsel %vm189, %v3351, %v2910
    %v3384 = vsel %vm189, %v3352, %v2912
    %v3385 = vsel %vm189, %v3353, %v2914
    %v3386 = vsel %vm189, %v3354, %v2916
    %v3387 = vsel %vm189, %v3355, %v2918
    %v3388 = vsel %vm189, %v3356, %v2920
    %v3389 = vsel %vm189, %v3357, %v2922
    %v3390 = vsel %vm1625, %v3358, %v2961
    %v3391 = vsel %vm1625, %v3359, %v2963
    %v3392 = vsel %vm1625, %v3360, %v2965
    %v3393 = vsel %vm1625, %v3361, %v2967
    %v3394 = vsel %vm1625, %v3362, %v2969
    %v3395 = vsel %vm1625, %v3363, %v2971
    %v3396 = vsel %vm1625, %v3364, %v2973
    %v3397 = vsel %vm1625, %v3365, %v2975
    %v3398 = vsel %vm1625, %v3366, %v2977
    %v3399 = vsel %vm1625, %v3367, %v2979
    %v3400 = vsel %vm1625, %v3368, %v2981
    %v3401 = vsel %vm1625, %v3369, %v2983
    %v3402 = vsel %vm1625, %v3370, %v2985
    %v3403 = vsel %vm1625, %v3371, %v2987
    %v3404 = vsel %vm1625, %v3372, %v2989
    %v3405 = vsel %vm1625, %v3373, %v2991
    %v3406 = vsel %vm1625, %v3374, %v2993
    %v3407 = vsel %vm1625, %v3375, %v2995
    %v3408 = vsel %vm1625, %v3376, %v2997
    %v3409 = vsel %vm1625, %v3377, %v2999
    %v3410 = vsel %vm1625, %v3378, %v3001
    %v3411 = vsel %vm1625, %v3379, %v3003
    %v3412 = vsel %vm1625, %v3380, %v3005
    %v3413 = vsel %vm1625, %v3381, %v3007
    %v3414 = vsel %vm1625, %v3382, %v3009
    %v3415 = vsel %vm1625, %v3383, %v3011
    %v3416 = vsel %vm1625, %v3384, %v3013
    %v3417 = vsel %vm1625, %v3385, %v3015
    %v3418 = vsel %vm1625, %v3386, %v3017
    %v3419 = vsel %vm1625, %v3387, %v3019
    %v3420 = vsel %vm1625, %v3388, %v3021
    %v3421 = vsel %vm1625, %v3389, %v3023
    %v3422 = vsel %vm1658, %v3390, %v3057
    %v3423 = vsel %vm1658, %v3391, %v3059
    %v3424 = vsel %vm1658, %v3392, %v3061
    %v3425 = vsel %vm1658, %v3393, %v3063
    %v3426 = vsel %vm1658, %v3394, %v3065
    %v3427 = vsel %vm1658, %v3395, %v3067
    %v3428 = vsel %vm1658, %v3396, %v3069
    %v3429 = vsel %vm1658, %v3397, %v3071
    %v3430 = vsel %vm1658, %v3398, %v3073
    %v3431 = vsel %vm1658, %v3399, %v3075
    %v3432 = vsel %vm1658, %v3400, %v3077
    %v3433 = vsel %vm1658, %v3401, %v3079
    %v3434 = vsel %vm1658, %v3402, %v3081
    %v3435 = vsel %vm1658, %v3403, %v3083
    %v3436 = vsel %vm1658, %v3404, %v3085
    %v3437 = vsel %vm1658, %v3405, %v3087
    %v3438 = vsel %vm1658, %v3406, %v3089
    %v3439 = vsel %vm1658, %v3407, %v3091
    %v3440 = vsel %vm1658, %v3408, %v3093
    %v3441 = vsel %vm1658, %v3409, %v3095
    %v3442 = vsel %vm1658, %v3410, %v3097
    %v3443 = vsel %vm1658, %v3411, %v3099
    %v3444 = vsel %vm1658, %v3412, %v3101
    %v3445 = vsel %vm1658, %v3413, %v3103
    %v3446 = vsel %vm1658, %v3414, %v3105
    %v3447 = vsel %vm1658, %v3415, %v3107
    %v3448 = vsel %vm1658, %v3416, %v3109
    %v3449 = vsel %vm1658, %v3417, %v3111
    %v3450 = vsel %vm1658, %v3418, %v3113
    %v3451 = vsel %vm1658, %v3419, %v3115
    %v3452 = vsel %vm1658, %v3420, %v1331
    %v3453 = vsel %vm1658, %v3421, %v1333
    %v3454 = vsel %vm1691, %v3422, %v3147
    %v3455 = vsel %vm1691, %v3423, %v3149
    %v3456 = vsel %vm1691, %v3424, %v3151
    %v3457 = vsel %vm1691, %v3425, %v3153
    %v3458 = vsel %vm1691, %v3426, %v3155
    %v3459 = vsel %vm1691, %v3427, %v3157
    %v3460 = vsel %vm1691, %v3428, %v3159
    %v3461 = vsel %vm1691, %v3429, %v3161
    %v3462 = vsel %vm1691, %v3430, %v3163
    %v3463 = vsel %vm1691, %v3431, %v3165
    %v3464 = vsel %vm1691, %v3432, %v3167
    %v3465 = vsel %vm1691, %v3433, %v3169
    %v3466 = vsel %vm1691, %v3434, %v3171
    %v3467 = vsel %vm1691, %v3435, %v3173
    %v3468 = vsel %vm1691, %v3436, %v3175
    %v3469 = vsel %vm1691, %v3437, %v3177
    %v3470 = vsel %vm1691, %v3438, %v3179
    %v3471 = vsel %vm1691, %v3439, %v3181
    %v3472 = vsel %vm1691, %v3440, %v3183
    %v3473 = vsel %vm1691, %v3441, %v3185
    %v3474 = vsel %vm1691, %v3442, %v3187
    %v3475 = vsel %vm1691, %v3443, %v3189
    %v3476 = vsel %vm1691, %v3444, %v3191
    %v3477 = vsel %vm1691, %v3445, %v3193
    %v3478 = vsel %vm1691, %v3446, %v3195
    %v3479 = vsel %vm1691, %v3447, %v3197
    %v3480 = vsel %vm1691, %v3448, %v3199
    %v3481 = vsel %vm1691, %v3449, %v3201
    %v3482 = vsel %vm1691, %v3450, %v3203
    %v3483 = vsel %vm1691, %v3451, %v3205
    %v3484 = vsel %vm1691, %v3452, %v1427
    %v3485 = vsel %vm1691, %v3453, %v1429
    %v3486 = vpack.c.bf16 %v3455, %v3454
    %v3487 = vpack.c.bf16 %v2600, %v2598
    %v3488 = vpack.c.bf16 %v3457, %v3456
    %v3489 = vpack.c.bf16 %v2605, %v2603
    %v3490 = vpack.c.bf16 %v3459, %v3458
    %v3491 = vpack.c.bf16 %v2610, %v2608
    %v3492 = vpack.c.bf16 %v3461, %v3460
    %v3493 = vpack.c.bf16 %v2615, %v2613
    %v3494 = vpack.c.bf16 %v3463, %v3462
    %v3495 = vpack.c.bf16 %v2620, %v2618
    %v3496 = vpack.c.bf16 %v3465, %v3464
    %v3497 = vpack.c.bf16 %v2625, %v2623
    %v3498 = vpack.c.bf16 %v3467, %v3466
    %v3499 = vpack.c.bf16 %v2630, %v2628
    %v3500 = vpack.c.bf16 %v3469, %v3468
    %v3501 = vpack.c.bf16 %v2635, %v2633
    %v3502 = vpack.c.bf16 %v3471, %v3470
    %v3503 = vpack.c.bf16 %v2640, %v2638
    %v3504 = vpack.c.bf16 %v3473, %v3472
    %v3505 = vpack.c.bf16 %v2645, %v2643
    %v3506 = vpack.c.bf16 %v3475, %v3474
    %v3507 = vpack.c.bf16 %v2650, %v2648
    %v3508 = vpack.c.bf16 %v3477, %v3476
    %v3509 = vpack.c.bf16 %v2655, %v2653
    %v3510 = vpack.c.bf16 %v3479, %v3478
    %v3511 = vpack.c.bf16 %v2660, %v2658
    %v3512 = vpack.c.bf16 %v3481, %v3480
    %v3513 = vpack.c.bf16 %v2665, %v2663
    %v3514 = vpack.c.bf16 %v3483, %v3482
    %v3515 = vpack.c.bf16 %v2959, %v2957
    %v3516 = vpack.c.bf16 %v3485, %v3484
    %v3535 = vunpack.c.l.b16 %v2219
    %v3536 = vunpack.c.l.b16 %v2220
    %v3537 = vunpack.c.l.b16 %v2221
    %v3538 = vunpack.c.l.b16 %v2222
    %v3539 = vunpack.c.l.b16 %v2223
    %v3540 = vunpack.c.l.b16 %v2224
    %v3541 = vunpack.c.l.b16 %v2225
    %v3542 = vunpack.c.l.b16 %v2226
    %v3543 = vunpack.c.l.b16 %v2227
    %v3544 = vunpack.c.l.b16 %v2228
    %v3545 = vunpack.c.l.b16 %v2229
    %v3546 = vunpack.c.l.b16 %v2230
    %v3547 = vunpack.c.l.b16 %v2231
    %v3548 = vunpack.c.l.b16 %v2232
    %v3549 = vunpack.c.l.b16 %v2233
    %v3550 = vunpack.c.l.b16 %v2234
    %v3551 = vunpack.c.l.b16 %v2235
    %v3552 = vunpack.c.l.b16 %v2236
    %v3553 = vpack.c.b16 %v3536, %v3535
    %v3554 = vpack.c.b16 %v3538, %v3537
    %v3555 = vpack.c.b16 %v3540, %v3539
    %v3556 = vpack.c.b16 %v3542, %v3541
    %v3557 = vpack.c.b16 %v3544, %v3543
    %v3558 = vpack.c.b16 %v3546, %v3545
    %v3559 = vpack.c.b16 %v3548, %v3547
    %v3560 = vpack.c.b16 %v3550, %v3549
    %v3561 = vpack.c.b16 %v3552, %v3551
    %v3572 = vsel %vm1494, %v3487, 0
    %v3575 = vsel %vm1494, %v3489, 0
    %v3578 = vsel %vm1494, %v3491, 0
    %v3581 = vsel %vm1494, %v3493, 0
    %v3584 = vsel %vm1494, %v3495, 0
    %v3587 = vsel %vm1494, %v3497, 0
    %v3590 = vsel %vm1494, %v3499, 0
    %v3593 = vsel %vm1494, %v3501, 0
    %v3596 = vsel %vm1494, %v3503, 0
    %v3599 = vsel %vm1494, %v3505, 0
    %v3602 = vsel %vm1494, %v3507, 0
    %v3605 = vsel %vm1494, %v3509, 0
    %v3608 = vsel %vm1494, %v3511, 0
    %v3611 = vsel %vm1494, %v3513, 0
    %v3614 = vsel %vm1494, %v3515, 0
    %3616 = vmatprep.subr.bf16.mxu0 0
    %3617 = vmatpush1.bf16.msra.mxu0 %v3560
    %3618 = vmatprep.subr.bf16.mxu0 0
    %3619 = vmatpush1.bf16.msra.mxu0 %v3559
    %3620 = vmatprep.subr.bf16.mxu0 0
    %3621 = vmatpush1.bf16.msra.mxu0 %v3558
    %3622 = vmatprep.subr.bf16.mxu0 0
    %3623 = vmatpush1.bf16.msra.mxu0 %v3557
    %3624 = vmatprep.subr.bf16.mxu0 0
    %3625 = vmatpush1.bf16.msra.mxu0 %v3556
    %3626 = vmatprep.subr.bf16.mxu0 0
    %3627 = vmatpush1.bf16.msra.mxu0 %v3555
    %3628 = vmatprep.subr.bf16.mxu0 0
    %3629 = vmatpush1.bf16.msra.mxu0 %v3554
    %3630 = vmatprep.subr.bf16.mxu0 0
    %3631 = vmatpush1.bf16.msra.mxu0 %v3553
    %3632 = vmatprep.subr.bf16.mxu0 0
    %3633 = vmatpush2.bf16.msra.mxu0 0
    %3634 = vmatprep.subr.bf16.mxu0 0
    %3635 = vmatpush2.bf16.msra.mxu0 0
    %3636 = vmatprep.subr.bf16.mxu0 0
    %3637 = vmatpush2.bf16.msra.mxu0 0
    %3638 = vmatprep.subr.bf16.mxu0 0
    %3639 = vmatpush2.bf16.msra.mxu0 0
    %3640 = vmatprep.subr.bf16.mxu0 0
    %3641 = vmatpush2.bf16.msra.mxu0 0
    %3642 = vmatprep.subr.bf16.mxu0 0
    %3643 = vmatpush2.bf16.msra.mxu0 0
    %3644 = vmatprep.subr.bf16.mxu0 0
    %3645 = vmatpush2.bf16.msra.mxu0 0
    %3646 = vmatprep.subr.bf16.mxu0 0
    %3647 = vmatpush2.bf16.msra.mxu0 %v3561
    %3648 = vmatprep.mubr.bf16.mxu0 %v3572
    %3649 = vmatmul.mubr.bf16.gmra.mxu0 %v3486
    %v3650 = vpop.f32.mrf.mxu0
    %v3651 = vadd.f32 0.0, %v3650
    %v3652 = vpop.f32.mrf.mxu0
    %v3653 = vpop.f32.mrf.mxu0
    %v3654 = vadd.f32 0.0, %v3653
    %v3655 = vpop.f32.mrf.mxu0
    %3656 = vmatprep.mubr.bf16.mxu0 %v3575
    %3657 = vmatmul.mubr.bf16.gmra.mxu0 %v3488
    %v3658 = vpop.f32.mrf.mxu0
    %v3659 = vadd.f32 0.0, %v3658
    %v3660 = vpop.f32.mrf.mxu0
    %v3661 = vpop.f32.mrf.mxu0
    %v3662 = vadd.f32 0.0, %v3661
    %v3663 = vpop.f32.mrf.mxu0
    %3664 = vmatprep.mubr.bf16.mxu0 %v3578
    %3665 = vmatmul.mubr.bf16.gmra.mxu0 %v3490
    %v3666 = vpop.f32.mrf.mxu0
    %v3667 = vadd.f32 0.0, %v3666
    %v3668 = vpop.f32.mrf.mxu0
    %v3669 = vpop.f32.mrf.mxu0
    %v3670 = vadd.f32 0.0, %v3669
    %v3671 = vpop.f32.mrf.mxu0
    %3672 = vmatprep.mubr.bf16.mxu0 %v3581
    %3673 = vmatmul.mubr.bf16.gmra.mxu0 %v3492
    %v3674 = vpop.f32.mrf.mxu0
    %v3675 = vadd.f32 0.0, %v3674
    %v3676 = vpop.f32.mrf.mxu0
    %v3677 = vpop.f32.mrf.mxu0
    %v3678 = vadd.f32 0.0, %v3677
    %v3679 = vpop.f32.mrf.mxu0
    %3680 = vmatprep.mubr.bf16.mxu0 %v3584
    %3681 = vmatmul.mubr.bf16.gmra.mxu0 %v3494
    %v3682 = vpop.f32.mrf.mxu0
    %v3683 = vadd.f32 0.0, %v3682
    %v3684 = vpop.f32.mrf.mxu0
    %v3685 = vpop.f32.mrf.mxu0
    %v3686 = vadd.f32 0.0, %v3685
    %v3687 = vpop.f32.mrf.mxu0
    %3688 = vmatprep.mubr.bf16.mxu0 %v3587
    %3689 = vmatmul.mubr.bf16.gmra.mxu0 %v3496
    %v3690 = vpop.f32.mrf.mxu0
    %v3691 = vadd.f32 0.0, %v3690
    %v3692 = vpop.f32.mrf.mxu0
    %v3693 = vpop.f32.mrf.mxu0
    %v3694 = vadd.f32 0.0, %v3693
    %v3695 = vpop.f32.mrf.mxu0
    %3696 = vmatprep.mubr.bf16.mxu0 %v3590
    %3697 = vmatmul.mubr.bf16.gmra.mxu0 %v3498
    %v3698 = vpop.f32.mrf.mxu0
    %v3699 = vadd.f32 0.0, %v3698
    %v3700 = vpop.f32.mrf.mxu0
    %v3701 = vpop.f32.mrf.mxu0
    %v3702 = vadd.f32 0.0, %v3701
    %v3703 = vpop.f32.mrf.mxu0
    %3704 = vmatprep.mubr.bf16.mxu0 %v3593
    %3705 = vmatmul.mubr.bf16.gmra.mxu0 %v3500
    %v3706 = vpop.f32.mrf.mxu0
    %v3707 = vadd.f32 0.0, %v3706
    %v3708 = vpop.f32.mrf.mxu0
    %v3709 = vpop.f32.mrf.mxu0
    %v3710 = vadd.f32 0.0, %v3709
    %v3711 = vpop.f32.mrf.mxu0
    %3712 = vmatprep.mubr.bf16.mxu0 %v3596
    %3713 = vmatmul.mubr.bf16.gmra.mxu0 %v3502
    %v3714 = vpop.f32.mrf.mxu0
    %v3715 = vadd.f32 0.0, %v3714
    %v3716 = vpop.f32.mrf.mxu0
    %v3717 = vpop.f32.mrf.mxu0
    %v3718 = vadd.f32 0.0, %v3717
    %v3719 = vpop.f32.mrf.mxu0
    %3720 = vmatprep.mubr.bf16.mxu0 %v3599
    %3721 = vmatmul.mubr.bf16.gmra.mxu0 %v3504
    %v3722 = vpop.f32.mrf.mxu0
    %v3723 = vadd.f32 0.0, %v3722
    %v3724 = vpop.f32.mrf.mxu0
    %v3725 = vpop.f32.mrf.mxu0
    %v3726 = vadd.f32 0.0, %v3725
    %v3727 = vpop.f32.mrf.mxu0
    %3728 = vmatprep.mubr.bf16.mxu0 %v3602
    %3729 = vmatmul.mubr.bf16.gmra.mxu0 %v3506
    %v3730 = vpop.f32.mrf.mxu0
    %v3731 = vadd.f32 0.0, %v3730
    %v3732 = vpop.f32.mrf.mxu0
    %v3733 = vpop.f32.mrf.mxu0
    %v3734 = vadd.f32 0.0, %v3733
    %v3735 = vpop.f32.mrf.mxu0
    %3736 = vmatprep.mubr.bf16.mxu0 %v3605
    %3737 = vmatmul.mubr.bf16.gmra.mxu0 %v3508
    %v3738 = vpop.f32.mrf.mxu0
    %v3739 = vadd.f32 0.0, %v3738
    %v3740 = vpop.f32.mrf.mxu0
    %v3741 = vpop.f32.mrf.mxu0
    %v3742 = vadd.f32 0.0, %v3741
    %v3743 = vpop.f32.mrf.mxu0
    %3744 = vmatprep.mubr.bf16.mxu0 %v3608
    %3745 = vmatmul.mubr.bf16.gmra.mxu0 %v3510
    %v3746 = vpop.f32.mrf.mxu0
    %v3747 = vadd.f32 0.0, %v3746
    %v3748 = vpop.f32.mrf.mxu0
    %v3749 = vpop.f32.mrf.mxu0
    %v3750 = vadd.f32 0.0, %v3749
    %v3751 = vpop.f32.mrf.mxu0
    %3752 = vmatprep.mubr.bf16.mxu0 %v3611
    %3753 = vmatmul.mubr.bf16.gmra.mxu0 %v3512
    %v3754 = vpop.f32.mrf.mxu0
    %v3755 = vadd.f32 0.0, %v3754
    %v3756 = vpop.f32.mrf.mxu0
    %v3757 = vpop.f32.mrf.mxu0
    %v3758 = vadd.f32 0.0, %v3757
    %v3759 = vpop.f32.mrf.mxu0
    %3760 = vmatprep.mubr.bf16.mxu0 %v3614
    %3761 = vmatmul.mubr.bf16.gmra.mxu0 %v3514
    %v3762 = vpop.f32.mrf.mxu0
    %v3763 = vadd.f32 0.0, %v3762
    %v3764 = vpop.f32.mrf.mxu0
    %v3765 = vpop.f32.mrf.mxu0
    %v3766 = vadd.f32 0.0, %v3765
    %v3767 = vpop.f32.mrf.mxu0
    %3768 = vmatprep.mubr.bf16.mxu0 %v1863
    %3769 = vmatmul.mubr.bf16.gmra.mxu0 %v3516
    %v3770 = vpop.f32.mrf.mxu0
    %v3771 = vadd.f32 0.0, %v3770
    %v3772 = vpop.f32.mrf.mxu0
    %v3773 = vpop.f32.mrf.mxu0
    %v3774 = vadd.f32 0.0, %v3773
    %v3775 = vpop.f32.mrf.mxu0
    %3776 = vdwg.mxu0
    %v3777 = vld [vmem:[%s6] sm:$0x1]
    %v3778 = vld [vmem:[%s7] sm:$0x1]
    %v3779 = vsel %vm1494, %v3651, 0.0
    %v3780 = vsel %vm1494, %v3654, 0.0
    %v3781 = vadd.f32 %v3779, %v3780
    %v3782 = vsel %vm1494, %v3659, 0.0
    %v3783 = vadd.f32 %v3781, %v3782
    %v3784 = vsel %vm1494, %v3662, 0.0
    %v3785 = vadd.f32 %v3783, %v3784
    %v3786 = vsel %vm1494, %v3667, 0.0
    %v3787 = vadd.f32 %v3785, %v3786
    %v3788 = vsel %vm1494, %v3670, 0.0
    %v3789 = vadd.f32 %v3787, %v3788
    %v3790 = vsel %vm1494, %v3675, 0.0
    %v3791 = vadd.f32 %v3789, %v3790
    %v3792 = vsel %vm1494, %v3678, 0.0
    %v3793 = vadd.f32 %v3791, %v3792
    %v3794 = vsel %vm1494, %v3683, 0.0
    %v3795 = vadd.f32 %v3793, %v3794
    %v3796 = vsel %vm1494, %v3686, 0.0
    %v3797 = vadd.f32 %v3795, %v3796
    %v3798 = vsel %vm1494, %v3691, 0.0
    %v3799 = vadd.f32 %v3797, %v3798
    %v3800 = vsel %vm1494, %v3694, 0.0
    %v3801 = vadd.f32 %v3799, %v3800
    %v3802 = vsel %vm1494, %v3699, 0.0
    %v3803 = vadd.f32 %v3801, %v3802
    %v3804 = vsel %vm1494, %v3702, 0.0
    %v3805 = vadd.f32 %v3803, %v3804
    %v3806 = vsel %vm1494, %v3707, 0.0
    %v3807 = vadd.f32 %v3805, %v3806
    %v3808 = vsel %vm1494, %v3710, 0.0
    %v3809 = vadd.f32 %v3807, %v3808
    %v3810 = vsel %vm1494, %v3715, 0.0
    %v3811 = vadd.f32 %v3809, %v3810
    %v3812 = vsel %vm1494, %v3718, 0.0
    %v3813 = vadd.f32 %v3811, %v3812
    %v3814 = vsel %vm1494, %v3723, 0.0
    %v3815 = vadd.f32 %v3813, %v3814
    %v3816 = vsel %vm1494, %v3726, 0.0
    %v3817 = vadd.f32 %v3815, %v3816
    %v3818 = vsel %vm1494, %v3731, 0.0
    %v3819 = vadd.f32 %v3817, %v3818
    %v3820 = vsel %vm1494, %v3734, 0.0
    %v3821 = vadd.f32 %v3819, %v3820
    %v3822 = vsel %vm1494, %v3739, 0.0
    %v3823 = vadd.f32 %v3821, %v3822
    %v3824 = vsel %vm1494, %v3742, 0.0
    %v3825 = vadd.f32 %v3823, %v3824
    %v3826 = vsel %vm1494, %v3747, 0.0
    %v3827 = vadd.f32 %v3825, %v3826
    %v3828 = vsel %vm1494, %v3750, 0.0
    %v3829 = vadd.f32 %v3827, %v3828
    %v3830 = vsel %vm1494, %v3755, 0.0
    %v3831 = vadd.f32 %v3829, %v3830
    %v3832 = vsel %vm1494, %v3758, 0.0
    %v3833 = vadd.f32 %v3831, %v3832
    %v3834 = vsel %vm1494, %v3763, 0.0
    %v3835 = vadd.f32 %v3833, %v3834
    %v3836 = vsel %vm1494, %v3766, 0.0
    %v3837 = vadd.f32 %v3835, %v3836
    %v3838 = vsel %vm1494, %v3771, 0.0
    %v3839 = vadd.f32 %v3837, %v3838
    %v3840 = vsel %vm1494, %v3774, 0.0
    %v3841 = vadd.f32 %v3839, %v3840
    %v3842 = vrot.slane %v3841, 4
    %v3843 = vadd.f32 %v3841, %v3842
    %v3844 = vrot.slane %v3843, 2
    %v3845 = vadd.f32 %v3843, %v3844
    %v3846 = vrot.slane %v3845, 1
    %v3847 = vadd.f32 %v3845, %v3846
    %v3849 = vsel %vm1494, %v3847, 0
    %3851 = vmatprep.subr.mxu0 0.0
    %3852 = vmatpush1.msra.mxu0 0.0
    %3853 = vmatprep.subr.mxu0 0.0
    %3854 = vmatpush1.msra.mxu0 0.0
    %3855 = vmatprep.subr.mxu0 0.0
    %3856 = vmatpush1.msra.mxu0 0.0
    %3857 = vmatprep.subr.mxu0 0.0
    %3858 = vmatpush1.msra.mxu0 0.0
    %3859 = vmatprep.subr.mxu0 0.0
    %3860 = vmatpush1.msra.mxu0 0.0
    %3861 = vmatprep.subr.mxu0 0.0
    %3862 = vmatpush1.msra.mxu0 0.0
    %3863 = vmatprep.subr.mxu0 0.0
    %3864 = vmatpush1.msra.mxu0 0.0
    %3865 = vmatprep.subr.mxu0 0.0
    %3866 = vmatpush1.msra.mxu0 0.0
    %3867 = vmatprep.subr.mxu0 0.0
    %3868 = vmatpush1.msra.mxu0 0.0
    %3869 = vmatprep.subr.mxu0 0.0
    %3870 = vmatpush1.msra.mxu0 0.0
    %3871 = vmatprep.subr.mxu0 0.0
    %3872 = vmatpush1.msra.mxu0 0.0
    %3873 = vmatprep.subr.mxu0 0.0
    %3874 = vmatpush1.msra.mxu0 0.0
    %3875 = vmatprep.subr.mxu0 0.0
    %3876 = vmatpush1.msra.mxu0 0.0
    %3877 = vmatprep.subr.mxu0 0.0
    %3878 = vmatpush1.msra.mxu0 0.0
    %3879 = vmatprep.subr.mxu0 0.0
    %v3880 = vand.u32 %v44, 4294901760
    %3881 = vmatpush1.msra.mxu0 %v3880
    %3882 = vmatprep.subr.mxu0 0.0
    %v3883 = vand.u32 %v43, 4294901760
    %3884 = vmatpush1.msra.mxu0 %v3883
    %3885 = vmatprep.subr.mxu0 0.0
    %3886 = vmatpush2.msra.mxu0 0.0
    %3887 = vmatprep.subr.mxu0 0.0
    %3888 = vmatpush2.msra.mxu0 0.0
    %3889 = vmatprep.subr.mxu0 0.0
    %3890 = vmatpush2.msra.mxu0 0.0
    %3891 = vmatprep.subr.mxu0 0.0
    %3892 = vmatpush2.msra.mxu0 0.0
    %3893 = vmatprep.subr.mxu0 0.0
    %3894 = vmatpush2.msra.mxu0 0.0
    %3895 = vmatprep.subr.mxu0 0.0
    %3896 = vmatpush2.msra.mxu0 0.0
    %3897 = vmatprep.subr.mxu0 0.0
    %3898 = vmatpush2.msra.mxu0 0.0
    %3899 = vmatprep.subr.mxu0 0.0
    %3900 = vmatpush2.msra.mxu0 0.0
    %3901 = vmatprep.subr.mxu0 0.0
    %3902 = vmatpush2.msra.mxu0 0.0
    %3903 = vmatprep.subr.mxu0 0.0
    %3904 = vmatpush2.msra.mxu0 0.0
    %3905 = vmatprep.subr.mxu0 0.0
    %3906 = vmatpush2.msra.mxu0 0.0
    %3907 = vmatprep.subr.mxu0 0.0
    %3908 = vmatpush2.msra.mxu0 0.0
    %3909 = vmatprep.subr.mxu0 0.0
    %3910 = vmatpush2.msra.mxu0 0.0
    %3911 = vmatprep.subr.mxu0 0.0
    %3912 = vmatpush2.msra.mxu0 0.0
    %3913 = vmatprep.subr.mxu0 0.0
    %3914 = vmatpush2.msra.mxu0 0.0
    %3915 = vmatprep.subr.mxu0 0.0
    %3916 = vmatpush2.msra.mxu0 0.0
    %3917 = vmatprep.mubr.f32.mxu0 0.0
    %v3918 = vand.u32 %v3849, 4294901760
    %v3919 = vsub.f32 %v3849, %v3918
    %v3920 = vand.u32 %v3919, 4294901760
    %v3921 = vsub.f32 %v3919, %v3920
    %v3922 = vand.u32 %v3921, 4294901760
    %3923 = vmatmul.mubr.f32.gmra.mxu0 %v3922
    %v3924 = vpop.f32.mrf.mxu0
    %v3925 = vadd.f32 0.0, %v3924
    %v3926 = vpop.f32.mrf.mxu0
    %3927 = vdwg.mxu0
    %3928 = vmatprep.subr.mxu0 0.0
    %3929 = vmatpush1.msra.mxu0 0.0
    %3930 = vmatprep.subr.mxu0 0.0
    %3931 = vmatpush1.msra.mxu0 0.0
    %3932 = vmatprep.subr.mxu0 0.0
    %3933 = vmatpush1.msra.mxu0 0.0
    %3934 = vmatprep.subr.mxu0 0.0
    %3935 = vmatpush1.msra.mxu0 0.0
    %3936 = vmatprep.subr.mxu0 0.0
    %3937 = vmatpush1.msra.mxu0 0.0
    %3938 = vmatprep.subr.mxu0 0.0
    %3939 = vmatpush1.msra.mxu0 0.0
    %3940 = vmatprep.subr.mxu0 0.0
    %3941 = vmatpush1.msra.mxu0 0.0
    %3942 = vmatprep.subr.mxu0 0.0
    %3943 = vmatpush1.msra.mxu0 0.0
    %3944 = vmatprep.subr.mxu0 0.0
    %3945 = vmatpush1.msra.mxu0 0.0
    %3946 = vmatprep.subr.mxu0 0.0
    %3947 = vmatpush1.msra.mxu0 0.0
    %3948 = vmatprep.subr.mxu0 0.0
    %3949 = vmatpush1.msra.mxu0 0.0
    %3950 = vmatprep.subr.mxu0 0.0
    %3951 = vmatpush1.msra.mxu0 0.0
    %3952 = vmatprep.subr.mxu0 0.0
    %3953 = vmatpush1.msra.mxu0 0.0
    %3954 = vmatprep.subr.mxu0 0.0
    %3955 = vmatpush1.msra.mxu0 0.0
    %3956 = vmatprep.subr.mxu0 0.0
    %v3957 = vand.u32 %v44, 4294901760
    %v3958 = vsub.f32 %v44, %v3957
    %v3959 = vand.u32 %v3958, 4294901760
    %v3960 = vsub.f32 %v3958, %v3959
    %v3961 = vand.u32 %v3960, 4294901760
    %3962 = vmatpush1.msra.mxu0 %v3961
    %3963 = vmatprep.subr.mxu0 0.0
    %v3964 = vand.u32 %v43, 4294901760
    %v3965 = vsub.f32 %v43, %v3964
    %v3966 = vand.u32 %v3965, 4294901760
    %v3967 = vsub.f32 %v3965, %v3966
    %v3968 = vand.u32 %v3967, 4294901760
    %3969 = vmatpush1.msra.mxu0 %v3968
    %3970 = vmatprep.subr.mxu0 0.0
    %3971 = vmatpush2.msra.mxu0 0.0
    %3972 = vmatprep.subr.mxu0 0.0
    %3973 = vmatpush2.msra.mxu0 0.0
    %3974 = vmatprep.subr.mxu0 0.0
    %3975 = vmatpush2.msra.mxu0 0.0
    %3976 = vmatprep.subr.mxu0 0.0
    %3977 = vmatpush2.msra.mxu0 0.0
    %3978 = vmatprep.subr.mxu0 0.0
    %3979 = vmatpush2.msra.mxu0 0.0
    %3980 = vmatprep.subr.mxu0 0.0
    %3981 = vmatpush2.msra.mxu0 0.0
    %3982 = vmatprep.subr.mxu0 0.0
    %3983 = vmatpush2.msra.mxu0 0.0
    %3984 = vmatprep.subr.mxu0 0.0
    %3985 = vmatpush2.msra.mxu0 0.0
    %3986 = vmatprep.subr.mxu0 0.0
    %3987 = vmatpush2.msra.mxu0 0.0
    %3988 = vmatprep.subr.mxu0 0.0
    %3989 = vmatpush2.msra.mxu0 0.0
    %3990 = vmatprep.subr.mxu0 0.0
    %3991 = vmatpush2.msra.mxu0 0.0
    %3992 = vmatprep.subr.mxu0 0.0
    %3993 = vmatpush2.msra.mxu0 0.0
    %3994 = vmatprep.subr.mxu0 0.0
    %3995 = vmatpush2.msra.mxu0 0.0
    %3996 = vmatprep.subr.mxu0 0.0
    %3997 = vmatpush2.msra.mxu0 0.0
    %3998 = vmatprep.subr.mxu0 0.0
    %3999 = vmatpush2.msra.mxu0 0.0
    %4000 = vmatprep.subr.mxu0 0.0
    %4001 = vmatpush2.msra.mxu0 0.0
    %4002 = vmatprep.mubr.f32.mxu0 0.0
    %v4003 = vand.u32 %v3849, 4294901760
    %4004 = vmatmul.mubr.f32.gmra.mxu0 %v4003
    %v4005 = vpop.f32.mrf.mxu0
    %v4006 = vadd.f32 %v3925, %v4005
    %v4007 = vpop.f32.mrf.mxu0
    %4008 = vdwg.mxu0
    %4009 = vmatprep.subr.mxu0 0.0
    %4010 = vmatpush1.msra.mxu0 0.0
    %4011 = vmatprep.subr.mxu0 0.0
    %4012 = vmatpush1.msra.mxu0 0.0
    %4013 = vmatprep.subr.mxu0 0.0
    %4014 = vmatpush1.msra.mxu0 0.0
    %4015 = vmatprep.subr.mxu0 0.0
    %4016 = vmatpush1.msra.mxu0 0.0
    %4017 = vmatprep.subr.mxu0 0.0
    %4018 = vmatpush1.msra.mxu0 0.0
    %4019 = vmatprep.subr.mxu0 0.0
    %4020 = vmatpush1.msra.mxu0 0.0
    %4021 = vmatprep.subr.mxu0 0.0
    %4022 = vmatpush1.msra.mxu0 0.0
    %4023 = vmatprep.subr.mxu0 0.0
    %4024 = vmatpush1.msra.mxu0 0.0
    %4025 = vmatprep.subr.mxu0 0.0
    %4026 = vmatpush1.msra.mxu0 0.0
    %4027 = vmatprep.subr.mxu0 0.0
    %4028 = vmatpush1.msra.mxu0 0.0
    %4029 = vmatprep.subr.mxu0 0.0
    %4030 = vmatpush1.msra.mxu0 0.0
    %4031 = vmatprep.subr.mxu0 0.0
    %4032 = vmatpush1.msra.mxu0 0.0
    %4033 = vmatprep.subr.mxu0 0.0
    %4034 = vmatpush1.msra.mxu0 0.0
    %4035 = vmatprep.subr.mxu0 0.0
    %4036 = vmatpush1.msra.mxu0 0.0
    %4037 = vmatprep.subr.mxu0 0.0
    %v4038 = vand.u32 %v44, 4294901760
    %v4039 = vsub.f32 %v44, %v4038
    %4040 = vmatpush1.msra.mxu0 %v4039
    %4041 = vmatprep.subr.mxu0 0.0
    %v4042 = vand.u32 %v43, 4294901760
    %v4043 = vsub.f32 %v43, %v4042
    %4044 = vmatpush1.msra.mxu0 %v4043
    %4045 = vmatprep.subr.mxu0 0.0
    %4046 = vmatpush2.msra.mxu0 0.0
    %4047 = vmatprep.subr.mxu0 0.0
    %4048 = vmatpush2.msra.mxu0 0.0
    %4049 = vmatprep.subr.mxu0 0.0
    %4050 = vmatpush2.msra.mxu0 0.0
    %4051 = vmatprep.subr.mxu0 0.0
    %4052 = vmatpush2.msra.mxu0 0.0
    %4053 = vmatprep.subr.mxu0 0.0
    %4054 = vmatpush2.msra.mxu0 0.0
    %4055 = vmatprep.subr.mxu0 0.0
    %4056 = vmatpush2.msra.mxu0 0.0
    %4057 = vmatprep.subr.mxu0 0.0
    %4058 = vmatpush2.msra.mxu0 0.0
    %4059 = vmatprep.subr.mxu0 0.0
    %4060 = vmatpush2.msra.mxu0 0.0
    %4061 = vmatprep.subr.mxu0 0.0
    %4062 = vmatpush2.msra.mxu0 0.0
    %4063 = vmatprep.subr.mxu0 0.0
    %4064 = vmatpush2.msra.mxu0 0.0
    %4065 = vmatprep.subr.mxu0 0.0
    %4066 = vmatpush2.msra.mxu0 0.0
    %4067 = vmatprep.subr.mxu0 0.0
    %4068 = vmatpush2.msra.mxu0 0.0
    %4069 = vmatprep.subr.mxu0 0.0
    %4070 = vmatpush2.msra.mxu0 0.0
    %4071 = vmatprep.subr.mxu0 0.0
    %4072 = vmatpush2.msra.mxu0 0.0
    %4073 = vmatprep.subr.mxu0 0.0
    %4074 = vmatpush2.msra.mxu0 0.0
    %4075 = vmatprep.subr.mxu0 0.0
    %4076 = vmatpush2.msra.mxu0 0.0
    %4077 = vmatprep.mubr.f32.mxu0 0.0
    %v4078 = vand.u32 %v3849, 4294901760
    %v4079 = vsub.f32 %v3849, %v4078
    %4080 = vmatmul.mubr.f32.gmra.mxu0 %v4079
    %v4081 = vpop.f32.mrf.mxu0
    %v4082 = vadd.f32 %v4006, %v4081
    %v4083 = vpop.f32.mrf.mxu0
    %4084 = vdwg.mxu0
    %4085 = vmatprep.subr.mxu0 0.0
    %4086 = vmatpush1.msra.mxu0 0.0
    %4087 = vmatprep.subr.mxu0 0.0
    %4088 = vmatpush1.msra.mxu0 0.0
    %4089 = vmatprep.subr.mxu0 0.0
    %4090 = vmatpush1.msra.mxu0 0.0
    %4091 = vmatprep.subr.mxu0 0.0
    %4092 = vmatpush1.msra.mxu0 0.0
    %4093 = vmatprep.subr.mxu0 0.0
    %4094 = vmatpush1.msra.mxu0 0.0
    %4095 = vmatprep.subr.mxu0 0.0
    %4096 = vmatpush1.msra.mxu0 0.0
    %4097 = vmatprep.subr.mxu0 0.0
    %4098 = vmatpush1.msra.mxu0 0.0
    %4099 = vmatprep.subr.mxu0 0.0
    %4100 = vmatpush1.msra.mxu0 0.0
    %4101 = vmatprep.subr.mxu0 0.0
    %4102 = vmatpush1.msra.mxu0 0.0
    %4103 = vmatprep.subr.mxu0 0.0
    %4104 = vmatpush1.msra.mxu0 0.0
    %4105 = vmatprep.subr.mxu0 0.0
    %4106 = vmatpush1.msra.mxu0 0.0
    %4107 = vmatprep.subr.mxu0 0.0
    %4108 = vmatpush1.msra.mxu0 0.0
    %4109 = vmatprep.subr.mxu0 0.0
    %4110 = vmatpush1.msra.mxu0 0.0
    %4111 = vmatprep.subr.mxu0 0.0
    %4112 = vmatpush1.msra.mxu0 0.0
    %4113 = vmatprep.subr.mxu0 0.0
    %v4114 = vand.u32 %v44, 4294901760
    %4115 = vmatpush1.msra.mxu0 %v4114
    %4116 = vmatprep.subr.mxu0 0.0
    %v4117 = vand.u32 %v43, 4294901760
    %4118 = vmatpush1.msra.mxu0 %v4117
    %4119 = vmatprep.subr.mxu0 0.0
    %4120 = vmatpush2.msra.mxu0 0.0
    %4121 = vmatprep.subr.mxu0 0.0
    %4122 = vmatpush2.msra.mxu0 0.0
    %4123 = vmatprep.subr.mxu0 0.0
    %4124 = vmatpush2.msra.mxu0 0.0
    %4125 = vmatprep.subr.mxu0 0.0
    %4126 = vmatpush2.msra.mxu0 0.0
    %4127 = vmatprep.subr.mxu0 0.0
    %4128 = vmatpush2.msra.mxu0 0.0
    %4129 = vmatprep.subr.mxu0 0.0
    %4130 = vmatpush2.msra.mxu0 0.0
    %4131 = vmatprep.subr.mxu0 0.0
    %4132 = vmatpush2.msra.mxu0 0.0
    %4133 = vmatprep.subr.mxu0 0.0
    %4134 = vmatpush2.msra.mxu0 0.0
    %4135 = vmatprep.subr.mxu0 0.0
    %4136 = vmatpush2.msra.mxu0 0.0
    %4137 = vmatprep.subr.mxu0 0.0
    %4138 = vmatpush2.msra.mxu0 0.0
    %4139 = vmatprep.subr.mxu0 0.0
    %4140 = vmatpush2.msra.mxu0 0.0
    %4141 = vmatprep.subr.mxu0 0.0
    %4142 = vmatpush2.msra.mxu0 0.0
    %4143 = vmatprep.subr.mxu0 0.0
    %4144 = vmatpush2.msra.mxu0 0.0
    %4145 = vmatprep.subr.mxu0 0.0
    %4146 = vmatpush2.msra.mxu0 0.0
    %4147 = vmatprep.subr.mxu0 0.0
    %4148 = vmatpush2.msra.mxu0 0.0
    %4149 = vmatprep.subr.mxu0 0.0
    %4150 = vmatpush2.msra.mxu0 0.0
    %4151 = vmatprep.mubr.f32.mxu0 0.0
    %v4152 = vand.u32 %v3849, 4294901760
    %v4153 = vsub.f32 %v3849, %v4152
    %v4154 = vand.u32 %v4153, 4294901760
    %4155 = vmatmul.mubr.f32.gmra.mxu0 %v4154
    %v4156 = vpop.f32.mrf.mxu0
    %v4157 = vadd.f32 %v4082, %v4156
    %v4158 = vpop.f32.mrf.mxu0
    %4159 = vdwg.mxu0
    %4160 = vmatprep.subr.mxu0 0.0
    %4161 = vmatpush1.msra.mxu0 0.0
    %4162 = vmatprep.subr.mxu0 0.0
    %4163 = vmatpush1.msra.mxu0 0.0
    %4164 = vmatprep.subr.mxu0 0.0
    %4165 = vmatpush1.msra.mxu0 0.0
    %4166 = vmatprep.subr.mxu0 0.0
    %4167 = vmatpush1.msra.mxu0 0.0
    %4168 = vmatprep.subr.mxu0 0.0
    %4169 = vmatpush1.msra.mxu0 0.0
    %4170 = vmatprep.subr.mxu0 0.0
    %4171 = vmatpush1.msra.mxu0 0.0
    %4172 = vmatprep.subr.mxu0 0.0
    %4173 = vmatpush1.msra.mxu0 0.0
    %4174 = vmatprep.subr.mxu0 0.0
    %4175 = vmatpush1.msra.mxu0 0.0
    %4176 = vmatprep.subr.mxu0 0.0
    %4177 = vmatpush1.msra.mxu0 0.0
    %4178 = vmatprep.subr.mxu0 0.0
    %4179 = vmatpush1.msra.mxu0 0.0
    %4180 = vmatprep.subr.mxu0 0.0
    %4181 = vmatpush1.msra.mxu0 0.0
    %4182 = vmatprep.subr.mxu0 0.0
    %4183 = vmatpush1.msra.mxu0 0.0
    %4184 = vmatprep.subr.mxu0 0.0
    %4185 = vmatpush1.msra.mxu0 0.0
    %4186 = vmatprep.subr.mxu0 0.0
    %4187 = vmatpush1.msra.mxu0 0.0
    %4188 = vmatprep.subr.mxu0 0.0
    %v4189 = vand.u32 %v44, 4294901760
    %v4190 = vsub.f32 %v44, %v4189
    %v4191 = vand.u32 %v4190, 4294901760
    %4192 = vmatpush1.msra.mxu0 %v4191
    %4193 = vmatprep.subr.mxu0 0.0
    %v4194 = vand.u32 %v43, 4294901760
    %v4195 = vsub.f32 %v43, %v4194
    %v4196 = vand.u32 %v4195, 4294901760
    %4197 = vmatpush1.msra.mxu0 %v4196
    %4198 = vmatprep.subr.mxu0 0.0
    %4199 = vmatpush2.msra.mxu0 0.0
    %4200 = vmatprep.subr.mxu0 0.0
    %4201 = vmatpush2.msra.mxu0 0.0
    %4202 = vmatprep.subr.mxu0 0.0
    %4203 = vmatpush2.msra.mxu0 0.0
    %4204 = vmatprep.subr.mxu0 0.0
    %4205 = vmatpush2.msra.mxu0 0.0
    %4206 = vmatprep.subr.mxu0 0.0
    %4207 = vmatpush2.msra.mxu0 0.0
    %4208 = vmatprep.subr.mxu0 0.0
    %4209 = vmatpush2.msra.mxu0 0.0
    %4210 = vmatprep.subr.mxu0 0.0
    %4211 = vmatpush2.msra.mxu0 0.0
    %4212 = vmatprep.subr.mxu0 0.0
    %4213 = vmatpush2.msra.mxu0 0.0
    %4214 = vmatprep.subr.mxu0 0.0
    %4215 = vmatpush2.msra.mxu0 0.0
    %4216 = vmatprep.subr.mxu0 0.0
    %4217 = vmatpush2.msra.mxu0 0.0
    %4218 = vmatprep.subr.mxu0 0.0
    %4219 = vmatpush2.msra.mxu0 0.0
    %4220 = vmatprep.subr.mxu0 0.0
    %4221 = vmatpush2.msra.mxu0 0.0
    %4222 = vmatprep.subr.mxu0 0.0
    %4223 = vmatpush2.msra.mxu0 0.0
    %4224 = vmatprep.subr.mxu0 0.0
    %4225 = vmatpush2.msra.mxu0 0.0
    %4226 = vmatprep.subr.mxu0 0.0
    %4227 = vmatpush2.msra.mxu0 0.0
    %4228 = vmatprep.subr.mxu0 0.0
    %4229 = vmatpush2.msra.mxu0 0.0
    %4230 = vmatprep.mubr.f32.mxu0 0.0
    %v4231 = vand.u32 %v3849, 4294901760
    %4232 = vmatmul.mubr.f32.gmra.mxu0 %v4231
    %v4233 = vpop.f32.mrf.mxu0
    %v4234 = vadd.f32 %v4157, %v4233
    %v4235 = vpop.f32.mrf.mxu0
    %4236 = vdwg.mxu0
    %4237 = vmatprep.subr.mxu0 0.0
    %4238 = vmatpush1.msra.mxu0 0.0
    %4239 = vmatprep.subr.mxu0 0.0
    %4240 = vmatpush1.msra.mxu0 0.0
    %4241 = vmatprep.subr.mxu0 0.0
    %4242 = vmatpush1.msra.mxu0 0.0
    %4243 = vmatprep.subr.mxu0 0.0
    %4244 = vmatpush1.msra.mxu0 0.0
    %4245 = vmatprep.subr.mxu0 0.0
    %4246 = vmatpush1.msra.mxu0 0.0
    %4247 = vmatprep.subr.mxu0 0.0
    %4248 = vmatpush1.msra.mxu0 0.0
    %4249 = vmatprep.subr.mxu0 0.0
    %4250 = vmatpush1.msra.mxu0 0.0
    %4251 = vmatprep.subr.mxu0 0.0
    %4252 = vmatpush1.msra.mxu0 0.0
    %4253 = vmatprep.subr.mxu0 0.0
    %4254 = vmatpush1.msra.mxu0 0.0
    %4255 = vmatprep.subr.mxu0 0.0
    %4256 = vmatpush1.msra.mxu0 0.0
    %4257 = vmatprep.subr.mxu0 0.0
    %4258 = vmatpush1.msra.mxu0 0.0
    %4259 = vmatprep.subr.mxu0 0.0
    %4260 = vmatpush1.msra.mxu0 0.0
    %4261 = vmatprep.subr.mxu0 0.0
    %4262 = vmatpush1.msra.mxu0 0.0
    %4263 = vmatprep.subr.mxu0 0.0
    %4264 = vmatpush1.msra.mxu0 0.0
    %4265 = vmatprep.subr.mxu0 0.0
    %v4266 = vand.u32 %v44, 4294901760
    %4267 = vmatpush1.msra.mxu0 %v4266
    %4268 = vmatprep.subr.mxu0 0.0
    %v4269 = vand.u32 %v43, 4294901760
    %4270 = vmatpush1.msra.mxu0 %v4269
    %4271 = vmatprep.subr.mxu0 0.0
    %4272 = vmatpush2.msra.mxu0 0.0
    %4273 = vmatprep.subr.mxu0 0.0
    %4274 = vmatpush2.msra.mxu0 0.0
    %4275 = vmatprep.subr.mxu0 0.0
    %4276 = vmatpush2.msra.mxu0 0.0
    %4277 = vmatprep.subr.mxu0 0.0
    %4278 = vmatpush2.msra.mxu0 0.0
    %4279 = vmatprep.subr.mxu0 0.0
    %4280 = vmatpush2.msra.mxu0 0.0
    %4281 = vmatprep.subr.mxu0 0.0
    %4282 = vmatpush2.msra.mxu0 0.0
    %4283 = vmatprep.subr.mxu0 0.0
    %4284 = vmatpush2.msra.mxu0 0.0
    %4285 = vmatprep.subr.mxu0 0.0
    %4286 = vmatpush2.msra.mxu0 0.0
    %4287 = vmatprep.subr.mxu0 0.0
    %4288 = vmatpush2.msra.mxu0 0.0
    %4289 = vmatprep.subr.mxu0 0.0
    %4290 = vmatpush2.msra.mxu0 0.0
    %4291 = vmatprep.subr.mxu0 0.0
    %4292 = vmatpush2.msra.mxu0 0.0
    %4293 = vmatprep.subr.mxu0 0.0
    %4294 = vmatpush2.msra.mxu0 0.0
    %4295 = vmatprep.subr.mxu0 0.0
    %4296 = vmatpush2.msra.mxu0 0.0
    %4297 = vmatprep.subr.mxu0 0.0
    %4298 = vmatpush2.msra.mxu0 0.0
    %4299 = vmatprep.subr.mxu0 0.0
    %4300 = vmatpush2.msra.mxu0 0.0
    %4301 = vmatprep.subr.mxu0 0.0
    %4302 = vmatpush2.msra.mxu0 0.0
    %4303 = vmatprep.mubr.f32.mxu0 0.0
    %v4304 = vand.u32 %v3849, 4294901760
    %4305 = vmatmul.mubr.f32.gmra.mxu0 %v4304
    %v4306 = vpop.f32.mrf.mxu0
    %v4307 = vadd.f32 %v4234, %v4306
    %v4308 = vpop.f32.mrf.mxu0
    %4309 = vdwg.mxu0
    %v4310 = vmul.f32 %v3651, %v3651
    %v4311 = vmul.f32 %v3654, %v3654
    %v4312 = vmul.f32 %v3659, %v3659
    %v4313 = vmul.f32 %v3662, %v3662
    %v4314 = vmul.f32 %v3667, %v3667
    %v4315 = vmul.f32 %v3670, %v3670
    %v4316 = vmul.f32 %v3675, %v3675
    %v4317 = vmul.f32 %v3678, %v3678
    %v4318 = vmul.f32 %v3683, %v3683
    %v4319 = vmul.f32 %v3686, %v3686
    %v4320 = vmul.f32 %v3691, %v3691
    %v4321 = vmul.f32 %v3694, %v3694
    %v4322 = vmul.f32 %v3699, %v3699
    %v4323 = vmul.f32 %v3702, %v3702
    %v4324 = vmul.f32 %v3707, %v3707
    %v4325 = vmul.f32 %v3710, %v3710
    %v4326 = vmul.f32 %v3715, %v3715
    %v4327 = vmul.f32 %v3718, %v3718
    %v4328 = vmul.f32 %v3723, %v3723
    %v4329 = vmul.f32 %v3726, %v3726
    %v4330 = vmul.f32 %v3731, %v3731
    %v4331 = vmul.f32 %v3734, %v3734
    %v4332 = vmul.f32 %v3739, %v3739
    %v4333 = vmul.f32 %v3742, %v3742
    %v4334 = vmul.f32 %v3747, %v3747
    %v4335 = vmul.f32 %v3750, %v3750
    %v4336 = vmul.f32 %v3755, %v3755
    %v4337 = vmul.f32 %v3758, %v3758
    %v4338 = vmul.f32 %v3763, %v3763
    %v4339 = vmul.f32 %v3766, %v3766
    %v4340 = vmul.f32 %v3771, %v3771
    %v4341 = vmul.f32 %v3774, %v3774
    %v4342 = vsel %vm1494, %v4310, 0.0
    %v4343 = vsel %vm1494, %v4311, 0.0
    %v4344 = vadd.f32 %v4342, %v4343
    %v4345 = vsel %vm1494, %v4312, 0.0
    %v4346 = vadd.f32 %v4344, %v4345
    %v4347 = vsel %vm1494, %v4313, 0.0
    %v4348 = vadd.f32 %v4346, %v4347
    %v4349 = vsel %vm1494, %v4314, 0.0
    %v4350 = vadd.f32 %v4348, %v4349
    %v4351 = vsel %vm1494, %v4315, 0.0
    %v4352 = vadd.f32 %v4350, %v4351
    %v4353 = vsel %vm1494, %v4316, 0.0
    %v4354 = vadd.f32 %v4352, %v4353
    %v4355 = vsel %vm1494, %v4317, 0.0
    %v4356 = vadd.f32 %v4354, %v4355
    %v4357 = vsel %vm1494, %v4318, 0.0
    %v4358 = vadd.f32 %v4356, %v4357
    %v4359 = vsel %vm1494, %v4319, 0.0
    %v4360 = vadd.f32 %v4358, %v4359
    %v4361 = vsel %vm1494, %v4320, 0.0
    %v4362 = vadd.f32 %v4360, %v4361
    %v4363 = vsel %vm1494, %v4321, 0.0
    %v4364 = vadd.f32 %v4362, %v4363
    %v4365 = vsel %vm1494, %v4322, 0.0
    %v4366 = vadd.f32 %v4364, %v4365
    %v4367 = vsel %vm1494, %v4323, 0.0
    %v4368 = vadd.f32 %v4366, %v4367
    %v4369 = vsel %vm1494, %v4324, 0.0
    %v4370 = vadd.f32 %v4368, %v4369
    %v4371 = vsel %vm1494, %v4325, 0.0
    %v4372 = vadd.f32 %v4370, %v4371
    %v4373 = vsel %vm1494, %v4326, 0.0
    %v4374 = vadd.f32 %v4372, %v4373
    %v4375 = vsel %vm1494, %v4327, 0.0
    %v4376 = vadd.f32 %v4374, %v4375
    %v4377 = vsel %vm1494, %v4328, 0.0
    %v4378 = vadd.f32 %v4376, %v4377
    %v4379 = vsel %vm1494, %v4329, 0.0
    %v4380 = vadd.f32 %v4378, %v4379
    %v4381 = vsel %vm1494, %v4330, 0.0
    %v4382 = vadd.f32 %v4380, %v4381
    %v4383 = vsel %vm1494, %v4331, 0.0
    %v4384 = vadd.f32 %v4382, %v4383
    %v4385 = vsel %vm1494, %v4332, 0.0
    %v4386 = vadd.f32 %v4384, %v4385
    %v4387 = vsel %vm1494, %v4333, 0.0
    %v4388 = vadd.f32 %v4386, %v4387
    %v4389 = vsel %vm1494, %v4334, 0.0
    %v4390 = vadd.f32 %v4388, %v4389
    %v4391 = vsel %vm1494, %v4335, 0.0
    %v4392 = vadd.f32 %v4390, %v4391
    %v4393 = vsel %vm1494, %v4336, 0.0
    %v4394 = vadd.f32 %v4392, %v4393
    %v4395 = vsel %vm1494, %v4337, 0.0
    %v4396 = vadd.f32 %v4394, %v4395
    %v4397 = vsel %vm1494, %v4338, 0.0
    %v4398 = vadd.f32 %v4396, %v4397
    %v4399 = vsel %vm1494, %v4339, 0.0
    %v4400 = vadd.f32 %v4398, %v4399
    %v4401 = vsel %vm1494, %v4340, 0.0
    %v4402 = vadd.f32 %v4400, %v4401
    %v4403 = vsel %vm1494, %v4341, 0.0
    %v4404 = vadd.f32 %v4402, %v4403
    %v4405 = vrot.slane %v4404, 4
    %v4406 = vadd.f32 %v4404, %v4405
    %v4407 = vrot.slane %v4406, 2
    %v4408 = vadd.f32 %v4406, %v4407
    %v4409 = vrot.slane %v4408, 1
    %v4410 = vadd.f32 %v4408, %v4409
    %v4412 = vsel %vm1494, %v4410, 0
    %4414 = vmatprep.subr.mxu0 0.0
    %4415 = vmatpush1.msra.mxu0 0.0
    %4416 = vmatprep.subr.mxu0 0.0
    %4417 = vmatpush1.msra.mxu0 0.0
    %4418 = vmatprep.subr.mxu0 0.0
    %4419 = vmatpush1.msra.mxu0 0.0
    %4420 = vmatprep.subr.mxu0 0.0
    %4421 = vmatpush1.msra.mxu0 0.0
    %4422 = vmatprep.subr.mxu0 0.0
    %4423 = vmatpush1.msra.mxu0 0.0
    %4424 = vmatprep.subr.mxu0 0.0
    %4425 = vmatpush1.msra.mxu0 0.0
    %4426 = vmatprep.subr.mxu0 0.0
    %4427 = vmatpush1.msra.mxu0 0.0
    %4428 = vmatprep.subr.mxu0 0.0
    %4429 = vmatpush1.msra.mxu0 0.0
    %4430 = vmatprep.subr.mxu0 0.0
    %4431 = vmatpush1.msra.mxu0 0.0
    %4432 = vmatprep.subr.mxu0 0.0
    %4433 = vmatpush1.msra.mxu0 0.0
    %4434 = vmatprep.subr.mxu0 0.0
    %4435 = vmatpush1.msra.mxu0 0.0
    %4436 = vmatprep.subr.mxu0 0.0
    %4437 = vmatpush1.msra.mxu0 0.0
    %4438 = vmatprep.subr.mxu0 0.0
    %4439 = vmatpush1.msra.mxu0 0.0
    %4440 = vmatprep.subr.mxu0 0.0
    %4441 = vmatpush1.msra.mxu0 0.0
    %4442 = vmatprep.subr.mxu0 0.0
    %v4443 = vand.u32 %v44, 4294901760
    %4444 = vmatpush1.msra.mxu0 %v4443
    %4445 = vmatprep.subr.mxu0 0.0
    %v4446 = vand.u32 %v43, 4294901760
    %4447 = vmatpush1.msra.mxu0 %v4446
    %4448 = vmatprep.subr.mxu0 0.0
    %4449 = vmatpush2.msra.mxu0 0.0
    %4450 = vmatprep.subr.mxu0 0.0
    %4451 = vmatpush2.msra.mxu0 0.0
    %4452 = vmatprep.subr.mxu0 0.0
    %4453 = vmatpush2.msra.mxu0 0.0
    %4454 = vmatprep.subr.mxu0 0.0
    %4455 = vmatpush2.msra.mxu0 0.0
    %4456 = vmatprep.subr.mxu0 0.0
    %4457 = vmatpush2.msra.mxu0 0.0
    %4458 = vmatprep.subr.mxu0 0.0
    %4459 = vmatpush2.msra.mxu0 0.0
    %4460 = vmatprep.subr.mxu0 0.0
    %4461 = vmatpush2.msra.mxu0 0.0
    %4462 = vmatprep.subr.mxu0 0.0
    %4463 = vmatpush2.msra.mxu0 0.0
    %4464 = vmatprep.subr.mxu0 0.0
    %4465 = vmatpush2.msra.mxu0 0.0
    %4466 = vmatprep.subr.mxu0 0.0
    %4467 = vmatpush2.msra.mxu0 0.0
    %4468 = vmatprep.subr.mxu0 0.0
    %4469 = vmatpush2.msra.mxu0 0.0
    %4470 = vmatprep.subr.mxu0 0.0
    %4471 = vmatpush2.msra.mxu0 0.0
    %4472 = vmatprep.subr.mxu0 0.0
    %4473 = vmatpush2.msra.mxu0 0.0
    %4474 = vmatprep.subr.mxu0 0.0
    %4475 = vmatpush2.msra.mxu0 0.0
    %4476 = vmatprep.subr.mxu0 0.0
    %4477 = vmatpush2.msra.mxu0 0.0
    %4478 = vmatprep.subr.mxu0 0.0
    %4479 = vmatpush2.msra.mxu0 0.0
    %4480 = vmatprep.mubr.f32.mxu0 0.0
    %v4481 = vand.u32 %v4412, 4294901760
    %v4482 = vsub.f32 %v4412, %v4481
    %v4483 = vand.u32 %v4482, 4294901760
    %v4484 = vsub.f32 %v4482, %v4483
    %v4485 = vand.u32 %v4484, 4294901760
    %4486 = vmatmul.mubr.f32.gmra.mxu0 %v4485
    %v4487 = vpop.f32.mrf.mxu0
    %v4488 = vadd.f32 0.0, %v4487
    %v4489 = vpop.f32.mrf.mxu0
    %4490 = vdwg.mxu0
    %4491 = vmatprep.subr.mxu0 0.0
    %4492 = vmatpush1.msra.mxu0 0.0
    %4493 = vmatprep.subr.mxu0 0.0
    %4494 = vmatpush1.msra.mxu0 0.0
    %4495 = vmatprep.subr.mxu0 0.0
    %4496 = vmatpush1.msra.mxu0 0.0
    %4497 = vmatprep.subr.mxu0 0.0
    %4498 = vmatpush1.msra.mxu0 0.0
    %4499 = vmatprep.subr.mxu0 0.0
    %4500 = vmatpush1.msra.mxu0 0.0
    %4501 = vmatprep.subr.mxu0 0.0
    %4502 = vmatpush1.msra.mxu0 0.0
    %4503 = vmatprep.subr.mxu0 0.0
    %4504 = vmatpush1.msra.mxu0 0.0
    %4505 = vmatprep.subr.mxu0 0.0
    %4506 = vmatpush1.msra.mxu0 0.0
    %4507 = vmatprep.subr.mxu0 0.0
    %4508 = vmatpush1.msra.mxu0 0.0
    %4509 = vmatprep.subr.mxu0 0.0
    %4510 = vmatpush1.msra.mxu0 0.0
    %4511 = vmatprep.subr.mxu0 0.0
    %4512 = vmatpush1.msra.mxu0 0.0
    %4513 = vmatprep.subr.mxu0 0.0
    %4514 = vmatpush1.msra.mxu0 0.0
    %4515 = vmatprep.subr.mxu0 0.0
    %4516 = vmatpush1.msra.mxu0 0.0
    %4517 = vmatprep.subr.mxu0 0.0
    %4518 = vmatpush1.msra.mxu0 0.0
    %4519 = vmatprep.subr.mxu0 0.0
    %v4520 = vand.u32 %v44, 4294901760
    %v4521 = vsub.f32 %v44, %v4520
    %v4522 = vand.u32 %v4521, 4294901760
    %v4523 = vsub.f32 %v4521, %v4522
    %v4524 = vand.u32 %v4523, 4294901760
    %4525 = vmatpush1.msra.mxu0 %v4524
    %4526 = vmatprep.subr.mxu0 0.0
    %v4527 = vand.u32 %v43, 4294901760
    %v4528 = vsub.f32 %v43, %v4527
    %v4529 = vand.u32 %v4528, 4294901760
    %v4530 = vsub.f32 %v4528, %v4529
    %v4531 = vand.u32 %v4530, 4294901760
    %4532 = vmatpush1.msra.mxu0 %v4531
    %4533 = vmatprep.subr.mxu0 0.0
    %4534 = vmatpush2.msra.mxu0 0.0
    %4535 = vmatprep.subr.mxu0 0.0
    %4536 = vmatpush2.msra.mxu0 0.0
    %4537 = vmatprep.subr.mxu0 0.0
    %4538 = vmatpush2.msra.mxu0 0.0
    %4539 = vmatprep.subr.mxu0 0.0
    %4540 = vmatpush2.msra.mxu0 0.0
    %4541 = vmatprep.subr.mxu0 0.0
    %4542 = vmatpush2.msra.mxu0 0.0
    %4543 = vmatprep.subr.mxu0 0.0
    %4544 = vmatpush2.msra.mxu0 0.0
    %4545 = vmatprep.subr.mxu0 0.0
    %4546 = vmatpush2.msra.mxu0 0.0
    %4547 = vmatprep.subr.mxu0 0.0
    %4548 = vmatpush2.msra.mxu0 0.0
    %4549 = vmatprep.subr.mxu0 0.0
    %4550 = vmatpush2.msra.mxu0 0.0
    %4551 = vmatprep.subr.mxu0 0.0
    %4552 = vmatpush2.msra.mxu0 0.0
    %4553 = vmatprep.subr.mxu0 0.0
    %4554 = vmatpush2.msra.mxu0 0.0
    %4555 = vmatprep.subr.mxu0 0.0
    %4556 = vmatpush2.msra.mxu0 0.0
    %4557 = vmatprep.subr.mxu0 0.0
    %4558 = vmatpush2.msra.mxu0 0.0
    %4559 = vmatprep.subr.mxu0 0.0
    %4560 = vmatpush2.msra.mxu0 0.0
    %4561 = vmatprep.subr.mxu0 0.0
    %4562 = vmatpush2.msra.mxu0 0.0
    %4563 = vmatprep.subr.mxu0 0.0
    %4564 = vmatpush2.msra.mxu0 0.0
    %4565 = vmatprep.mubr.f32.mxu0 0.0
    %v4566 = vand.u32 %v4412, 4294901760
    %4567 = vmatmul.mubr.f32.gmra.mxu0 %v4566
    %v4568 = vpop.f32.mrf.mxu0
    %v4569 = vadd.f32 %v4488, %v4568
    %v4570 = vpop.f32.mrf.mxu0
    %4571 = vdwg.mxu0
    %4572 = vmatprep.subr.mxu0 0.0
    %4573 = vmatpush1.msra.mxu0 0.0
    %4574 = vmatprep.subr.mxu0 0.0
    %4575 = vmatpush1.msra.mxu0 0.0
    %4576 = vmatprep.subr.mxu0 0.0
    %4577 = vmatpush1.msra.mxu0 0.0
    %4578 = vmatprep.subr.mxu0 0.0
    %4579 = vmatpush1.msra.mxu0 0.0
    %4580 = vmatprep.subr.mxu0 0.0
    %4581 = vmatpush1.msra.mxu0 0.0
    %4582 = vmatprep.subr.mxu0 0.0
    %4583 = vmatpush1.msra.mxu0 0.0
    %4584 = vmatprep.subr.mxu0 0.0
    %4585 = vmatpush1.msra.mxu0 0.0
    %4586 = vmatprep.subr.mxu0 0.0
    %4587 = vmatpush1.msra.mxu0 0.0
    %4588 = vmatprep.subr.mxu0 0.0
    %4589 = vmatpush1.msra.mxu0 0.0
    %4590 = vmatprep.subr.mxu0 0.0
    %4591 = vmatpush1.msra.mxu0 0.0
    %4592 = vmatprep.subr.mxu0 0.0
    %4593 = vmatpush1.msra.mxu0 0.0
    %4594 = vmatprep.subr.mxu0 0.0
    %4595 = vmatpush1.msra.mxu0 0.0
    %4596 = vmatprep.subr.mxu0 0.0
    %4597 = vmatpush1.msra.mxu0 0.0
    %4598 = vmatprep.subr.mxu0 0.0
    %4599 = vmatpush1.msra.mxu0 0.0
    %4600 = vmatprep.subr.mxu0 0.0
    %v4601 = vand.u32 %v44, 4294901760
    %v4602 = vsub.f32 %v44, %v4601
    %4603 = vmatpush1.msra.mxu0 %v4602
    %4604 = vmatprep.subr.mxu0 0.0
    %v4605 = vand.u32 %v43, 4294901760
    %v4606 = vsub.f32 %v43, %v4605
    %4607 = vmatpush1.msra.mxu0 %v4606
    %4608 = vmatprep.subr.mxu0 0.0
    %4609 = vmatpush2.msra.mxu0 0.0
    %4610 = vmatprep.subr.mxu0 0.0
    %4611 = vmatpush2.msra.mxu0 0.0
    %4612 = vmatprep.subr.mxu0 0.0
    %4613 = vmatpush2.msra.mxu0 0.0
    %4614 = vmatprep.subr.mxu0 0.0
    %4615 = vmatpush2.msra.mxu0 0.0
    %4616 = vmatprep.subr.mxu0 0.0
    %4617 = vmatpush2.msra.mxu0 0.0
    %4618 = vmatprep.subr.mxu0 0.0
    %4619 = vmatpush2.msra.mxu0 0.0
    %4620 = vmatprep.subr.mxu0 0.0
    %4621 = vmatpush2.msra.mxu0 0.0
    %4622 = vmatprep.subr.mxu0 0.0
    %4623 = vmatpush2.msra.mxu0 0.0
    %4624 = vmatprep.subr.mxu0 0.0
    %4625 = vmatpush2.msra.mxu0 0.0
    %4626 = vmatprep.subr.mxu0 0.0
    %4627 = vmatpush2.msra.mxu0 0.0
    %4628 = vmatprep.subr.mxu0 0.0
    %4629 = vmatpush2.msra.mxu0 0.0
    %4630 = vmatprep.subr.mxu0 0.0
    %4631 = vmatpush2.msra.mxu0 0.0
    %4632 = vmatprep.subr.mxu0 0.0
    %4633 = vmatpush2.msra.mxu0 0.0
    %4634 = vmatprep.subr.mxu0 0.0
    %4635 = vmatpush2.msra.mxu0 0.0
    %4636 = vmatprep.subr.mxu0 0.0
    %4637 = vmatpush2.msra.mxu0 0.0
    %4638 = vmatprep.subr.mxu0 0.0
    %4639 = vmatpush2.msra.mxu0 0.0
    %4640 = vmatprep.mubr.f32.mxu0 0.0
    %v4641 = vand.u32 %v4412, 4294901760
    %v4642 = vsub.f32 %v4412, %v4641
    %4643 = vmatmul.mubr.f32.gmra.mxu0 %v4642
    %v4644 = vpop.f32.mrf.mxu0
    %v4645 = vadd.f32 %v4569, %v4644
    %v4646 = vpop.f32.mrf.mxu0
    %4647 = vdwg.mxu0
    %4648 = vmatprep.subr.mxu0 0.0
    %4649 = vmatpush1.msra.mxu0 0.0
    %4650 = vmatprep.subr.mxu0 0.0
    %4651 = vmatpush1.msra.mxu0 0.0
    %4652 = vmatprep.subr.mxu0 0.0
    %4653 = vmatpush1.msra.mxu0 0.0
    %4654 = vmatprep.subr.mxu0 0.0
    %4655 = vmatpush1.msra.mxu0 0.0
    %4656 = vmatprep.subr.mxu0 0.0
    %4657 = vmatpush1.msra.mxu0 0.0
    %4658 = vmatprep.subr.mxu0 0.0
    %4659 = vmatpush1.msra.mxu0 0.0
    %4660 = vmatprep.subr.mxu0 0.0
    %4661 = vmatpush1.msra.mxu0 0.0
    %4662 = vmatprep.subr.mxu0 0.0
    %4663 = vmatpush1.msra.mxu0 0.0
    %4664 = vmatprep.subr.mxu0 0.0
    %4665 = vmatpush1.msra.mxu0 0.0
    %4666 = vmatprep.subr.mxu0 0.0
    %4667 = vmatpush1.msra.mxu0 0.0
    %4668 = vmatprep.subr.mxu0 0.0
    %4669 = vmatpush1.msra.mxu0 0.0
    %4670 = vmatprep.subr.mxu0 0.0
    %4671 = vmatpush1.msra.mxu0 0.0
    %4672 = vmatprep.subr.mxu0 0.0
    %4673 = vmatpush1.msra.mxu0 0.0
    %4674 = vmatprep.subr.mxu0 0.0
    %4675 = vmatpush1.msra.mxu0 0.0
    %4676 = vmatprep.subr.mxu0 0.0
    %v4677 = vand.u32 %v44, 4294901760
    %4678 = vmatpush1.msra.mxu0 %v4677
    %4679 = vmatprep.subr.mxu0 0.0
    %v4680 = vand.u32 %v43, 4294901760
    %4681 = vmatpush1.msra.mxu0 %v4680
    %4682 = vmatprep.subr.mxu0 0.0
    %4683 = vmatpush2.msra.mxu0 0.0
    %4684 = vmatprep.subr.mxu0 0.0
    %4685 = vmatpush2.msra.mxu0 0.0
    %4686 = vmatprep.subr.mxu0 0.0
    %4687 = vmatpush2.msra.mxu0 0.0
    %4688 = vmatprep.subr.mxu0 0.0
    %4689 = vmatpush2.msra.mxu0 0.0
    %4690 = vmatprep.subr.mxu0 0.0
    %4691 = vmatpush2.msra.mxu0 0.0
    %4692 = vmatprep.subr.mxu0 0.0
    %4693 = vmatpush2.msra.mxu0 0.0
    %4694 = vmatprep.subr.mxu0 0.0
    %4695 = vmatpush2.msra.mxu0 0.0
    %4696 = vmatprep.subr.mxu0 0.0
    %4697 = vmatpush2.msra.mxu0 0.0
    %4698 = vmatprep.subr.mxu0 0.0
    %4699 = vmatpush2.msra.mxu0 0.0
    %4700 = vmatprep.subr.mxu0 0.0
    %4701 = vmatpush2.msra.mxu0 0.0
    %4702 = vmatprep.subr.mxu0 0.0
    %4703 = vmatpush2.msra.mxu0 0.0
    %4704 = vmatprep.subr.mxu0 0.0
    %4705 = vmatpush2.msra.mxu0 0.0
    %4706 = vmatprep.subr.mxu0 0.0
    %4707 = vmatpush2.msra.mxu0 0.0
    %4708 = vmatprep.subr.mxu0 0.0
    %4709 = vmatpush2.msra.mxu0 0.0
    %4710 = vmatprep.subr.mxu0 0.0
    %4711 = vmatpush2.msra.mxu0 0.0
    %4712 = vmatprep.subr.mxu0 0.0
    %4713 = vmatpush2.msra.mxu0 0.0
    %4714 = vmatprep.mubr.f32.mxu0 0.0
    %v4715 = vand.u32 %v4412, 4294901760
    %v4716 = vsub.f32 %v4412, %v4715
    %v4717 = vand.u32 %v4716, 4294901760
    %4718 = vmatmul.mubr.f32.gmra.mxu0 %v4717
    %v4719 = vpop.f32.mrf.mxu0
    %v4720 = vadd.f32 %v4645, %v4719
    %v4721 = vpop.f32.mrf.mxu0
    %4722 = vdwg.mxu0
    %4723 = vmatprep.subr.mxu0 0.0
    %4724 = vmatpush1.msra.mxu0 0.0
    %4725 = vmatprep.subr.mxu0 0.0
    %4726 = vmatpush1.msra.mxu0 0.0
    %4727 = vmatprep.subr.mxu0 0.0
    %4728 = vmatpush1.msra.mxu0 0.0
    %4729 = vmatprep.subr.mxu0 0.0
    %4730 = vmatpush1.msra.mxu0 0.0
    %4731 = vmatprep.subr.mxu0 0.0
    %4732 = vmatpush1.msra.mxu0 0.0
    %4733 = vmatprep.subr.mxu0 0.0
    %4734 = vmatpush1.msra.mxu0 0.0
    %4735 = vmatprep.subr.mxu0 0.0
    %4736 = vmatpush1.msra.mxu0 0.0
    %4737 = vmatprep.subr.mxu0 0.0
    %4738 = vmatpush1.msra.mxu0 0.0
    %4739 = vmatprep.subr.mxu0 0.0
    %4740 = vmatpush1.msra.mxu0 0.0
    %4741 = vmatprep.subr.mxu0 0.0
    %4742 = vmatpush1.msra.mxu0 0.0
    %4743 = vmatprep.subr.mxu0 0.0
    %4744 = vmatpush1.msra.mxu0 0.0
    %4745 = vmatprep.subr.mxu0 0.0
    %4746 = vmatpush1.msra.mxu0 0.0
    %4747 = vmatprep.subr.mxu0 0.0
    %4748 = vmatpush1.msra.mxu0 0.0
    %4749 = vmatprep.subr.mxu0 0.0
    %4750 = vmatpush1.msra.mxu0 0.0
    %4751 = vmatprep.subr.mxu0 0.0
    %v4752 = vand.u32 %v44, 4294901760
    %v4753 = vsub.f32 %v44, %v4752
    %v4754 = vand.u32 %v4753, 4294901760
    %4755 = vmatpush1.msra.mxu0 %v4754
    %4756 = vmatprep.subr.mxu0 0.0
    %v4757 = vand.u32 %v43, 4294901760
    %v4758 = vsub.f32 %v43, %v4757
    %v4759 = vand.u32 %v4758, 4294901760
    %4760 = vmatpush1.msra.mxu0 %v4759
    %4761 = vmatprep.subr.mxu0 0.0
    %4762 = vmatpush2.msra.mxu0 0.0
    %4763 = vmatprep.subr.mxu0 0.0
    %4764 = vmatpush2.msra.mxu0 0.0
    %4765 = vmatprep.subr.mxu0 0.0
    %4766 = vmatpush2.msra.mxu0 0.0
    %4767 = vmatprep.subr.mxu0 0.0
    %4768 = vmatpush2.msra.mxu0 0.0
    %4769 = vmatprep.subr.mxu0 0.0
    %4770 = vmatpush2.msra.mxu0 0.0
    %4771 = vmatprep.subr.mxu0 0.0
    %4772 = vmatpush2.msra.mxu0 0.0
    %4773 = vmatprep.subr.mxu0 0.0
    %4774 = vmatpush2.msra.mxu0 0.0
    %4775 = vmatprep.subr.mxu0 0.0
    %4776 = vmatpush2.msra.mxu0 0.0
    %4777 = vmatprep.subr.mxu0 0.0
    %4778 = vmatpush2.msra.mxu0 0.0
    %4779 = vmatprep.subr.mxu0 0.0
    %4780 = vmatpush2.msra.mxu0 0.0
    %4781 = vmatprep.subr.mxu0 0.0
    %4782 = vmatpush2.msra.mxu0 0.0
    %4783 = vmatprep.subr.mxu0 0.0
    %4784 = vmatpush2.msra.mxu0 0.0
    %4785 = vmatprep.subr.mxu0 0.0
    %4786 = vmatpush2.msra.mxu0 0.0
    %4787 = vmatprep.subr.mxu0 0.0
    %4788 = vmatpush2.msra.mxu0 0.0
    %4789 = vmatprep.subr.mxu0 0.0
    %4790 = vmatpush2.msra.mxu0 0.0
    %4791 = vmatprep.subr.mxu0 0.0
    %4792 = vmatpush2.msra.mxu0 0.0
    %4793 = vmatprep.mubr.f32.mxu0 0.0
    %v4794 = vand.u32 %v4412, 4294901760
    %4795 = vmatmul.mubr.f32.gmra.mxu0 %v4794
    %v4796 = vpop.f32.mrf.mxu0
    %v4797 = vadd.f32 %v4720, %v4796
    %v4798 = vpop.f32.mrf.mxu0
    %4799 = vdwg.mxu0
    %4800 = vmatprep.subr.mxu0 0.0
    %4801 = vmatpush1.msra.mxu0 0.0
    %4802 = vmatprep.subr.mxu0 0.0
    %4803 = vmatpush1.msra.mxu0 0.0
    %4804 = vmatprep.subr.mxu0 0.0
    %4805 = vmatpush1.msra.mxu0 0.0
    %4806 = vmatprep.subr.mxu0 0.0
    %4807 = vmatpush1.msra.mxu0 0.0
    %4808 = vmatprep.subr.mxu0 0.0
    %4809 = vmatpush1.msra.mxu0 0.0
    %4810 = vmatprep.subr.mxu0 0.0
    %4811 = vmatpush1.msra.mxu0 0.0
    %4812 = vmatprep.subr.mxu0 0.0
    %4813 = vmatpush1.msra.mxu0 0.0
    %4814 = vmatprep.subr.mxu0 0.0
    %4815 = vmatpush1.msra.mxu0 0.0
    %4816 = vmatprep.subr.mxu0 0.0
    %4817 = vmatpush1.msra.mxu0 0.0
    %4818 = vmatprep.subr.mxu0 0.0
    %4819 = vmatpush1.msra.mxu0 0.0
    %4820 = vmatprep.subr.mxu0 0.0
    %4821 = vmatpush1.msra.mxu0 0.0
    %4822 = vmatprep.subr.mxu0 0.0
    %4823 = vmatpush1.msra.mxu0 0.0
    %4824 = vmatprep.subr.mxu0 0.0
    %4825 = vmatpush1.msra.mxu0 0.0
    %4826 = vmatprep.subr.mxu0 0.0
    %4827 = vmatpush1.msra.mxu0 0.0
    %4828 = vmatprep.subr.mxu0 0.0
    %v4829 = vand.u32 %v44, 4294901760
    %4830 = vmatpush1.msra.mxu0 %v4829
    %4831 = vmatprep.subr.mxu0 0.0
    %v4832 = vand.u32 %v43, 4294901760
    %4833 = vmatpush1.msra.mxu0 %v4832
    %4834 = vmatprep.subr.mxu0 0.0
    %4835 = vmatpush2.msra.mxu0 0.0
    %4836 = vmatprep.subr.mxu0 0.0
    %4837 = vmatpush2.msra.mxu0 0.0
    %4838 = vmatprep.subr.mxu0 0.0
    %4839 = vmatpush2.msra.mxu0 0.0
    %4840 = vmatprep.subr.mxu0 0.0
    %4841 = vmatpush2.msra.mxu0 0.0
    %4842 = vmatprep.subr.mxu0 0.0
    %4843 = vmatpush2.msra.mxu0 0.0
    %4844 = vmatprep.subr.mxu0 0.0
    %4845 = vmatpush2.msra.mxu0 0.0
    %4846 = vmatprep.subr.mxu0 0.0
    %4847 = vmatpush2.msra.mxu0 0.0
    %4848 = vmatprep.subr.mxu0 0.0
    %4849 = vmatpush2.msra.mxu0 0.0
    %4850 = vmatprep.subr.mxu0 0.0
    %4851 = vmatpush2.msra.mxu0 0.0
    %4852 = vmatprep.subr.mxu0 0.0
    %4853 = vmatpush2.msra.mxu0 0.0
    %4854 = vmatprep.subr.mxu0 0.0
    %4855 = vmatpush2.msra.mxu0 0.0
    %4856 = vmatprep.subr.mxu0 0.0
    %4857 = vmatpush2.msra.mxu0 0.0
    %4858 = vmatprep.subr.mxu0 0.0
    %4859 = vmatpush2.msra.mxu0 0.0
    %4860 = vmatprep.subr.mxu0 0.0
    %4861 = vmatpush2.msra.mxu0 0.0
    %4862 = vmatprep.subr.mxu0 0.0
    %4863 = vmatpush2.msra.mxu0 0.0
    %4864 = vmatprep.subr.mxu0 0.0
    %4865 = vmatpush2.msra.mxu0 0.0
    %4866 = vmatprep.mubr.f32.mxu0 0.0
    %v4867 = vand.u32 %v4412, 4294901760
    %4868 = vmatmul.mubr.f32.gmra.mxu0 %v4867
    %v4869 = vpop.f32.mrf.mxu0
    %v4870 = vadd.f32 %v4797, %v4869
    %v4871 = vpop.f32.mrf.mxu0
    %4872 = vdwg.mxu0
    %v4873 = vmul.f32 %v4307, 0.001953125
    %v4874 = vmul.f32 %v4870, 0.001953125
    %v4875 = vmul.f32 %v4873, %v4873
    %v4876 = vsub.f32 %v4874, %v4875
    %v4877 = vadd.f32 %v4876, 1e-05
    %v4878 = vrsqrt.pop %v4877
    %v4879 = vmul.f32 %v3777, %v4878
    %v4880 = vmul.f32 %v4873, %v4879
    %v4881 = vsub.f32 %v3778, %v4880
    %v4883 = vlaneseq
    %v4884 = vshrl.u32 %v4883, 7
    %v4885 = vsub.s32 0, %v4884
    %v4886 = vrot.slane %v4879, %v4885
    %v4888 = vmul.f32 %v3651, %v4886
    %v4889 = vmul.f32 %v3654, %v4886
    %v4890 = vmul.f32 %v3659, %v4886
    %v4891 = vmul.f32 %v3662, %v4886
    %v4892 = vmul.f32 %v3667, %v4886
    %v4893 = vmul.f32 %v3670, %v4886
    %v4894 = vmul.f32 %v3675, %v4886
    %v4895 = vmul.f32 %v3678, %v4886
    %v4896 = vmul.f32 %v3683, %v4886
    %v4897 = vmul.f32 %v3686, %v4886
    %v4898 = vmul.f32 %v3691, %v4886
    %v4899 = vmul.f32 %v3694, %v4886
    %v4900 = vmul.f32 %v3699, %v4886
    %v4901 = vmul.f32 %v3702, %v4886
    %v4902 = vmul.f32 %v3707, %v4886
    %v4903 = vmul.f32 %v3710, %v4886
    %v4904 = vmul.f32 %v3715, %v4886
    %v4905 = vmul.f32 %v3718, %v4886
    %v4906 = vmul.f32 %v3723, %v4886
    %v4907 = vmul.f32 %v3726, %v4886
    %v4908 = vmul.f32 %v3731, %v4886
    %v4909 = vmul.f32 %v3734, %v4886
    %v4910 = vmul.f32 %v3739, %v4886
    %v4911 = vmul.f32 %v3742, %v4886
    %v4912 = vmul.f32 %v3747, %v4886
    %v4913 = vmul.f32 %v3750, %v4886
    %v4914 = vmul.f32 %v3755, %v4886
    %v4915 = vmul.f32 %v3758, %v4886
    %v4916 = vmul.f32 %v3763, %v4886
    %v4917 = vmul.f32 %v3766, %v4886
    %v4918 = vmul.f32 %v3771, %v4886
    %v4919 = vmul.f32 %v3774, %v4886
    %v4921 = vlaneseq
    %v4922 = vshrl.u32 %v4921, 7
    %v4923 = vsub.s32 0, %v4922
    %v4924 = vrot.slane %v4881, %v4923
    %v4926 = vadd.f32 %v4888, %v4924
    %v4927 = vadd.f32 %v4889, %v4924
    %v4928 = vadd.f32 %v4890, %v4924
    %v4929 = vadd.f32 %v4891, %v4924
    %v4930 = vadd.f32 %v4892, %v4924
    %v4931 = vadd.f32 %v4893, %v4924
    %v4932 = vadd.f32 %v4894, %v4924
    %v4933 = vadd.f32 %v4895, %v4924
    %v4934 = vadd.f32 %v4896, %v4924
    %v4935 = vadd.f32 %v4897, %v4924
    %v4936 = vadd.f32 %v4898, %v4924
    %v4937 = vadd.f32 %v4899, %v4924
    %v4938 = vadd.f32 %v4900, %v4924
    %v4939 = vadd.f32 %v4901, %v4924
    %v4940 = vadd.f32 %v4902, %v4924
    %v4941 = vadd.f32 %v4903, %v4924
    %v4942 = vadd.f32 %v4904, %v4924
    %v4943 = vadd.f32 %v4905, %v4924
    %v4944 = vadd.f32 %v4906, %v4924
    %v4945 = vadd.f32 %v4907, %v4924
    %v4946 = vadd.f32 %v4908, %v4924
    %v4947 = vadd.f32 %v4909, %v4924
    %v4948 = vadd.f32 %v4910, %v4924
    %v4949 = vadd.f32 %v4911, %v4924
    %v4950 = vadd.f32 %v4912, %v4924
    %v4951 = vadd.f32 %v4913, %v4924
    %v4952 = vadd.f32 %v4914, %v4924
    %v4953 = vadd.f32 %v4915, %v4924
    %v4954 = vadd.f32 %v4916, %v4924
    %v4955 = vadd.f32 %v4917, %v4924
    %v4956 = vadd.f32 %v4918, %v4924
    %v4957 = vadd.f32 %v4919, %v4924
    %vm4958 = vcmp.gt.f32.partialorder %v4926, 0.0
    %vm4959 = vcmp.gt.f32.partialorder %v4927, 0.0
    %vm4960 = vcmp.gt.f32.partialorder %v4928, 0.0
    %vm4961 = vcmp.gt.f32.partialorder %v4929, 0.0
    %vm4962 = vcmp.gt.f32.partialorder %v4930, 0.0
    %vm4963 = vcmp.gt.f32.partialorder %v4931, 0.0
    %vm4964 = vcmp.gt.f32.partialorder %v4932, 0.0
    %vm4965 = vcmp.gt.f32.partialorder %v4933, 0.0
    %vm4966 = vcmp.gt.f32.partialorder %v4934, 0.0
    %vm4967 = vcmp.gt.f32.partialorder %v4935, 0.0
    %vm4968 = vcmp.gt.f32.partialorder %v4936, 0.0
    %vm4969 = vcmp.gt.f32.partialorder %v4937, 0.0
    %vm4970 = vcmp.gt.f32.partialorder %v4938, 0.0
    %vm4971 = vcmp.gt.f32.partialorder %v4939, 0.0
    %vm4972 = vcmp.gt.f32.partialorder %v4940, 0.0
    %vm4973 = vcmp.gt.f32.partialorder %v4941, 0.0
    %vm4974 = vcmp.gt.f32.partialorder %v4942, 0.0
    %vm4975 = vcmp.gt.f32.partialorder %v4943, 0.0
    %vm4976 = vcmp.gt.f32.partialorder %v4944, 0.0
    %vm4977 = vcmp.gt.f32.partialorder %v4945, 0.0
    %vm4978 = vcmp.gt.f32.partialorder %v4946, 0.0
    %vm4979 = vcmp.gt.f32.partialorder %v4947, 0.0
    %vm4980 = vcmp.gt.f32.partialorder %v4948, 0.0
    %vm4981 = vcmp.gt.f32.partialorder %v4949, 0.0
    %vm4982 = vcmp.gt.f32.partialorder %v4950, 0.0
    %vm4983 = vcmp.gt.f32.partialorder %v4951, 0.0
    %vm4984 = vcmp.gt.f32.partialorder %v4952, 0.0
    %vm4985 = vcmp.gt.f32.partialorder %v4953, 0.0
    %vm4986 = vcmp.gt.f32.partialorder %v4954, 0.0
    %vm4987 = vcmp.gt.f32.partialorder %v4955, 0.0
    %vm4988 = vcmp.gt.f32.partialorder %v4956, 0.0
    %vm4989 = vcmp.gt.f32.partialorder %v4957, 0.0
    %v4990 = vmul.f32 %v4926, 0.2
    %v4991 = vmul.f32 %v4927, 0.2
    %v4992 = vmul.f32 %v4928, 0.2
    %v4993 = vmul.f32 %v4929, 0.2
    %v4994 = vmul.f32 %v4930, 0.2
    %v4995 = vmul.f32 %v4931, 0.2
    %v4996 = vmul.f32 %v4932, 0.2
    %v4997 = vmul.f32 %v4933, 0.2
    %v4998 = vmul.f32 %v4934, 0.2
    %v4999 = vmul.f32 %v4935, 0.2
    %v5000 = vmul.f32 %v4936, 0.2
    %v5001 = vmul.f32 %v4937, 0.2
    %v5002 = vmul.f32 %v4938, 0.2
    %v5003 = vmul.f32 %v4939, 0.2
    %v5004 = vmul.f32 %v4940, 0.2
    %v5005 = vmul.f32 %v4941, 0.2
    %v5006 = vmul.f32 %v4942, 0.2
    %v5007 = vmul.f32 %v4943, 0.2
    %v5008 = vmul.f32 %v4944, 0.2
    %v5009 = vmul.f32 %v4945, 0.2
    %v5010 = vmul.f32 %v4946, 0.2
    %v5011 = vmul.f32 %v4947, 0.2
    %v5012 = vmul.f32 %v4948, 0.2
    %v5013 = vmul.f32 %v4949, 0.2
    %v5014 = vmul.f32 %v4950, 0.2
    %v5015 = vmul.f32 %v4951, 0.2
    %v5016 = vmul.f32 %v4952, 0.2
    %v5017 = vmul.f32 %v4953, 0.2
    %v5018 = vmul.f32 %v4954, 0.2
    %v5019 = vmul.f32 %v4955, 0.2
    %v5020 = vmul.f32 %v4956, 0.2
    %v5021 = vmul.f32 %v4957, 0.2
    %v5022 = vsel %vm4958, %v4926, %v4990
    %v5023 = vsel %vm4959, %v4927, %v4991
    %v5024 = vsel %vm4960, %v4928, %v4992
    %v5025 = vsel %vm4961, %v4929, %v4993
    %v5026 = vsel %vm4962, %v4930, %v4994
    %v5027 = vsel %vm4963, %v4931, %v4995
    %v5028 = vsel %vm4964, %v4932, %v4996
    %v5029 = vsel %vm4965, %v4933, %v4997
    %v5030 = vsel %vm4966, %v4934, %v4998
    %v5031 = vsel %vm4967, %v4935, %v4999
    %v5032 = vsel %vm4968, %v4936, %v5000
    %v5033 = vsel %vm4969, %v4937, %v5001
    %v5034 = vsel %vm4970, %v4938, %v5002
    %v5035 = vsel %vm4971, %v4939, %v5003
    %v5036 = vsel %vm4972, %v4940, %v5004
    %v5037 = vsel %vm4973, %v4941, %v5005
    %v5038 = vsel %vm4974, %v4942, %v5006
    %v5039 = vsel %vm4975, %v4943, %v5007
    %v5040 = vsel %vm4976, %v4944, %v5008
    %v5041 = vsel %vm4977, %v4945, %v5009
    %v5042 = vsel %vm4978, %v4946, %v5010
    %v5043 = vsel %vm4979, %v4947, %v5011
    %v5044 = vsel %vm4980, %v4948, %v5012
    %v5045 = vsel %vm4981, %v4949, %v5013
    %v5046 = vsel %vm4982, %v4950, %v5014
    %v5047 = vsel %vm4983, %v4951, %v5015
    %v5048 = vsel %vm4984, %v4952, %v5016
    %v5049 = vsel %vm4985, %v4953, %v5017
    %v5050 = vsel %vm4986, %v4954, %v5018
    %v5051 = vsel %vm4987, %v4955, %v5019
    %v5052 = vsel %vm4988, %v4956, %v5020
    %v5053 = vsel %vm4989, %v4957, %v5021
    %v5054 = vld [vmem:[%s8] sm:$0xf]
    %v5055 = vld [vmem:[%s8 + $0x4] sm:$0xf]
    %v5056 = vld [vmem:[%s8 + $0x8] sm:$0xf]
    %v5057 = vld [vmem:[%s8 + $0xc] sm:$0xf]
    %v5058 = vld [vmem:[%s8 + $0x10] sm:$0xf]
    %v5059 = vld [vmem:[%s8 + $0x14] sm:$0xf]
    %v5060 = vld [vmem:[%s8 + $0x18] sm:$0xf]
    %v5061 = vld [vmem:[%s8 + $0x1c] sm:$0xf]
    %v5062 = vld [vmem:[%s8 + $0x20] sm:$0xf]
    %v5063 = vld [vmem:[%s8 + $0x24] sm:$0xf]
    %v5064 = vld [vmem:[%s8 + $0x28] sm:$0xf]
    %v5065 = vld [vmem:[%s8 + $0x2c] sm:$0xf]
    %v5066 = vld [vmem:[%s8 + $0x30] sm:$0xf]
    %v5067 = vld [vmem:[%s8 + $0x34] sm:$0xf]
    %v5068 = vld [vmem:[%s8 + $0x38] sm:$0xf]
    %v5069 = vld [vmem:[%s8 + $0x3c] sm:$0xf]
    %v5070 = vld [vmem:[%s8 + $0x40] sm:$0xf]
    %v5071 = vld [vmem:[%s8 + $0x44] sm:$0xf]
    %v5104 = vrot.slane %v5022, 7
    %v5105 = vrot.slane %v5023, 7
    %v5106 = vsel %vm450, %v5104, %v5105
    %v5107 = vrot.slane %v5024, 7
    %v5108 = vrot.slane %v5025, 7
    %v5109 = vsel %vm450, %v5107, %v5108
    %v5110 = vrot.slane %v5026, 7
    %v5111 = vrot.slane %v5027, 7
    %v5112 = vsel %vm450, %v5110, %v5111
    %v5113 = vrot.slane %v5028, 7
    %v5114 = vrot.slane %v5029, 7
    %v5115 = vsel %vm450, %v5113, %v5114
    %v5116 = vrot.slane %v5030, 7
    %v5117 = vrot.slane %v5031, 7
    %v5118 = vsel %vm450, %v5116, %v5117
    %v5119 = vrot.slane %v5032, 7
    %v5120 = vrot.slane %v5033, 7
    %v5121 = vsel %vm450, %v5119, %v5120
    %v5122 = vrot.slane %v5034, 7
    %v5123 = vrot.slane %v5035, 7
    %v5124 = vsel %vm450, %v5122, %v5123
    %v5125 = vrot.slane %v5036, 7
    %v5126 = vrot.slane %v5037, 7
    %v5127 = vsel %vm450, %v5125, %v5126
    %v5128 = vrot.slane %v5038, 7
    %v5129 = vrot.slane %v5039, 7
    %v5130 = vsel %vm450, %v5128, %v5129
    %v5131 = vrot.slane %v5040, 7
    %v5132 = vrot.slane %v5041, 7
    %v5133 = vsel %vm450, %v5131, %v5132
    %v5134 = vrot.slane %v5042, 7
    %v5135 = vrot.slane %v5043, 7
    %v5136 = vsel %vm450, %v5134, %v5135
    %v5137 = vrot.slane %v5044, 7
    %v5138 = vrot.slane %v5045, 7
    %v5139 = vsel %vm450, %v5137, %v5138
    %v5140 = vrot.slane %v5046, 7
    %v5141 = vrot.slane %v5047, 7
    %v5142 = vsel %vm450, %v5140, %v5141
    %v5143 = vrot.slane %v5048, 7
    %v5144 = vrot.slane %v5049, 7
    %v5145 = vsel %vm450, %v5143, %v5144
    %v5146 = vrot.slane %v5050, 7
    %v5147 = vrot.slane %v5051, 7
    %v5148 = vsel %vm450, %v5146, %v5147
    %v5149 = vrot.slane %v5052, 7
    %v5150 = vrot.slane %v5053, 7
    %v5151 = vsel %vm450, %v5149, %v5150
    %v5199 = vsel %vm450, 0.0, %v5104
    %v5200 = vsel %vm450, 0.0, %v5107
    %v5201 = vsel %vm450, 0.0, %v5110
    %v5202 = vsel %vm450, 0.0, %v5113
    %v5203 = vsel %vm450, 0.0, %v5116
    %v5204 = vsel %vm450, 0.0, %v5119
    %v5205 = vsel %vm450, 0.0, %v5122
    %v5206 = vsel %vm450, 0.0, %v5125
    %v5207 = vsel %vm450, 0.0, %v5128
    %v5208 = vsel %vm450, 0.0, %v5131
    %v5209 = vsel %vm450, 0.0, %v5134
    %v5210 = vsel %vm450, 0.0, %v5137
    %v5211 = vsel %vm450, 0.0, %v5140
    %v5212 = vsel %vm450, 0.0, %v5143
    %v5213 = vsel %vm450, 0.0, %v5146
    %v5214 = vsel %vm450, 0.0, %v5149
    %v5215 = vsel %vm450, %v5105, 0.0
    %v5216 = vsel %vm450, %v5108, 0.0
    %v5217 = vsel %vm450, %v5111, 0.0
    %v5218 = vsel %vm450, %v5114, 0.0
    %v5219 = vsel %vm450, %v5117, 0.0
    %v5220 = vsel %vm450, %v5120, 0.0
    %v5221 = vsel %vm450, %v5123, 0.0
    %v5222 = vsel %vm450, %v5126, 0.0
    %v5223 = vsel %vm450, %v5129, 0.0
    %v5224 = vsel %vm450, %v5132, 0.0
    %v5225 = vsel %vm450, %v5135, 0.0
    %v5226 = vsel %vm450, %v5138, 0.0
    %v5227 = vsel %vm450, %v5141, 0.0
    %v5228 = vsel %vm450, %v5144, 0.0
    %v5229 = vsel %vm450, %v5147, 0.0
    %v5230 = vsel %vm450, %v5150, 0.0
    %v5261 = vrot.slane %v5199, 1
    %v5262 = vrot.slane %v5106, 1
    %v5263 = vsel %vm616, %v5261, %v5262
    %v5264 = vrot.slane %v5215, 1
    %v5265 = vsel %vm616, %v5262, %v5264
    %v5266 = vrot.slane %v5200, 1
    %v5267 = vrot.slane %v5109, 1
    %v5268 = vsel %vm616, %v5266, %v5267
    %v5269 = vrot.slane %v5216, 1
    %v5270 = vsel %vm616, %v5267, %v5269
    %v5271 = vrot.slane %v5201, 1
    %v5272 = vrot.slane %v5112, 1
    %v5273 = vsel %vm616, %v5271, %v5272
    %v5274 = vrot.slane %v5217, 1
    %v5275 = vsel %vm616, %v5272, %v5274
    %v5276 = vrot.slane %v5202, 1
    %v5277 = vrot.slane %v5115, 1
    %v5278 = vsel %vm616, %v5276, %v5277
    %v5279 = vrot.slane %v5218, 1
    %v5280 = vsel %vm616, %v5277, %v5279
    %v5281 = vrot.slane %v5203, 1
    %v5282 = vrot.slane %v5118, 1
    %v5283 = vsel %vm616, %v5281, %v5282
    %v5284 = vrot.slane %v5219, 1
    %v5285 = vsel %vm616, %v5282, %v5284
    %v5286 = vrot.slane %v5204, 1
    %v5287 = vrot.slane %v5121, 1
    %v5288 = vsel %vm616, %v5286, %v5287
    %v5289 = vrot.slane %v5220, 1
    %v5290 = vsel %vm616, %v5287, %v5289
    %v5291 = vrot.slane %v5205, 1
    %v5292 = vrot.slane %v5124, 1
    %v5293 = vsel %vm616, %v5291, %v5292
    %v5294 = vrot.slane %v5221, 1
    %v5295 = vsel %vm616, %v5292, %v5294
    %v5296 = vrot.slane %v5206, 1
    %v5297 = vrot.slane %v5127, 1
    %v5298 = vsel %vm616, %v5296, %v5297
    %v5299 = vrot.slane %v5222, 1
    %v5300 = vsel %vm616, %v5297, %v5299
    %v5301 = vrot.slane %v5207, 1
    %v5302 = vrot.slane %v5130, 1
    %v5303 = vsel %vm616, %v5301, %v5302
    %v5304 = vrot.slane %v5223, 1
    %v5305 = vsel %vm616, %v5302, %v5304
    %v5306 = vrot.slane %v5208, 1
    %v5307 = vrot.slane %v5133, 1
    %v5308 = vsel %vm616, %v5306, %v5307
    %v5309 = vrot.slane %v5224, 1
    %v5310 = vsel %vm616, %v5307, %v5309
    %v5311 = vrot.slane %v5209, 1
    %v5312 = vrot.slane %v5136, 1
    %v5313 = vsel %vm616, %v5311, %v5312
    %v5314 = vrot.slane %v5225, 1
    %v5315 = vsel %vm616, %v5312, %v5314
    %v5316 = vrot.slane %v5210, 1
    %v5317 = vrot.slane %v5139, 1
    %v5318 = vsel %vm616, %v5316, %v5317
    %v5319 = vrot.slane %v5226, 1
    %v5320 = vsel %vm616, %v5317, %v5319
    %v5321 = vrot.slane %v5211, 1
    %v5322 = vrot.slane %v5142, 1
    %v5323 = vsel %vm616, %v5321, %v5322
    %v5324 = vrot.slane %v5227, 1
    %v5325 = vsel %vm616, %v5322, %v5324
    %v5326 = vrot.slane %v5212, 1
    %v5327 = vrot.slane %v5145, 1
    %v5328 = vsel %vm616, %v5326, %v5327
    %v5329 = vrot.slane %v5228, 1
    %v5330 = vsel %vm616, %v5327, %v5329
    %v5331 = vrot.slane %v5213, 1
    %v5332 = vrot.slane %v5148, 1
    %v5333 = vsel %vm616, %v5331, %v5332
    %v5334 = vrot.slane %v5229, 1
    %v5335 = vsel %vm616, %v5332, %v5334
    %5336 = vrot.lane.b32.xlu0 %v5263, 16
    %v5337 = vpop.permute.xlu0 %5336
    %5338 = vrot.lane.b32.xlu0 %v5265, 16
    %v5339 = vpop.permute.xlu0 %5338
    %5340 = vrot.lane.b32.xlu0 %v5268, 16
    %v5341 = vpop.permute.xlu0 %5340
    %5342 = vrot.lane.b32.xlu0 %v5270, 16
    %v5343 = vpop.permute.xlu0 %5342
    %5344 = vrot.lane.b32.xlu0 %v5273, 16
    %v5345 = vpop.permute.xlu0 %5344
    %5346 = vrot.lane.b32.xlu0 %v5275, 16
    %v5347 = vpop.permute.xlu0 %5346
    %5348 = vrot.lane.b32.xlu0 %v5278, 16
    %v5349 = vpop.permute.xlu0 %5348
    %5350 = vrot.lane.b32.xlu0 %v5280, 16
    %v5351 = vpop.permute.xlu0 %5350
    %5352 = vrot.lane.b32.xlu0 %v5283, 16
    %v5353 = vpop.permute.xlu0 %5352
    %5354 = vrot.lane.b32.xlu0 %v5285, 16
    %v5355 = vpop.permute.xlu0 %5354
    %5356 = vrot.lane.b32.xlu0 %v5288, 16
    %v5357 = vpop.permute.xlu0 %5356
    %5358 = vrot.lane.b32.xlu0 %v5290, 16
    %v5359 = vpop.permute.xlu0 %5358
    %5360 = vrot.lane.b32.xlu0 %v5293, 16
    %v5361 = vpop.permute.xlu0 %5360
    %5362 = vrot.lane.b32.xlu0 %v5295, 16
    %v5363 = vpop.permute.xlu0 %5362
    %5364 = vrot.lane.b32.xlu0 %v5298, 16
    %v5365 = vpop.permute.xlu0 %5364
    %5366 = vrot.lane.b32.xlu0 %v5300, 16
    %v5367 = vpop.permute.xlu0 %5366
    %5368 = vrot.lane.b32.xlu0 %v5303, 16
    %v5369 = vpop.permute.xlu0 %5368
    %5370 = vrot.lane.b32.xlu0 %v5305, 16
    %v5371 = vpop.permute.xlu0 %5370
    %5372 = vrot.lane.b32.xlu0 %v5308, 16
    %v5373 = vpop.permute.xlu0 %5372
    %5374 = vrot.lane.b32.xlu0 %v5310, 16
    %v5375 = vpop.permute.xlu0 %5374
    %5376 = vrot.lane.b32.xlu0 %v5313, 16
    %v5377 = vpop.permute.xlu0 %5376
    %5378 = vrot.lane.b32.xlu0 %v5315, 16
    %v5379 = vpop.permute.xlu0 %5378
    %5380 = vrot.lane.b32.xlu0 %v5318, 16
    %v5381 = vpop.permute.xlu0 %5380
    %5382 = vrot.lane.b32.xlu0 %v5320, 16
    %v5383 = vpop.permute.xlu0 %5382
    %5384 = vrot.lane.b32.xlu0 %v5323, 16
    %v5385 = vpop.permute.xlu0 %5384
    %5386 = vrot.lane.b32.xlu0 %v5325, 16
    %v5387 = vpop.permute.xlu0 %5386
    %5388 = vrot.lane.b32.xlu0 %v5328, 16
    %v5389 = vpop.permute.xlu0 %5388
    %5390 = vrot.lane.b32.xlu0 %v5330, 16
    %v5391 = vpop.permute.xlu0 %5390
    %5392 = vrot.lane.b32.xlu0 %v5333, 16
    %v5393 = vpop.permute.xlu0 %5392
    %5394 = vrot.lane.b32.xlu0 %v5335, 16
    %v5395 = vpop.permute.xlu0 %5394
    %v5426 = vrot.slane %v5199, 2
    %v5427 = vrot.slane %v5106, 2
    %v5428 = vsel %vm793, %v5426, %v5427
    %v5429 = vrot.slane %v5215, 2
    %v5430 = vsel %vm793, %v5427, %v5429
    %v5431 = vrot.slane %v5200, 2
    %v5432 = vrot.slane %v5109, 2
    %v5433 = vsel %vm793, %v5431, %v5432
    %v5434 = vrot.slane %v5216, 2
    %v5435 = vsel %vm793, %v5432, %v5434
    %v5436 = vrot.slane %v5201, 2
    %v5437 = vrot.slane %v5112, 2
    %v5438 = vsel %vm793, %v5436, %v5437
    %v5439 = vrot.slane %v5217, 2
    %v5440 = vsel %vm793, %v5437, %v5439
    %v5441 = vrot.slane %v5202, 2
    %v5442 = vrot.slane %v5115, 2
    %v5443 = vsel %vm793, %v5441, %v5442
    %v5444 = vrot.slane %v5218, 2
    %v5445 = vsel %vm793, %v5442, %v5444
    %v5446 = vrot.slane %v5203, 2
    %v5447 = vrot.slane %v5118, 2
    %v5448 = vsel %vm793, %v5446, %v5447
    %v5449 = vrot.slane %v5219, 2
    %v5450 = vsel %vm793, %v5447, %v5449
    %v5451 = vrot.slane %v5204, 2
    %v5452 = vrot.slane %v5121, 2
    %v5453 = vsel %vm793, %v5451, %v5452
    %v5454 = vrot.slane %v5220, 2
    %v5455 = vsel %vm793, %v5452, %v5454
    %v5456 = vrot.slane %v5205, 2
    %v5457 = vrot.slane %v5124, 2
    %v5458 = vsel %vm793, %v5456, %v5457
    %v5459 = vrot.slane %v5221, 2
    %v5460 = vsel %vm793, %v5457, %v5459
    %v5461 = vrot.slane %v5206, 2
    %v5462 = vrot.slane %v5127, 2
    %v5463 = vsel %vm793, %v5461, %v5462
    %v5464 = vrot.slane %v5222, 2
    %v5465 = vsel %vm793, %v5462, %v5464
    %v5466 = vrot.slane %v5207, 2
    %v5467 = vrot.slane %v5130, 2
    %v5468 = vsel %vm793, %v5466, %v5467
    %v5469 = vrot.slane %v5223, 2
    %v5470 = vsel %vm793, %v5467, %v5469
    %v5471 = vrot.slane %v5208, 2
    %v5472 = vrot.slane %v5133, 2
    %v5473 = vsel %vm793, %v5471, %v5472
    %v5474 = vrot.slane %v5224, 2
    %v5475 = vsel %vm793, %v5472, %v5474
    %v5476 = vrot.slane %v5209, 2
    %v5477 = vrot.slane %v5136, 2
    %v5478 = vsel %vm793, %v5476, %v5477
    %v5479 = vrot.slane %v5225, 2
    %v5480 = vsel %vm793, %v5477, %v5479
    %v5481 = vrot.slane %v5210, 2
    %v5482 = vrot.slane %v5139, 2
    %v5483 = vsel %vm793, %v5481, %v5482
    %v5484 = vrot.slane %v5226, 2
    %v5485 = vsel %vm793, %v5482, %v5484
    %v5486 = vrot.slane %v5211, 2
    %v5487 = vrot.slane %v5142, 2
    %v5488 = vsel %vm793, %v5486, %v5487
    %v5489 = vrot.slane %v5227, 2
    %v5490 = vsel %vm793, %v5487, %v5489
    %v5491 = vrot.slane %v5212, 2
    %v5492 = vrot.slane %v5145, 2
    %v5493 = vsel %vm793, %v5491, %v5492
    %v5494 = vrot.slane %v5228, 2
    %v5495 = vsel %vm793, %v5492, %v5494
    %v5496 = vrot.slane %v5213, 2
    %v5497 = vrot.slane %v5148, 2
    %v5498 = vsel %vm793, %v5496, %v5497
    %v5499 = vrot.slane %v5229, 2
    %v5500 = vsel %vm793, %v5497, %v5499
    %5501 = vrot.lane.b32.xlu0 %v5428, 32
    %v5502 = vpop.permute.xlu0 %5501
    %5503 = vrot.lane.b32.xlu0 %v5430, 32
    %v5504 = vpop.permute.xlu0 %5503
    %5505 = vrot.lane.b32.xlu0 %v5433, 32
    %v5506 = vpop.permute.xlu0 %5505
    %5507 = vrot.lane.b32.xlu0 %v5435, 32
    %v5508 = vpop.permute.xlu0 %5507
    %5509 = vrot.lane.b32.xlu0 %v5438, 32
    %v5510 = vpop.permute.xlu0 %5509
    %5511 = vrot.lane.b32.xlu0 %v5440, 32
    %v5512 = vpop.permute.xlu0 %5511
    %5513 = vrot.lane.b32.xlu0 %v5443, 32
    %v5514 = vpop.permute.xlu0 %5513
    %5515 = vrot.lane.b32.xlu0 %v5445, 32
    %v5516 = vpop.permute.xlu0 %5515
    %5517 = vrot.lane.b32.xlu0 %v5448, 32
    %v5518 = vpop.permute.xlu0 %5517
    %5519 = vrot.lane.b32.xlu0 %v5450, 32
    %v5520 = vpop.permute.xlu0 %5519
    %5521 = vrot.lane.b32.xlu0 %v5453, 32
    %v5522 = vpop.permute.xlu0 %5521
    %5523 = vrot.lane.b32.xlu0 %v5455, 32
    %v5524 = vpop.permute.xlu0 %5523
    %5525 = vrot.lane.b32.xlu0 %v5458, 32
    %v5526 = vpop.permute.xlu0 %5525
    %5527 = vrot.lane.b32.xlu0 %v5460, 32
    %v5528 = vpop.permute.xlu0 %5527
    %5529 = vrot.lane.b32.xlu0 %v5463, 32
    %v5530 = vpop.permute.xlu0 %5529
    %5531 = vrot.lane.b32.xlu0 %v5465, 32
    %v5532 = vpop.permute.xlu0 %5531
    %5533 = vrot.lane.b32.xlu0 %v5468, 32
    %v5534 = vpop.permute.xlu0 %5533
    %5535 = vrot.lane.b32.xlu0 %v5470, 32
    %v5536 = vpop.permute.xlu0 %5535
    %5537 = vrot.lane.b32.xlu0 %v5473, 32
    %v5538 = vpop.permute.xlu0 %5537
    %5539 = vrot.lane.b32.xlu0 %v5475, 32
    %v5540 = vpop.permute.xlu0 %5539
    %5541 = vrot.lane.b32.xlu0 %v5478, 32
    %v5542 = vpop.permute.xlu0 %5541
    %5543 = vrot.lane.b32.xlu0 %v5480, 32
    %v5544 = vpop.permute.xlu0 %5543
    %5545 = vrot.lane.b32.xlu0 %v5483, 32
    %v5546 = vpop.permute.xlu0 %5545
    %5547 = vrot.lane.b32.xlu0 %v5485, 32
    %v5548 = vpop.permute.xlu0 %5547
    %5549 = vrot.lane.b32.xlu0 %v5488, 32
    %v5550 = vpop.permute.xlu0 %5549
    %5551 = vrot.lane.b32.xlu0 %v5490, 32
    %v5552 = vpop.permute.xlu0 %5551
    %5553 = vrot.lane.b32.xlu0 %v5493, 32
    %v5554 = vpop.permute.xlu0 %5553
    %5555 = vrot.lane.b32.xlu0 %v5495, 32
    %v5556 = vpop.permute.xlu0 %5555
    %5557 = vrot.lane.b32.xlu0 %v5498, 32
    %v5558 = vpop.permute.xlu0 %5557
    %5559 = vrot.lane.b32.xlu0 %v5500, 32
    %v5560 = vpop.permute.xlu0 %5559
    %5592 = vrot.lane.b32.xlu0 %v5199, 48
    %v5593 = vpop.permute.xlu0 %5592
    %5594 = vrot.lane.b32.xlu0 %v5106, 48
    %v5595 = vpop.permute.xlu0 %5594
    %5596 = vrot.lane.b32.xlu0 %v5200, 48
    %v5597 = vpop.permute.xlu0 %5596
    %5598 = vrot.lane.b32.xlu0 %v5109, 48
    %v5599 = vpop.permute.xlu0 %5598
    %5600 = vrot.lane.b32.xlu0 %v5201, 48
    %v5601 = vpop.permute.xlu0 %5600
    %5602 = vrot.lane.b32.xlu0 %v5112, 48
    %v5603 = vpop.permute.xlu0 %5602
    %5604 = vrot.lane.b32.xlu0 %v5202, 48
    %v5605 = vpop.permute.xlu0 %5604
    %5606 = vrot.lane.b32.xlu0 %v5115, 48
    %v5607 = vpop.permute.xlu0 %5606
    %5608 = vrot.lane.b32.xlu0 %v5203, 48
    %v5609 = vpop.permute.xlu0 %5608
    %5610 = vrot.lane.b32.xlu0 %v5118, 48
    %v5611 = vpop.permute.xlu0 %5610
    %5612 = vrot.lane.b32.xlu0 %v5204, 48
    %v5613 = vpop.permute.xlu0 %5612
    %5614 = vrot.lane.b32.xlu0 %v5121, 48
    %v5615 = vpop.permute.xlu0 %5614
    %5616 = vrot.lane.b32.xlu0 %v5205, 48
    %v5617 = vpop.permute.xlu0 %5616
    %5618 = vrot.lane.b32.xlu0 %v5124, 48
    %v5619 = vpop.permute.xlu0 %5618
    %5620 = vrot.lane.b32.xlu0 %v5206, 48
    %v5621 = vpop.permute.xlu0 %5620
    %5622 = vrot.lane.b32.xlu0 %v5127, 48
    %v5623 = vpop.permute.xlu0 %5622
    %5624 = vrot.lane.b32.xlu0 %v5207, 48
    %v5625 = vpop.permute.xlu0 %5624
    %5626 = vrot.lane.b32.xlu0 %v5130, 48
    %v5627 = vpop.permute.xlu0 %5626
    %5628 = vrot.lane.b32.xlu0 %v5208, 48
    %v5629 = vpop.permute.xlu0 %5628
    %5630 = vrot.lane.b32.xlu0 %v5133, 48
    %v5631 = vpop.permute.xlu0 %5630
    %5632 = vrot.lane.b32.xlu0 %v5209, 48
    %v5633 = vpop.permute.xlu0 %5632
    %5634 = vrot.lane.b32.xlu0 %v5136, 48
    %v5635 = vpop.permute.xlu0 %5634
    %5636 = vrot.lane.b32.xlu0 %v5210, 48
    %v5637 = vpop.permute.xlu0 %5636
    %5638 = vrot.lane.b32.xlu0 %v5139, 48
    %v5639 = vpop.permute.xlu0 %5638
    %5640 = vrot.lane.b32.xlu0 %v5211, 48
    %v5641 = vpop.permute.xlu0 %5640
    %5642 = vrot.lane.b32.xlu0 %v5142, 48
    %v5643 = vpop.permute.xlu0 %5642
    %5644 = vrot.lane.b32.xlu0 %v5212, 48
    %v5645 = vpop.permute.xlu0 %5644
    %5646 = vrot.lane.b32.xlu0 %v5145, 48
    %v5647 = vpop.permute.xlu0 %5646
    %5648 = vrot.lane.b32.xlu0 %v5213, 48
    %v5649 = vpop.permute.xlu0 %5648
    %5650 = vrot.lane.b32.xlu0 %v5148, 48
    %v5651 = vpop.permute.xlu0 %5650
    %5652 = vrot.lane.b32.xlu0 %v5214, 48
    %v5653 = vpop.permute.xlu0 %5652
    %5654 = vrot.lane.b32.xlu0 %v5151, 48
    %v5655 = vpop.permute.xlu0 %5654
    %v5689 = vrot.slane %v5214, 1
    %v5690 = vrot.slane %v5151, 1
    %v5691 = vsel %vm616, %v5689, %v5690
    %v5692 = vrot.slane %v5230, 1
    %v5693 = vsel %vm616, %v5690, %v5692
    %5694 = vrot.lane.b32.xlu0 %v5263, 64
    %v5695 = vpop.permute.xlu0 %5694
    %5696 = vrot.lane.b32.xlu0 %v5265, 64
    %v5697 = vpop.permute.xlu0 %5696
    %5698 = vrot.lane.b32.xlu0 %v5268, 64
    %v5699 = vpop.permute.xlu0 %5698
    %5700 = vrot.lane.b32.xlu0 %v5270, 64
    %v5701 = vpop.permute.xlu0 %5700
    %5702 = vrot.lane.b32.xlu0 %v5273, 64
    %v5703 = vpop.permute.xlu0 %5702
    %5704 = vrot.lane.b32.xlu0 %v5275, 64
    %v5705 = vpop.permute.xlu0 %5704
    %5706 = vrot.lane.b32.xlu0 %v5278, 64
    %v5707 = vpop.permute.xlu0 %5706
    %5708 = vrot.lane.b32.xlu0 %v5280, 64
    %v5709 = vpop.permute.xlu0 %5708
    %5710 = vrot.lane.b32.xlu0 %v5283, 64
    %v5711 = vpop.permute.xlu0 %5710
    %5712 = vrot.lane.b32.xlu0 %v5285, 64
    %v5713 = vpop.permute.xlu0 %5712
    %5714 = vrot.lane.b32.xlu0 %v5288, 64
    %v5715 = vpop.permute.xlu0 %5714
    %5716 = vrot.lane.b32.xlu0 %v5290, 64
    %v5717 = vpop.permute.xlu0 %5716
    %5718 = vrot.lane.b32.xlu0 %v5293, 64
    %v5719 = vpop.permute.xlu0 %5718
    %5720 = vrot.lane.b32.xlu0 %v5295, 64
    %v5721 = vpop.permute.xlu0 %5720
    %5722 = vrot.lane.b32.xlu0 %v5298, 64
    %v5723 = vpop.permute.xlu0 %5722
    %5724 = vrot.lane.b32.xlu0 %v5300, 64
    %v5725 = vpop.permute.xlu0 %5724
    %5726 = vrot.lane.b32.xlu0 %v5303, 64
    %v5727 = vpop.permute.xlu0 %5726
    %5728 = vrot.lane.b32.xlu0 %v5305, 64
    %v5729 = vpop.permute.xlu0 %5728
    %5730 = vrot.lane.b32.xlu0 %v5308, 64
    %v5731 = vpop.permute.xlu0 %5730
    %5732 = vrot.lane.b32.xlu0 %v5310, 64
    %v5733 = vpop.permute.xlu0 %5732
    %5734 = vrot.lane.b32.xlu0 %v5313, 64
    %v5735 = vpop.permute.xlu0 %5734
    %5736 = vrot.lane.b32.xlu0 %v5315, 64
    %v5737 = vpop.permute.xlu0 %5736
    %5738 = vrot.lane.b32.xlu0 %v5318, 64
    %v5739 = vpop.permute.xlu0 %5738
    %5740 = vrot.lane.b32.xlu0 %v5320, 64
    %v5741 = vpop.permute.xlu0 %5740
    %5742 = vrot.lane.b32.xlu0 %v5323, 64
    %v5743 = vpop.permute.xlu0 %5742
    %5744 = vrot.lane.b32.xlu0 %v5325, 64
    %v5745 = vpop.permute.xlu0 %5744
    %5746 = vrot.lane.b32.xlu0 %v5328, 64
    %v5747 = vpop.permute.xlu0 %5746
    %5748 = vrot.lane.b32.xlu0 %v5330, 64
    %v5749 = vpop.permute.xlu0 %5748
    %5750 = vrot.lane.b32.xlu0 %v5333, 64
    %v5751 = vpop.permute.xlu0 %5750
    %5752 = vrot.lane.b32.xlu0 %v5335, 64
    %v5753 = vpop.permute.xlu0 %5752
    %5754 = vrot.lane.b32.xlu0 %v5691, 64
    %v5755 = vpop.permute.xlu0 %5754
    %5756 = vrot.lane.b32.xlu0 %v5693, 64
    %v5757 = vpop.permute.xlu0 %5756
    %v5790 = vrot.slane %v5214, 2
    %v5791 = vrot.slane %v5151, 2
    %v5792 = vsel %vm793, %v5790, %v5791
    %v5793 = vrot.slane %v5230, 2
    %v5794 = vsel %vm793, %v5791, %v5793
    %5795 = vrot.lane.b32.xlu0 %v5428, 80
    %v5796 = vpop.permute.xlu0 %5795
    %5797 = vrot.lane.b32.xlu0 %v5430, 80
    %v5798 = vpop.permute.xlu0 %5797
    %5799 = vrot.lane.b32.xlu0 %v5433, 80
    %v5800 = vpop.permute.xlu0 %5799
    %5801 = vrot.lane.b32.xlu0 %v5435, 80
    %v5802 = vpop.permute.xlu0 %5801
    %5803 = vrot.lane.b32.xlu0 %v5438, 80
    %v5804 = vpop.permute.xlu0 %5803
    %5805 = vrot.lane.b32.xlu0 %v5440, 80
    %v5806 = vpop.permute.xlu0 %5805
    %5807 = vrot.lane.b32.xlu0 %v5443, 80
    %v5808 = vpop.permute.xlu0 %5807
    %5809 = vrot.lane.b32.xlu0 %v5445, 80
    %v5810 = vpop.permute.xlu0 %5809
    %5811 = vrot.lane.b32.xlu0 %v5448, 80
    %v5812 = vpop.permute.xlu0 %5811
    %5813 = vrot.lane.b32.xlu0 %v5450, 80
    %v5814 = vpop.permute.xlu0 %5813
    %5815 = vrot.lane.b32.xlu0 %v5453, 80
    %v5816 = vpop.permute.xlu0 %5815
    %5817 = vrot.lane.b32.xlu0 %v5455, 80
    %v5818 = vpop.permute.xlu0 %5817
    %5819 = vrot.lane.b32.xlu0 %v5458, 80
    %v5820 = vpop.permute.xlu0 %5819
    %5821 = vrot.lane.b32.xlu0 %v5460, 80
    %v5822 = vpop.permute.xlu0 %5821
    %5823 = vrot.lane.b32.xlu0 %v5463, 80
    %v5824 = vpop.permute.xlu0 %5823
    %5825 = vrot.lane.b32.xlu0 %v5465, 80
    %v5826 = vpop.permute.xlu0 %5825
    %5827 = vrot.lane.b32.xlu0 %v5468, 80
    %v5828 = vpop.permute.xlu0 %5827
    %5829 = vrot.lane.b32.xlu0 %v5470, 80
    %v5830 = vpop.permute.xlu0 %5829
    %5831 = vrot.lane.b32.xlu0 %v5473, 80
    %v5832 = vpop.permute.xlu0 %5831
    %5833 = vrot.lane.b32.xlu0 %v5475, 80
    %v5834 = vpop.permute.xlu0 %5833
    %5835 = vrot.lane.b32.xlu0 %v5478, 80
    %v5836 = vpop.permute.xlu0 %5835
    %5837 = vrot.lane.b32.xlu0 %v5480, 80
    %v5838 = vpop.permute.xlu0 %5837
    %5839 = vrot.lane.b32.xlu0 %v5483, 80
    %v5840 = vpop.permute.xlu0 %5839
    %5841 = vrot.lane.b32.xlu0 %v5485, 80
    %v5842 = vpop.permute.xlu0 %5841
    %5843 = vrot.lane.b32.xlu0 %v5488, 80
    %v5844 = vpop.permute.xlu0 %5843
    %5845 = vrot.lane.b32.xlu0 %v5490, 80
    %v5846 = vpop.permute.xlu0 %5845
    %5847 = vrot.lane.b32.xlu0 %v5493, 80
    %v5848 = vpop.permute.xlu0 %5847
    %5849 = vrot.lane.b32.xlu0 %v5495, 80
    %v5850 = vpop.permute.xlu0 %5849
    %5851 = vrot.lane.b32.xlu0 %v5498, 80
    %v5852 = vpop.permute.xlu0 %5851
    %5853 = vrot.lane.b32.xlu0 %v5500, 80
    %v5854 = vpop.permute.xlu0 %5853
    %5855 = vrot.lane.b32.xlu0 %v5792, 80
    %v5856 = vpop.permute.xlu0 %5855
    %5857 = vrot.lane.b32.xlu0 %v5794, 80
    %v5858 = vpop.permute.xlu0 %5857
    %5891 = vrot.lane.b32.xlu0 %v5200, 96
    %v5892 = vpop.permute.xlu0 %5891
    %5893 = vrot.lane.b32.xlu0 %v5109, 96
    %v5894 = vpop.permute.xlu0 %5893
    %5895 = vrot.lane.b32.xlu0 %v5201, 96
    %v5896 = vpop.permute.xlu0 %5895
    %5897 = vrot.lane.b32.xlu0 %v5112, 96
    %v5898 = vpop.permute.xlu0 %5897
    %5899 = vrot.lane.b32.xlu0 %v5202, 96
    %v5900 = vpop.permute.xlu0 %5899
    %5901 = vrot.lane.b32.xlu0 %v5115, 96
    %v5902 = vpop.permute.xlu0 %5901
    %5903 = vrot.lane.b32.xlu0 %v5203, 96
    %v5904 = vpop.permute.xlu0 %5903
    %5905 = vrot.lane.b32.xlu0 %v5118, 96
    %v5906 = vpop.permute.xlu0 %5905
    %5907 = vrot.lane.b32.xlu0 %v5204, 96
    %v5908 = vpop.permute.xlu0 %5907
    %5909 = vrot.lane.b32.xlu0 %v5121, 96
    %v5910 = vpop.permute.xlu0 %5909
    %5911 = vrot.lane.b32.xlu0 %v5205, 96
    %v5912 = vpop.permute.xlu0 %5911
    %5913 = vrot.lane.b32.xlu0 %v5124, 96
    %v5914 = vpop.permute.xlu0 %5913
    %5915 = vrot.lane.b32.xlu0 %v5206, 96
    %v5916 = vpop.permute.xlu0 %5915
    %5917 = vrot.lane.b32.xlu0 %v5127, 96
    %v5918 = vpop.permute.xlu0 %5917
    %5919 = vrot.lane.b32.xlu0 %v5207, 96
    %v5920 = vpop.permute.xlu0 %5919
    %5921 = vrot.lane.b32.xlu0 %v5130, 96
    %v5922 = vpop.permute.xlu0 %5921
    %5923 = vrot.lane.b32.xlu0 %v5208, 96
    %v5924 = vpop.permute.xlu0 %5923
    %5925 = vrot.lane.b32.xlu0 %v5133, 96
    %v5926 = vpop.permute.xlu0 %5925
    %5927 = vrot.lane.b32.xlu0 %v5209, 96
    %v5928 = vpop.permute.xlu0 %5927
    %5929 = vrot.lane.b32.xlu0 %v5136, 96
    %v5930 = vpop.permute.xlu0 %5929
    %5931 = vrot.lane.b32.xlu0 %v5210, 96
    %v5932 = vpop.permute.xlu0 %5931
    %5933 = vrot.lane.b32.xlu0 %v5139, 96
    %v5934 = vpop.permute.xlu0 %5933
    %5935 = vrot.lane.b32.xlu0 %v5211, 96
    %v5936 = vpop.permute.xlu0 %5935
    %5937 = vrot.lane.b32.xlu0 %v5142, 96
    %v5938 = vpop.permute.xlu0 %5937
    %5939 = vrot.lane.b32.xlu0 %v5212, 96
    %v5940 = vpop.permute.xlu0 %5939
    %5941 = vrot.lane.b32.xlu0 %v5145, 96
    %v5942 = vpop.permute.xlu0 %5941
    %5943 = vrot.lane.b32.xlu0 %v5213, 96
    %v5944 = vpop.permute.xlu0 %5943
    %5945 = vrot.lane.b32.xlu0 %v5148, 96
    %v5946 = vpop.permute.xlu0 %5945
    %5947 = vrot.lane.b32.xlu0 %v5214, 96
    %v5948 = vpop.permute.xlu0 %5947
    %5949 = vrot.lane.b32.xlu0 %v5151, 96
    %v5950 = vpop.permute.xlu0 %5949
    %5981 = vrot.lane.b32.xlu0 %v5268, 112
    %v5982 = vpop.permute.xlu0 %5981
    %5983 = vrot.lane.b32.xlu0 %v5270, 112
    %v5984 = vpop.permute.xlu0 %5983
    %5985 = vrot.lane.b32.xlu0 %v5273, 112
    %v5986 = vpop.permute.xlu0 %5985
    %5987 = vrot.lane.b32.xlu0 %v5275, 112
    %v5988 = vpop.permute.xlu0 %5987
    %5989 = vrot.lane.b32.xlu0 %v5278, 112
    %v5990 = vpop.permute.xlu0 %5989
    %5991 = vrot.lane.b32.xlu0 %v5280, 112
    %v5992 = vpop.permute.xlu0 %5991
    %5993 = vrot.lane.b32.xlu0 %v5283, 112
    %v5994 = vpop.permute.xlu0 %5993
    %5995 = vrot.lane.b32.xlu0 %v5285, 112
    %v5996 = vpop.permute.xlu0 %5995
    %5997 = vrot.lane.b32.xlu0 %v5288, 112
    %v5998 = vpop.permute.xlu0 %5997
    %5999 = vrot.lane.b32.xlu0 %v5290, 112
    %v6000 = vpop.permute.xlu0 %5999
    %6001 = vrot.lane.b32.xlu0 %v5293, 112
    %v6002 = vpop.permute.xlu0 %6001
    %6003 = vrot.lane.b32.xlu0 %v5295, 112
    %v6004 = vpop.permute.xlu0 %6003
    %6005 = vrot.lane.b32.xlu0 %v5298, 112
    %v6006 = vpop.permute.xlu0 %6005
    %6007 = vrot.lane.b32.xlu0 %v5300, 112
    %v6008 = vpop.permute.xlu0 %6007
    %6009 = vrot.lane.b32.xlu0 %v5303, 112
    %v6010 = vpop.permute.xlu0 %6009
    %6011 = vrot.lane.b32.xlu0 %v5305, 112
    %v6012 = vpop.permute.xlu0 %6011
    %6013 = vrot.lane.b32.xlu0 %v5308, 112
    %v6014 = vpop.permute.xlu0 %6013
    %6015 = vrot.lane.b32.xlu0 %v5310, 112
    %v6016 = vpop.permute.xlu0 %6015
    %6017 = vrot.lane.b32.xlu0 %v5313, 112
    %v6018 = vpop.permute.xlu0 %6017
    %6019 = vrot.lane.b32.xlu0 %v5315, 112
    %v6020 = vpop.permute.xlu0 %6019
    %6021 = vrot.lane.b32.xlu0 %v5318, 112
    %v6022 = vpop.permute.xlu0 %6021
    %6023 = vrot.lane.b32.xlu0 %v5320, 112
    %v6024 = vpop.permute.xlu0 %6023
    %6025 = vrot.lane.b32.xlu0 %v5323, 112
    %v6026 = vpop.permute.xlu0 %6025
    %6027 = vrot.lane.b32.xlu0 %v5325, 112
    %v6028 = vpop.permute.xlu0 %6027
    %6029 = vrot.lane.b32.xlu0 %v5328, 112
    %v6030 = vpop.permute.xlu0 %6029
    %6031 = vrot.lane.b32.xlu0 %v5330, 112
    %v6032 = vpop.permute.xlu0 %6031
    %6033 = vrot.lane.b32.xlu0 %v5333, 112
    %v6034 = vpop.permute.xlu0 %6033
    %6035 = vrot.lane.b32.xlu0 %v5335, 112
    %v6036 = vpop.permute.xlu0 %6035
    %6037 = vrot.lane.b32.xlu0 %v5691, 112
    %v6038 = vpop.permute.xlu0 %6037
    %6039 = vrot.lane.b32.xlu0 %v5693, 112
    %v6040 = vpop.permute.xlu0 %6039
    %v6101 = vsel %vm1494, %v5199, %v5337
    %v6102 = vsel %vm1494, %v5106, %v5339
    %v6103 = vsel %vm1494, %v5200, %v5341
    %v6104 = vsel %vm1494, %v5109, %v5343
    %v6105 = vsel %vm1494, %v5201, %v5345
    %v6106 = vsel %vm1494, %v5112, %v5347
    %v6107 = vsel %vm1494, %v5202, %v5349
    %v6108 = vsel %vm1494, %v5115, %v5351
    %v6109 = vsel %vm1494, %v5203, %v5353
    %v6110 = vsel %vm1494, %v5118, %v5355
    %v6111 = vsel %vm1494, %v5204, %v5357
    %v6112 = vsel %vm1494, %v5121, %v5359
    %v6113 = vsel %vm1494, %v5205, %v5361
    %v6114 = vsel %vm1494, %v5124, %v5363
    %v6115 = vsel %vm1494, %v5206, %v5365
    %v6116 = vsel %vm1494, %v5127, %v5367
    %v6117 = vsel %vm1494, %v5207, %v5369
    %v6118 = vsel %vm1494, %v5130, %v5371
    %v6119 = vsel %vm1494, %v5208, %v5373
    %v6120 = vsel %vm1494, %v5133, %v5375
    %v6121 = vsel %vm1494, %v5209, %v5377
    %v6122 = vsel %vm1494, %v5136, %v5379
    %v6123 = vsel %vm1494, %v5210, %v5381
    %v6124 = vsel %vm1494, %v5139, %v5383
    %v6125 = vsel %vm1494, %v5211, %v5385
    %v6126 = vsel %vm1494, %v5142, %v5387
    %v6127 = vsel %vm1494, %v5212, %v5389
    %v6128 = vsel %vm1494, %v5145, %v5391
    %v6129 = vsel %vm1494, %v5213, %v5393
    %v6130 = vsel %vm1494, %v5148, %v5395
    %v6131 = vsel %vm1527, %v6101, %v5502
    %v6132 = vsel %vm1527, %v6102, %v5504
    %v6133 = vsel %vm1527, %v6103, %v5506
    %v6134 = vsel %vm1527, %v6104, %v5508
    %v6135 = vsel %vm1527, %v6105, %v5510
    %v6136 = vsel %vm1527, %v6106, %v5512
    %v6137 = vsel %vm1527, %v6107, %v5514
    %v6138 = vsel %vm1527, %v6108, %v5516
    %v6139 = vsel %vm1527, %v6109, %v5518
    %v6140 = vsel %vm1527, %v6110, %v5520
    %v6141 = vsel %vm1527, %v6111, %v5522
    %v6142 = vsel %vm1527, %v6112, %v5524
    %v6143 = vsel %vm1527, %v6113, %v5526
    %v6144 = vsel %vm1527, %v6114, %v5528
    %v6145 = vsel %vm1527, %v6115, %v5530
    %v6146 = vsel %vm1527, %v6116, %v5532
    %v6147 = vsel %vm1527, %v6117, %v5534
    %v6148 = vsel %vm1527, %v6118, %v5536
    %v6149 = vsel %vm1527, %v6119, %v5538
    %v6150 = vsel %vm1527, %v6120, %v5540
    %v6151 = vsel %vm1527, %v6121, %v5542
    %v6152 = vsel %vm1527, %v6122, %v5544
    %v6153 = vsel %vm1527, %v6123, %v5546
    %v6154 = vsel %vm1527, %v6124, %v5548
    %v6155 = vsel %vm1527, %v6125, %v5550
    %v6156 = vsel %vm1527, %v6126, %v5552
    %v6157 = vsel %vm1527, %v6127, %v5554
    %v6158 = vsel %vm1527, %v6128, %v5556
    %v6159 = vsel %vm1527, %v6129, %v5558
    %v6160 = vsel %vm1527, %v6130, %v5560
    %v6161 = vsel %vm1560, %v1528, %v5593
    %v6162 = vsel %vm1560, %v1529, %v5595
    %v6163 = vsel %vm1560, %v6131, %v5597
    %v6164 = vsel %vm1560, %v6132, %v5599
    %v6165 = vsel %vm1560, %v6133, %v5601
    %v6166 = vsel %vm1560, %v6134, %v5603
    %v6167 = vsel %vm1560, %v6135, %v5605
    %v6168 = vsel %vm1560, %v6136, %v5607
    %v6169 = vsel %vm1560, %v6137, %v5609
    %v6170 = vsel %vm1560, %v6138, %v5611
    %v6171 = vsel %vm1560, %v6139, %v5613
    %v6172 = vsel %vm1560, %v6140, %v5615
    %v6173 = vsel %vm1560, %v6141, %v5617
    %v6174 = vsel %vm1560, %v6142, %v5619
    %v6175 = vsel %vm1560, %v6143, %v5621
    %v6176 = vsel %vm1560, %v6144, %v5623
    %v6177 = vsel %vm1560, %v6145, %v5625
    %v6178 = vsel %vm1560, %v6146, %v5627
    %v6179 = vsel %vm1560, %v6147, %v5629
    %v6180 = vsel %vm1560, %v6148, %v5631
    %v6181 = vsel %vm1560, %v6149, %v5633
    %v6182 = vsel %vm1560, %v6150, %v5635
    %v6183 = vsel %vm1560, %v6151, %v5637
    %v6184 = vsel %vm1560, %v6152, %v5639
    %v6185 = vsel %vm1560, %v6153, %v5641
    %v6186 = vsel %vm1560, %v6154, %v5643
    %v6187 = vsel %vm1560, %v6155, %v5645
    %v6188 = vsel %vm1560, %v6156, %v5647
    %v6189 = vsel %vm1560, %v6157, %v5649
    %v6190 = vsel %vm1560, %v6158, %v5651
    %v6191 = vsel %vm1560, %v6159, %v5653
    %v6192 = vsel %vm1560, %v6160, %v5655
    %v6193 = vsel %vm189, %v6161, %v5695
    %v6194 = vsel %vm189, %v6162, %v5697
    %v6195 = vsel %vm189, %v6163, %v5699
    %v6196 = vsel %vm189, %v6164, %v5701
    %v6197 = vsel %vm189, %v6165, %v5703
    %v6198 = vsel %vm189, %v6166, %v5705
    %v6199 = vsel %vm189, %v6167, %v5707
    %v6200 = vsel %vm189, %v6168, %v5709
    %v6201 = vsel %vm189, %v6169, %v5711
    %v6202 = vsel %vm189, %v6170, %v5713
    %v6203 = vsel %vm189, %v6171, %v5715
    %v6204 = vsel %vm189, %v6172, %v5717
    %v6205 = vsel %vm189, %v6173, %v5719
    %v6206 = vsel %vm189, %v6174, %v5721
    %v6207 = vsel %vm189, %v6175, %v5723
    %v6208 = vsel %vm189, %v6176, %v5725
    %v6209 = vsel %vm189, %v6177, %v5727
    %v6210 = vsel %vm189, %v6178, %v5729
    %v6211 = vsel %vm189, %v6179, %v5731
    %v6212 = vsel %vm189, %v6180, %v5733
    %v6213 = vsel %vm189, %v6181, %v5735
    %v6214 = vsel %vm189, %v6182, %v5737
    %v6215 = vsel %vm189, %v6183, %v5739
    %v6216 = vsel %vm189, %v6184, %v5741
    %v6217 = vsel %vm189, %v6185, %v5743
    %v6218 = vsel %vm189, %v6186, %v5745
    %v6219 = vsel %vm189, %v6187, %v5747
    %v6220 = vsel %vm189, %v6188, %v5749
    %v6221 = vsel %vm189, %v6189, %v5751
    %v6222 = vsel %vm189, %v6190, %v5753
    %v6223 = vsel %vm189, %v6191, %v5755
    %v6224 = vsel %vm189, %v6192, %v5757
    %v6225 = vsel %vm1625, %v6193, %v5796
    %v6226 = vsel %vm1625, %v6194, %v5798
    %v6227 = vsel %vm1625, %v6195, %v5800
    %v6228 = vsel %vm1625, %v6196, %v5802
    %v6229 = vsel %vm1625, %v6197, %v5804
    %v6230 = vsel %vm1625, %v6198, %v5806
    %v6231 = vsel %vm1625, %v6199, %v5808
    %v6232 = vsel %vm1625, %v6200, %v5810
    %v6233 = vsel %vm1625, %v6201, %v5812
    %v6234 = vsel %vm1625, %v6202, %v5814
    %v6235 = vsel %vm1625, %v6203, %v5816
    %v6236 = vsel %vm1625, %v6204, %v5818
    %v6237 = vsel %vm1625, %v6205, %v5820
    %v6238 = vsel %vm1625, %v6206, %v5822
    %v6239 = vsel %vm1625, %v6207, %v5824
    %v6240 = vsel %vm1625, %v6208, %v5826
    %v6241 = vsel %vm1625, %v6209, %v5828
    %v6242 = vsel %vm1625, %v6210, %v5830
    %v6243 = vsel %vm1625, %v6211, %v5832
    %v6244 = vsel %vm1625, %v6212, %v5834
    %v6245 = vsel %vm1625, %v6213, %v5836
    %v6246 = vsel %vm1625, %v6214, %v5838
    %v6247 = vsel %vm1625, %v6215, %v5840
    %v6248 = vsel %vm1625, %v6216, %v5842
    %v6249 = vsel %vm1625, %v6217, %v5844
    %v6250 = vsel %vm1625, %v6218, %v5846
    %v6251 = vsel %vm1625, %v6219, %v5848
    %v6252 = vsel %vm1625, %v6220, %v5850
    %v6253 = vsel %vm1625, %v6221, %v5852
    %v6254 = vsel %vm1625, %v6222, %v5854
    %v6255 = vsel %vm1625, %v6223, %v5856
    %v6256 = vsel %vm1625, %v6224, %v5858
    %v6257 = vsel %vm1658, %v6225, %v5892
    %v6258 = vsel %vm1658, %v6226, %v5894
    %v6259 = vsel %vm1658, %v6227, %v5896
    %v6260 = vsel %vm1658, %v6228, %v5898
    %v6261 = vsel %vm1658, %v6229, %v5900
    %v6262 = vsel %vm1658, %v6230, %v5902
    %v6263 = vsel %vm1658, %v6231, %v5904
    %v6264 = vsel %vm1658, %v6232, %v5906
    %v6265 = vsel %vm1658, %v6233, %v5908
    %v6266 = vsel %vm1658, %v6234, %v5910
    %v6267 = vsel %vm1658, %v6235, %v5912
    %v6268 = vsel %vm1658, %v6236, %v5914
    %v6269 = vsel %vm1658, %v6237, %v5916
    %v6270 = vsel %vm1658, %v6238, %v5918
    %v6271 = vsel %vm1658, %v6239, %v5920
    %v6272 = vsel %vm1658, %v6240, %v5922
    %v6273 = vsel %vm1658, %v6241, %v5924
    %v6274 = vsel %vm1658, %v6242, %v5926
    %v6275 = vsel %vm1658, %v6243, %v5928
    %v6276 = vsel %vm1658, %v6244, %v5930
    %v6277 = vsel %vm1658, %v6245, %v5932
    %v6278 = vsel %vm1658, %v6246, %v5934
    %v6279 = vsel %vm1658, %v6247, %v5936
    %v6280 = vsel %vm1658, %v6248, %v5938
    %v6281 = vsel %vm1658, %v6249, %v5940
    %v6282 = vsel %vm1658, %v6250, %v5942
    %v6283 = vsel %vm1658, %v6251, %v5944
    %v6284 = vsel %vm1658, %v6252, %v5946
    %v6285 = vsel %vm1658, %v6253, %v5948
    %v6286 = vsel %vm1658, %v6254, %v5950
    %v6287 = vsel %vm1658, %v6255, %v1331
    %v6288 = vsel %vm1658, %v6256, %v1333
    %v6289 = vsel %vm1691, %v6257, %v5982
    %v6290 = vsel %vm1691, %v6258, %v5984
    %v6291 = vsel %vm1691, %v6259, %v5986
    %v6292 = vsel %vm1691, %v6260, %v5988
    %v6293 = vsel %vm1691, %v6261, %v5990
    %v6294 = vsel %vm1691, %v6262, %v5992
    %v6295 = vsel %vm1691, %v6263, %v5994
    %v6296 = vsel %vm1691, %v6264, %v5996
    %v6297 = vsel %vm1691, %v6265, %v5998
    %v6298 = vsel %vm1691, %v6266, %v6000
    %v6299 = vsel %vm1691, %v6267, %v6002
    %v6300 = vsel %vm1691, %v6268, %v6004
    %v6301 = vsel %vm1691, %v6269, %v6006
    %v6302 = vsel %vm1691, %v6270, %v6008
    %v6303 = vsel %vm1691, %v6271, %v6010
    %v6304 = vsel %vm1691, %v6272, %v6012
    %v6305 = vsel %vm1691, %v6273, %v6014
    %v6306 = vsel %vm1691, %v6274, %v6016
    %v6307 = vsel %vm1691, %v6275, %v6018
    %v6308 = vsel %vm1691, %v6276, %v6020
    %v6309 = vsel %vm1691, %v6277, %v6022
    %v6310 = vsel %vm1691, %v6278, %v6024
    %v6311 = vsel %vm1691, %v6279, %v6026
    %v6312 = vsel %vm1691, %v6280, %v6028
    %v6313 = vsel %vm1691, %v6281, %v6030
    %v6314 = vsel %vm1691, %v6282, %v6032
    %v6315 = vsel %vm1691, %v6283, %v6034
    %v6316 = vsel %vm1691, %v6284, %v6036
    %v6317 = vsel %vm1691, %v6285, %v6038
    %v6318 = vsel %vm1691, %v6286, %v6040
    %v6319 = vsel %vm1691, %v6287, %v1427
    %v6320 = vsel %vm1691, %v6288, %v1429
    %v6321 = vpack.c.bf16 %v6290, %v6289
    %v6322 = vpack.c.bf16 %v5435, %v5433
    %v6323 = vpack.c.bf16 %v6292, %v6291
    %v6324 = vpack.c.bf16 %v5440, %v5438
    %v6325 = vpack.c.bf16 %v6294, %v6293
    %v6326 = vpack.c.bf16 %v5445, %v5443
    %v6327 = vpack.c.bf16 %v6296, %v6295
    %v6328 = vpack.c.bf16 %v5450, %v5448
    %v6329 = vpack.c.bf16 %v6298, %v6297
    %v6330 = vpack.c.bf16 %v5455, %v5453
    %v6331 = vpack.c.bf16 %v6300, %v6299
    %v6332 = vpack.c.bf16 %v5460, %v5458
    %v6333 = vpack.c.bf16 %v6302, %v6301
    %v6334 = vpack.c.bf16 %v5465, %v5463
    %v6335 = vpack.c.bf16 %v6304, %v6303
    %v6336 = vpack.c.bf16 %v5470, %v5468
    %v6337 = vpack.c.bf16 %v6306, %v6305
    %v6338 = vpack.c.bf16 %v5475, %v5473
    %v6339 = vpack.c.bf16 %v6308, %v6307
    %v6340 = vpack.c.bf16 %v5480, %v5478
    %v6341 = vpack.c.bf16 %v6310, %v6309
    %v6342 = vpack.c.bf16 %v5485, %v5483
    %v6343 = vpack.c.bf16 %v6312, %v6311
    %v6344 = vpack.c.bf16 %v5490, %v5488
    %v6345 = vpack.c.bf16 %v6314, %v6313
    %v6346 = vpack.c.bf16 %v5495, %v5493
    %v6347 = vpack.c.bf16 %v6316, %v6315
    %v6348 = vpack.c.bf16 %v5500, %v5498
    %v6349 = vpack.c.bf16 %v6318, %v6317
    %v6350 = vpack.c.bf16 %v5794, %v5792
    %v6351 = vpack.c.bf16 %v6320, %v6319
    %v6370 = vunpack.c.l.b16 %v5054
    %v6371 = vunpack.c.l.b16 %v5055
    %v6372 = vunpack.c.l.b16 %v5056
    %v6373 = vunpack.c.l.b16 %v5057
    %v6374 = vunpack.c.l.b16 %v5058
    %v6375 = vunpack.c.l.b16 %v5059
    %v6376 = vunpack.c.l.b16 %v5060
    %v6377 = vunpack.c.l.b16 %v5061
    %v6378 = vunpack.c.l.b16 %v5062
    %v6379 = vunpack.c.l.b16 %v5063
    %v6380 = vunpack.c.l.b16 %v5064
    %v6381 = vunpack.c.l.b16 %v5065
    %v6382 = vunpack.c.l.b16 %v5066
    %v6383 = vunpack.c.l.b16 %v5067
    %v6384 = vunpack.c.l.b16 %v5068
    %v6385 = vunpack.c.l.b16 %v5069
    %v6386 = vunpack.c.l.b16 %v5070
    %v6387 = vunpack.c.l.b16 %v5071
    %v6388 = vpack.c.b16 %v6371, %v6370
    %v6389 = vpack.c.b16 %v6373, %v6372
    %v6390 = vpack.c.b16 %v6375, %v6374
    %v6391 = vpack.c.b16 %v6377, %v6376
    %v6392 = vpack.c.b16 %v6379, %v6378
    %v6393 = vpack.c.b16 %v6381, %v6380
    %v6394 = vpack.c.b16 %v6383, %v6382
    %v6395 = vpack.c.b16 %v6385, %v6384
    %v6396 = vpack.c.b16 %v6387, %v6386
    %v6407 = vsel %vm1494, %v6322, 0
    %v6410 = vsel %vm1494, %v6324, 0
    %v6413 = vsel %vm1494, %v6326, 0
    %v6416 = vsel %vm1494, %v6328, 0
    %v6419 = vsel %vm1494, %v6330, 0
    %v6422 = vsel %vm1494, %v6332, 0
    %v6425 = vsel %vm1494, %v6334, 0
    %v6428 = vsel %vm1494, %v6336, 0
    %v6431 = vsel %vm1494, %v6338, 0
    %v6434 = vsel %vm1494, %v6340, 0
    %v6437 = vsel %vm1494, %v6342, 0
    %v6440 = vsel %vm1494, %v6344, 0
    %v6443 = vsel %vm1494, %v6346, 0
    %v6446 = vsel %vm1494, %v6348, 0
    %v6449 = vsel %vm1494, %v6350, 0
    %6451 = vmatprep.subr.bf16.mxu0 0
    %6452 = vmatpush1.bf16.msra.mxu0 %v6395
    %6453 = vmatprep.subr.bf16.mxu0 0
    %6454 = vmatpush1.bf16.msra.mxu0 %v6394
    %6455 = vmatprep.subr.bf16.mxu0 0
    %6456 = vmatpush1.bf16.msra.mxu0 %v6393
    %6457 = vmatprep.subr.bf16.mxu0 0
    %6458 = vmatpush1.bf16.msra.mxu0 %v6392
    %6459 = vmatprep.subr.bf16.mxu0 0
    %6460 = vmatpush1.bf16.msra.mxu0 %v6391
    %6461 = vmatprep.subr.bf16.mxu0 0
    %6462 = vmatpush1.bf16.msra.mxu0 %v6390
    %6463 = vmatprep.subr.bf16.mxu0 0
    %6464 = vmatpush1.bf16.msra.mxu0 %v6389
    %6465 = vmatprep.subr.bf16.mxu0 0
    %6466 = vmatpush1.bf16.msra.mxu0 %v6388
    %6467 = vmatprep.subr.bf16.mxu0 0
    %6468 = vmatpush2.bf16.msra.mxu0 0
    %6469 = vmatprep.subr.bf16.mxu0 0
    %6470 = vmatpush2.bf16.msra.mxu0 0
    %6471 = vmatprep.subr.bf16.mxu0 0
    %6472 = vmatpush2.bf16.msra.mxu0 0
    %6473 = vmatprep.subr.bf16.mxu0 0
    %6474 = vmatpush2.bf16.msra.mxu0 0
    %6475 = vmatprep.subr.bf16.mxu0 0
    %6476 = vmatpush2.bf16.msra.mxu0 0
    %6477 = vmatprep.subr.bf16.mxu0 0
    %6478 = vmatpush2.bf16.msra.mxu0 0
    %6479 = vmatprep.subr.bf16.mxu0 0
    %6480 = vmatpush2.bf16.msra.mxu0 0
    %6481 = vmatprep.subr.bf16.mxu0 0
    %6482 = vmatpush2.bf16.msra.mxu0 %v6396
    %6483 = vmatprep.mubr.bf16.mxu0 %v6407
    %6484 = vmatmul.mubr.bf16.gmra.mxu0 %v6321
    %v6485 = vpop.f32.mrf.mxu0
    %v6486 = vadd.f32 0.0, %v6485
    %v6487 = vpop.f32.mrf.mxu0
    %v6488 = vpop.f32.mrf.mxu0
    %v6489 = vadd.f32 0.0, %v6488
    %v6490 = vpop.f32.mrf.mxu0
    %6491 = vmatprep.mubr.bf16.mxu0 %v6410
    %6492 = vmatmul.mubr.bf16.gmra.mxu0 %v6323
    %v6493 = vpop.f32.mrf.mxu0
    %v6494 = vadd.f32 0.0, %v6493
    %v6495 = vpop.f32.mrf.mxu0
    %v6496 = vpop.f32.mrf.mxu0
    %v6497 = vadd.f32 0.0, %v6496
    %v6498 = vpop.f32.mrf.mxu0
    %6499 = vmatprep.mubr.bf16.mxu0 %v6413
    %6500 = vmatmul.mubr.bf16.gmra.mxu0 %v6325
    %v6501 = vpop.f32.mrf.mxu0
    %v6502 = vadd.f32 0.0, %v6501
    %v6503 = vpop.f32.mrf.mxu0
    %v6504 = vpop.f32.mrf.mxu0
    %v6505 = vadd.f32 0.0, %v6504
    %v6506 = vpop.f32.mrf.mxu0
    %6507 = vmatprep.mubr.bf16.mxu0 %v6416
    %6508 = vmatmul.mubr.bf16.gmra.mxu0 %v6327
    %v6509 = vpop.f32.mrf.mxu0
    %v6510 = vadd.f32 0.0, %v6509
    %v6511 = vpop.f32.mrf.mxu0
    %v6512 = vpop.f32.mrf.mxu0
    %v6513 = vadd.f32 0.0, %v6512
    %v6514 = vpop.f32.mrf.mxu0
    %6515 = vmatprep.mubr.bf16.mxu0 %v6419
    %6516 = vmatmul.mubr.bf16.gmra.mxu0 %v6329
    %v6517 = vpop.f32.mrf.mxu0
    %v6518 = vadd.f32 0.0, %v6517
    %v6519 = vpop.f32.mrf.mxu0
    %v6520 = vpop.f32.mrf.mxu0
    %v6521 = vadd.f32 0.0, %v6520
    %v6522 = vpop.f32.mrf.mxu0
    %6523 = vmatprep.mubr.bf16.mxu0 %v6422
    %6524 = vmatmul.mubr.bf16.gmra.mxu0 %v6331
    %v6525 = vpop.f32.mrf.mxu0
    %v6526 = vadd.f32 0.0, %v6525
    %v6527 = vpop.f32.mrf.mxu0
    %v6528 = vpop.f32.mrf.mxu0
    %v6529 = vadd.f32 0.0, %v6528
    %v6530 = vpop.f32.mrf.mxu0
    %6531 = vmatprep.mubr.bf16.mxu0 %v6425
    %6532 = vmatmul.mubr.bf16.gmra.mxu0 %v6333
    %v6533 = vpop.f32.mrf.mxu0
    %v6534 = vadd.f32 0.0, %v6533
    %v6535 = vpop.f32.mrf.mxu0
    %v6536 = vpop.f32.mrf.mxu0
    %v6537 = vadd.f32 0.0, %v6536
    %v6538 = vpop.f32.mrf.mxu0
    %6539 = vmatprep.mubr.bf16.mxu0 %v6428
    %6540 = vmatmul.mubr.bf16.gmra.mxu0 %v6335
    %v6541 = vpop.f32.mrf.mxu0
    %v6542 = vadd.f32 0.0, %v6541
    %v6543 = vpop.f32.mrf.mxu0
    %v6544 = vpop.f32.mrf.mxu0
    %v6545 = vadd.f32 0.0, %v6544
    %v6546 = vpop.f32.mrf.mxu0
    %6547 = vmatprep.mubr.bf16.mxu0 %v6431
    %6548 = vmatmul.mubr.bf16.gmra.mxu0 %v6337
    %v6549 = vpop.f32.mrf.mxu0
    %v6550 = vadd.f32 0.0, %v6549
    %v6551 = vpop.f32.mrf.mxu0
    %v6552 = vpop.f32.mrf.mxu0
    %v6553 = vadd.f32 0.0, %v6552
    %v6554 = vpop.f32.mrf.mxu0
    %6555 = vmatprep.mubr.bf16.mxu0 %v6434
    %6556 = vmatmul.mubr.bf16.gmra.mxu0 %v6339
    %v6557 = vpop.f32.mrf.mxu0
    %v6558 = vadd.f32 0.0, %v6557
    %v6559 = vpop.f32.mrf.mxu0
    %v6560 = vpop.f32.mrf.mxu0
    %v6561 = vadd.f32 0.0, %v6560
    %v6562 = vpop.f32.mrf.mxu0
    %6563 = vmatprep.mubr.bf16.mxu0 %v6437
    %6564 = vmatmul.mubr.bf16.gmra.mxu0 %v6341
    %v6565 = vpop.f32.mrf.mxu0
    %v6566 = vadd.f32 0.0, %v6565
    %v6567 = vpop.f32.mrf.mxu0
    %v6568 = vpop.f32.mrf.mxu0
    %v6569 = vadd.f32 0.0, %v6568
    %v6570 = vpop.f32.mrf.mxu0
    %6571 = vmatprep.mubr.bf16.mxu0 %v6440
    %6572 = vmatmul.mubr.bf16.gmra.mxu0 %v6343
    %v6573 = vpop.f32.mrf.mxu0
    %v6574 = vadd.f32 0.0, %v6573
    %v6575 = vpop.f32.mrf.mxu0
    %v6576 = vpop.f32.mrf.mxu0
    %v6577 = vadd.f32 0.0, %v6576
    %v6578 = vpop.f32.mrf.mxu0
    %6579 = vmatprep.mubr.bf16.mxu0 %v6443
    %6580 = vmatmul.mubr.bf16.gmra.mxu0 %v6345
    %v6581 = vpop.f32.mrf.mxu0
    %v6582 = vadd.f32 0.0, %v6581
    %v6583 = vpop.f32.mrf.mxu0
    %v6584 = vpop.f32.mrf.mxu0
    %v6585 = vadd.f32 0.0, %v6584
    %v6586 = vpop.f32.mrf.mxu0
    %6587 = vmatprep.mubr.bf16.mxu0 %v6446
    %6588 = vmatmul.mubr.bf16.gmra.mxu0 %v6347
    %v6589 = vpop.f32.mrf.mxu0
    %v6590 = vadd.f32 0.0, %v6589
    %v6591 = vpop.f32.mrf.mxu0
    %v6592 = vpop.f32.mrf.mxu0
    %v6593 = vadd.f32 0.0, %v6592
    %v6594 = vpop.f32.mrf.mxu0
    %6595 = vmatprep.mubr.bf16.mxu0 %v6449
    %6596 = vmatmul.mubr.bf16.gmra.mxu0 %v6349
    %v6597 = vpop.f32.mrf.mxu0
    %v6598 = vadd.f32 0.0, %v6597
    %v6599 = vpop.f32.mrf.mxu0
    %v6600 = vpop.f32.mrf.mxu0
    %v6601 = vadd.f32 0.0, %v6600
    %v6602 = vpop.f32.mrf.mxu0
    %6603 = vmatprep.mubr.bf16.mxu0 %v1863
    %6604 = vmatmul.mubr.bf16.gmra.mxu0 %v6351
    %v6605 = vpop.f32.mrf.mxu0
    %v6606 = vadd.f32 0.0, %v6605
    %v6607 = vpop.f32.mrf.mxu0
    %v6608 = vpop.f32.mrf.mxu0
    %v6609 = vadd.f32 0.0, %v6608
    %v6610 = vpop.f32.mrf.mxu0
    %6611 = vdwg.mxu0
    %v6612 = vld [vmem:[%s9] sm:$0x1]
    %v6613 = vld [vmem:[%s10] sm:$0x1]
    %v6614 = vsel %vm1494, %v6486, 0.0
    %v6615 = vsel %vm1494, %v6489, 0.0
    %v6616 = vadd.f32 %v6614, %v6615
    %v6617 = vsel %vm1494, %v6494, 0.0
    %v6618 = vadd.f32 %v6616, %v6617
    %v6619 = vsel %vm1494, %v6497, 0.0
    %v6620 = vadd.f32 %v6618, %v6619
    %v6621 = vsel %vm1494, %v6502, 0.0
    %v6622 = vadd.f32 %v6620, %v6621
    %v6623 = vsel %vm1494, %v6505, 0.0
    %v6624 = vadd.f32 %v6622, %v6623
    %v6625 = vsel %vm1494, %v6510, 0.0
    %v6626 = vadd.f32 %v6624, %v6625
    %v6627 = vsel %vm1494, %v6513, 0.0
    %v6628 = vadd.f32 %v6626, %v6627
    %v6629 = vsel %vm1494, %v6518, 0.0
    %v6630 = vadd.f32 %v6628, %v6629
    %v6631 = vsel %vm1494, %v6521, 0.0
    %v6632 = vadd.f32 %v6630, %v6631
    %v6633 = vsel %vm1494, %v6526, 0.0
    %v6634 = vadd.f32 %v6632, %v6633
    %v6635 = vsel %vm1494, %v6529, 0.0
    %v6636 = vadd.f32 %v6634, %v6635
    %v6637 = vsel %vm1494, %v6534, 0.0
    %v6638 = vadd.f32 %v6636, %v6637
    %v6639 = vsel %vm1494, %v6537, 0.0
    %v6640 = vadd.f32 %v6638, %v6639
    %v6641 = vsel %vm1494, %v6542, 0.0
    %v6642 = vadd.f32 %v6640, %v6641
    %v6643 = vsel %vm1494, %v6545, 0.0
    %v6644 = vadd.f32 %v6642, %v6643
    %v6645 = vsel %vm1494, %v6550, 0.0
    %v6646 = vadd.f32 %v6644, %v6645
    %v6647 = vsel %vm1494, %v6553, 0.0
    %v6648 = vadd.f32 %v6646, %v6647
    %v6649 = vsel %vm1494, %v6558, 0.0
    %v6650 = vadd.f32 %v6648, %v6649
    %v6651 = vsel %vm1494, %v6561, 0.0
    %v6652 = vadd.f32 %v6650, %v6651
    %v6653 = vsel %vm1494, %v6566, 0.0
    %v6654 = vadd.f32 %v6652, %v6653
    %v6655 = vsel %vm1494, %v6569, 0.0
    %v6656 = vadd.f32 %v6654, %v6655
    %v6657 = vsel %vm1494, %v6574, 0.0
    %v6658 = vadd.f32 %v6656, %v6657
    %v6659 = vsel %vm1494, %v6577, 0.0
    %v6660 = vadd.f32 %v6658, %v6659
    %v6661 = vsel %vm1494, %v6582, 0.0
    %v6662 = vadd.f32 %v6660, %v6661
    %v6663 = vsel %vm1494, %v6585, 0.0
    %v6664 = vadd.f32 %v6662, %v6663
    %v6665 = vsel %vm1494, %v6590, 0.0
    %v6666 = vadd.f32 %v6664, %v6665
    %v6667 = vsel %vm1494, %v6593, 0.0
    %v6668 = vadd.f32 %v6666, %v6667
    %v6669 = vsel %vm1494, %v6598, 0.0
    %v6670 = vadd.f32 %v6668, %v6669
    %v6671 = vsel %vm1494, %v6601, 0.0
    %v6672 = vadd.f32 %v6670, %v6671
    %v6673 = vsel %vm1494, %v6606, 0.0
    %v6674 = vadd.f32 %v6672, %v6673
    %v6675 = vsel %vm1494, %v6609, 0.0
    %v6676 = vadd.f32 %v6674, %v6675
    %v6677 = vrot.slane %v6676, 4
    %v6678 = vadd.f32 %v6676, %v6677
    %v6679 = vrot.slane %v6678, 2
    %v6680 = vadd.f32 %v6678, %v6679
    %v6681 = vrot.slane %v6680, 1
    %v6682 = vadd.f32 %v6680, %v6681
    %v6684 = vsel %vm1494, %v6682, 0
    %6686 = vmatprep.subr.mxu0 0.0
    %6687 = vmatpush1.msra.mxu0 0.0
    %6688 = vmatprep.subr.mxu0 0.0
    %6689 = vmatpush1.msra.mxu0 0.0
    %6690 = vmatprep.subr.mxu0 0.0
    %6691 = vmatpush1.msra.mxu0 0.0
    %6692 = vmatprep.subr.mxu0 0.0
    %6693 = vmatpush1.msra.mxu0 0.0
    %6694 = vmatprep.subr.mxu0 0.0
    %6695 = vmatpush1.msra.mxu0 0.0
    %6696 = vmatprep.subr.mxu0 0.0
    %6697 = vmatpush1.msra.mxu0 0.0
    %6698 = vmatprep.subr.mxu0 0.0
    %6699 = vmatpush1.msra.mxu0 0.0
    %6700 = vmatprep.subr.mxu0 0.0
    %6701 = vmatpush1.msra.mxu0 0.0
    %6702 = vmatprep.subr.mxu0 0.0
    %6703 = vmatpush1.msra.mxu0 0.0
    %6704 = vmatprep.subr.mxu0 0.0
    %6705 = vmatpush1.msra.mxu0 0.0
    %6706 = vmatprep.subr.mxu0 0.0
    %6707 = vmatpush1.msra.mxu0 0.0
    %6708 = vmatprep.subr.mxu0 0.0
    %6709 = vmatpush1.msra.mxu0 0.0
    %6710 = vmatprep.subr.mxu0 0.0
    %6711 = vmatpush1.msra.mxu0 0.0
    %6712 = vmatprep.subr.mxu0 0.0
    %6713 = vmatpush1.msra.mxu0 0.0
    %6714 = vmatprep.subr.mxu0 0.0
    %v6715 = vand.u32 %v44, 4294901760
    %6716 = vmatpush1.msra.mxu0 %v6715
    %6717 = vmatprep.subr.mxu0 0.0
    %v6718 = vand.u32 %v43, 4294901760
    %6719 = vmatpush1.msra.mxu0 %v6718
    %6720 = vmatprep.subr.mxu0 0.0
    %6721 = vmatpush2.msra.mxu0 0.0
    %6722 = vmatprep.subr.mxu0 0.0
    %6723 = vmatpush2.msra.mxu0 0.0
    %6724 = vmatprep.subr.mxu0 0.0
    %6725 = vmatpush2.msra.mxu0 0.0
    %6726 = vmatprep.subr.mxu0 0.0
    %6727 = vmatpush2.msra.mxu0 0.0
    %6728 = vmatprep.subr.mxu0 0.0
    %6729 = vmatpush2.msra.mxu0 0.0
    %6730 = vmatprep.subr.mxu0 0.0
    %6731 = vmatpush2.msra.mxu0 0.0
    %6732 = vmatprep.subr.mxu0 0.0
    %6733 = vmatpush2.msra.mxu0 0.0
    %6734 = vmatprep.subr.mxu0 0.0
    %6735 = vmatpush2.msra.mxu0 0.0
    %6736 = vmatprep.subr.mxu0 0.0
    %6737 = vmatpush2.msra.mxu0 0.0
    %6738 = vmatprep.subr.mxu0 0.0
    %6739 = vmatpush2.msra.mxu0 0.0
    %6740 = vmatprep.subr.mxu0 0.0
    %6741 = vmatpush2.msra.mxu0 0.0
    %6742 = vmatprep.subr.mxu0 0.0
    %6743 = vmatpush2.msra.mxu0 0.0
    %6744 = vmatprep.subr.mxu0 0.0
    %6745 = vmatpush2.msra.mxu0 0.0
    %6746 = vmatprep.subr.mxu0 0.0
    %6747 = vmatpush2.msra.mxu0 0.0
    %6748 = vmatprep.subr.mxu0 0.0
    %6749 = vmatpush2.msra.mxu0 0.0
    %6750 = vmatprep.subr.mxu0 0.0
    %6751 = vmatpush2.msra.mxu0 0.0
    %6752 = vmatprep.mubr.f32.mxu0 0.0
    %v6753 = vand.u32 %v6684, 4294901760
    %v6754 = vsub.f32 %v6684, %v6753
    %v6755 = vand.u32 %v6754, 4294901760
    %v6756 = vsub.f32 %v6754, %v6755
    %v6757 = vand.u32 %v6756, 4294901760
    %6758 = vmatmul.mubr.f32.gmra.mxu0 %v6757
    %v6759 = vpop.f32.mrf.mxu0
    %v6760 = vadd.f32 0.0, %v6759
    %v6761 = vpop.f32.mrf.mxu0
    %6762 = vdwg.mxu0
    %6763 = vmatprep.subr.mxu0 0.0
    %6764 = vmatpush1.msra.mxu0 0.0
    %6765 = vmatprep.subr.mxu0 0.0
    %6766 = vmatpush1.msra.mxu0 0.0
    %6767 = vmatprep.subr.mxu0 0.0
    %6768 = vmatpush1.msra.mxu0 0.0
    %6769 = vmatprep.subr.mxu0 0.0
    %6770 = vmatpush1.msra.mxu0 0.0
    %6771 = vmatprep.subr.mxu0 0.0
    %6772 = vmatpush1.msra.mxu0 0.0
    %6773 = vmatprep.subr.mxu0 0.0
    %6774 = vmatpush1.msra.mxu0 0.0
    %6775 = vmatprep.subr.mxu0 0.0
    %6776 = vmatpush1.msra.mxu0 0.0
    %6777 = vmatprep.subr.mxu0 0.0
    %6778 = vmatpush1.msra.mxu0 0.0
    %6779 = vmatprep.subr.mxu0 0.0
    %6780 = vmatpush1.msra.mxu0 0.0
    %6781 = vmatprep.subr.mxu0 0.0
    %6782 = vmatpush1.msra.mxu0 0.0
    %6783 = vmatprep.subr.mxu0 0.0
    %6784 = vmatpush1.msra.mxu0 0.0
    %6785 = vmatprep.subr.mxu0 0.0
    %6786 = vmatpush1.msra.mxu0 0.0
    %6787 = vmatprep.subr.mxu0 0.0
    %6788 = vmatpush1.msra.mxu0 0.0
    %6789 = vmatprep.subr.mxu0 0.0
    %6790 = vmatpush1.msra.mxu0 0.0
    %6791 = vmatprep.subr.mxu0 0.0
    %v6792 = vand.u32 %v44, 4294901760
    %v6793 = vsub.f32 %v44, %v6792
    %v6794 = vand.u32 %v6793, 4294901760
    %v6795 = vsub.f32 %v6793, %v6794
    %v6796 = vand.u32 %v6795, 4294901760
    %6797 = vmatpush1.msra.mxu0 %v6796
    %6798 = vmatprep.subr.mxu0 0.0
    %v6799 = vand.u32 %v43, 4294901760
    %v6800 = vsub.f32 %v43, %v6799
    %v6801 = vand.u32 %v6800, 4294901760
    %v6802 = vsub.f32 %v6800, %v6801
    %v6803 = vand.u32 %v6802, 4294901760
    %6804 = vmatpush1.msra.mxu0 %v6803
    %6805 = vmatprep.subr.mxu0 0.0
    %6806 = vmatpush2.msra.mxu0 0.0
    %6807 = vmatprep.subr.mxu0 0.0
    %6808 = vmatpush2.msra.mxu0 0.0
    %6809 = vmatprep.subr.mxu0 0.0
    %6810 = vmatpush2.msra.mxu0 0.0
    %6811 = vmatprep.subr.mxu0 0.0
    %6812 = vmatpush2.msra.mxu0 0.0
    %6813 = vmatprep.subr.mxu0 0.0
    %6814 = vmatpush2.msra.mxu0 0.0
    %6815 = vmatprep.subr.mxu0 0.0
    %6816 = vmatpush2.msra.mxu0 0.0
    %6817 = vmatprep.subr.mxu0 0.0
    %6818 = vmatpush2.msra.mxu0 0.0
    %6819 = vmatprep.subr.mxu0 0.0
    %6820 = vmatpush2.msra.mxu0 0.0
    %6821 = vmatprep.subr.mxu0 0.0
    %6822 = vmatpush2.msra.mxu0 0.0
    %6823 = vmatprep.subr.mxu0 0.0
    %6824 = vmatpush2.msra.mxu0 0.0
    %6825 = vmatprep.subr.mxu0 0.0
    %6826 = vmatpush2.msra.mxu0 0.0
    %6827 = vmatprep.subr.mxu0 0.0
    %6828 = vmatpush2.msra.mxu0 0.0
    %6829 = vmatprep.subr.mxu0 0.0
    %6830 = vmatpush2.msra.mxu0 0.0
    %6831 = vmatprep.subr.mxu0 0.0
    %6832 = vmatpush2.msra.mxu0 0.0
    %6833 = vmatprep.subr.mxu0 0.0
    %6834 = vmatpush2.msra.mxu0 0.0
    %6835 = vmatprep.subr.mxu0 0.0
    %6836 = vmatpush2.msra.mxu0 0.0
    %6837 = vmatprep.mubr.f32.mxu0 0.0
    %v6838 = vand.u32 %v6684, 4294901760
    %6839 = vmatmul.mubr.f32.gmra.mxu0 %v6838
    %v6840 = vpop.f32.mrf.mxu0
    %v6841 = vadd.f32 %v6760, %v6840
    %v6842 = vpop.f32.mrf.mxu0
    %6843 = vdwg.mxu0
    %6844 = vmatprep.subr.mxu0 0.0
    %6845 = vmatpush1.msra.mxu0 0.0
    %6846 = vmatprep.subr.mxu0 0.0
    %6847 = vmatpush1.msra.mxu0 0.0
    %6848 = vmatprep.subr.mxu0 0.0
    %6849 = vmatpush1.msra.mxu0 0.0
    %6850 = vmatprep.subr.mxu0 0.0
    %6851 = vmatpush1.msra.mxu0 0.0
    %6852 = vmatprep.subr.mxu0 0.0
    %6853 = vmatpush1.msra.mxu0 0.0
    %6854 = vmatprep.subr.mxu0 0.0
    %6855 = vmatpush1.msra.mxu0 0.0
    %6856 = vmatprep.subr.mxu0 0.0
    %6857 = vmatpush1.msra.mxu0 0.0
    %6858 = vmatprep.subr.mxu0 0.0
    %6859 = vmatpush1.msra.mxu0 0.0
    %6860 = vmatprep.subr.mxu0 0.0
    %6861 = vmatpush1.msra.mxu0 0.0
    %6862 = vmatprep.subr.mxu0 0.0
    %6863 = vmatpush1.msra.mxu0 0.0
    %6864 = vmatprep.subr.mxu0 0.0
    %6865 = vmatpush1.msra.mxu0 0.0
    %6866 = vmatprep.subr.mxu0 0.0
    %6867 = vmatpush1.msra.mxu0 0.0
    %6868 = vmatprep.subr.mxu0 0.0
    %6869 = vmatpush1.msra.mxu0 0.0
    %6870 = vmatprep.subr.mxu0 0.0
    %6871 = vmatpush1.msra.mxu0 0.0
    %6872 = vmatprep.subr.mxu0 0.0
    %v6873 = vand.u32 %v44, 4294901760
    %v6874 = vsub.f32 %v44, %v6873
    %6875 = vmatpush1.msra.mxu0 %v6874
    %6876 = vmatprep.subr.mxu0 0.0
    %v6877 = vand.u32 %v43, 4294901760
    %v6878 = vsub.f32 %v43, %v6877
    %6879 = vmatpush1.msra.mxu0 %v6878
    %6880 = vmatprep.subr.mxu0 0.0
    %6881 = vmatpush2.msra.mxu0 0.0
    %6882 = vmatprep.subr.mxu0 0.0
    %6883 = vmatpush2.msra.mxu0 0.0
    %6884 = vmatprep.subr.mxu0 0.0
    %6885 = vmatpush2.msra.mxu0 0.0
    %6886 = vmatprep.subr.mxu0 0.0
    %6887 = vmatpush2.msra.mxu0 0.0
    %6888 = vmatprep.subr.mxu0 0.0
    %6889 = vmatpush2.msra.mxu0 0.0
    %6890 = vmatprep.subr.mxu0 0.0
    %6891 = vmatpush2.msra.mxu0 0.0
    %6892 = vmatprep.subr.mxu0 0.0
    %6893 = vmatpush2.msra.mxu0 0.0
    %6894 = vmatprep.subr.mxu0 0.0
    %6895 = vmatpush2.msra.mxu0 0.0
    %6896 = vmatprep.subr.mxu0 0.0
    %6897 = vmatpush2.msra.mxu0 0.0
    %6898 = vmatprep.subr.mxu0 0.0
    %6899 = vmatpush2.msra.mxu0 0.0
    %6900 = vmatprep.subr.mxu0 0.0
    %6901 = vmatpush2.msra.mxu0 0.0
    %6902 = vmatprep.subr.mxu0 0.0
    %6903 = vmatpush2.msra.mxu0 0.0
    %6904 = vmatprep.subr.mxu0 0.0
    %6905 = vmatpush2.msra.mxu0 0.0
    %6906 = vmatprep.subr.mxu0 0.0
    %6907 = vmatpush2.msra.mxu0 0.0
    %6908 = vmatprep.subr.mxu0 0.0
    %6909 = vmatpush2.msra.mxu0 0.0
    %6910 = vmatprep.subr.mxu0 0.0
    %6911 = vmatpush2.msra.mxu0 0.0
    %6912 = vmatprep.mubr.f32.mxu0 0.0
    %v6913 = vand.u32 %v6684, 4294901760
    %v6914 = vsub.f32 %v6684, %v6913
    %6915 = vmatmul.mubr.f32.gmra.mxu0 %v6914
    %v6916 = vpop.f32.mrf.mxu0
    %v6917 = vadd.f32 %v6841, %v6916
    %v6918 = vpop.f32.mrf.mxu0
    %6919 = vdwg.mxu0
    %6920 = vmatprep.subr.mxu0 0.0
    %6921 = vmatpush1.msra.mxu0 0.0
    %6922 = vmatprep.subr.mxu0 0.0
    %6923 = vmatpush1.msra.mxu0 0.0
    %6924 = vmatprep.subr.mxu0 0.0
    %6925 = vmatpush1.msra.mxu0 0.0
    %6926 = vmatprep.subr.mxu0 0.0
    %6927 = vmatpush1.msra.mxu0 0.0
    %6928 = vmatprep.subr.mxu0 0.0
    %6929 = vmatpush1.msra.mxu0 0.0
    %6930 = vmatprep.subr.mxu0 0.0
    %6931 = vmatpush1.msra.mxu0 0.0
    %6932 = vmatprep.subr.mxu0 0.0
    %6933 = vmatpush1.msra.mxu0 0.0
    %6934 = vmatprep.subr.mxu0 0.0
    %6935 = vmatpush1.msra.mxu0 0.0
    %6936 = vmatprep.subr.mxu0 0.0
    %6937 = vmatpush1.msra.mxu0 0.0
    %6938 = vmatprep.subr.mxu0 0.0
    %6939 = vmatpush1.msra.mxu0 0.0
    %6940 = vmatprep.subr.mxu0 0.0
    %6941 = vmatpush1.msra.mxu0 0.0
    %6942 = vmatprep.subr.mxu0 0.0
    %6943 = vmatpush1.msra.mxu0 0.0
    %6944 = vmatprep.subr.mxu0 0.0
    %6945 = vmatpush1.msra.mxu0 0.0
    %6946 = vmatprep.subr.mxu0 0.0
    %6947 = vmatpush1.msra.mxu0 0.0
    %6948 = vmatprep.subr.mxu0 0.0
    %v6949 = vand.u32 %v44, 4294901760
    %6950 = vmatpush1.msra.mxu0 %v6949
    %6951 = vmatprep.subr.mxu0 0.0
    %v6952 = vand.u32 %v43, 4294901760
    %6953 = vmatpush1.msra.mxu0 %v6952
    %6954 = vmatprep.subr.mxu0 0.0
    %6955 = vmatpush2.msra.mxu0 0.0
    %6956 = vmatprep.subr.mxu0 0.0
    %6957 = vmatpush2.msra.mxu0 0.0
    %6958 = vmatprep.subr.mxu0 0.0
    %6959 = vmatpush2.msra.mxu0 0.0
    %6960 = vmatprep.subr.mxu0 0.0
    %6961 = vmatpush2.msra.mxu0 0.0
    %6962 = vmatprep.subr.mxu0 0.0
    %6963 = vmatpush2.msra.mxu0 0.0
    %6964 = vmatprep.subr.mxu0 0.0
    %6965 = vmatpush2.msra.mxu0 0.0
    %6966 = vmatprep.subr.mxu0 0.0
    %6967 = vmatpush2.msra.mxu0 0.0
    %6968 = vmatprep.subr.mxu0 0.0
    %6969 = vmatpush2.msra.mxu0 0.0
    %6970 = vmatprep.subr.mxu0 0.0
    %6971 = vmatpush2.msra.mxu0 0.0
    %6972 = vmatprep.subr.mxu0 0.0
    %6973 = vmatpush2.msra.mxu0 0.0
    %6974 = vmatprep.subr.mxu0 0.0
    %6975 = vmatpush2.msra.mxu0 0.0
    %6976 = vmatprep.subr.mxu0 0.0
    %6977 = vmatpush2.msra.mxu0 0.0
    %6978 = vmatprep.subr.mxu0 0.0
    %6979 = vmatpush2.msra.mxu0 0.0
    %6980 = vmatprep.subr.mxu0 0.0
    %6981 = vmatpush2.msra.mxu0 0.0
    %6982 = vmatprep.subr.mxu0 0.0
    %6983 = vmatpush2.msra.mxu0 0.0
    %6984 = vmatprep.subr.mxu0 0.0
    %6985 = vmatpush2.msra.mxu0 0.0
    %6986 = vmatprep.mubr.f32.mxu0 0.0
    %v6987 = vand.u32 %v6684, 4294901760
    %v6988 = vsub.f32 %v6684, %v6987
    %v6989 = vand.u32 %v6988, 4294901760
    %6990 = vmatmul.mubr.f32.gmra.mxu0 %v6989
    %v6991 = vpop.f32.mrf.mxu0
    %v6992 = vadd.f32 %v6917, %v6991
    %v6993 = vpop.f32.mrf.mxu0
    %6994 = vdwg.mxu0
    %6995 = vmatprep.subr.mxu0 0.0
    %6996 = vmatpush1.msra.mxu0 0.0
    %6997 = vmatprep.subr.mxu0 0.0
    %6998 = vmatpush1.msra.mxu0 0.0
    %6999 = vmatprep.subr.mxu0 0.0
    %7000 = vmatpush1.msra.mxu0 0.0
    %7001 = vmatprep.subr.mxu0 0.0
    %7002 = vmatpush1.msra.mxu0 0.0
    %7003 = vmatprep.subr.mxu0 0.0
    %7004 = vmatpush1.msra.mxu0 0.0
    %7005 = vmatprep.subr.mxu0 0.0
    %7006 = vmatpush1.msra.mxu0 0.0
    %7007 = vmatprep.subr.mxu0 0.0
    %7008 = vmatpush1.msra.mxu0 0.0
    %7009 = vmatprep.subr.mxu0 0.0
    %7010 = vmatpush1.msra.mxu0 0.0
    %7011 = vmatprep.subr.mxu0 0.0
    %7012 = vmatpush1.msra.mxu0 0.0
    %7013 = vmatprep.subr.mxu0 0.0
    %7014 = vmatpush1.msra.mxu0 0.0
    %7015 = vmatprep.subr.mxu0 0.0
    %7016 = vmatpush1.msra.mxu0 0.0
    %7017 = vmatprep.subr.mxu0 0.0
    %7018 = vmatpush1.msra.mxu0 0.0
    %7019 = vmatprep.subr.mxu0 0.0
    %7020 = vmatpush1.msra.mxu0 0.0
    %7021 = vmatprep.subr.mxu0 0.0
    %7022 = vmatpush1.msra.mxu0 0.0
    %7023 = vmatprep.subr.mxu0 0.0
    %v7024 = vand.u32 %v44, 4294901760
    %v7025 = vsub.f32 %v44, %v7024
    %v7026 = vand.u32 %v7025, 4294901760
    %7027 = vmatpush1.msra.mxu0 %v7026
    %7028 = vmatprep.subr.mxu0 0.0
    %v7029 = vand.u32 %v43, 4294901760
    %v7030 = vsub.f32 %v43, %v7029
    %v7031 = vand.u32 %v7030, 4294901760
    %7032 = vmatpush1.msra.mxu0 %v7031
    %7033 = vmatprep.subr.mxu0 0.0
    %7034 = vmatpush2.msra.mxu0 0.0
    %7035 = vmatprep.subr.mxu0 0.0
    %7036 = vmatpush2.msra.mxu0 0.0
    %7037 = vmatprep.subr.mxu0 0.0
    %7038 = vmatpush2.msra.mxu0 0.0
    %7039 = vmatprep.subr.mxu0 0.0
    %7040 = vmatpush2.msra.mxu0 0.0
    %7041 = vmatprep.subr.mxu0 0.0
    %7042 = vmatpush2.msra.mxu0 0.0
    %7043 = vmatprep.subr.mxu0 0.0
    %7044 = vmatpush2.msra.mxu0 0.0
    %7045 = vmatprep.subr.mxu0 0.0
    %7046 = vmatpush2.msra.mxu0 0.0
    %7047 = vmatprep.subr.mxu0 0.0
    %7048 = vmatpush2.msra.mxu0 0.0
    %7049 = vmatprep.subr.mxu0 0.0
    %7050 = vmatpush2.msra.mxu0 0.0
    %7051 = vmatprep.subr.mxu0 0.0
    %7052 = vmatpush2.msra.mxu0 0.0
    %7053 = vmatprep.subr.mxu0 0.0
    %7054 = vmatpush2.msra.mxu0 0.0
    %7055 = vmatprep.subr.mxu0 0.0
    %7056 = vmatpush2.msra.mxu0 0.0
    %7057 = vmatprep.subr.mxu0 0.0
    %7058 = vmatpush2.msra.mxu0 0.0
    %7059 = vmatprep.subr.mxu0 0.0
    %7060 = vmatpush2.msra.mxu0 0.0
    %7061 = vmatprep.subr.mxu0 0.0
    %7062 = vmatpush2.msra.mxu0 0.0
    %7063 = vmatprep.subr.mxu0 0.0
    %7064 = vmatpush2.msra.mxu0 0.0
    %7065 = vmatprep.mubr.f32.mxu0 0.0
    %v7066 = vand.u32 %v6684, 4294901760
    %7067 = vmatmul.mubr.f32.gmra.mxu0 %v7066
    %v7068 = vpop.f32.mrf.mxu0
    %v7069 = vadd.f32 %v6992, %v7068
    %v7070 = vpop.f32.mrf.mxu0
    %7071 = vdwg.mxu0
    %7072 = vmatprep.subr.mxu0 0.0
    %7073 = vmatpush1.msra.mxu0 0.0
    %7074 = vmatprep.subr.mxu0 0.0
    %7075 = vmatpush1.msra.mxu0 0.0
    %7076 = vmatprep.subr.mxu0 0.0
    %7077 = vmatpush1.msra.mxu0 0.0
    %7078 = vmatprep.subr.mxu0 0.0
    %7079 = vmatpush1.msra.mxu0 0.0
    %7080 = vmatprep.subr.mxu0 0.0
    %7081 = vmatpush1.msra.mxu0 0.0
    %7082 = vmatprep.subr.mxu0 0.0
    %7083 = vmatpush1.msra.mxu0 0.0
    %7084 = vmatprep.subr.mxu0 0.0
    %7085 = vmatpush1.msra.mxu0 0.0
    %7086 = vmatprep.subr.mxu0 0.0
    %7087 = vmatpush1.msra.mxu0 0.0
    %7088 = vmatprep.subr.mxu0 0.0
    %7089 = vmatpush1.msra.mxu0 0.0
    %7090 = vmatprep.subr.mxu0 0.0
    %7091 = vmatpush1.msra.mxu0 0.0
    %7092 = vmatprep.subr.mxu0 0.0
    %7093 = vmatpush1.msra.mxu0 0.0
    %7094 = vmatprep.subr.mxu0 0.0
    %7095 = vmatpush1.msra.mxu0 0.0
    %7096 = vmatprep.subr.mxu0 0.0
    %7097 = vmatpush1.msra.mxu0 0.0
    %7098 = vmatprep.subr.mxu0 0.0
    %7099 = vmatpush1.msra.mxu0 0.0
    %7100 = vmatprep.subr.mxu0 0.0
    %v7101 = vand.u32 %v44, 4294901760
    %7102 = vmatpush1.msra.mxu0 %v7101
    %7103 = vmatprep.subr.mxu0 0.0
    %v7104 = vand.u32 %v43, 4294901760
    %7105 = vmatpush1.msra.mxu0 %v7104
    %7106 = vmatprep.subr.mxu0 0.0
    %7107 = vmatpush2.msra.mxu0 0.0
    %7108 = vmatprep.subr.mxu0 0.0
    %7109 = vmatpush2.msra.mxu0 0.0
    %7110 = vmatprep.subr.mxu0 0.0
    %7111 = vmatpush2.msra.mxu0 0.0
    %7112 = vmatprep.subr.mxu0 0.0
    %7113 = vmatpush2.msra.mxu0 0.0
    %7114 = vmatprep.subr.mxu0 0.0
    %7115 = vmatpush2.msra.mxu0 0.0
    %7116 = vmatprep.subr.mxu0 0.0
    %7117 = vmatpush2.msra.mxu0 0.0
    %7118 = vmatprep.subr.mxu0 0.0
    %7119 = vmatpush2.msra.mxu0 0.0
    %7120 = vmatprep.subr.mxu0 0.0
    %7121 = vmatpush2.msra.mxu0 0.0
    %7122 = vmatprep.subr.mxu0 0.0
    %7123 = vmatpush2.msra.mxu0 0.0
    %7124 = vmatprep.subr.mxu0 0.0
    %7125 = vmatpush2.msra.mxu0 0.0
    %7126 = vmatprep.subr.mxu0 0.0
    %7127 = vmatpush2.msra.mxu0 0.0
    %7128 = vmatprep.subr.mxu0 0.0
    %7129 = vmatpush2.msra.mxu0 0.0
    %7130 = vmatprep.subr.mxu0 0.0
    %7131 = vmatpush2.msra.mxu0 0.0
    %7132 = vmatprep.subr.mxu0 0.0
    %7133 = vmatpush2.msra.mxu0 0.0
    %7134 = vmatprep.subr.mxu0 0.0
    %7135 = vmatpush2.msra.mxu0 0.0
    %7136 = vmatprep.subr.mxu0 0.0
    %7137 = vmatpush2.msra.mxu0 0.0
    %7138 = vmatprep.mubr.f32.mxu0 0.0
    %v7139 = vand.u32 %v6684, 4294901760
    %7140 = vmatmul.mubr.f32.gmra.mxu0 %v7139
    %v7141 = vpop.f32.mrf.mxu0
    %v7142 = vadd.f32 %v7069, %v7141
    %v7143 = vpop.f32.mrf.mxu0
    %7144 = vdwg.mxu0
    %v7145 = vmul.f32 %v6486, %v6486
    %v7146 = vmul.f32 %v6489, %v6489
    %v7147 = vmul.f32 %v6494, %v6494
    %v7148 = vmul.f32 %v6497, %v6497
    %v7149 = vmul.f32 %v6502, %v6502
    %v7150 = vmul.f32 %v6505, %v6505
    %v7151 = vmul.f32 %v6510, %v6510
    %v7152 = vmul.f32 %v6513, %v6513
    %v7153 = vmul.f32 %v6518, %v6518
    %v7154 = vmul.f32 %v6521, %v6521
    %v7155 = vmul.f32 %v6526, %v6526
    %v7156 = vmul.f32 %v6529, %v6529
    %v7157 = vmul.f32 %v6534, %v6534
    %v7158 = vmul.f32 %v6537, %v6537
    %v7159 = vmul.f32 %v6542, %v6542
    %v7160 = vmul.f32 %v6545, %v6545
    %v7161 = vmul.f32 %v6550, %v6550
    %v7162 = vmul.f32 %v6553, %v6553
    %v7163 = vmul.f32 %v6558, %v6558
    %v7164 = vmul.f32 %v6561, %v6561
    %v7165 = vmul.f32 %v6566, %v6566
    %v7166 = vmul.f32 %v6569, %v6569
    %v7167 = vmul.f32 %v6574, %v6574
    %v7168 = vmul.f32 %v6577, %v6577
    %v7169 = vmul.f32 %v6582, %v6582
    %v7170 = vmul.f32 %v6585, %v6585
    %v7171 = vmul.f32 %v6590, %v6590
    %v7172 = vmul.f32 %v6593, %v6593
    %v7173 = vmul.f32 %v6598, %v6598
    %v7174 = vmul.f32 %v6601, %v6601
    %v7175 = vmul.f32 %v6606, %v6606
    %v7176 = vmul.f32 %v6609, %v6609
    %v7177 = vsel %vm1494, %v7145, 0.0
    %v7178 = vsel %vm1494, %v7146, 0.0
    %v7179 = vadd.f32 %v7177, %v7178
    %v7180 = vsel %vm1494, %v7147, 0.0
    %v7181 = vadd.f32 %v7179, %v7180
    %v7182 = vsel %vm1494, %v7148, 0.0
    %v7183 = vadd.f32 %v7181, %v7182
    %v7184 = vsel %vm1494, %v7149, 0.0
    %v7185 = vadd.f32 %v7183, %v7184
    %v7186 = vsel %vm1494, %v7150, 0.0
    %v7187 = vadd.f32 %v7185, %v7186
    %v7188 = vsel %vm1494, %v7151, 0.0
    %v7189 = vadd.f32 %v7187, %v7188
    %v7190 = vsel %vm1494, %v7152, 0.0
    %v7191 = vadd.f32 %v7189, %v7190
    %v7192 = vsel %vm1494, %v7153, 0.0
    %v7193 = vadd.f32 %v7191, %v7192
    %v7194 = vsel %vm1494, %v7154, 0.0
    %v7195 = vadd.f32 %v7193, %v7194
    %v7196 = vsel %vm1494, %v7155, 0.0
    %v7197 = vadd.f32 %v7195, %v7196
    %v7198 = vsel %vm1494, %v7156, 0.0
    %v7199 = vadd.f32 %v7197, %v7198
    %v7200 = vsel %vm1494, %v7157, 0.0
    %v7201 = vadd.f32 %v7199, %v7200
    %v7202 = vsel %vm1494, %v7158, 0.0
    %v7203 = vadd.f32 %v7201, %v7202
    %v7204 = vsel %vm1494, %v7159, 0.0
    %v7205 = vadd.f32 %v7203, %v7204
    %v7206 = vsel %vm1494, %v7160, 0.0
    %v7207 = vadd.f32 %v7205, %v7206
    %v7208 = vsel %vm1494, %v7161, 0.0
    %v7209 = vadd.f32 %v7207, %v7208
    %v7210 = vsel %vm1494, %v7162, 0.0
    %v7211 = vadd.f32 %v7209, %v7210
    %v7212 = vsel %vm1494, %v7163, 0.0
    %v7213 = vadd.f32 %v7211, %v7212
    %v7214 = vsel %vm1494, %v7164, 0.0
    %v7215 = vadd.f32 %v7213, %v7214
    %v7216 = vsel %vm1494, %v7165, 0.0
    %v7217 = vadd.f32 %v7215, %v7216
    %v7218 = vsel %vm1494, %v7166, 0.0
    %v7219 = vadd.f32 %v7217, %v7218
    %v7220 = vsel %vm1494, %v7167, 0.0
    %v7221 = vadd.f32 %v7219, %v7220
    %v7222 = vsel %vm1494, %v7168, 0.0
    %v7223 = vadd.f32 %v7221, %v7222
    %v7224 = vsel %vm1494, %v7169, 0.0
    %v7225 = vadd.f32 %v7223, %v7224
    %v7226 = vsel %vm1494, %v7170, 0.0
    %v7227 = vadd.f32 %v7225, %v7226
    %v7228 = vsel %vm1494, %v7171, 0.0
    %v7229 = vadd.f32 %v7227, %v7228
    %v7230 = vsel %vm1494, %v7172, 0.0
    %v7231 = vadd.f32 %v7229, %v7230
    %v7232 = vsel %vm1494, %v7173, 0.0
    %v7233 = vadd.f32 %v7231, %v7232
    %v7234 = vsel %vm1494, %v7174, 0.0
    %v7235 = vadd.f32 %v7233, %v7234
    %v7236 = vsel %vm1494, %v7175, 0.0
    %v7237 = vadd.f32 %v7235, %v7236
    %v7238 = vsel %vm1494, %v7176, 0.0
    %v7239 = vadd.f32 %v7237, %v7238
    %v7240 = vrot.slane %v7239, 4
    %v7241 = vadd.f32 %v7239, %v7240
    %v7242 = vrot.slane %v7241, 2
    %v7243 = vadd.f32 %v7241, %v7242
    %v7244 = vrot.slane %v7243, 1
    %v7245 = vadd.f32 %v7243, %v7244
    %v7247 = vsel %vm1494, %v7245, 0
    %7249 = vmatprep.subr.mxu0 0.0
    %7250 = vmatpush1.msra.mxu0 0.0
    %7251 = vmatprep.subr.mxu0 0.0
    %7252 = vmatpush1.msra.mxu0 0.0
    %7253 = vmatprep.subr.mxu0 0.0
    %7254 = vmatpush1.msra.mxu0 0.0
    %7255 = vmatprep.subr.mxu0 0.0
    %7256 = vmatpush1.msra.mxu0 0.0
    %7257 = vmatprep.subr.mxu0 0.0
    %7258 = vmatpush1.msra.mxu0 0.0
    %7259 = vmatprep.subr.mxu0 0.0
    %7260 = vmatpush1.msra.mxu0 0.0
    %7261 = vmatprep.subr.mxu0 0.0
    %7262 = vmatpush1.msra.mxu0 0.0
    %7263 = vmatprep.subr.mxu0 0.0
    %7264 = vmatpush1.msra.mxu0 0.0
    %7265 = vmatprep.subr.mxu0 0.0
    %7266 = vmatpush1.msra.mxu0 0.0
    %7267 = vmatprep.subr.mxu0 0.0
    %7268 = vmatpush1.msra.mxu0 0.0
    %7269 = vmatprep.subr.mxu0 0.0
    %7270 = vmatpush1.msra.mxu0 0.0
    %7271 = vmatprep.subr.mxu0 0.0
    %7272 = vmatpush1.msra.mxu0 0.0
    %7273 = vmatprep.subr.mxu0 0.0
    %7274 = vmatpush1.msra.mxu0 0.0
    %7275 = vmatprep.subr.mxu0 0.0
    %7276 = vmatpush1.msra.mxu0 0.0
    %7277 = vmatprep.subr.mxu0 0.0
    %v7278 = vand.u32 %v44, 4294901760
    %7279 = vmatpush1.msra.mxu0 %v7278
    %7280 = vmatprep.subr.mxu0 0.0
    %v7281 = vand.u32 %v43, 4294901760
    %7282 = vmatpush1.msra.mxu0 %v7281
    %7283 = vmatprep.subr.mxu0 0.0
    %7284 = vmatpush2.msra.mxu0 0.0
    %7285 = vmatprep.subr.mxu0 0.0
    %7286 = vmatpush2.msra.mxu0 0.0
    %7287 = vmatprep.subr.mxu0 0.0
    %7288 = vmatpush2.msra.mxu0 0.0
    %7289 = vmatprep.subr.mxu0 0.0
    %7290 = vmatpush2.msra.mxu0 0.0
    %7291 = vmatprep.subr.mxu0 0.0
    %7292 = vmatpush2.msra.mxu0 0.0
    %7293 = vmatprep.subr.mxu0 0.0
    %7294 = vmatpush2.msra.mxu0 0.0
    %7295 = vmatprep.subr.mxu0 0.0
    %7296 = vmatpush2.msra.mxu0 0.0
    %7297 = vmatprep.subr.mxu0 0.0
    %7298 = vmatpush2.msra.mxu0 0.0
    %7299 = vmatprep.subr.mxu0 0.0
    %7300 = vmatpush2.msra.mxu0 0.0
    %7301 = vmatprep.subr.mxu0 0.0
    %7302 = vmatpush2.msra.mxu0 0.0
    %7303 = vmatprep.subr.mxu0 0.0
    %7304 = vmatpush2.msra.mxu0 0.0
    %7305 = vmatprep.subr.mxu0 0.0
    %7306 = vmatpush2.msra.mxu0 0.0
    %7307 = vmatprep.subr.mxu0 0.0
    %7308 = vmatpush2.msra.mxu0 0.0
    %7309 = vmatprep.subr.mxu0 0.0
    %7310 = vmatpush2.msra.mxu0 0.0
    %7311 = vmatprep.subr.mxu0 0.0
    %7312 = vmatpush2.msra.mxu0 0.0
    %7313 = vmatprep.subr.mxu0 0.0
    %7314 = vmatpush2.msra.mxu0 0.0
    %7315 = vmatprep.mubr.f32.mxu0 0.0
    %v7316 = vand.u32 %v7247, 4294901760
    %v7317 = vsub.f32 %v7247, %v7316
    %v7318 = vand.u32 %v7317, 4294901760
    %v7319 = vsub.f32 %v7317, %v7318
    %v7320 = vand.u32 %v7319, 4294901760
    %7321 = vmatmul.mubr.f32.gmra.mxu0 %v7320
    %v7322 = vpop.f32.mrf.mxu0
    %v7323 = vadd.f32 0.0, %v7322
    %v7324 = vpop.f32.mrf.mxu0
    %7325 = vdwg.mxu0
    %7326 = vmatprep.subr.mxu0 0.0
    %7327 = vmatpush1.msra.mxu0 0.0
    %7328 = vmatprep.subr.mxu0 0.0
    %7329 = vmatpush1.msra.mxu0 0.0
    %7330 = vmatprep.subr.mxu0 0.0
    %7331 = vmatpush1.msra.mxu0 0.0
    %7332 = vmatprep.subr.mxu0 0.0
    %7333 = vmatpush1.msra.mxu0 0.0
    %7334 = vmatprep.subr.mxu0 0.0
    %7335 = vmatpush1.msra.mxu0 0.0
    %7336 = vmatprep.subr.mxu0 0.0
    %7337 = vmatpush1.msra.mxu0 0.0
    %7338 = vmatprep.subr.mxu0 0.0
    %7339 = vmatpush1.msra.mxu0 0.0
    %7340 = vmatprep.subr.mxu0 0.0
    %7341 = vmatpush1.msra.mxu0 0.0
    %7342 = vmatprep.subr.mxu0 0.0
    %7343 = vmatpush1.msra.mxu0 0.0
    %7344 = vmatprep.subr.mxu0 0.0
    %7345 = vmatpush1.msra.mxu0 0.0
    %7346 = vmatprep.subr.mxu0 0.0
    %7347 = vmatpush1.msra.mxu0 0.0
    %7348 = vmatprep.subr.mxu0 0.0
    %7349 = vmatpush1.msra.mxu0 0.0
    %7350 = vmatprep.subr.mxu0 0.0
    %7351 = vmatpush1.msra.mxu0 0.0
    %7352 = vmatprep.subr.mxu0 0.0
    %7353 = vmatpush1.msra.mxu0 0.0
    %7354 = vmatprep.subr.mxu0 0.0
    %v7355 = vand.u32 %v44, 4294901760
    %v7356 = vsub.f32 %v44, %v7355
    %v7357 = vand.u32 %v7356, 4294901760
    %v7358 = vsub.f32 %v7356, %v7357
    %v7359 = vand.u32 %v7358, 4294901760
    %7360 = vmatpush1.msra.mxu0 %v7359
    %7361 = vmatprep.subr.mxu0 0.0
    %v7362 = vand.u32 %v43, 4294901760
    %v7363 = vsub.f32 %v43, %v7362
    %v7364 = vand.u32 %v7363, 4294901760
    %v7365 = vsub.f32 %v7363, %v7364
    %v7366 = vand.u32 %v7365, 4294901760
    %7367 = vmatpush1.msra.mxu0 %v7366
    %7368 = vmatprep.subr.mxu0 0.0
    %7369 = vmatpush2.msra.mxu0 0.0
    %7370 = vmatprep.subr.mxu0 0.0
    %7371 = vmatpush2.msra.mxu0 0.0
    %7372 = vmatprep.subr.mxu0 0.0
    %7373 = vmatpush2.msra.mxu0 0.0
    %7374 = vmatprep.subr.mxu0 0.0
    %7375 = vmatpush2.msra.mxu0 0.0
    %7376 = vmatprep.subr.mxu0 0.0
    %7377 = vmatpush2.msra.mxu0 0.0
    %7378 = vmatprep.subr.mxu0 0.0
    %7379 = vmatpush2.msra.mxu0 0.0
    %7380 = vmatprep.subr.mxu0 0.0
    %7381 = vmatpush2.msra.mxu0 0.0
    %7382 = vmatprep.subr.mxu0 0.0
    %7383 = vmatpush2.msra.mxu0 0.0
    %7384 = vmatprep.subr.mxu0 0.0
    %7385 = vmatpush2.msra.mxu0 0.0
    %7386 = vmatprep.subr.mxu0 0.0
    %7387 = vmatpush2.msra.mxu0 0.0
    %7388 = vmatprep.subr.mxu0 0.0
    %7389 = vmatpush2.msra.mxu0 0.0
    %7390 = vmatprep.subr.mxu0 0.0
    %7391 = vmatpush2.msra.mxu0 0.0
    %7392 = vmatprep.subr.mxu0 0.0
    %7393 = vmatpush2.msra.mxu0 0.0
    %7394 = vmatprep.subr.mxu0 0.0
    %7395 = vmatpush2.msra.mxu0 0.0
    %7396 = vmatprep.subr.mxu0 0.0
    %7397 = vmatpush2.msra.mxu0 0.0
    %7398 = vmatprep.subr.mxu0 0.0
    %7399 = vmatpush2.msra.mxu0 0.0
    %7400 = vmatprep.mubr.f32.mxu0 0.0
    %v7401 = vand.u32 %v7247, 4294901760
    %7402 = vmatmul.mubr.f32.gmra.mxu0 %v7401
    %v7403 = vpop.f32.mrf.mxu0
    %v7404 = vadd.f32 %v7323, %v7403
    %v7405 = vpop.f32.mrf.mxu0
    %7406 = vdwg.mxu0
    %7407 = vmatprep.subr.mxu0 0.0
    %7408 = vmatpush1.msra.mxu0 0.0
    %7409 = vmatprep.subr.mxu0 0.0
    %7410 = vmatpush1.msra.mxu0 0.0
    %7411 = vmatprep.subr.mxu0 0.0
    %7412 = vmatpush1.msra.mxu0 0.0
    %7413 = vmatprep.subr.mxu0 0.0
    %7414 = vmatpush1.msra.mxu0 0.0
    %7415 = vmatprep.subr.mxu0 0.0
    %7416 = vmatpush1.msra.mxu0 0.0
    %7417 = vmatprep.subr.mxu0 0.0
    %7418 = vmatpush1.msra.mxu0 0.0
    %7419 = vmatprep.subr.mxu0 0.0
    %7420 = vmatpush1.msra.mxu0 0.0
    %7421 = vmatprep.subr.mxu0 0.0
    %7422 = vmatpush1.msra.mxu0 0.0
    %7423 = vmatprep.subr.mxu0 0.0
    %7424 = vmatpush1.msra.mxu0 0.0
    %7425 = vmatprep.subr.mxu0 0.0
    %7426 = vmatpush1.msra.mxu0 0.0
    %7427 = vmatprep.subr.mxu0 0.0
    %7428 = vmatpush1.msra.mxu0 0.0
    %7429 = vmatprep.subr.mxu0 0.0
    %7430 = vmatpush1.msra.mxu0 0.0
    %7431 = vmatprep.subr.mxu0 0.0
    %7432 = vmatpush1.msra.mxu0 0.0
    %7433 = vmatprep.subr.mxu0 0.0
    %7434 = vmatpush1.msra.mxu0 0.0
    %7435 = vmatprep.subr.mxu0 0.0
    %v7436 = vand.u32 %v44, 4294901760
    %v7437 = vsub.f32 %v44, %v7436
    %7438 = vmatpush1.msra.mxu0 %v7437
    %7439 = vmatprep.subr.mxu0 0.0
    %v7440 = vand.u32 %v43, 4294901760
    %v7441 = vsub.f32 %v43, %v7440
    %7442 = vmatpush1.msra.mxu0 %v7441
    %7443 = vmatprep.subr.mxu0 0.0
    %7444 = vmatpush2.msra.mxu0 0.0
    %7445 = vmatprep.subr.mxu0 0.0
    %7446 = vmatpush2.msra.mxu0 0.0
    %7447 = vmatprep.subr.mxu0 0.0
    %7448 = vmatpush2.msra.mxu0 0.0
    %7449 = vmatprep.subr.mxu0 0.0
    %7450 = vmatpush2.msra.mxu0 0.0
    %7451 = vmatprep.subr.mxu0 0.0
    %7452 = vmatpush2.msra.mxu0 0.0
    %7453 = vmatprep.subr.mxu0 0.0
    %7454 = vmatpush2.msra.mxu0 0.0
    %7455 = vmatprep.subr.mxu0 0.0
    %7456 = vmatpush2.msra.mxu0 0.0
    %7457 = vmatprep.subr.mxu0 0.0
    %7458 = vmatpush2.msra.mxu0 0.0
    %7459 = vmatprep.subr.mxu0 0.0
    %7460 = vmatpush2.msra.mxu0 0.0
    %7461 = vmatprep.subr.mxu0 0.0
    %7462 = vmatpush2.msra.mxu0 0.0
    %7463 = vmatprep.subr.mxu0 0.0
    %7464 = vmatpush2.msra.mxu0 0.0
    %7465 = vmatprep.subr.mxu0 0.0
    %7466 = vmatpush2.msra.mxu0 0.0
    %7467 = vmatprep.subr.mxu0 0.0
    %7468 = vmatpush2.msra.mxu0 0.0
    %7469 = vmatprep.subr.mxu0 0.0
    %7470 = vmatpush2.msra.mxu0 0.0
    %7471 = vmatprep.subr.mxu0 0.0
    %7472 = vmatpush2.msra.mxu0 0.0
    %7473 = vmatprep.subr.mxu0 0.0
    %7474 = vmatpush2.msra.mxu0 0.0
    %7475 = vmatprep.mubr.f32.mxu0 0.0
    %v7476 = vand.u32 %v7247, 4294901760
    %v7477 = vsub.f32 %v7247, %v7476
    %7478 = vmatmul.mubr.f32.gmra.mxu0 %v7477
    %v7479 = vpop.f32.mrf.mxu0
    %v7480 = vadd.f32 %v7404, %v7479
    %v7481 = vpop.f32.mrf.mxu0
    %7482 = vdwg.mxu0
    %7483 = vmatprep.subr.mxu0 0.0
    %7484 = vmatpush1.msra.mxu0 0.0
    %7485 = vmatprep.subr.mxu0 0.0
    %7486 = vmatpush1.msra.mxu0 0.0
    %7487 = vmatprep.subr.mxu0 0.0
    %7488 = vmatpush1.msra.mxu0 0.0
    %7489 = vmatprep.subr.mxu0 0.0
    %7490 = vmatpush1.msra.mxu0 0.0
    %7491 = vmatprep.subr.mxu0 0.0
    %7492 = vmatpush1.msra.mxu0 0.0
    %7493 = vmatprep.subr.mxu0 0.0
    %7494 = vmatpush1.msra.mxu0 0.0
    %7495 = vmatprep.subr.mxu0 0.0
    %7496 = vmatpush1.msra.mxu0 0.0
    %7497 = vmatprep.subr.mxu0 0.0
    %7498 = vmatpush1.msra.mxu0 0.0
    %7499 = vmatprep.subr.mxu0 0.0
    %7500 = vmatpush1.msra.mxu0 0.0
    %7501 = vmatprep.subr.mxu0 0.0
    %7502 = vmatpush1.msra.mxu0 0.0
    %7503 = vmatprep.subr.mxu0 0.0
    %7504 = vmatpush1.msra.mxu0 0.0
    %7505 = vmatprep.subr.mxu0 0.0
    %7506 = vmatpush1.msra.mxu0 0.0
    %7507 = vmatprep.subr.mxu0 0.0
    %7508 = vmatpush1.msra.mxu0 0.0
    %7509 = vmatprep.subr.mxu0 0.0
    %7510 = vmatpush1.msra.mxu0 0.0
    %7511 = vmatprep.subr.mxu0 0.0
    %v7512 = vand.u32 %v44, 4294901760
    %7513 = vmatpush1.msra.mxu0 %v7512
    %7514 = vmatprep.subr.mxu0 0.0
    %v7515 = vand.u32 %v43, 4294901760
    %7516 = vmatpush1.msra.mxu0 %v7515
    %7517 = vmatprep.subr.mxu0 0.0
    %7518 = vmatpush2.msra.mxu0 0.0
    %7519 = vmatprep.subr.mxu0 0.0
    %7520 = vmatpush2.msra.mxu0 0.0
    %7521 = vmatprep.subr.mxu0 0.0
    %7522 = vmatpush2.msra.mxu0 0.0
    %7523 = vmatprep.subr.mxu0 0.0
    %7524 = vmatpush2.msra.mxu0 0.0
    %7525 = vmatprep.subr.mxu0 0.0
    %7526 = vmatpush2.msra.mxu0 0.0
    %7527 = vmatprep.subr.mxu0 0.0
    %7528 = vmatpush2.msra.mxu0 0.0
    %7529 = vmatprep.subr.mxu0 0.0
    %7530 = vmatpush2.msra.mxu0 0.0
    %7531 = vmatprep.subr.mxu0 0.0
    %7532 = vmatpush2.msra.mxu0 0.0
    %7533 = vmatprep.subr.mxu0 0.0
    %7534 = vmatpush2.msra.mxu0 0.0
    %7535 = vmatprep.subr.mxu0 0.0
    %7536 = vmatpush2.msra.mxu0 0.0
    %7537 = vmatprep.subr.mxu0 0.0
    %7538 = vmatpush2.msra.mxu0 0.0
    %7539 = vmatprep.subr.mxu0 0.0
    %7540 = vmatpush2.msra.mxu0 0.0
    %7541 = vmatprep.subr.mxu0 0.0
    %7542 = vmatpush2.msra.mxu0 0.0
    %7543 = vmatprep.subr.mxu0 0.0
    %7544 = vmatpush2.msra.mxu0 0.0
    %7545 = vmatprep.subr.mxu0 0.0
    %7546 = vmatpush2.msra.mxu0 0.0
    %7547 = vmatprep.subr.mxu0 0.0
    %7548 = vmatpush2.msra.mxu0 0.0
    %7549 = vmatprep.mubr.f32.mxu0 0.0
    %v7550 = vand.u32 %v7247, 4294901760
    %v7551 = vsub.f32 %v7247, %v7550
    %v7552 = vand.u32 %v7551, 4294901760
    %7553 = vmatmul.mubr.f32.gmra.mxu0 %v7552
    %v7554 = vpop.f32.mrf.mxu0
    %v7555 = vadd.f32 %v7480, %v7554
    %v7556 = vpop.f32.mrf.mxu0
    %7557 = vdwg.mxu0
    %7558 = vmatprep.subr.mxu0 0.0
    %7559 = vmatpush1.msra.mxu0 0.0
    %7560 = vmatprep.subr.mxu0 0.0
    %7561 = vmatpush1.msra.mxu0 0.0
    %7562 = vmatprep.subr.mxu0 0.0
    %7563 = vmatpush1.msra.mxu0 0.0
    %7564 = vmatprep.subr.mxu0 0.0
    %7565 = vmatpush1.msra.mxu0 0.0
    %7566 = vmatprep.subr.mxu0 0.0
    %7567 = vmatpush1.msra.mxu0 0.0
    %7568 = vmatprep.subr.mxu0 0.0
    %7569 = vmatpush1.msra.mxu0 0.0
    %7570 = vmatprep.subr.mxu0 0.0
    %7571 = vmatpush1.msra.mxu0 0.0
    %7572 = vmatprep.subr.mxu0 0.0
    %7573 = vmatpush1.msra.mxu0 0.0
    %7574 = vmatprep.subr.mxu0 0.0
    %7575 = vmatpush1.msra.mxu0 0.0
    %7576 = vmatprep.subr.mxu0 0.0
    %7577 = vmatpush1.msra.mxu0 0.0
    %7578 = vmatprep.subr.mxu0 0.0
    %7579 = vmatpush1.msra.mxu0 0.0
    %7580 = vmatprep.subr.mxu0 0.0
    %7581 = vmatpush1.msra.mxu0 0.0
    %7582 = vmatprep.subr.mxu0 0.0
    %7583 = vmatpush1.msra.mxu0 0.0
    %7584 = vmatprep.subr.mxu0 0.0
    %7585 = vmatpush1.msra.mxu0 0.0
    %7586 = vmatprep.subr.mxu0 0.0
    %v7587 = vand.u32 %v44, 4294901760
    %v7588 = vsub.f32 %v44, %v7587
    %v7589 = vand.u32 %v7588, 4294901760
    %7590 = vmatpush1.msra.mxu0 %v7589
    %7591 = vmatprep.subr.mxu0 0.0
    %v7592 = vand.u32 %v43, 4294901760
    %v7593 = vsub.f32 %v43, %v7592
    %v7594 = vand.u32 %v7593, 4294901760
    %7595 = vmatpush1.msra.mxu0 %v7594
    %7596 = vmatprep.subr.mxu0 0.0
    %7597 = vmatpush2.msra.mxu0 0.0
    %7598 = vmatprep.subr.mxu0 0.0
    %7599 = vmatpush2.msra.mxu0 0.0
    %7600 = vmatprep.subr.mxu0 0.0
    %7601 = vmatpush2.msra.mxu0 0.0
    %7602 = vmatprep.subr.mxu0 0.0
    %7603 = vmatpush2.msra.mxu0 0.0
    %7604 = vmatprep.subr.mxu0 0.0
    %7605 = vmatpush2.msra.mxu0 0.0
    %7606 = vmatprep.subr.mxu0 0.0
    %7607 = vmatpush2.msra.mxu0 0.0
    %7608 = vmatprep.subr.mxu0 0.0
    %7609 = vmatpush2.msra.mxu0 0.0
    %7610 = vmatprep.subr.mxu0 0.0
    %7611 = vmatpush2.msra.mxu0 0.0
    %7612 = vmatprep.subr.mxu0 0.0
    %7613 = vmatpush2.msra.mxu0 0.0
    %7614 = vmatprep.subr.mxu0 0.0
    %7615 = vmatpush2.msra.mxu0 0.0
    %7616 = vmatprep.subr.mxu0 0.0
    %7617 = vmatpush2.msra.mxu0 0.0
    %7618 = vmatprep.subr.mxu0 0.0
    %7619 = vmatpush2.msra.mxu0 0.0
    %7620 = vmatprep.subr.mxu0 0.0
    %7621 = vmatpush2.msra.mxu0 0.0
    %7622 = vmatprep.subr.mxu0 0.0
    %7623 = vmatpush2.msra.mxu0 0.0
    %7624 = vmatprep.subr.mxu0 0.0
    %7625 = vmatpush2.msra.mxu0 0.0
    %7626 = vmatprep.subr.mxu0 0.0
    %7627 = vmatpush2.msra.mxu0 0.0
    %7628 = vmatprep.mubr.f32.mxu0 0.0
    %v7629 = vand.u32 %v7247, 4294901760
    %7630 = vmatmul.mubr.f32.gmra.mxu0 %v7629
    %v7631 = vpop.f32.mrf.mxu0
    %v7632 = vadd.f32 %v7555, %v7631
    %v7633 = vpop.f32.mrf.mxu0
    %7634 = vdwg.mxu0
    %7635 = vmatprep.subr.mxu0 0.0
    %7636 = vmatpush1.msra.mxu0 0.0
    %7637 = vmatprep.subr.mxu0 0.0
    %7638 = vmatpush1.msra.mxu0 0.0
    %7639 = vmatprep.subr.mxu0 0.0
    %7640 = vmatpush1.msra.mxu0 0.0
    %7641 = vmatprep.subr.mxu0 0.0
    %7642 = vmatpush1.msra.mxu0 0.0
    %7643 = vmatprep.subr.mxu0 0.0
    %7644 = vmatpush1.msra.mxu0 0.0
    %7645 = vmatprep.subr.mxu0 0.0
    %7646 = vmatpush1.msra.mxu0 0.0
    %7647 = vmatprep.subr.mxu0 0.0
    %7648 = vmatpush1.msra.mxu0 0.0
    %7649 = vmatprep.subr.mxu0 0.0
    %7650 = vmatpush1.msra.mxu0 0.0
    %7651 = vmatprep.subr.mxu0 0.0
    %7652 = vmatpush1.msra.mxu0 0.0
    %7653 = vmatprep.subr.mxu0 0.0
    %7654 = vmatpush1.msra.mxu0 0.0
    %7655 = vmatprep.subr.mxu0 0.0
    %7656 = vmatpush1.msra.mxu0 0.0
    %7657 = vmatprep.subr.mxu0 0.0
    %7658 = vmatpush1.msra.mxu0 0.0
    %7659 = vmatprep.subr.mxu0 0.0
    %7660 = vmatpush1.msra.mxu0 0.0
    %7661 = vmatprep.subr.mxu0 0.0
    %7662 = vmatpush1.msra.mxu0 0.0
    %7663 = vmatprep.subr.mxu0 0.0
    %v7664 = vand.u32 %v44, 4294901760
    %7665 = vmatpush1.msra.mxu0 %v7664
    %7666 = vmatprep.subr.mxu0 0.0
    %v7667 = vand.u32 %v43, 4294901760
    %7668 = vmatpush1.msra.mxu0 %v7667
    %7669 = vmatprep.subr.mxu0 0.0
    %7670 = vmatpush2.msra.mxu0 0.0
    %7671 = vmatprep.subr.mxu0 0.0
    %7672 = vmatpush2.msra.mxu0 0.0
    %7673 = vmatprep.subr.mxu0 0.0
    %7674 = vmatpush2.msra.mxu0 0.0
    %7675 = vmatprep.subr.mxu0 0.0
    %7676 = vmatpush2.msra.mxu0 0.0
    %7677 = vmatprep.subr.mxu0 0.0
    %7678 = vmatpush2.msra.mxu0 0.0
    %7679 = vmatprep.subr.mxu0 0.0
    %7680 = vmatpush2.msra.mxu0 0.0
    %7681 = vmatprep.subr.mxu0 0.0
    %7682 = vmatpush2.msra.mxu0 0.0
    %7683 = vmatprep.subr.mxu0 0.0
    %7684 = vmatpush2.msra.mxu0 0.0
    %7685 = vmatprep.subr.mxu0 0.0
    %7686 = vmatpush2.msra.mxu0 0.0
    %7687 = vmatprep.subr.mxu0 0.0
    %7688 = vmatpush2.msra.mxu0 0.0
    %7689 = vmatprep.subr.mxu0 0.0
    %7690 = vmatpush2.msra.mxu0 0.0
    %7691 = vmatprep.subr.mxu0 0.0
    %7692 = vmatpush2.msra.mxu0 0.0
    %7693 = vmatprep.subr.mxu0 0.0
    %7694 = vmatpush2.msra.mxu0 0.0
    %7695 = vmatprep.subr.mxu0 0.0
    %7696 = vmatpush2.msra.mxu0 0.0
    %7697 = vmatprep.subr.mxu0 0.0
    %7698 = vmatpush2.msra.mxu0 0.0
    %7699 = vmatprep.subr.mxu0 0.0
    %7700 = vmatpush2.msra.mxu0 0.0
    %7701 = vmatprep.mubr.f32.mxu0 0.0
    %v7702 = vand.u32 %v7247, 4294901760
    %7703 = vmatmul.mubr.f32.gmra.mxu0 %v7702
    %v7704 = vpop.f32.mrf.mxu0
    %v7705 = vadd.f32 %v7632, %v7704
    %v7706 = vpop.f32.mrf.mxu0
    %7707 = vdwg.mxu0
    %v7708 = vmul.f32 %v7142, 0.001953125
    %v7709 = vmul.f32 %v7705, 0.001953125
    %v7710 = vmul.f32 %v7708, %v7708
    %v7711 = vsub.f32 %v7709, %v7710
    %v7712 = vadd.f32 %v7711, 1e-05
    %v7713 = vrsqrt.pop %v7712
    %v7714 = vmul.f32 %v6612, %v7713
    %v7715 = vmul.f32 %v7708, %v7714
    %v7716 = vsub.f32 %v6613, %v7715
    %v7718 = vlaneseq
    %v7719 = vshrl.u32 %v7718, 7
    %v7720 = vsub.s32 0, %v7719
    %v7721 = vrot.slane %v7714, %v7720
    %v7723 = vmul.f32 %v6486, %v7721
    %v7724 = vmul.f32 %v6489, %v7721
    %v7725 = vmul.f32 %v6494, %v7721
    %v7726 = vmul.f32 %v6497, %v7721
    %v7727 = vmul.f32 %v6502, %v7721
    %v7728 = vmul.f32 %v6505, %v7721
    %v7729 = vmul.f32 %v6510, %v7721
    %v7730 = vmul.f32 %v6513, %v7721
    %v7731 = vmul.f32 %v6518, %v7721
    %v7732 = vmul.f32 %v6521, %v7721
    %v7733 = vmul.f32 %v6526, %v7721
    %v7734 = vmul.f32 %v6529, %v7721
    %v7735 = vmul.f32 %v6534, %v7721
    %v7736 = vmul.f32 %v6537, %v7721
    %v7737 = vmul.f32 %v6542, %v7721
    %v7738 = vmul.f32 %v6545, %v7721
    %v7739 = vmul.f32 %v6550, %v7721
    %v7740 = vmul.f32 %v6553, %v7721
    %v7741 = vmul.f32 %v6558, %v7721
    %v7742 = vmul.f32 %v6561, %v7721
    %v7743 = vmul.f32 %v6566, %v7721
    %v7744 = vmul.f32 %v6569, %v7721
    %v7745 = vmul.f32 %v6574, %v7721
    %v7746 = vmul.f32 %v6577, %v7721
    %v7747 = vmul.f32 %v6582, %v7721
    %v7748 = vmul.f32 %v6585, %v7721
    %v7749 = vmul.f32 %v6590, %v7721
    %v7750 = vmul.f32 %v6593, %v7721
    %v7751 = vmul.f32 %v6598, %v7721
    %v7752 = vmul.f32 %v6601, %v7721
    %v7753 = vmul.f32 %v6606, %v7721
    %v7754 = vmul.f32 %v6609, %v7721
    %v7756 = vlaneseq
    %v7757 = vshrl.u32 %v7756, 7
    %v7758 = vsub.s32 0, %v7757
    %v7759 = vrot.slane %v7716, %v7758
    %v7761 = vadd.f32 %v7723, %v7759
    %v7762 = vadd.f32 %v7724, %v7759
    %v7763 = vadd.f32 %v7725, %v7759
    %v7764 = vadd.f32 %v7726, %v7759
    %v7765 = vadd.f32 %v7727, %v7759
    %v7766 = vadd.f32 %v7728, %v7759
    %v7767 = vadd.f32 %v7729, %v7759
    %v7768 = vadd.f32 %v7730, %v7759
    %v7769 = vadd.f32 %v7731, %v7759
    %v7770 = vadd.f32 %v7732, %v7759
    %v7771 = vadd.f32 %v7733, %v7759
    %v7772 = vadd.f32 %v7734, %v7759
    %v7773 = vadd.f32 %v7735, %v7759
    %v7774 = vadd.f32 %v7736, %v7759
    %v7775 = vadd.f32 %v7737, %v7759
    %v7776 = vadd.f32 %v7738, %v7759
    %v7777 = vadd.f32 %v7739, %v7759
    %v7778 = vadd.f32 %v7740, %v7759
    %v7779 = vadd.f32 %v7741, %v7759
    %v7780 = vadd.f32 %v7742, %v7759
    %v7781 = vadd.f32 %v7743, %v7759
    %v7782 = vadd.f32 %v7744, %v7759
    %v7783 = vadd.f32 %v7745, %v7759
    %v7784 = vadd.f32 %v7746, %v7759
    %v7785 = vadd.f32 %v7747, %v7759
    %v7786 = vadd.f32 %v7748, %v7759
    %v7787 = vadd.f32 %v7749, %v7759
    %v7788 = vadd.f32 %v7750, %v7759
    %v7789 = vadd.f32 %v7751, %v7759
    %v7790 = vadd.f32 %v7752, %v7759
    %v7791 = vadd.f32 %v7753, %v7759
    %v7792 = vadd.f32 %v7754, %v7759
    %vm7793 = vcmp.gt.f32.partialorder %v7761, 0.0
    %vm7794 = vcmp.gt.f32.partialorder %v7762, 0.0
    %vm7795 = vcmp.gt.f32.partialorder %v7763, 0.0
    %vm7796 = vcmp.gt.f32.partialorder %v7764, 0.0
    %vm7797 = vcmp.gt.f32.partialorder %v7765, 0.0
    %vm7798 = vcmp.gt.f32.partialorder %v7766, 0.0
    %vm7799 = vcmp.gt.f32.partialorder %v7767, 0.0
    %vm7800 = vcmp.gt.f32.partialorder %v7768, 0.0
    %vm7801 = vcmp.gt.f32.partialorder %v7769, 0.0
    %vm7802 = vcmp.gt.f32.partialorder %v7770, 0.0
    %vm7803 = vcmp.gt.f32.partialorder %v7771, 0.0
    %vm7804 = vcmp.gt.f32.partialorder %v7772, 0.0
    %vm7805 = vcmp.gt.f32.partialorder %v7773, 0.0
    %vm7806 = vcmp.gt.f32.partialorder %v7774, 0.0
    %vm7807 = vcmp.gt.f32.partialorder %v7775, 0.0
    %vm7808 = vcmp.gt.f32.partialorder %v7776, 0.0
    %vm7809 = vcmp.gt.f32.partialorder %v7777, 0.0
    %vm7810 = vcmp.gt.f32.partialorder %v7778, 0.0
    %vm7811 = vcmp.gt.f32.partialorder %v7779, 0.0
    %vm7812 = vcmp.gt.f32.partialorder %v7780, 0.0
    %vm7813 = vcmp.gt.f32.partialorder %v7781, 0.0
    %vm7814 = vcmp.gt.f32.partialorder %v7782, 0.0
    %vm7815 = vcmp.gt.f32.partialorder %v7783, 0.0
    %vm7816 = vcmp.gt.f32.partialorder %v7784, 0.0
    %vm7817 = vcmp.gt.f32.partialorder %v7785, 0.0
    %vm7818 = vcmp.gt.f32.partialorder %v7786, 0.0
    %vm7819 = vcmp.gt.f32.partialorder %v7787, 0.0
    %vm7820 = vcmp.gt.f32.partialorder %v7788, 0.0
    %vm7821 = vcmp.gt.f32.partialorder %v7789, 0.0
    %vm7822 = vcmp.gt.f32.partialorder %v7790, 0.0
    %vm7823 = vcmp.gt.f32.partialorder %v7791, 0.0
    %vm7824 = vcmp.gt.f32.partialorder %v7792, 0.0
    %v7825 = vmul.f32 %v7761, 0.2
    %v7826 = vmul.f32 %v7762, 0.2
    %v7827 = vmul.f32 %v7763, 0.2
    %v7828 = vmul.f32 %v7764, 0.2
    %v7829 = vmul.f32 %v7765, 0.2
    %v7830 = vmul.f32 %v7766, 0.2
    %v7831 = vmul.f32 %v7767, 0.2
    %v7832 = vmul.f32 %v7768, 0.2
    %v7833 = vmul.f32 %v7769, 0.2
    %v7834 = vmul.f32 %v7770, 0.2
    %v7835 = vmul.f32 %v7771, 0.2
    %v7836 = vmul.f32 %v7772, 0.2
    %v7837 = vmul.f32 %v7773, 0.2
    %v7838 = vmul.f32 %v7774, 0.2
    %v7839 = vmul.f32 %v7775, 0.2
    %v7840 = vmul.f32 %v7776, 0.2
    %v7841 = vmul.f32 %v7777, 0.2
    %v7842 = vmul.f32 %v7778, 0.2
    %v7843 = vmul.f32 %v7779, 0.2
    %v7844 = vmul.f32 %v7780, 0.2
    %v7845 = vmul.f32 %v7781, 0.2
    %v7846 = vmul.f32 %v7782, 0.2
    %v7847 = vmul.f32 %v7783, 0.2
    %v7848 = vmul.f32 %v7784, 0.2
    %v7849 = vmul.f32 %v7785, 0.2
    %v7850 = vmul.f32 %v7786, 0.2
    %v7851 = vmul.f32 %v7787, 0.2
    %v7852 = vmul.f32 %v7788, 0.2
    %v7853 = vmul.f32 %v7789, 0.2
    %v7854 = vmul.f32 %v7790, 0.2
    %v7855 = vmul.f32 %v7791, 0.2
    %v7856 = vmul.f32 %v7792, 0.2
    %v7857 = vsel %vm7793, %v7761, %v7825
    %v7858 = vsel %vm7794, %v7762, %v7826
    %v7859 = vsel %vm7795, %v7763, %v7827
    %v7860 = vsel %vm7796, %v7764, %v7828
    %v7861 = vsel %vm7797, %v7765, %v7829
    %v7862 = vsel %vm7798, %v7766, %v7830
    %v7863 = vsel %vm7799, %v7767, %v7831
    %v7864 = vsel %vm7800, %v7768, %v7832
    %v7865 = vsel %vm7801, %v7769, %v7833
    %v7866 = vsel %vm7802, %v7770, %v7834
    %v7867 = vsel %vm7803, %v7771, %v7835
    %v7868 = vsel %vm7804, %v7772, %v7836
    %v7869 = vsel %vm7805, %v7773, %v7837
    %v7870 = vsel %vm7806, %v7774, %v7838
    %v7871 = vsel %vm7807, %v7775, %v7839
    %v7872 = vsel %vm7808, %v7776, %v7840
    %v7873 = vsel %vm7809, %v7777, %v7841
    %v7874 = vsel %vm7810, %v7778, %v7842
    %v7875 = vsel %vm7811, %v7779, %v7843
    %v7876 = vsel %vm7812, %v7780, %v7844
    %v7877 = vsel %vm7813, %v7781, %v7845
    %v7878 = vsel %vm7814, %v7782, %v7846
    %v7879 = vsel %vm7815, %v7783, %v7847
    %v7880 = vsel %vm7816, %v7784, %v7848
    %v7881 = vsel %vm7817, %v7785, %v7849
    %v7882 = vsel %vm7818, %v7786, %v7850
    %v7883 = vsel %vm7819, %v7787, %v7851
    %v7884 = vsel %vm7820, %v7788, %v7852
    %v7885 = vsel %vm7821, %v7789, %v7853
    %v7886 = vsel %vm7822, %v7790, %v7854
    %v7887 = vsel %vm7823, %v7791, %v7855
    %v7888 = vsel %vm7824, %v7792, %v7856
    %v7905 = vrot.slane %v7859, 7
    %vm7906 = vcmask 1041409
    %v7907 = vsel %vm7906, %v7905, %v7857
    %v7908 = vrot.slane %v7861, 6
    %vm7909 = vcmask 1042434
    %v7910 = vsel %vm7909, %v7908, %v7907
    %v7911 = vrot.slane %v7863, 5
    %vm7912 = vcmask 1043459
    %v7913 = vsel %vm7912, %v7911, %v7910
    %v7914 = vrot.slane %v7865, 4
    %vm7915 = vcmask 1044484
    %v7916 = vsel %vm7915, %v7914, %v7913
    %v7917 = vrot.slane %v7867, 3
    %vm7918 = vcmask 1045509
    %v7919 = vsel %vm7918, %v7917, %v7916
    %v7920 = vrot.slane %v7869, 2
    %vm7921 = vcmask 1046534
    %v7922 = vsel %vm7921, %v7920, %v7919
    %v7923 = vrot.slane %v7871, 1
    %vm7924 = vcmask 1047559
    %v7925 = vsel %vm7924, %v7923, %v7922
    %v7926 = vrot.slane %v7875, 7
    %v7927 = vsel %vm7906, %v7926, %v7873
    %v7928 = vrot.slane %v7877, 6
    %v7929 = vsel %vm7909, %v7928, %v7927
    %v7930 = vrot.slane %v7879, 5
    %v7931 = vsel %vm7912, %v7930, %v7929
    %v7932 = vrot.slane %v7881, 4
    %v7933 = vsel %vm7915, %v7932, %v7931
    %v7934 = vrot.slane %v7883, 3
    %v7935 = vsel %vm7918, %v7934, %v7933
    %v7936 = vrot.slane %v7885, 2
    %v7937 = vsel %vm7921, %v7936, %v7935
    %v7938 = vrot.slane %v7887, 1
    %v7939 = vsel %vm7924, %v7938, %v7937
    %v7942 = vrot.slane %v7857, 1
    %v7943 = vsel %vm7906, %v7859, %v7942
    %v7944 = vrot.slane %v7861, 7
    %v7945 = vsel %vm7909, %v7944, %v7943
    %v7946 = vrot.slane %v7863, 6
    %v7947 = vsel %vm7912, %v7946, %v7945
    %v7948 = vrot.slane %v7865, 5
    %v7949 = vsel %vm7915, %v7948, %v7947
    %v7950 = vrot.slane %v7867, 4
    %v7951 = vsel %vm7918, %v7950, %v7949
    %v7952 = vrot.slane %v7869, 3
    %v7953 = vsel %vm7921, %v7952, %v7951
    %v7954 = vrot.slane %v7871, 2
    %v7955 = vsel %vm7924, %v7954, %v7953
    %v7956 = vrot.slane %v7873, 1
    %v7957 = vsel %vm7906, %v7875, %v7956
    %v7958 = vrot.slane %v7877, 7
    %v7959 = vsel %vm7909, %v7958, %v7957
    %v7960 = vrot.slane %v7879, 6
    %v7961 = vsel %vm7912, %v7960, %v7959
    %v7962 = vrot.slane %v7881, 5
    %v7963 = vsel %vm7915, %v7962, %v7961
    %v7964 = vrot.slane %v7883, 4
    %v7965 = vsel %vm7918, %v7964, %v7963
    %v7966 = vrot.slane %v7885, 3
    %v7967 = vsel %vm7921, %v7966, %v7965
    %v7968 = vrot.slane %v7887, 2
    %v7969 = vsel %vm7924, %v7968, %v7967
    %7970 = vrot.lane.b32.xlu0 %v7955, 16
    %v7971 = vpop.permute.xlu0 %7970
    %7972 = vrot.lane.b32.xlu0 %v7969, 16
    %v7973 = vpop.permute.xlu0 %7972
    %v7976 = vrot.slane %v7857, 2
    %v7977 = vrot.slane %v7859, 1
    %v7978 = vsel %vm7906, %v7977, %v7976
    %v7979 = vsel %vm7909, %v7861, %v7978
    %v7980 = vrot.slane %v7863, 7
    %v7981 = vsel %vm7912, %v7980, %v7979
    %v7982 = vrot.slane %v7865, 6
    %v7983 = vsel %vm7915, %v7982, %v7981
    %v7984 = vrot.slane %v7867, 5
    %v7985 = vsel %vm7918, %v7984, %v7983
    %v7986 = vrot.slane %v7869, 4
    %v7987 = vsel %vm7921, %v7986, %v7985
    %v7988 = vrot.slane %v7871, 3
    %v7989 = vsel %vm7924, %v7988, %v7987
    %v7990 = vrot.slane %v7873, 2
    %v7991 = vrot.slane %v7875, 1
    %v7992 = vsel %vm7906, %v7991, %v7990
    %v7993 = vsel %vm7909, %v7877, %v7992
    %v7994 = vrot.slane %v7879, 7
    %v7995 = vsel %vm7912, %v7994, %v7993
    %v7996 = vrot.slane %v7881, 6
    %v7997 = vsel %vm7915, %v7996, %v7995
    %v7998 = vrot.slane %v7883, 5
    %v7999 = vsel %vm7918, %v7998, %v7997
    %v8000 = vrot.slane %v7885, 4
    %v8001 = vsel %vm7921, %v8000, %v7999
    %v8002 = vrot.slane %v7887, 3
    %v8003 = vsel %vm7924, %v8002, %v8001
    %8004 = vrot.lane.b32.xlu0 %v7989, 32
    %v8005 = vpop.permute.xlu0 %8004
    %8006 = vrot.lane.b32.xlu0 %v8003, 32
    %v8007 = vpop.permute.xlu0 %8006
    %v8010 = vrot.slane %v7857, 3
    %v8011 = vrot.slane %v7859, 2
    %v8012 = vsel %vm7906, %v8011, %v8010
    %v8013 = vrot.slane %v7861, 1
    %v8014 = vsel %vm7909, %v8013, %v8012
    %v8015 = vsel %vm7912, %v7863, %v8014
    %v8016 = vrot.slane %v7865, 7
    %v8017 = vsel %vm7915, %v8016, %v8015
    %v8018 = vrot.slane %v7867, 6
    %v8019 = vsel %vm7918, %v8018, %v8017
    %v8020 = vrot.slane %v7869, 5
    %v8021 = vsel %vm7921, %v8020, %v8019
    %v8022 = vrot.slane %v7871, 4
    %v8023 = vsel %vm7924, %v8022, %v8021
    %v8024 = vrot.slane %v7873, 3
    %v8025 = vrot.slane %v7875, 2
    %v8026 = vsel %vm7906, %v8025, %v8024
    %v8027 = vrot.slane %v7877, 1
    %v8028 = vsel %vm7909, %v8027, %v8026
    %v8029 = vsel %vm7912, %v7879, %v8028
    %v8030 = vrot.slane %v7881, 7
    %v8031 = vsel %vm7915, %v8030, %v8029
    %v8032 = vrot.slane %v7883, 6
    %v8033 = vsel %vm7918, %v8032, %v8031
    %v8034 = vrot.slane %v7885, 5
    %v8035 = vsel %vm7921, %v8034, %v8033
    %v8036 = vrot.slane %v7887, 4
    %v8037 = vsel %vm7924, %v8036, %v8035
    %8038 = vrot.lane.b32.xlu0 %v8023, 48
    %v8039 = vpop.permute.xlu0 %8038
    %8040 = vrot.lane.b32.xlu0 %v8037, 48
    %v8041 = vpop.permute.xlu0 %8040
    %v8044 = vrot.slane %v7857, 4
    %v8045 = vrot.slane %v7859, 3
    %v8046 = vsel %vm7906, %v8045, %v8044
    %v8047 = vrot.slane %v7861, 2
    %v8048 = vsel %vm7909, %v8047, %v8046
    %v8049 = vrot.slane %v7863, 1
    %v8050 = vsel %vm7912, %v8049, %v8048
    %v8051 = vsel %vm7915, %v7865, %v8050
    %v8052 = vrot.slane %v7867, 7
    %v8053 = vsel %vm7918, %v8052, %v8051
    %v8054 = vrot.slane %v7869, 6
    %v8055 = vsel %vm7921, %v8054, %v8053
    %v8056 = vrot.slane %v7871, 5
    %v8057 = vsel %vm7924, %v8056, %v8055
    %v8058 = vrot.slane %v7873, 4
    %v8059 = vrot.slane %v7875, 3
    %v8060 = vsel %vm7906, %v8059, %v8058
    %v8061 = vrot.slane %v7877, 2
    %v8062 = vsel %vm7909, %v8061, %v8060
    %v8063 = vrot.slane %v7879, 1
    %v8064 = vsel %vm7912, %v8063, %v8062
    %v8065 = vsel %vm7915, %v7881, %v8064
    %v8066 = vrot.slane %v7883, 7
    %v8067 = vsel %vm7918, %v8066, %v8065
    %v8068 = vrot.slane %v7885, 6
    %v8069 = vsel %vm7921, %v8068, %v8067
    %v8070 = vrot.slane %v7887, 5
    %v8071 = vsel %vm7924, %v8070, %v8069
    %8072 = vrot.lane.b32.xlu0 %v8057, 64
    %v8073 = vpop.permute.xlu0 %8072
    %8074 = vrot.lane.b32.xlu0 %v8071, 64
    %v8075 = vpop.permute.xlu0 %8074
    %v8078 = vrot.slane %v7857, 5
    %v8079 = vrot.slane %v7859, 4
    %v8080 = vsel %vm7906, %v8079, %v8078
    %v8081 = vrot.slane %v7861, 3
    %v8082 = vsel %vm7909, %v8081, %v8080
    %v8083 = vrot.slane %v7863, 2
    %v8084 = vsel %vm7912, %v8083, %v8082
    %v8085 = vrot.slane %v7865, 1
    %v8086 = vsel %vm7915, %v8085, %v8084
    %v8087 = vsel %vm7918, %v7867, %v8086
    %v8088 = vrot.slane %v7869, 7
    %v8089 = vsel %vm7921, %v8088, %v8087
    %v8090 = vrot.slane %v7871, 6
    %v8091 = vsel %vm7924, %v8090, %v8089
    %v8092 = vrot.slane %v7873, 5
    %v8093 = vrot.slane %v7875, 4
    %v8094 = vsel %vm7906, %v8093, %v8092
    %v8095 = vrot.slane %v7877, 3
    %v8096 = vsel %vm7909, %v8095, %v8094
    %v8097 = vrot.slane %v7879, 2
    %v8098 = vsel %vm7912, %v8097, %v8096
    %v8099 = vrot.slane %v7881, 1
    %v8100 = vsel %vm7915, %v8099, %v8098
    %v8101 = vsel %vm7918, %v7883, %v8100
    %v8102 = vrot.slane %v7885, 7
    %v8103 = vsel %vm7921, %v8102, %v8101
    %v8104 = vrot.slane %v7887, 6
    %v8105 = vsel %vm7924, %v8104, %v8103
    %8106 = vrot.lane.b32.xlu0 %v8091, 80
    %v8107 = vpop.permute.xlu0 %8106
    %8108 = vrot.lane.b32.xlu0 %v8105, 80
    %v8109 = vpop.permute.xlu0 %8108
    %v8112 = vrot.slane %v7857, 6
    %v8113 = vrot.slane %v7859, 5
    %v8114 = vsel %vm7906, %v8113, %v8112
    %v8115 = vrot.slane %v7861, 4
    %v8116 = vsel %vm7909, %v8115, %v8114
    %v8117 = vrot.slane %v7863, 3
    %v8118 = vsel %vm7912, %v8117, %v8116
    %v8119 = vrot.slane %v7865, 2
    %v8120 = vsel %vm7915, %v8119, %v8118
    %v8121 = vrot.slane %v7867, 1
    %v8122 = vsel %vm7918, %v8121, %v8120
    %v8123 = vsel %vm7921, %v7869, %v8122
    %v8124 = vrot.slane %v7871, 7
    %v8125 = vsel %vm7924, %v8124, %v8123
    %v8126 = vrot.slane %v7873, 6
    %v8127 = vrot.slane %v7875, 5
    %v8128 = vsel %vm7906, %v8127, %v8126
    %v8129 = vrot.slane %v7877, 4
    %v8130 = vsel %vm7909, %v8129, %v8128
    %v8131 = vrot.slane %v7879, 3
    %v8132 = vsel %vm7912, %v8131, %v8130
    %v8133 = vrot.slane %v7881, 2
    %v8134 = vsel %vm7915, %v8133, %v8132
    %v8135 = vrot.slane %v7883, 1
    %v8136 = vsel %vm7918, %v8135, %v8134
    %v8137 = vsel %vm7921, %v7885, %v8136
    %v8138 = vrot.slane %v7887, 7
    %v8139 = vsel %vm7924, %v8138, %v8137
    %8140 = vrot.lane.b32.xlu0 %v8125, 96
    %v8141 = vpop.permute.xlu0 %8140
    %8142 = vrot.lane.b32.xlu0 %v8139, 96
    %v8143 = vpop.permute.xlu0 %8142
    %v8146 = vrot.slane %v7857, 7
    %v8147 = vrot.slane %v7859, 6
    %v8148 = vsel %vm7906, %v8147, %v8146
    %v8149 = vrot.slane %v7861, 5
    %v8150 = vsel %vm7909, %v8149, %v8148
    %v8151 = vrot.slane %v7863, 4
    %v8152 = vsel %vm7912, %v8151, %v8150
    %v8153 = vrot.slane %v7865, 3
    %v8154 = vsel %vm7915, %v8153, %v8152
    %v8155 = vrot.slane %v7867, 2
    %v8156 = vsel %vm7918, %v8155, %v8154
    %v8157 = vrot.slane %v7869, 1
    %v8158 = vsel %vm7921, %v8157, %v8156
    %v8159 = vsel %vm7924, %v7871, %v8158
    %v8160 = vrot.slane %v7873, 7
    %v8161 = vrot.slane %v7875, 6
    %v8162 = vsel %vm7906, %v8161, %v8160
    %v8163 = vrot.slane %v7877, 5
    %v8164 = vsel %vm7909, %v8163, %v8162
    %v8165 = vrot.slane %v7879, 4
    %v8166 = vsel %vm7912, %v8165, %v8164
    %v8167 = vrot.slane %v7881, 3
    %v8168 = vsel %vm7915, %v8167, %v8166
    %v8169 = vrot.slane %v7883, 2
    %v8170 = vsel %vm7918, %v8169, %v8168
    %v8171 = vrot.slane %v7885, 1
    %v8172 = vsel %vm7921, %v8171, %v8170
    %v8173 = vsel %vm7924, %v7887, %v8172
    %8174 = vrot.lane.b32.xlu0 %v8159, 112
    %v8175 = vpop.permute.xlu0 %8174
    %8176 = vrot.lane.b32.xlu0 %v8173, 112
    %v8177 = vpop.permute.xlu0 %8176
    %v8196 = vrot.slane %v7860, 7
    %v8197 = vsel %vm7906, %v8196, %v7858
    %v8198 = vrot.slane %v7862, 6
    %v8199 = vsel %vm7909, %v8198, %v8197
    %v8200 = vrot.slane %v7864, 5
    %v8201 = vsel %vm7912, %v8200, %v8199
    %v8202 = vrot.slane %v7866, 4
    %v8203 = vsel %vm7915, %v8202, %v8201
    %v8204 = vrot.slane %v7868, 3
    %v8205 = vsel %vm7918, %v8204, %v8203
    %v8206 = vrot.slane %v7870, 2
    %v8207 = vsel %vm7921, %v8206, %v8205
    %v8208 = vrot.slane %v7872, 1
    %v8209 = vsel %vm7924, %v8208, %v8207
    %v8210 = vrot.slane %v7876, 7
    %v8211 = vsel %vm7906, %v8210, %v7874
    %v8212 = vrot.slane %v7878, 6
    %v8213 = vsel %vm7909, %v8212, %v8211
    %v8214 = vrot.slane %v7880, 5
    %v8215 = vsel %vm7912, %v8214, %v8213
    %v8216 = vrot.slane %v7882, 4
    %v8217 = vsel %vm7915, %v8216, %v8215
    %v8218 = vrot.slane %v7884, 3
    %v8219 = vsel %vm7918, %v8218, %v8217
    %v8220 = vrot.slane %v7886, 2
    %v8221 = vsel %vm7921, %v8220, %v8219
    %v8222 = vrot.slane %v7888, 1
    %v8223 = vsel %vm7924, %v8222, %v8221
    %v8226 = vrot.slane %v7858, 1
    %v8227 = vsel %vm7906, %v7860, %v8226
    %v8228 = vrot.slane %v7862, 7
    %v8229 = vsel %vm7909, %v8228, %v8227
    %v8230 = vrot.slane %v7864, 6
    %v8231 = vsel %vm7912, %v8230, %v8229
    %v8232 = vrot.slane %v7866, 5
    %v8233 = vsel %vm7915, %v8232, %v8231
    %v8234 = vrot.slane %v7868, 4
    %v8235 = vsel %vm7918, %v8234, %v8233
    %v8236 = vrot.slane %v7870, 3
    %v8237 = vsel %vm7921, %v8236, %v8235
    %v8238 = vrot.slane %v7872, 2
    %v8239 = vsel %vm7924, %v8238, %v8237
    %v8240 = vrot.slane %v7874, 1
    %v8241 = vsel %vm7906, %v7876, %v8240
    %v8242 = vrot.slane %v7878, 7
    %v8243 = vsel %vm7909, %v8242, %v8241
    %v8244 = vrot.slane %v7880, 6
    %v8245 = vsel %vm7912, %v8244, %v8243
    %v8246 = vrot.slane %v7882, 5
    %v8247 = vsel %vm7915, %v8246, %v8245
    %v8248 = vrot.slane %v7884, 4
    %v8249 = vsel %vm7918, %v8248, %v8247
    %v8250 = vrot.slane %v7886, 3
    %v8251 = vsel %vm7921, %v8250, %v8249
    %v8252 = vrot.slane %v7888, 2
    %v8253 = vsel %vm7924, %v8252, %v8251
    %8254 = vrot.lane.b32.xlu0 %v8239, 16
    %v8255 = vpop.permute.xlu0 %8254
    %8256 = vrot.lane.b32.xlu0 %v8253, 16
    %v8257 = vpop.permute.xlu0 %8256
    %v8260 = vrot.slane %v7858, 2
    %v8261 = vrot.slane %v7860, 1
    %v8262 = vsel %vm7906, %v8261, %v8260
    %v8263 = vsel %vm7909, %v7862, %v8262
    %v8264 = vrot.slane %v7864, 7
    %v8265 = vsel %vm7912, %v8264, %v8263
    %v8266 = vrot.slane %v7866, 6
    %v8267 = vsel %vm7915, %v8266, %v8265
    %v8268 = vrot.slane %v7868, 5
    %v8269 = vsel %vm7918, %v8268, %v8267
    %v8270 = vrot.slane %v7870, 4
    %v8271 = vsel %vm7921, %v8270, %v8269
    %v8272 = vrot.slane %v7872, 3
    %v8273 = vsel %vm7924, %v8272, %v8271
    %v8274 = vrot.slane %v7874, 2
    %v8275 = vrot.slane %v7876, 1
    %v8276 = vsel %vm7906, %v8275, %v8274
    %v8277 = vsel %vm7909, %v7878, %v8276
    %v8278 = vrot.slane %v7880, 7
    %v8279 = vsel %vm7912, %v8278, %v8277
    %v8280 = vrot.slane %v7882, 6
    %v8281 = vsel %vm7915, %v8280, %v8279
    %v8282 = vrot.slane %v7884, 5
    %v8283 = vsel %vm7918, %v8282, %v8281
    %v8284 = vrot.slane %v7886, 4
    %v8285 = vsel %vm7921, %v8284, %v8283
    %v8286 = vrot.slane %v7888, 3
    %v8287 = vsel %vm7924, %v8286, %v8285
    %8288 = vrot.lane.b32.xlu0 %v8273, 32
    %v8289 = vpop.permute.xlu0 %8288
    %8290 = vrot.lane.b32.xlu0 %v8287, 32
    %v8291 = vpop.permute.xlu0 %8290
    %v8294 = vrot.slane %v7858, 3
    %v8295 = vrot.slane %v7860, 2
    %v8296 = vsel %vm7906, %v8295, %v8294
    %v8297 = vrot.slane %v7862, 1
    %v8298 = vsel %vm7909, %v8297, %v8296
    %v8299 = vsel %vm7912, %v7864, %v8298
    %v8300 = vrot.slane %v7866, 7
    %v8301 = vsel %vm7915, %v8300, %v8299
    %v8302 = vrot.slane %v7868, 6
    %v8303 = vsel %vm7918, %v8302, %v8301
    %v8304 = vrot.slane %v7870, 5
    %v8305 = vsel %vm7921, %v8304, %v8303
    %v8306 = vrot.slane %v7872, 4
    %v8307 = vsel %vm7924, %v8306, %v8305
    %v8308 = vrot.slane %v7874, 3
    %v8309 = vrot.slane %v7876, 2
    %v8310 = vsel %vm7906, %v8309, %v8308
    %v8311 = vrot.slane %v7878, 1
    %v8312 = vsel %vm7909, %v8311, %v8310
    %v8313 = vsel %vm7912, %v7880, %v8312
    %v8314 = vrot.slane %v7882, 7
    %v8315 = vsel %vm7915, %v8314, %v8313
    %v8316 = vrot.slane %v7884, 6
    %v8317 = vsel %vm7918, %v8316, %v8315
    %v8318 = vrot.slane %v7886, 5
    %v8319 = vsel %vm7921, %v8318, %v8317
    %v8320 = vrot.slane %v7888, 4
    %v8321 = vsel %vm7924, %v8320, %v8319
    %8322 = vrot.lane.b32.xlu0 %v8307, 48
    %v8323 = vpop.permute.xlu0 %8322
    %8324 = vrot.lane.b32.xlu0 %v8321, 48
    %v8325 = vpop.permute.xlu0 %8324
    %v8328 = vrot.slane %v7858, 4
    %v8329 = vrot.slane %v7860, 3
    %v8330 = vsel %vm7906, %v8329, %v8328
    %v8331 = vrot.slane %v7862, 2
    %v8332 = vsel %vm7909, %v8331, %v8330
    %v8333 = vrot.slane %v7864, 1
    %v8334 = vsel %vm7912, %v8333, %v8332
    %v8335 = vsel %vm7915, %v7866, %v8334
    %v8336 = vrot.slane %v7868, 7
    %v8337 = vsel %vm7918, %v8336, %v8335
    %v8338 = vrot.slane %v7870, 6
    %v8339 = vsel %vm7921, %v8338, %v8337
    %v8340 = vrot.slane %v7872, 5
    %v8341 = vsel %vm7924, %v8340, %v8339
    %v8342 = vrot.slane %v7874, 4
    %v8343 = vrot.slane %v7876, 3
    %v8344 = vsel %vm7906, %v8343, %v8342
    %v8345 = vrot.slane %v7878, 2
    %v8346 = vsel %vm7909, %v8345, %v8344
    %v8347 = vrot.slane %v7880, 1
    %v8348 = vsel %vm7912, %v8347, %v8346
    %v8349 = vsel %vm7915, %v7882, %v8348
    %v8350 = vrot.slane %v7884, 7
    %v8351 = vsel %vm7918, %v8350, %v8349
    %v8352 = vrot.slane %v7886, 6
    %v8353 = vsel %vm7921, %v8352, %v8351
    %v8354 = vrot.slane %v7888, 5
    %v8355 = vsel %vm7924, %v8354, %v8353
    %8356 = vrot.lane.b32.xlu0 %v8341, 64
    %v8357 = vpop.permute.xlu0 %8356
    %8358 = vrot.lane.b32.xlu0 %v8355, 64
    %v8359 = vpop.permute.xlu0 %8358
    %v8362 = vrot.slane %v7858, 5
    %v8363 = vrot.slane %v7860, 4
    %v8364 = vsel %vm7906, %v8363, %v8362
    %v8365 = vrot.slane %v7862, 3
    %v8366 = vsel %vm7909, %v8365, %v8364
    %v8367 = vrot.slane %v7864, 2
    %v8368 = vsel %vm7912, %v8367, %v8366
    %v8369 = vrot.slane %v7866, 1
    %v8370 = vsel %vm7915, %v8369, %v8368
    %v8371 = vsel %vm7918, %v7868, %v8370
    %v8372 = vrot.slane %v7870, 7
    %v8373 = vsel %vm7921, %v8372, %v8371
    %v8374 = vrot.slane %v7872, 6
    %v8375 = vsel %vm7924, %v8374, %v8373
    %v8376 = vrot.slane %v7874, 5
    %v8377 = vrot.slane %v7876, 4
    %v8378 = vsel %vm7906, %v8377, %v8376
    %v8379 = vrot.slane %v7878, 3
    %v8380 = vsel %vm7909, %v8379, %v8378
    %v8381 = vrot.slane %v7880, 2
    %v8382 = vsel %vm7912, %v8381, %v8380
    %v8383 = vrot.slane %v7882, 1
    %v8384 = vsel %vm7915, %v8383, %v8382
    %v8385 = vsel %vm7918, %v7884, %v8384
    %v8386 = vrot.slane %v7886, 7
    %v8387 = vsel %vm7921, %v8386, %v8385
    %v8388 = vrot.slane %v7888, 6
    %v8389 = vsel %vm7924, %v8388, %v8387
    %8390 = vrot.lane.b32.xlu0 %v8375, 80
    %v8391 = vpop.permute.xlu0 %8390
    %8392 = vrot.lane.b32.xlu0 %v8389, 80
    %v8393 = vpop.permute.xlu0 %8392
    %v8396 = vrot.slane %v7858, 6
    %v8397 = vrot.slane %v7860, 5
    %v8398 = vsel %vm7906, %v8397, %v8396
    %v8399 = vrot.slane %v7862, 4
    %v8400 = vsel %vm7909, %v8399, %v8398
    %v8401 = vrot.slane %v7864, 3
    %v8402 = vsel %vm7912, %v8401, %v8400
    %v8403 = vrot.slane %v7866, 2
    %v8404 = vsel %vm7915, %v8403, %v8402
    %v8405 = vrot.slane %v7868, 1
    %v8406 = vsel %vm7918, %v8405, %v8404
    %v8407 = vsel %vm7921, %v7870, %v8406
    %v8408 = vrot.slane %v7872, 7
    %v8409 = vsel %vm7924, %v8408, %v8407
    %v8410 = vrot.slane %v7874, 6
    %v8411 = vrot.slane %v7876, 5
    %v8412 = vsel %vm7906, %v8411, %v8410
    %v8413 = vrot.slane %v7878, 4
    %v8414 = vsel %vm7909, %v8413, %v8412
    %v8415 = vrot.slane %v7880, 3
    %v8416 = vsel %vm7912, %v8415, %v8414
    %v8417 = vrot.slane %v7882, 2
    %v8418 = vsel %vm7915, %v8417, %v8416
    %v8419 = vrot.slane %v7884, 1
    %v8420 = vsel %vm7918, %v8419, %v8418
    %v8421 = vsel %vm7921, %v7886, %v8420
    %v8422 = vrot.slane %v7888, 7
    %v8423 = vsel %vm7924, %v8422, %v8421
    %8424 = vrot.lane.b32.xlu0 %v8409, 96
    %v8425 = vpop.permute.xlu0 %8424
    %8426 = vrot.lane.b32.xlu0 %v8423, 96
    %v8427 = vpop.permute.xlu0 %8426
    %v8430 = vrot.slane %v7858, 7
    %v8431 = vrot.slane %v7860, 6
    %v8432 = vsel %vm7906, %v8431, %v8430
    %v8433 = vrot.slane %v7862, 5
    %v8434 = vsel %vm7909, %v8433, %v8432
    %v8435 = vrot.slane %v7864, 4
    %v8436 = vsel %vm7912, %v8435, %v8434
    %v8437 = vrot.slane %v7866, 3
    %v8438 = vsel %vm7915, %v8437, %v8436
    %v8439 = vrot.slane %v7868, 2
    %v8440 = vsel %vm7918, %v8439, %v8438
    %v8441 = vrot.slane %v7870, 1
    %v8442 = vsel %vm7921, %v8441, %v8440
    %v8443 = vsel %vm7924, %v7872, %v8442
    %v8444 = vrot.slane %v7874, 7
    %v8445 = vrot.slane %v7876, 6
    %v8446 = vsel %vm7906, %v8445, %v8444
    %v8447 = vrot.slane %v7878, 5
    %v8448 = vsel %vm7909, %v8447, %v8446
    %v8449 = vrot.slane %v7880, 4
    %v8450 = vsel %vm7912, %v8449, %v8448
    %v8451 = vrot.slane %v7882, 3
    %v8452 = vsel %vm7915, %v8451, %v8450
    %v8453 = vrot.slane %v7884, 2
    %v8454 = vsel %vm7918, %v8453, %v8452
    %v8455 = vrot.slane %v7886, 1
    %v8456 = vsel %vm7921, %v8455, %v8454
    %v8457 = vsel %vm7924, %v7888, %v8456
    %8458 = vrot.lane.b32.xlu0 %v8443, 112
    %v8459 = vpop.permute.xlu0 %8458
    %8460 = vrot.lane.b32.xlu0 %v8457, 112
    %v8461 = vpop.permute.xlu0 %8460
    %v8464 = vsel %vm1494, %v7925, %v7971
    %v8465 = vsel %vm1494, %v7939, %v7973
    %v8466 = vsel %vm1527, %v8464, %v8005
    %v8467 = vsel %vm1527, %v8465, %v8007
    %v8468 = vsel %vm1560, %v8466, %v8039
    %v8469 = vsel %vm1560, %v8467, %v8041
    %v8470 = vsel %vm189, %v8468, %v8073
    %v8471 = vsel %vm189, %v8469, %v8075
    %v8472 = vsel %vm1625, %v8470, %v8107
    %v8473 = vsel %vm1625, %v8471, %v8109
    %v8474 = vsel %vm1658, %v8472, %v8141
    %v8475 = vsel %vm1658, %v8473, %v8143
    %v8476 = vsel %vm1691, %v8474, %v8175
    %v8477 = vsel %vm1691, %v8475, %v8177
    %v8478 = vsel %vm1494, %v8209, %v8255
    %v8479 = vsel %vm1494, %v8223, %v8257
    %v8480 = vsel %vm1527, %v8478, %v8289
    %v8481 = vsel %vm1527, %v8479, %v8291
    %v8482 = vsel %vm1560, %v8480, %v8323
    %v8483 = vsel %vm1560, %v8481, %v8325
    %v8484 = vsel %vm189, %v8482, %v8357
    %v8485 = vsel %vm189, %v8483, %v8359
    %v8486 = vsel %vm1625, %v8484, %v8391
    %v8487 = vsel %vm1625, %v8485, %v8393
    %v8488 = vsel %vm1658, %v8486, %v8425
    %v8489 = vsel %vm1658, %v8487, %v8427
    %v8490 = vsel %vm1691, %v8488, %v8459
    %v8491 = vsel %vm1691, %v8489, %v8461
    %8492 = vst [vmem:[#allocation2] sm:$0xff] %v8476
    %8493 = vst [vmem:[#allocation2 + $0x8] sm:$0xff] %v8490
    %8494 = vst [vmem:[#allocation2 + $0x10] sm:$0xff] %v8477
    %8495 = vst [vmem:[#allocation2 + $0x18] sm:$0xff] %v8491
    // Predicated region
    $region50: #{tpu_custom_call.1} parent=1 // pred_check
      _
    $region51: #{tpu_custom_call.1} parent=1 // pred_check_branch
      %8497 = sbr.rel (0) target = $region53
    $region52: #{tpu_custom_call.1} parent=1 // pred_region
      %s8499 = ssub.s32 512, 512
      %8500 = vsyncadd [#allocation3], %s8499
      %s8501 = sshll.u32 [#allocation2], 4
      %s8502 = int_to_ptr.vmem [resolvable:$true] %s8501
      %8507 = dma.vmem_to_hbm [thread:$0]  %s8502, 512, %s12, [#allocation3], 256, 256, 16
    $region53: #{tpu_custom_call.1} parent=1 // pred_fallthru
      _
    // Predicated region
    $region54: #{tpu_custom_call.1} parent=1 // pred_check
      _
    $region55: #{tpu_custom_call.1} parent=1 // pred_check_branch
      %8509 = sbr.rel (0) target = $region57
    $region56: #{tpu_custom_call.1} parent=1 // pred_region
      %8510 = dma.done [#allocation3], 512
    $region57: #{tpu_custom_call.1} parent=1 // pred_fallthru
      _
    %8511 = vsyncpa [#allocation3], 1

</llo_original>
